<compile_context>
chip_gen: v7x
topology: tpu7x:2x2x1
jax: 0.10.0
libtpu: 0.0.40
codegen_flags: <defaults>
</compile_context>

<pallas_src>
import jax
import jax.numpy as jnp
from jax.experimental import pallas as pl
from jax.experimental.pallas import tpu as pltpu


# ----------------------------------------------------------------------------
# constants
# ----------------------------------------------------------------------------
K1, K2 = 5, 3
COUT1, COUT2 = 10, 20
POOLED_HW = 12                                  # 24x24 conv1 out, pooled 2x2 -> 12x12
CONV2_HW = 10                                   # 12 - 3 + 1
N_POOL_OFF = 4                                  # 2x2 pool-window offsets
POOLED_ROWS = POOLED_HW * POOLED_HW             # 144 spatial rows / image
PATCH_ROWS = N_POOL_OFF * POOLED_ROWS           # 576 conv1 patch rows / image
K1P = 32                                        # conv1 contraction 25 -> 32
C1P = 128                                       # conv1 channels 10 -> 128 lanes
POOL_PAD_ROWS = 176                             # 144 + 32 zero rows (3x3 tap slices)
FC1_IN = POOLED_ROWS * COUT2                    # 2880 packed fc1 features
FC1_OUT, FC1_OUT_PAD = 500, 512
FC2_OUT, FC2_OUT_PAD = 10, 128

_COMPILER_PARAMS = pltpu.CompilerParams(
    dimension_semantics=("parallel",),
    vmem_limit_bytes=32 * 1024 * 1024,
)


def _round_up(x, m):
    return ((x + m - 1) // m) * m


# ----------------------------------------------------------------------------
# Pallas kernels
# ----------------------------------------------------------------------------
def _conv_fused_kernel(p_ref, w1_ref, b1_ref, w2_ref, b2_ref, o_ref):
    """conv1(5x5) + ReLU + maxpool(2,2) + conv2(3x3) + ReLU for `tb` images.

    p_ref : (tb, 576, 32) bf16   pool-grouped im2col patches
    w1_ref: (32, 128)     bf16   conv1 weights (25 real rows, 10 real cols)
    b1_ref: (1, 128)      f32
    w2_ref: (9, 128, 20)  bf16   conv2 weights, one (cin, cout) slab per tap
    b2_ref: (1, 20)       f32
    o_ref : (tb, 144, 20) bf16   conv2 output on the 12x12 grid (rows with
                                 oh>=10 or ow>=10 are garbage; fc1 weight rows
                                 for those positions are zero)
    """
    tb = p_ref.shape[0]

    # --- conv1: one MXU matmul over all 4 pool offsets at once -------------
    p = p_ref[...].reshape(tb * PATCH_ROWS, K1P)                    # (tb*576, 32)
    z1 = jnp.dot(p, w1_ref[...], preferred_element_type=jnp.float32)
    z1 = z1.reshape(tb, N_POOL_OFF, POOLED_ROWS, C1P)               # (tb,4,144,128)
    zmax = jnp.maximum(jnp.maximum(z1[:, 0], z1[:, 1]),
                       jnp.maximum(z1[:, 2], z1[:, 3]))             # (tb,144,128)
    # relu(max_d(z)+b) == maxpool(relu(z+b)) (shared bias, monotone ReLU).
    pooled = jnp.maximum(zmax + b1_ref[...], 0.0).astype(jnp.bfloat16)
    # Pad 144 -> 176 zero rows so every 3x3 tap below is a contiguous slice.
    pooled = jnp.concatenate(
        [pooled,
         jnp.zeros((tb, POOL_PAD_ROWS - POOLED_ROWS, C1P), jnp.bfloat16)],
        axis=1)                                                     # (tb,176,128)

    # --- conv2: 9 row-shifted matmuls accumulated in f32 -------------------
    acc = jnp.zeros((tb * POOLED_ROWS, COUT2), jnp.float32)
    for kh in range(K2):
        for kw in range(K2):
            off = kh * POOLED_HW + kw
            lhs = pooled[:, off:off + POOLED_ROWS, :]
            lhs = lhs.reshape(tb * POOLED_ROWS, C1P)
            acc = acc + jnp.dot(lhs, w2_ref[kh * K2 + kw],
                                preferred_element_type=jnp.float32)
    y2 = jnp.maximum(acc + b2_ref[...], 0.0)                        # (tb*144, 20)
    o_ref[...] = y2.reshape(tb, POOLED_ROWS, COUT2).astype(o_ref.dtype)


def _fc_fused_kernel(x_ref, w1_ref, b1_ref, w2_ref, b2_ref, o_ref):
    """fc1 + ReLU + fc2; the hidden activation h stays in VMEM."""
    h = jnp.dot(x_ref[...], w1_ref[...], preferred_element_type=jnp.float32)
    h = jnp.maximum(h + b1_ref[...], 0.0)
    z = jnp.dot(h.astype(jnp.bfloat16), w2_ref[...],
                preferred_element_type=jnp.float32)
    o_ref[...] = (z + b2_ref[...]).astype(o_ref.dtype)


# ----------------------------------------------------------------------------
# pallas_call wrappers (batch-gridded, double-buffered, resident weights)
# ----------------------------------------------------------------------------
def conv1_pool_conv2(patches, w1, b1, w2, b2, *, tb_cap=8):
    n = patches.shape[0]
    tb = max(1, min(tb_cap, -(-n // 2)))        # >=2 grid steps whenever n >= 2
    np_ = _round_up(n, tb)
    if np_ > n:
        patches = jnp.pad(patches, ((0, np_ - n), (0, 0), (0, 0)))
    out = pl.pallas_call(
        _conv_fused_kernel,
        out_shape=jax.ShapeDtypeStruct((np_, POOLED_ROWS, COUT2), jnp.bfloat16),
        grid=(np_ // tb,),
        in_specs=[
            pl.BlockSpec((tb, PATCH_ROWS, K1P), lambda i: (i, 0, 0)),
            pl.BlockSpec((K1P, C1P), lambda i: (0, 0)),
            pl.BlockSpec((1, C1P), lambda i: (0, 0)),
            pl.BlockSpec((K2 * K2, C1P, COUT2), lambda i: (0, 0, 0)),
            pl.BlockSpec((1, COUT2), lambda i: (0, 0)),
        ],
        out_specs=pl.BlockSpec((tb, POOLED_ROWS, COUT2), lambda i: (i, 0, 0)),
        compiler_params=_COMPILER_PARAMS,
    )(patches, w1, b1, w2, b2)
    return out[:n]


def fc1_relu_fc2(flat, w1, b1, w2, b2, *, tf_cap=256):
    m, k = flat.shape
    tf = max(16, min(tf_cap, _round_up(-(-m // 2), 16)))   # bf16-friendly M tile
    mp = _round_up(m, tf)
    if mp > m:
        flat = jnp.pad(flat, ((0, mp - m), (0, 0)))
    out = pl.pallas_call(
        _fc_fused_kernel,
        out_shape=jax.ShapeDtypeStruct((mp, FC2_OUT_PAD), jnp.float32),
        grid=(mp // tf,),
        in_specs=[
            pl.BlockSpec((tf, k), lambda i: (i, 0)),
            pl.BlockSpec((k, FC1_OUT_PAD), lambda i: (0, 0)),
            pl.BlockSpec((1, FC1_OUT_PAD), lambda i: (0, 0)),
            pl.BlockSpec((FC1_OUT_PAD, FC2_OUT_PAD), lambda i: (0, 0)),
            pl.BlockSpec((1, FC2_OUT_PAD), lambda i: (0, 0)),
        ],
        out_specs=pl.BlockSpec((tf, FC2_OUT_PAD), lambda i: (i, 0)),
        compiler_params=_COMPILER_PARAMS,
    )(flat, w1, b1, w2, b2)
    return out[:m]


# ----------------------------------------------------------------------------
# Plain-JAX glue: pool-grouped im2col for conv1, parameter packing
# ----------------------------------------------------------------------------
def conv1_pool_patches(x):
    """x: (N, 28, 28) f32 -> (N, 576, 32) bf16 pool-grouped im2col.

    Row index inside an image = d*144 + ph*12 + pw with d the 2x2 pool-window
    offset; column = kh*5 + kw (zero-padded 25 -> 32)."""
    n, hh, ww = x.shape
    oh = (hh - K1 + 1) // 2      # 12
    ow = (ww - K1 + 1) // 2      # 12
    groups = []
    for dh in range(2):
        for dw in range(2):
            taps = []
            for kh in range(K1):
                for kw in range(K1):
                    s0, s1 = dh + kh, dw + kw
                    taps.append(x[:, s0:s0 + 2 * oh:2, s1:s1 + 2 * ow:2])
            g = jnp.stack(taps, axis=-1).reshape(n, oh * ow, K1 * K1)
            groups.append(g)
    p = jnp.stack(groups, axis=1).reshape(n, PATCH_ROWS, K1 * K1)
    p = jnp.pad(p, ((0, 0), (0, 0), (0, K1P - K1 * K1)))
    return p.astype(jnp.bfloat16)


def init_params(key):
    """Parameters in PyTorch (nn.Conv2d / nn.Linear) layout."""
    ks = jax.random.split(key, 8)
    s = 0.05
    return {
        "conv1_w": jax.random.normal(ks[0], (COUT1, 1, K1, K1), jnp.float32) * s,
        "conv1_b": jax.random.normal(ks[1], (COUT1,), jnp.float32) * s,
        "conv2_w": jax.random.normal(ks[2], (COUT2, COUT1, K2, K2), jnp.float32) * s,
        "conv2_b": jax.random.normal(ks[3], (COUT2,), jnp.float32) * s,
        "fc1_w": jax.random.normal(ks[4], (FC1_OUT, 2000), jnp.float32) * s,
        "fc1_b": jax.random.normal(ks[5], (FC1_OUT,), jnp.float32) * s,
        "fc2_w": jax.random.normal(ks[6], (FC2_OUT, FC1_OUT), jnp.float32) * s,
        "fc2_b": jax.random.normal(ks[7], (FC2_OUT,), jnp.float32) * s,
    }


def pack_params(p):
    """One-time repack into kernel layouts (bf16 MXU weights, padded dims)."""
    # conv1: (10,1,5,5) -> (32, 128); rows = kh*5+kw, cols = cout
    w1 = p["conv1_w"].reshape(COUT1, K1 * K1).T
    w1 = jnp.pad(w1, ((0, K1P - K1 * K1), (0, C1P - COUT1))).astype(jnp.bfloat16)
    b1 = jnp.pad(p["conv1_b"], (0, C1P - COUT1)).reshape(1, C1P).astype(jnp.float32)

    # conv2: (20,10,3,3) -> (9, 128, 20); [kh*3+kw, cin, cout]
    w2 = p["conv2_w"].transpose(2, 3, 1, 0).reshape(K2 * K2, COUT1, COUT2)
    w2 = jnp.pad(w2, ((0, 0), (0, C1P - COUT1), (0, 0))).astype(jnp.bfloat16)
    b2 = p["conv2_b"].reshape(1, COUT2).astype(jnp.float32)

    # fc1: PyTorch input index c*100 + oh*10 + ow (NCHW out.view(N,-1)) ->
    # packed row index (oh*12 + ow)*20 + c, matching the conv kernel's
    # (N, 144, 20) output; rows for oh>=10 / ow>=10 are zero.
    wf1 = p["fc1_w"].reshape(FC1_OUT, COUT2, CONV2_HW, CONV2_HW)
    wf1 = wf1.transpose(2, 3, 1, 0)                          # (oh, ow, c, j)
    wf1 = jnp.pad(wf1, ((0, POOLED_HW - CONV2_HW), (0, POOLED_HW - CONV2_HW),
                        (0, 0), (0, FC1_OUT_PAD - FC1_OUT)))
    wf1 = wf1.reshape(FC1_IN, FC1_OUT_PAD).astype(jnp.bfloat16)
    bf1 = jnp.pad(p["fc1_b"], (0, FC1_OUT_PAD - FC1_OUT)).reshape(
        1, FC1_OUT_PAD).astype(jnp.float32)

    wf2 = jnp.pad(p["fc2_w"].T, ((0, FC1_OUT_PAD - FC1_OUT),
                                 (0, FC2_OUT_PAD - FC2_OUT))).astype(jnp.bfloat16)
    bf2 = jnp.pad(p["fc2_b"], (0, FC2_OUT_PAD - FC2_OUT)).reshape(
        1, FC2_OUT_PAD).astype(jnp.float32)

    return {"w1": w1, "b1": b1, "w2": w2, "b2": b2,
            "wf1": wf1, "bf1": bf1, "wf2": wf2, "bf2": bf2}


def forward(packed, x):
    """x: (N, 1, 28, 28) f32 (NCHW, as in the PyTorch module) -> (N, 10) f32."""
    n = x.shape[0]
    xs = x.reshape(n, 28, 28)                                 # Cin == 1

    patches = conv1_pool_patches(xs)                          # (N, 576, 32) bf16
    conv_out = conv1_pool_conv2(patches, packed["w1"], packed["b1"],
                                packed["w2"], packed["b2"])   # (N, 144, 20) bf16
    flat = conv_out.reshape(n, FC1_IN)                        # free row-major reshape
    logits = fc1_relu_fc2(flat, packed["wf1"], packed["bf1"],
                          packed["wf2"], packed["bf2"])       # (N, 128) f32
    return logits[:, :FC2_OUT]


if __name__ == "__main__":
    key = jax.random.PRNGKey(0)
    pkey, xkey = jax.random.split(key)
    packed = pack_params(init_params(pkey))
    # MNIST-sized input is required by fc1's 2000-feature flatten: 28x28.
    x = jax.random.normal(xkey, (2, 1, 28, 28), jnp.float32)

    logits = jax.jit(forward)(packed, x)
    jax.block_until_ready(logits)
    assert logits.shape == (2, FC2_OUT) and logits.dtype == jnp.float32
    print("KERNEL_OK")
</pallas_src>

<mosaic_0001>
module attributes {stable_mosaic.version = 11 : i64} {
  func.func @_conv_fused_kernel(%arg0: i32, %arg1: memref<1x576x32xbf16, #tpu.memory_space<vmem>>, %arg2: memref<32x128xbf16, #tpu.memory_space<vmem>>, %arg3: memref<1x128xf32, #tpu.memory_space<vmem>>, %arg4: memref<9x128x20xbf16, #tpu.memory_space<vmem>>, %arg5: memref<1x20xf32, #tpu.memory_space<vmem>>, %arg6: memref<1x144x20xbf16, #tpu.memory_space<vmem>>) attributes {dimension_semantics = [#tpu.dimension_semantics<parallel>], iteration_bounds = array<i64: 2>, scalar_prefetch = 0 : i64, scratch_operands = 0 : i64, tpu.core_type = #tpu.core_type<tc>, window_params = [{transform_indices = @transform_0, window_bounds = array<i64: 1, 576, 32>}, {pipeline_mode = #tpu.pipeline_mode<synchronous>, transform_indices = @transform_1, window_bounds = array<i64: 32, 128>}, {pipeline_mode = #tpu.pipeline_mode<synchronous>, transform_indices = @transform_2, window_bounds = array<i64: 1, 128>}, {pipeline_mode = #tpu.pipeline_mode<synchronous>, transform_indices = @transform_3, window_bounds = array<i64: 9, 128, 20>}, {pipeline_mode = #tpu.pipeline_mode<synchronous>, transform_indices = @transform_4, window_bounds = array<i64: 1, 20>}, {transform_indices = @transform_5, window_bounds = array<i64: 1, 144, 20>}]} {
    %c0 = arith.constant 0 : index
    %c0_0 = arith.constant 0 : index
    %c0_1 = arith.constant 0 : index
    %0 = vector.load %arg1[%c0, %c0_0, %c0_1] : memref<1x576x32xbf16, #tpu.memory_space<vmem>>, vector<1x576x32xbf16>
    %1 = vector.shape_cast %0 : vector<1x576x32xbf16> to vector<576x32xbf16>
    %c0_2 = arith.constant 0 : index
    %c0_3 = arith.constant 0 : index
    %2 = vector.load %arg2[%c0_2, %c0_3] : memref<32x128xbf16, #tpu.memory_space<vmem>>, vector<32x128xbf16>
    %cst = arith.constant dense<0.000000e+00> : vector<576x128xf32>
    %3 = tpu.matmul %1, %2, %cst {dimension_numbers = #tpu.dot_dimension_numbers<[1], [0], [0], [1], [0, 0, 1, 1], [], []>} : vector<576x32xbf16>, vector<32x128xbf16>, vector<576x128xf32> -> vector<576x128xf32>
    %4 = vector.shape_cast %3 : vector<576x128xf32> to vector<1x4x144x128xf32>
    %5 = vector.extract_strided_slice %4 {offsets = [0, 0, 0, 0], sizes = [1, 1, 144, 128], strides = [1, 1, 1, 1]} : vector<1x4x144x128xf32> to vector<1x1x144x128xf32>
    %6 = vector.shape_cast %5 : vector<1x1x144x128xf32> to vector<1x144x128xf32>
    %7 = vector.extract_strided_slice %4 {offsets = [0, 1, 0, 0], sizes = [1, 1, 144, 128], strides = [1, 1, 1, 1]} : vector<1x4x144x128xf32> to vector<1x1x144x128xf32>
    %8 = vector.shape_cast %7 : vector<1x1x144x128xf32> to vector<1x144x128xf32>
    %9 = arith.maximumf %6, %8 : vector<1x144x128xf32>
    %10 = vector.extract_strided_slice %4 {offsets = [0, 2, 0, 0], sizes = [1, 1, 144, 128], strides = [1, 1, 1, 1]} : vector<1x4x144x128xf32> to vector<1x1x144x128xf32>
    %11 = vector.shape_cast %10 : vector<1x1x144x128xf32> to vector<1x144x128xf32>
    %12 = vector.extract_strided_slice %4 {offsets = [0, 3, 0, 0], sizes = [1, 1, 144, 128], strides = [1, 1, 1, 1]} : vector<1x4x144x128xf32> to vector<1x1x144x128xf32>
    %13 = vector.shape_cast %12 : vector<1x1x144x128xf32> to vector<1x144x128xf32>
    %14 = arith.maximumf %11, %13 : vector<1x144x128xf32>
    %15 = arith.maximumf %9, %14 : vector<1x144x128xf32>
    %c0_4 = arith.constant 0 : index
    %c0_5 = arith.constant 0 : index
    %16 = vector.load %arg3[%c0_4, %c0_5] : memref<1x128xf32, #tpu.memory_space<vmem>>, vector<1x128xf32>
    %17 = vector.shape_cast %16 : vector<1x128xf32> to vector<1x1x128xf32>
    %18 = vector.broadcast %17 : vector<1x1x128xf32> to vector<1x144x128xf32>
    %19 = arith.addf %15, %18 : vector<1x144x128xf32>
    %cst_6 = arith.constant 0.000000e+00 : f32
    %20 = vector.broadcast %cst_6 : f32 to vector<1x144x128xf32>
    %21 = arith.maximumf %19, %20 : vector<1x144x128xf32>
    %22 = arith.truncf %21 : vector<1x144x128xf32> to vector<1x144x128xbf16>
    %cst_7 = arith.constant 0.000000e+00 : bf16
    %23 = vector.broadcast %cst_7 : bf16 to vector<1x32x128xbf16>
    %24 = tpu.concatenate %22, %23 in 1 : vector<1x144x128xbf16>, vector<1x32x128xbf16> -> vector<1x176x128xbf16>
    %cst_8 = arith.constant 0.000000e+00 : f32
    %25 = vector.broadcast %cst_8 : f32 to vector<144x20xf32>
    %26 = vector.extract_strided_slice %24 {offsets = [0, 0, 0], sizes = [1, 144, 128], strides = [1, 1, 1]} : vector<1x176x128xbf16> to vector<1x144x128xbf16>
    %27 = vector.shape_cast %26 : vector<1x144x128xbf16> to vector<144x128xbf16>
    %c0_9 = arith.constant 0 : index
    %c0_10 = arith.constant 0 : index
    %c0_11 = arith.constant 0 : index
    %28 = vector.load %arg4[%c0_9, %c0_10, %c0_11] : memref<9x128x20xbf16, #tpu.memory_space<vmem>>, vector<1x128x20xbf16>
    %29 = vector.shape_cast %28 : vector<1x128x20xbf16> to vector<128x20xbf16>
    %cst_12 = arith.constant dense<0.000000e+00> : vector<144x20xf32>
    %30 = tpu.matmul %27, %29, %cst_12 {dimension_numbers = #tpu.dot_dimension_numbers<[1], [0], [0], [1], [0, 0, 1, 1], [], []>} : vector<144x128xbf16>, vector<128x20xbf16>, vector<144x20xf32> -> vector<144x20xf32>
    %31 = arith.addf %25, %30 : vector<144x20xf32>
    %32 = vector.extract_strided_slice %24 {offsets = [0, 1, 0], sizes = [1, 144, 128], strides = [1, 1, 1]} : vector<1x176x128xbf16> to vector<1x144x128xbf16>
    %33 = vector.shape_cast %32 : vector<1x144x128xbf16> to vector<144x128xbf16>
    %c1 = arith.constant 1 : index
    %c0_13 = arith.constant 0 : index
    %c0_14 = arith.constant 0 : index
    %34 = vector.load %arg4[%c1, %c0_13, %c0_14] : memref<9x128x20xbf16, #tpu.memory_space<vmem>>, vector<1x128x20xbf16>
    %35 = vector.shape_cast %34 : vector<1x128x20xbf16> to vector<128x20xbf16>
    %cst_15 = arith.constant dense<0.000000e+00> : vector<144x20xf32>
    %36 = tpu.matmul %33, %35, %cst_15 {dimension_numbers = #tpu.dot_dimension_numbers<[1], [0], [0], [1], [0, 0, 1, 1], [], []>} : vector<144x128xbf16>, vector<128x20xbf16>, vector<144x20xf32> -> vector<144x20xf32>
    %37 = arith.addf %31, %36 : vector<144x20xf32>
    %38 = vector.extract_strided_slice %24 {offsets = [0, 2, 0], sizes = [1, 144, 128], strides = [1, 1, 1]} : vector<1x176x128xbf16> to vector<1x144x128xbf16>
    %39 = vector.shape_cast %38 : vector<1x144x128xbf16> to vector<144x128xbf16>
    %c2 = arith.constant 2 : index
    %c0_16 = arith.constant 0 : index
    %c0_17 = arith.constant 0 : index
    %40 = vector.load %arg4[%c2, %c0_16, %c0_17] : memref<9x128x20xbf16, #tpu.memory_space<vmem>>, vector<1x128x20xbf16>
    %41 = vector.shape_cast %40 : vector<1x128x20xbf16> to vector<128x20xbf16>
    %cst_18 = arith.constant dense<0.000000e+00> : vector<144x20xf32>
    %42 = tpu.matmul %39, %41, %cst_18 {dimension_numbers = #tpu.dot_dimension_numbers<[1], [0], [0], [1], [0, 0, 1, 1], [], []>} : vector<144x128xbf16>, vector<128x20xbf16>, vector<144x20xf32> -> vector<144x20xf32>
    %43 = arith.addf %37, %42 : vector<144x20xf32>
    %44 = vector.extract_strided_slice %24 {offsets = [0, 12, 0], sizes = [1, 144, 128], strides = [1, 1, 1]} : vector<1x176x128xbf16> to vector<1x144x128xbf16>
    %45 = vector.shape_cast %44 : vector<1x144x128xbf16> to vector<144x128xbf16>
    %c3 = arith.constant 3 : index
    %c0_19 = arith.constant 0 : index
    %c0_20 = arith.constant 0 : index
    %46 = vector.load %arg4[%c3, %c0_19, %c0_20] : memref<9x128x20xbf16, #tpu.memory_space<vmem>>, vector<1x128x20xbf16>
    %47 = vector.shape_cast %46 : vector<1x128x20xbf16> to vector<128x20xbf16>
    %cst_21 = arith.constant dense<0.000000e+00> : vector<144x20xf32>
    %48 = tpu.matmul %45, %47, %cst_21 {dimension_numbers = #tpu.dot_dimension_numbers<[1], [0], [0], [1], [0, 0, 1, 1], [], []>} : vector<144x128xbf16>, vector<128x20xbf16>, vector<144x20xf32> -> vector<144x20xf32>
    %49 = arith.addf %43, %48 : vector<144x20xf32>
    %50 = vector.extract_strided_slice %24 {offsets = [0, 13, 0], sizes = [1, 144, 128], strides = [1, 1, 1]} : vector<1x176x128xbf16> to vector<1x144x128xbf16>
    %51 = vector.shape_cast %50 : vector<1x144x128xbf16> to vector<144x128xbf16>
    %c4 = arith.constant 4 : index
    %c0_22 = arith.constant 0 : index
    %c0_23 = arith.constant 0 : index
    %52 = vector.load %arg4[%c4, %c0_22, %c0_23] : memref<9x128x20xbf16, #tpu.memory_space<vmem>>, vector<1x128x20xbf16>
    %53 = vector.shape_cast %52 : vector<1x128x20xbf16> to vector<128x20xbf16>
    %cst_24 = arith.constant dense<0.000000e+00> : vector<144x20xf32>
    %54 = tpu.matmul %51, %53, %cst_24 {dimension_numbers = #tpu.dot_dimension_numbers<[1], [0], [0], [1], [0, 0, 1, 1], [], []>} : vector<144x128xbf16>, vector<128x20xbf16>, vector<144x20xf32> -> vector<144x20xf32>
    %55 = arith.addf %49, %54 : vector<144x20xf32>
    %56 = vector.extract_strided_slice %24 {offsets = [0, 14, 0], sizes = [1, 144, 128], strides = [1, 1, 1]} : vector<1x176x128xbf16> to vector<1x144x128xbf16>
    %57 = vector.shape_cast %56 : vector<1x144x128xbf16> to vector<144x128xbf16>
    %c5 = arith.constant 5 : index
    %c0_25 = arith.constant 0 : index
    %c0_26 = arith.constant 0 : index
    %58 = vector.load %arg4[%c5, %c0_25, %c0_26] : memref<9x128x20xbf16, #tpu.memory_space<vmem>>, vector<1x128x20xbf16>
    %59 = vector.shape_cast %58 : vector<1x128x20xbf16> to vector<128x20xbf16>
    %cst_27 = arith.constant dense<0.000000e+00> : vector<144x20xf32>
    %60 = tpu.matmul %57, %59, %cst_27 {dimension_numbers = #tpu.dot_dimension_numbers<[1], [0], [0], [1], [0, 0, 1, 1], [], []>} : vector<144x128xbf16>, vector<128x20xbf16>, vector<144x20xf32> -> vector<144x20xf32>
    %61 = arith.addf %55, %60 : vector<144x20xf32>
    %62 = vector.extract_strided_slice %24 {offsets = [0, 24, 0], sizes = [1, 144, 128], strides = [1, 1, 1]} : vector<1x176x128xbf16> to vector<1x144x128xbf16>
    %63 = vector.shape_cast %62 : vector<1x144x128xbf16> to vector<144x128xbf16>
    %c6 = arith.constant 6 : index
    %c0_28 = arith.constant 0 : index
    %c0_29 = arith.constant 0 : index
    %64 = vector.load %arg4[%c6, %c0_28, %c0_29] : memref<9x128x20xbf16, #tpu.memory_space<vmem>>, vector<1x128x20xbf16>
    %65 = vector.shape_cast %64 : vector<1x128x20xbf16> to vector<128x20xbf16>
    %cst_30 = arith.constant dense<0.000000e+00> : vector<144x20xf32>
    %66 = tpu.matmul %63, %65, %cst_30 {dimension_numbers = #tpu.dot_dimension_numbers<[1], [0], [0], [1], [0, 0, 1, 1], [], []>} : vector<144x128xbf16>, vector<128x20xbf16>, vector<144x20xf32> -> vector<144x20xf32>
    %67 = arith.addf %61, %66 : vector<144x20xf32>
    %68 = vector.extract_strided_slice %24 {offsets = [0, 25, 0], sizes = [1, 144, 128], strides = [1, 1, 1]} : vector<1x176x128xbf16> to vector<1x144x128xbf16>
    %69 = vector.shape_cast %68 : vector<1x144x128xbf16> to vector<144x128xbf16>
    %c7 = arith.constant 7 : index
    %c0_31 = arith.constant 0 : index
    %c0_32 = arith.constant 0 : index
    %70 = vector.load %arg4[%c7, %c0_31, %c0_32] : memref<9x128x20xbf16, #tpu.memory_space<vmem>>, vector<1x128x20xbf16>
    %71 = vector.shape_cast %70 : vector<1x128x20xbf16> to vector<128x20xbf16>
    %cst_33 = arith.constant dense<0.000000e+00> : vector<144x20xf32>
    %72 = tpu.matmul %69, %71, %cst_33 {dimension_numbers = #tpu.dot_dimension_numbers<[1], [0], [0], [1], [0, 0, 1, 1], [], []>} : vector<144x128xbf16>, vector<128x20xbf16>, vector<144x20xf32> -> vector<144x20xf32>
    %73 = arith.addf %67, %72 : vector<144x20xf32>
    %74 = vector.extract_strided_slice %24 {offsets = [0, 26, 0], sizes = [1, 144, 128], strides = [1, 1, 1]} : vector<1x176x128xbf16> to vector<1x144x128xbf16>
    %75 = vector.shape_cast %74 : vector<1x144x128xbf16> to vector<144x128xbf16>
    %c8 = arith.constant 8 : index
    %c0_34 = arith.constant 0 : index
    %c0_35 = arith.constant 0 : index
    %76 = vector.load %arg4[%c8, %c0_34, %c0_35] : memref<9x128x20xbf16, #tpu.memory_space<vmem>>, vector<1x128x20xbf16>
    %77 = vector.shape_cast %76 : vector<1x128x20xbf16> to vector<128x20xbf16>
    %cst_36 = arith.constant dense<0.000000e+00> : vector<144x20xf32>
    %78 = tpu.matmul %75, %77, %cst_36 {dimension_numbers = #tpu.dot_dimension_numbers<[1], [0], [0], [1], [0, 0, 1, 1], [], []>} : vector<144x128xbf16>, vector<128x20xbf16>, vector<144x20xf32> -> vector<144x20xf32>
    %79 = arith.addf %73, %78 : vector<144x20xf32>
    %c0_37 = arith.constant 0 : index
    %c0_38 = arith.constant 0 : index
    %80 = vector.load %arg5[%c0_37, %c0_38] : memref<1x20xf32, #tpu.memory_space<vmem>>, vector<1x20xf32>
    %81 = vector.broadcast %80 : vector<1x20xf32> to vector<144x20xf32>
    %82 = arith.addf %79, %81 : vector<144x20xf32>
    %cst_39 = arith.constant 0.000000e+00 : f32
    %83 = vector.broadcast %cst_39 : f32 to vector<144x20xf32>
    %84 = arith.maximumf %82, %83 : vector<144x20xf32>
    %85 = vector.shape_cast %84 : vector<144x20xf32> to vector<1x144x20xf32>
    %86 = arith.truncf %85 : vector<1x144x20xf32> to vector<1x144x20xbf16>
    %c0_40 = arith.constant 0 : index
    %c0_41 = arith.constant 0 : index
    %c0_42 = arith.constant 0 : index
    %87 = vector.load %arg6[%c0_40, %c0_41, %c0_42] : memref<1x144x20xbf16, #tpu.memory_space<vmem>>, vector<1x144x20xbf16>
    tpu.vector_store %arg6[%c0_40, %c0_41, %c0_42], %86 {strides = array<i32>} : memref<1x144x20xbf16, #tpu.memory_space<vmem>>, vector<1x144x20xbf16>,
    return
  }
  func.func @transform_0(%arg0: i32) -> (i32, i32, i32) {
    %c0_i32 = arith.constant 0 : i32
    %c0_i32_0 = arith.constant 0 : i32
    %c0_i32_1 = arith.constant 0 : i32
    return %arg0, %c0_i32, %c0_i32_0 : i32, i32, i32
  }
  func.func @transform_1(%arg0: i32) -> (i32, i32) {
    %c0_i32 = arith.constant 0 : i32
    %c0_i32_0 = arith.constant 0 : i32
    %c0_i32_1 = arith.constant 0 : i32
    return %c0_i32, %c0_i32_0 : i32, i32
  }
  func.func @transform_2(%arg0: i32) -> (i32, i32) {
    %c0_i32 = arith.constant 0 : i32
    %c0_i32_0 = arith.constant 0 : i32
    %c0_i32_1 = arith.constant 0 : i32
    return %c0_i32, %c0_i32_0 : i32, i32
  }
  func.func @transform_3(%arg0: i32) -> (i32, i32, i32) {
    %c0_i32 = arith.constant 0 : i32
    %c0_i32_0 = arith.constant 0 : i32
    %c0_i32_1 = arith.constant 0 : i32
    %c0_i32_2 = arith.constant 0 : i32
    return %c0_i32, %c0_i32_0, %c0_i32_1 : i32, i32, i32
  }
  func.func @transform_4(%arg0: i32) -> (i32, i32) {
    %c0_i32 = arith.constant 0 : i32
    %c0_i32_0 = arith.constant 0 : i32
    %c0_i32_1 = arith.constant 0 : i32
    return %c0_i32, %c0_i32_0 : i32, i32
  }
  func.func @transform_5(%arg0: i32) -> (i32, i32, i32) {
    %c0_i32 = arith.constant 0 : i32
    %c0_i32_0 = arith.constant 0 : i32
    %c0_i32_1 = arith.constant 0 : i32
    return %arg0, %c0_i32, %c0_i32_0 : i32, i32, i32
  }
}

module attributes {stable_mosaic.version = 11 : i64} {
  func.func @_fc_fused_kernel(%arg0: i32, %arg1: memref<16x2880xbf16, #tpu.memory_space<vmem>>, %arg2: memref<2880x512xbf16, #tpu.memory_space<vmem>>, %arg3: memref<1x512xf32, #tpu.memory_space<vmem>>, %arg4: memref<512x128xbf16, #tpu.memory_space<vmem>>, %arg5: memref<1x128xf32, #tpu.memory_space<vmem>>, %arg6: memref<16x128xf32, #tpu.memory_space<vmem>>) attributes {dimension_semantics = [#tpu.dimension_semantics<parallel>], iteration_bounds = array<i64: 1>, scalar_prefetch = 0 : i64, scratch_operands = 0 : i64, tpu.core_type = #tpu.core_type<tc>, window_params = [{transform_indices = @transform_0, window_bounds = array<i64: 16, 2880>}, {pipeline_mode = #tpu.pipeline_mode<synchronous>, transform_indices = @transform_1, window_bounds = array<i64: 2880, 512>}, {pipeline_mode = #tpu.pipeline_mode<synchronous>, transform_indices = @transform_2, window_bounds = array<i64: 1, 512>}, {pipeline_mode = #tpu.pipeline_mode<synchronous>, transform_indices = @transform_3, window_bounds = array<i64: 512, 128>}, {pipeline_mode = #tpu.pipeline_mode<synchronous>, transform_indices = @transform_4, window_bounds = array<i64: 1, 128>}, {transform_indices = @transform_5, window_bounds = array<i64: 16, 128>}]} {
    %c0 = arith.constant 0 : index
    %c0_0 = arith.constant 0 : index
    %0 = vector.load %arg1[%c0, %c0_0] : memref<16x2880xbf16, #tpu.memory_space<vmem>>, vector<16x2880xbf16>
    %c0_1 = arith.constant 0 : index
    %c0_2 = arith.constant 0 : index
    %1 = vector.load %arg2[%c0_1, %c0_2] : memref<2880x512xbf16, #tpu.memory_space<vmem>>, vector<2880x512xbf16>
    %cst = arith.constant dense<0.000000e+00> : vector<16x512xf32>
    %2 = tpu.matmul %0, %1, %cst {dimension_numbers = #tpu.dot_dimension_numbers<[1], [0], [0], [1], [0, 0, 1, 1], [], []>} : vector<16x2880xbf16>, vector<2880x512xbf16>, vector<16x512xf32> -> vector<16x512xf32>
    %c0_3 = arith.constant 0 : index
    %c0_4 = arith.constant 0 : index
    %3 = vector.load %arg3[%c0_3, %c0_4] : memref<1x512xf32, #tpu.memory_space<vmem>>, vector<1x512xf32>
    %4 = vector.broadcast %3 : vector<1x512xf32> to vector<16x512xf32>
    %5 = arith.addf %2, %4 : vector<16x512xf32>
    %cst_5 = arith.constant 0.000000e+00 : f32
    %6 = vector.broadcast %cst_5 : f32 to vector<16x512xf32>
    %7 = arith.maximumf %5, %6 : vector<16x512xf32>
    %8 = arith.truncf %7 : vector<16x512xf32> to vector<16x512xbf16>
    %c0_6 = arith.constant 0 : index
    %c0_7 = arith.constant 0 : index
    %9 = vector.load %arg4[%c0_6, %c0_7] : memref<512x128xbf16, #tpu.memory_space<vmem>>, vector<512x128xbf16>
    %cst_8 = arith.constant dense<0.000000e+00> : vector<16x128xf32>
    %10 = tpu.matmul %8, %9, %cst_8 {dimension_numbers = #tpu.dot_dimension_numbers<[1], [0], [0], [1], [0, 0, 1, 1], [], []>} : vector<16x512xbf16>, vector<512x128xbf16>, vector<16x128xf32> -> vector<16x128xf32>
    %c0_9 = arith.constant 0 : index
    %c0_10 = arith.constant 0 : index
    %11 = vector.load %arg5[%c0_9, %c0_10] : memref<1x128xf32, #tpu.memory_space<vmem>>, vector<1x128xf32>
    %12 = vector.broadcast %11 : vector<1x128xf32> to vector<16x128xf32>
    %13 = arith.addf %10, %12 : vector<16x128xf32>
    %c0_11 = arith.constant 0 : index
    %c0_12 = arith.constant 0 : index
    %14 = vector.load %arg6[%c0_11, %c0_12] : memref<16x128xf32, #tpu.memory_space<vmem>>, vector<16x128xf32>
    tpu.vector_store %arg6[%c0_11, %c0_12], %13 {strides = array<i32>} : memref<16x128xf32, #tpu.memory_space<vmem>>, vector<16x128xf32>,
    return
  }
  func.func @transform_0(%arg0: i32) -> (i32, i32) {
    %c0_i32 = arith.constant 0 : i32
    %c0_i32_0 = arith.constant 0 : i32
    return %arg0, %c0_i32 : i32, i32
  }
  func.func @transform_1(%arg0: i32) -> (i32, i32) {
    %c0_i32 = arith.constant 0 : i32
    %c0_i32_0 = arith.constant 0 : i32
    %c0_i32_1 = arith.constant 0 : i32
    return %c0_i32, %c0_i32_0 : i32, i32
  }
  func.func @transform_2(%arg0: i32) -> (i32, i32) {
    %c0_i32 = arith.constant 0 : i32
    %c0_i32_0 = arith.constant 0 : i32
    %c0_i32_1 = arith.constant 0 : i32
    return %c0_i32, %c0_i32_0 : i32, i32
  }
  func.func @transform_3(%arg0: i32) -> (i32, i32) {
    %c0_i32 = arith.constant 0 : i32
    %c0_i32_0 = arith.constant 0 : i32
    %c0_i32_1 = arith.constant 0 : i32
    return %c0_i32, %c0_i32_0 : i32, i32
  }
  func.func @transform_4(%arg0: i32) -> (i32, i32) {
    %c0_i32 = arith.constant 0 : i32
    %c0_i32_0 = arith.constant 0 : i32
    %c0_i32_1 = arith.constant 0 : i32
    return %c0_i32, %c0_i32_0 : i32, i32
  }
  func.func @transform_5(%arg0: i32) -> (i32, i32) {
    %c0_i32 = arith.constant 0 : i32
    %c0_i32_0 = arith.constant 0 : i32
    return %arg0, %c0_i32 : i32, i32
  }
}

</mosaic_0001>

<llo_original>
// kernel: forward.2
$region0: #{forward.2}
  #allocation0 [shape = 'u32[]', space=smem, size = 0x4, offset = 0x4, fixed_abs, tag = 'smem constant byte address 0x4 - core index']
  #allocation1 [shape = 'u32[144,128]{1,0:T(1,128)}', space=vmem, size = 0x12000, scoped, tag = 'internal scratch']
  %s0 = inlined_call_operand.vmem [shape: bf16[2,576,32], index: 0, kind: input, shape index: {}]
  %s1 = inlined_call_operand.vmem [shape: bf16[32,128], index: 1, kind: input, shape index: {}]
  %s2 = inlined_call_operand.vmem [shape: f32[1,128], index: 2, kind: input, shape index: {}]
  %s3 = inlined_call_operand.vmem [shape: bf16[9,128,20], index: 3, kind: input, shape index: {}]
  %s4 = inlined_call_operand.vmem [shape: f32[1,20], index: 4, kind: input, shape index: {}]
  %s5 = inlined_call_operand.vmem [shape: bf16[2,144,20], index: 5, kind: output, shape index: {}]
  %s6 = sld [smem:[#allocation0]]
  $region53: #{forward.2} parent=0
    _
  %s8 = ssub.s32 1, %s6
  %s9 = scalar_select 0, %s8, %s6
  loop: start=0, step=1, limit=4
  $region2: #{forward.2} parent=0 // loop_pre_header
    _
  $region3: #{forward.2} parent=0 // loop_header
    %s11 = sphi 0, %s15
    %p12 = scmp.ge.s32.totalorder %s11, 4
    %s21 = sphi 0, %s23
    %s24 = sphi 0, %s21
    %s25 = sphi 0, %s24
    %s41 = sphi 0, %s25
    %s45 = sphi 0, %s45
    %s47 = sphi 0, %s45
    %s48 = sphi 0, %s47
    %s62 = sphi 0, %s48
    %s66 = sphi 0, %s66
    %s68 = sphi 0, %s66
    %s69 = sphi 0, %s68
    %s83 = sphi 0, %s69
    %s87 = sphi 0, %s87
    %s89 = sphi 0, %s87
    %s90 = sphi 0, %s89
    %s104 = sphi 0, %s90
    %s108 = sphi 0, %s108
    %s110 = sphi 0, %s108
    %s111 = sphi 0, %s110
    %s125 = sphi 0, %s111
    %s131 = sphi 0, %s133
    %s134 = sphi 0, %s131
    %s135 = sphi 0, %s134
    %s151 = sphi 0, %s135
  $region4: #{forward.2} parent=0 // loop_header_branch
    %14 = sbr.rel (%p12) target = $region8
  $region5: #{forward.2} parent=0 // loop_body
    %s16 = ssub.s32 %s11, 1
    %s17 = ssub.s32 %s11, 2
    %s18 = sadd.s32 %s11, 1
    %s19 = ssub.s32 %s11, %s18
    %p20 = scmp.eq.s32.totalorder %s19, 0
    %s22 = sadd.s32 %s21, 1
    %s23 = scalar_select %p20, %s21, %s22
    %p26 = pneg %p20
    %p27 = scmp.eq.s32.totalorder %s11, 1
    %p28 = por %p26, %p27
    %p29 = scmp.ne.s32.totalorder %s21, %s24
    %p30 = scmp.eq.s32.totalorder %s11, 0
    %p31 = por %p29, %p30
    %p32 = scmp.ne.s32.totalorder %s21, %s24
    %p33 = scmp.eq.s32.totalorder %s16, 1
    %p34 = por %p32, %p33
    %p35 = scmp.ne.s32.totalorder %s24, %s25
    %p36 = scmp.eq.s32.totalorder %s16, 0
    %p37 = por %p35, %p36
    %p38 = scmp.ne.s32.totalorder %s24, %s25
    %p39 = scmp.eq.s32.totalorder %s17, 1
    %p40 = por %p38, %p39
    %p42 = scmp.ne.s32.totalorder %s25, %s41
    %p43 = scmp.eq.s32.totalorder %s17, 0
    %p44 = por %p42, %p43
    %s46 = sadd.s32 %s45, 1
    %p49 = scmp.eq.s32.totalorder %s11, 1
    %p50 = scmp.ne.s32.totalorder %s45, %s47
    %p51 = scmp.eq.s32.totalorder %s11, 0
    %p52 = por %p50, %p51
    %p53 = scmp.ne.s32.totalorder %s45, %s47
    %p54 = scmp.eq.s32.totalorder %s16, 1
    %p55 = por %p53, %p54
    %p56 = scmp.ne.s32.totalorder %s47, %s48
    %p57 = scmp.eq.s32.totalorder %s16, 0
    %p58 = por %p56, %p57
    %p59 = scmp.ne.s32.totalorder %s47, %s48
    %p60 = scmp.eq.s32.totalorder %s17, 1
    %p61 = por %p59, %p60
    %p63 = scmp.ne.s32.totalorder %s48, %s62
    %p64 = scmp.eq.s32.totalorder %s17, 0
    %p65 = por %p63, %p64
    %s67 = sadd.s32 %s66, 1
    %p70 = scmp.eq.s32.totalorder %s11, 1
    %p71 = scmp.ne.s32.totalorder %s66, %s68
    %p72 = scmp.eq.s32.totalorder %s11, 0
    %p73 = por %p71, %p72
    %p74 = scmp.ne.s32.totalorder %s66, %s68
    %p75 = scmp.eq.s32.totalorder %s16, 1
    %p76 = por %p74, %p75
    %p77 = scmp.ne.s32.totalorder %s68, %s69
    %p78 = scmp.eq.s32.totalorder %s16, 0
    %p79 = por %p77, %p78
    %p80 = scmp.ne.s32.totalorder %s68, %s69
    %p81 = scmp.eq.s32.totalorder %s17, 1
    %p82 = por %p80, %p81
    %p84 = scmp.ne.s32.totalorder %s69, %s83
    %p85 = scmp.eq.s32.totalorder %s17, 0
    %p86 = por %p84, %p85
    %s88 = sadd.s32 %s87, 1
    %p91 = scmp.eq.s32.totalorder %s11, 1
    %p92 = scmp.ne.s32.totalorder %s87, %s89
    %p93 = scmp.eq.s32.totalorder %s11, 0
    %p94 = por %p92, %p93
    %p95 = scmp.ne.s32.totalorder %s87, %s89
    %p96 = scmp.eq.s32.totalorder %s16, 1
    %p97 = por %p95, %p96
    %p98 = scmp.ne.s32.totalorder %s89, %s90
    %p99 = scmp.eq.s32.totalorder %s16, 0
    %p100 = por %p98, %p99
    %p101 = scmp.ne.s32.totalorder %s89, %s90
    %p102 = scmp.eq.s32.totalorder %s17, 1
    %p103 = por %p101, %p102
    %p105 = scmp.ne.s32.totalorder %s90, %s104
    %p106 = scmp.eq.s32.totalorder %s17, 0
    %p107 = por %p105, %p106
    %s109 = sadd.s32 %s108, 1
    %p112 = scmp.eq.s32.totalorder %s11, 1
    %p113 = scmp.ne.s32.totalorder %s108, %s110
    %p114 = scmp.eq.s32.totalorder %s11, 0
    %p115 = por %p113, %p114
    %p116 = scmp.ne.s32.totalorder %s108, %s110
    %p117 = scmp.eq.s32.totalorder %s16, 1
    %p118 = por %p116, %p117
    %p119 = scmp.ne.s32.totalorder %s110, %s111
    %p120 = scmp.eq.s32.totalorder %s16, 0
    %p121 = por %p119, %p120
    %p122 = scmp.ne.s32.totalorder %s110, %s111
    %p123 = scmp.eq.s32.totalorder %s17, 1
    %p124 = por %p122, %p123
    %p126 = scmp.ne.s32.totalorder %s111, %s125
    %p127 = scmp.eq.s32.totalorder %s17, 0
    %p128 = por %p126, %p127
    %s129 = ssub.s32 %s11, %s18
    %p130 = scmp.eq.s32.totalorder %s129, 0
    %s132 = sadd.s32 %s131, 1
    %s133 = scalar_select %p130, %s131, %s132
    %p136 = pneg %p130
    %p137 = scmp.eq.s32.totalorder %s11, 1
    %p138 = por %p136, %p137
    %p139 = scmp.ne.s32.totalorder %s131, %s134
    %p140 = scmp.eq.s32.totalorder %s11, 0
    %p141 = por %p139, %p140
    %p142 = scmp.ne.s32.totalorder %s131, %s134
    %p143 = scmp.eq.s32.totalorder %s16, 1
    %p144 = por %p142, %p143
    %p145 = scmp.ne.s32.totalorder %s134, %s135
    %p146 = scmp.eq.s32.totalorder %s16, 0
    %p147 = por %p145, %p146
    %p148 = scmp.ne.s32.totalorder %s134, %s135
    %p149 = scmp.eq.s32.totalorder %s17, 1
    %p150 = por %p148, %p149
    %p152 = scmp.ne.s32.totalorder %s135, %s151
    %p153 = scmp.eq.s32.totalorder %s17, 0
    %p154 = por %p152, %p153
    %p155 = scmp.le.s32.totalorder 1, %s11
    %p156 = scmp.lt.s32.totalorder %s11, 3
    %p157 = pnand %p155, %p156
    %p158 = pneg %p157
    // Predicated region
    $region9: #{forward.2} parent=5 // pred_check
      _
    $region10: #{forward.2} parent=5 // pred_check_branch
      %160 = sbr.rel (%p157) target = $region12
    $region11: #{forward.2} parent=5 // pred_region
      %s161 = ssub.s32 %s11, 1
      // Predicated region
      $region13: #{forward.2} parent=11 // pred_check
        %p162 = pneg %p58
      $region14: #{forward.2} parent=11 // pred_check_branch
        %164 = sbr.rel (%p162) target = $region16
      $region15: #{forward.2} parent=11 // pred_region
        _
      $region16: #{forward.2} parent=11 // pred_fallthru
        _
      // Predicated region
      $region17: #{forward.2} parent=11 // pred_check
        %p165 = pneg %p79
      $region18: #{forward.2} parent=11 // pred_check_branch
        %167 = sbr.rel (%p165) target = $region20
      $region19: #{forward.2} parent=11 // pred_region
        _
      $region20: #{forward.2} parent=11 // pred_fallthru
        _
      // Predicated region
      $region21: #{forward.2} parent=11 // pred_check
        %p168 = pneg %p100
      $region22: #{forward.2} parent=11 // pred_check_branch
        %170 = sbr.rel (%p168) target = $region24
      $region23: #{forward.2} parent=11 // pred_region
        _
      $region24: #{forward.2} parent=11 // pred_fallthru
        _
      // Predicated region
      $region25: #{forward.2} parent=11 // pred_check
        %p171 = pneg %p121
      $region26: #{forward.2} parent=11 // pred_check_branch
        %173 = sbr.rel (%p171) target = $region28
      $region27: #{forward.2} parent=11 // pred_region
        _
      $region28: #{forward.2} parent=11 // pred_fallthru
        _
    $region12: #{forward.2} parent=5 // pred_fallthru
      _
    %p174 = scmp.lt.s32.totalorder %s11, 2
    // Predicated region
    $region29: #{forward.2} parent=5 // pred_check
      %p175 = pneg %p174
    $region30: #{forward.2} parent=5 // pred_check_branch
      %177 = sbr.rel (%p175) target = $region32
    $region31: #{forward.2} parent=5 // pred_region
      // Predicated region
      $region33: #{forward.2} parent=31 // pred_check
        %p178 = pneg %p31
      $region34: #{forward.2} parent=31 // pred_check_branch
        %180 = sbr.rel (%p178) target = $region36
      $region35: #{forward.2} parent=31 // pred_region
        %p181 = scmp.lt.s32.totalorder %s11, 1
        %s182 = scalar_select %p181, %s11, 1
        %s183 = smul.addr %s182, 72
        %s184 = smul.addr %s183, 4
        %s185 = scalar_lea.vmem %s0, %s184
      $region36: #{forward.2} parent=31 // pred_fallthru
        _
    $region32: #{forward.2} parent=5 // pred_fallthru
      _
    %p186 = scmp.le.s32.totalorder 1, %s11
    %p187 = scmp.lt.s32.totalorder %s11, 3
    %p188 = pnand %p186, %p187
    %p189 = pneg %p188
    // Predicated region
    $region37: #{forward.2} parent=5 // pred_check
      _
    $region38: #{forward.2} parent=5 // pred_check_branch
      %191 = sbr.rel (%p188) target = $region40
    $region39: #{forward.2} parent=5 // pred_region
      %s192 = ssub.s32 %s11, 1
      %p193 = scmp.lt.s32.totalorder %s16, 1
      %s194 = scalar_select %p193, %s16, 1
      %s195 = smul.addr %s194, 72
      %s196 = smul.addr %s195, 4
      %s197 = scalar_lea.vmem %s0, %s196
      %p198 = pneg %p37
      %p199 = pneg %p34
      %p200 = pneg %p58
      %p201 = pneg %p55
      %p202 = pneg %p79
      %p203 = pneg %p76
      %p204 = pneg %p100
      %p205 = pneg %p97
      %p206 = pneg %p121
      %p207 = pneg %p118
      %p208 = pneg %p147
      %p209 = pneg %p144
      %p210 = scmp.lt.s32.totalorder %s16, 1
      %s211 = scalar_select %p210, %s16, 1
      %s212 = smul.addr %s211, 18
      %s213 = smul.addr %s212, 4
      %s214 = scalar_lea.vmem %s5, %s213
      %p215 = scmp.lt.s32.totalorder %s16, 1
      %s216 = scalar_select %p215, %s16, 1
      %s217 = smul.addr %s216, 72
      %s218 = smul.addr %s217, 4
      %s219 = scalar_lea.vmem %s0, %s218
      %p220 = scmp.lt.s32.totalorder %s16, 1
      %s221 = scalar_select %p220, %s16, 1
      %s222 = smul.addr %s221, 18
      %s223 = smul.addr %s222, 4
      %s224 = scalar_lea.vmem %s5, %s223
      %v226 = vld [vmem:[%s219] sm:$0xf]
      %v227 = vld [vmem:[%s219 + $0x4] sm:$0xf]
      %v228 = vld [vmem:[%s219 + $0x8] sm:$0xf]
      %v229 = vld [vmem:[%s219 + $0xc] sm:$0xf]
      %v230 = vld [vmem:[%s219 + $0x10] sm:$0xf]
      %v231 = vld [vmem:[%s219 + $0x14] sm:$0xf]
      %v232 = vld [vmem:[%s219 + $0x18] sm:$0xf]
      %v233 = vld [vmem:[%s219 + $0x1c] sm:$0xf]
      %v234 = vld [vmem:[%s219 + $0x20] sm:$0xf]
      %v235 = vld [vmem:[%s219 + $0x24] sm:$0xf]
      %v236 = vld [vmem:[%s219 + $0x28] sm:$0xf]
      %v237 = vld [vmem:[%s219 + $0x2c] sm:$0xf]
      %v238 = vld [vmem:[%s219 + $0x30] sm:$0xf]
      %v239 = vld [vmem:[%s219 + $0x34] sm:$0xf]
      %v240 = vld [vmem:[%s219 + $0x38] sm:$0xf]
      %v241 = vld [vmem:[%s219 + $0x3c] sm:$0xf]
      %v242 = vld [vmem:[%s219 + $0x40] sm:$0xf]
      %v243 = vld [vmem:[%s219 + $0x44] sm:$0xf]
      %v244 = vld [vmem:[%s219 + $0x48] sm:$0xf]
      %v245 = vld [vmem:[%s219 + $0x4c] sm:$0xf]
      %v246 = vld [vmem:[%s219 + $0x50] sm:$0xf]
      %v247 = vld [vmem:[%s219 + $0x54] sm:$0xf]
      %v248 = vld [vmem:[%s219 + $0x58] sm:$0xf]
      %v249 = vld [vmem:[%s219 + $0x5c] sm:$0xf]
      %v250 = vld [vmem:[%s219 + $0x60] sm:$0xf]
      %v251 = vld [vmem:[%s219 + $0x64] sm:$0xf]
      %v252 = vld [vmem:[%s219 + $0x68] sm:$0xf]
      %v253 = vld [vmem:[%s219 + $0x6c] sm:$0xf]
      %v254 = vld [vmem:[%s219 + $0x70] sm:$0xf]
      %v255 = vld [vmem:[%s219 + $0x74] sm:$0xf]
      %v256 = vld [vmem:[%s219 + $0x78] sm:$0xf]
      %v257 = vld [vmem:[%s219 + $0x7c] sm:$0xf]
      %v258 = vld [vmem:[%s219 + $0x80] sm:$0xf]
      %v259 = vld [vmem:[%s219 + $0x84] sm:$0xf]
      %v260 = vld [vmem:[%s219 + $0x88] sm:$0xf]
      %v261 = vld [vmem:[%s219 + $0x8c] sm:$0xf]
      %v262 = vld [vmem:[%s219 + $0x90] sm:$0xf]
      %v263 = vld [vmem:[%s219 + $0x94] sm:$0xf]
      %v264 = vld [vmem:[%s219 + $0x98] sm:$0xf]
      %v265 = vld [vmem:[%s219 + $0x9c] sm:$0xf]
      %v266 = vld [vmem:[%s219 + $0xa0] sm:$0xf]
      %v267 = vld [vmem:[%s219 + $0xa4] sm:$0xf]
      %v268 = vld [vmem:[%s219 + $0xa8] sm:$0xf]
      %v269 = vld [vmem:[%s219 + $0xac] sm:$0xf]
      %v270 = vld [vmem:[%s219 + $0xb0] sm:$0xf]
      %v271 = vld [vmem:[%s219 + $0xb4] sm:$0xf]
      %v272 = vld [vmem:[%s219 + $0xb8] sm:$0xf]
      %v273 = vld [vmem:[%s219 + $0xbc] sm:$0xf]
      %v274 = vld [vmem:[%s219 + $0xc0] sm:$0xf]
      %v275 = vld [vmem:[%s219 + $0xc4] sm:$0xf]
      %v276 = vld [vmem:[%s219 + $0xc8] sm:$0xf]
      %v277 = vld [vmem:[%s219 + $0xcc] sm:$0xf]
      %v278 = vld [vmem:[%s219 + $0xd0] sm:$0xf]
      %v279 = vld [vmem:[%s219 + $0xd4] sm:$0xf]
      %v280 = vld [vmem:[%s219 + $0xd8] sm:$0xf]
      %v281 = vld [vmem:[%s219 + $0xdc] sm:$0xf]
      %v282 = vld [vmem:[%s219 + $0xe0] sm:$0xf]
      %v283 = vld [vmem:[%s219 + $0xe4] sm:$0xf]
      %v284 = vld [vmem:[%s219 + $0xe8] sm:$0xf]
      %v285 = vld [vmem:[%s219 + $0xec] sm:$0xf]
      %v286 = vld [vmem:[%s219 + $0xf0] sm:$0xf]
      %v287 = vld [vmem:[%s219 + $0xf4] sm:$0xf]
      %v288 = vld [vmem:[%s219 + $0xf8] sm:$0xf]
      %v289 = vld [vmem:[%s219 + $0xfc] sm:$0xf]
      %v290 = vld [vmem:[%s219 + $0x100] sm:$0xf]
      %v291 = vld [vmem:[%s219 + $0x104] sm:$0xf]
      %v292 = vld [vmem:[%s219 + $0x108] sm:$0xf]
      %v293 = vld [vmem:[%s219 + $0x10c] sm:$0xf]
      %v294 = vld [vmem:[%s219 + $0x110] sm:$0xf]
      %v295 = vld [vmem:[%s219 + $0x114] sm:$0xf]
      %v296 = vld [vmem:[%s219 + $0x118] sm:$0xf]
      %v297 = vld [vmem:[%s219 + $0x11c] sm:$0xf]
      %v298 = vld [vmem:[%s1] sm:$0xf]
      %v299 = vld [vmem:[%s1 + $0x4] sm:$0xf]
      %v300 = vld [vmem:[%s1 + $0x8] sm:$0xf]
      %v301 = vld [vmem:[%s1 + $0xc] sm:$0xf]
      %v374 = vunpack.c.l.b16 %v226
      %v375 = vunpack.c.l.b16 %v227
      %v376 = vunpack.c.l.b16 %v228
      %v377 = vunpack.c.l.b16 %v229
      %v378 = vunpack.c.l.b16 %v230
      %v379 = vunpack.c.l.b16 %v231
      %v380 = vunpack.c.l.b16 %v232
      %v381 = vunpack.c.l.b16 %v233
      %v382 = vunpack.c.l.b16 %v234
      %v383 = vunpack.c.l.b16 %v235
      %v384 = vunpack.c.l.b16 %v236
      %v385 = vunpack.c.l.b16 %v237
      %v386 = vunpack.c.l.b16 %v238
      %v387 = vunpack.c.l.b16 %v239
      %v388 = vunpack.c.l.b16 %v240
      %v389 = vunpack.c.l.b16 %v241
      %v390 = vunpack.c.l.b16 %v242
      %v391 = vunpack.c.l.b16 %v243
      %v392 = vunpack.c.l.b16 %v244
      %v393 = vunpack.c.l.b16 %v245
      %v394 = vunpack.c.l.b16 %v246
      %v395 = vunpack.c.l.b16 %v247
      %v396 = vunpack.c.l.b16 %v248
      %v397 = vunpack.c.l.b16 %v249
      %v398 = vunpack.c.l.b16 %v250
      %v399 = vunpack.c.l.b16 %v251
      %v400 = vunpack.c.l.b16 %v252
      %v401 = vunpack.c.l.b16 %v253
      %v402 = vunpack.c.l.b16 %v254
      %v403 = vunpack.c.l.b16 %v255
      %v404 = vunpack.c.l.b16 %v256
      %v405 = vunpack.c.l.b16 %v257
      %v406 = vunpack.c.l.b16 %v258
      %v407 = vunpack.c.l.b16 %v259
      %v408 = vunpack.c.l.b16 %v260
      %v409 = vunpack.c.l.b16 %v261
      %v410 = vunpack.c.l.b16 %v262
      %v411 = vunpack.c.l.b16 %v263
      %v412 = vunpack.c.l.b16 %v264
      %v413 = vunpack.c.l.b16 %v265
      %v414 = vunpack.c.l.b16 %v266
      %v415 = vunpack.c.l.b16 %v267
      %v416 = vunpack.c.l.b16 %v268
      %v417 = vunpack.c.l.b16 %v269
      %v418 = vunpack.c.l.b16 %v270
      %v419 = vunpack.c.l.b16 %v271
      %v420 = vunpack.c.l.b16 %v272
      %v421 = vunpack.c.l.b16 %v273
      %v422 = vunpack.c.l.b16 %v274
      %v423 = vunpack.c.l.b16 %v275
      %v424 = vunpack.c.l.b16 %v276
      %v425 = vunpack.c.l.b16 %v277
      %v426 = vunpack.c.l.b16 %v278
      %v427 = vunpack.c.l.b16 %v279
      %v428 = vunpack.c.l.b16 %v280
      %v429 = vunpack.c.l.b16 %v281
      %v430 = vunpack.c.l.b16 %v282
      %v431 = vunpack.c.l.b16 %v283
      %v432 = vunpack.c.l.b16 %v284
      %v433 = vunpack.c.l.b16 %v285
      %v434 = vunpack.c.l.b16 %v286
      %v435 = vunpack.c.l.b16 %v287
      %v436 = vunpack.c.l.b16 %v288
      %v437 = vunpack.c.l.b16 %v289
      %v438 = vunpack.c.l.b16 %v290
      %v439 = vunpack.c.l.b16 %v291
      %v440 = vunpack.c.l.b16 %v292
      %v441 = vunpack.c.l.b16 %v293
      %v442 = vunpack.c.l.b16 %v294
      %v443 = vunpack.c.l.b16 %v295
      %v444 = vunpack.c.l.b16 %v296
      %v445 = vunpack.c.l.b16 %v297
      %v446 = vpack.c.b16 %v375, %v374
      %v447 = vpack.c.b16 %v377, %v376
      %v448 = vpack.c.b16 %v379, %v378
      %v449 = vpack.c.b16 %v381, %v380
      %v450 = vpack.c.b16 %v383, %v382
      %v451 = vpack.c.b16 %v385, %v384
      %v452 = vpack.c.b16 %v387, %v386
      %v453 = vpack.c.b16 %v389, %v388
      %v454 = vpack.c.b16 %v391, %v390
      %v455 = vpack.c.b16 %v393, %v392
      %v456 = vpack.c.b16 %v395, %v394
      %v457 = vpack.c.b16 %v397, %v396
      %v458 = vpack.c.b16 %v399, %v398
      %v459 = vpack.c.b16 %v401, %v400
      %v460 = vpack.c.b16 %v403, %v402
      %v461 = vpack.c.b16 %v405, %v404
      %v462 = vpack.c.b16 %v407, %v406
      %v463 = vpack.c.b16 %v409, %v408
      %v464 = vpack.c.b16 %v411, %v410
      %v465 = vpack.c.b16 %v413, %v412
      %v466 = vpack.c.b16 %v415, %v414
      %v467 = vpack.c.b16 %v417, %v416
      %v468 = vpack.c.b16 %v419, %v418
      %v469 = vpack.c.b16 %v421, %v420
      %v470 = vpack.c.b16 %v423, %v422
      %v471 = vpack.c.b16 %v425, %v424
      %v472 = vpack.c.b16 %v427, %v426
      %v473 = vpack.c.b16 %v429, %v428
      %v474 = vpack.c.b16 %v431, %v430
      %v475 = vpack.c.b16 %v433, %v432
      %v476 = vpack.c.b16 %v435, %v434
      %v477 = vpack.c.b16 %v437, %v436
      %v478 = vpack.c.b16 %v439, %v438
      %v479 = vpack.c.b16 %v441, %v440
      %v480 = vpack.c.b16 %v443, %v442
      %v481 = vpack.c.b16 %v445, %v444
      %v486 = vunpack.c.l.b16 %v298
      %v487 = vunpack.c.l.b16 %v299
      %v488 = vunpack.c.l.b16 %v300
      %v489 = vunpack.c.l.b16 %v301
      %v490 = vpack.c.b16 %v487, %v486
      %v491 = vpack.c.b16 %v489, %v488
      %vm494 = vcmask 261120
      %v496 = vsel %vm494, %v446, 0
      %v499 = vsel %vm494, %v447, 0
      %v502 = vsel %vm494, %v448, 0
      %v505 = vsel %vm494, %v449, 0
      %v508 = vsel %vm494, %v450, 0
      %v511 = vsel %vm494, %v451, 0
      %v514 = vsel %vm494, %v452, 0
      %v517 = vsel %vm494, %v453, 0
      %v520 = vsel %vm494, %v454, 0
      %v523 = vsel %vm494, %v455, 0
      %v526 = vsel %vm494, %v456, 0
      %v529 = vsel %vm494, %v457, 0
      %v532 = vsel %vm494, %v458, 0
      %v535 = vsel %vm494, %v459, 0
      %v538 = vsel %vm494, %v460, 0
      %v541 = vsel %vm494, %v461, 0
      %v544 = vsel %vm494, %v462, 0
      %v547 = vsel %vm494, %v463, 0
      %v550 = vsel %vm494, %v464, 0
      %v553 = vsel %vm494, %v465, 0
      %v556 = vsel %vm494, %v466, 0
      %v559 = vsel %vm494, %v467, 0
      %v562 = vsel %vm494, %v468, 0
      %v565 = vsel %vm494, %v469, 0
      %v568 = vsel %vm494, %v470, 0
      %v571 = vsel %vm494, %v471, 0
      %v574 = vsel %vm494, %v472, 0
      %v577 = vsel %vm494, %v473, 0
      %v580 = vsel %vm494, %v474, 0
      %v583 = vsel %vm494, %v475, 0
      %v586 = vsel %vm494, %v476, 0
      %v589 = vsel %vm494, %v477, 0
      %v592 = vsel %vm494, %v478, 0
      %v595 = vsel %vm494, %v479, 0
      %v598 = vsel %vm494, %v480, 0
      %v601 = vsel %vm494, %v481, 0
      %603 = vmatprep.subr.bf16.mxu0 0
      %604 = vmatpush1.bf16.msra.mxu0 %v490
      %605 = vmatprep.subr.bf16.mxu0 0
      %606 = vmatpush1.bf16.msra.mxu0 %v491
      %607 = vmatprep.subr.bf16.mxu0 0
      %608 = vmatpush1.bf16.msra.mxu0 0
      %609 = vmatprep.subr.bf16.mxu0 0
      %610 = vmatpush1.bf16.msra.mxu0 0
      %611 = vmatprep.subr.bf16.mxu0 0
      %612 = vmatpush1.bf16.msra.mxu0 0
      %613 = vmatprep.subr.bf16.mxu0 0
      %614 = vmatpush1.bf16.msra.mxu0 0
      %615 = vmatprep.subr.bf16.mxu0 0
      %616 = vmatpush1.bf16.msra.mxu0 0
      %617 = vmatprep.subr.bf16.mxu0 0
      %618 = vmatpush1.bf16.msra.mxu0 0
      %619 = vmatprep.subr.bf16.mxu0 0
      %620 = vmatpush1.bf16.msra.mxu0 0
      %621 = vmatprep.subr.bf16.mxu0 0
      %622 = vmatpush1.bf16.msra.mxu0 0
      %623 = vmatprep.subr.bf16.mxu0 0
      %624 = vmatpush1.bf16.msra.mxu0 0
      %625 = vmatprep.subr.bf16.mxu0 0
      %626 = vmatpush1.bf16.msra.mxu0 0
      %627 = vmatprep.subr.bf16.mxu0 0
      %628 = vmatpush1.bf16.msra.mxu0 0
      %629 = vmatprep.subr.bf16.mxu0 0
      %630 = vmatpush1.bf16.msra.mxu0 0
      %631 = vmatprep.subr.bf16.mxu0 0
      %632 = vmatpush1.bf16.msra.mxu0 0
      %633 = vmatprep.subr.bf16.mxu0 0
      %634 = vmatpush1.bf16.msra.mxu0 0
      %635 = vmatprep.mubr.bf16.mxu0 0
      %636 = vmatmul.mubr.bf16.gmra.mrb[0].mxu0 %v496
      %v637 = vpop.f32.mrb[0].mxu0
      %v638 = vadd.f32 0.0, %v637
      %v639 = vpop.f32.mrb[0].mxu0
      %v640 = vpop.f32.mrb[0].mxu0
      %v641 = vadd.f32 0.0, %v640
      %v642 = vpop.f32.mrb[0].mxu0
      %643 = vmatprep.mubr.bf16.mxu0 0
      %644 = vmatmul.mubr.bf16.gmra.mrb[0].mxu0 %v499
      %v645 = vpop.f32.mrb[0].mxu0
      %v646 = vadd.f32 0.0, %v645
      %v647 = vpop.f32.mrb[0].mxu0
      %v648 = vpop.f32.mrb[0].mxu0
      %v649 = vadd.f32 0.0, %v648
      %v650 = vpop.f32.mrb[0].mxu0
      %651 = vmatprep.mubr.bf16.mxu0 0
      %652 = vmatmul.mubr.bf16.gmra.mrb[0].mxu0 %v502
      %v653 = vpop.f32.mrb[0].mxu0
      %v654 = vadd.f32 0.0, %v653
      %v655 = vpop.f32.mrb[0].mxu0
      %v656 = vpop.f32.mrb[0].mxu0
      %v657 = vadd.f32 0.0, %v656
      %v658 = vpop.f32.mrb[0].mxu0
      %659 = vmatprep.mubr.bf16.mxu0 0
      %660 = vmatmul.mubr.bf16.gmra.mrb[0].mxu0 %v505
      %v661 = vpop.f32.mrb[0].mxu0
      %v662 = vadd.f32 0.0, %v661
      %v663 = vpop.f32.mrb[0].mxu0
      %v664 = vpop.f32.mrb[0].mxu0
      %v665 = vadd.f32 0.0, %v664
      %v666 = vpop.f32.mrb[0].mxu0
      %667 = vmatprep.mubr.bf16.mxu0 0
      %668 = vmatmul.mubr.bf16.gmra.mrb[0].mxu0 %v508
      %v669 = vpop.f32.mrb[0].mxu0
      %v670 = vadd.f32 0.0, %v669
      %v671 = vpop.f32.mrb[0].mxu0
      %v672 = vpop.f32.mrb[0].mxu0
      %v673 = vadd.f32 0.0, %v672
      %v674 = vpop.f32.mrb[0].mxu0
      %675 = vmatprep.mubr.bf16.mxu0 0
      %676 = vmatmul.mubr.bf16.gmra.mrb[0].mxu0 %v511
      %v677 = vpop.f32.mrb[0].mxu0
      %v678 = vadd.f32 0.0, %v677
      %v679 = vpop.f32.mrb[0].mxu0
      %v680 = vpop.f32.mrb[0].mxu0
      %v681 = vadd.f32 0.0, %v680
      %v682 = vpop.f32.mrb[0].mxu0
      %683 = vmatprep.mubr.bf16.mxu0 0
      %684 = vmatmul.mubr.bf16.gmra.mrb[0].mxu0 %v514
      %v685 = vpop.f32.mrb[0].mxu0
      %v686 = vadd.f32 0.0, %v685
      %v687 = vpop.f32.mrb[0].mxu0
      %v688 = vpop.f32.mrb[0].mxu0
      %v689 = vadd.f32 0.0, %v688
      %v690 = vpop.f32.mrb[0].mxu0
      %691 = vmatprep.mubr.bf16.mxu0 0
      %692 = vmatmul.mubr.bf16.gmra.mrb[0].mxu0 %v517
      %v693 = vpop.f32.mrb[0].mxu0
      %v694 = vadd.f32 0.0, %v693
      %v695 = vpop.f32.mrb[0].mxu0
      %v696 = vpop.f32.mrb[0].mxu0
      %v697 = vadd.f32 0.0, %v696
      %v698 = vpop.f32.mrb[0].mxu0
      %699 = vmatprep.mubr.bf16.mxu0 0
      %700 = vmatmul.mubr.bf16.gmra.mrb[0].mxu0 %v520
      %v701 = vpop.f32.mrb[0].mxu0
      %v702 = vadd.f32 0.0, %v701
      %v703 = vpop.f32.mrb[0].mxu0
      %v704 = vpop.f32.mrb[0].mxu0
      %v705 = vadd.f32 0.0, %v704
      %v706 = vpop.f32.mrb[0].mxu0
      %707 = vmatprep.mubr.bf16.mxu0 0
      %708 = vmatmul.mubr.bf16.gmra.mrb[0].mxu0 %v523
      %v709 = vpop.f32.mrb[0].mxu0
      %v710 = vadd.f32 0.0, %v709
      %v711 = vpop.f32.mrb[0].mxu0
      %v712 = vpop.f32.mrb[0].mxu0
      %v713 = vadd.f32 0.0, %v712
      %v714 = vpop.f32.mrb[0].mxu0
      %715 = vmatprep.mubr.bf16.mxu0 0
      %716 = vmatmul.mubr.bf16.gmra.mrb[0].mxu0 %v526
      %v717 = vpop.f32.mrb[0].mxu0
      %v718 = vadd.f32 0.0, %v717
      %v719 = vpop.f32.mrb[0].mxu0
      %v720 = vpop.f32.mrb[0].mxu0
      %v721 = vadd.f32 0.0, %v720
      %v722 = vpop.f32.mrb[0].mxu0
      %723 = vmatprep.mubr.bf16.mxu0 0
      %724 = vmatmul.mubr.bf16.gmra.mrb[0].mxu0 %v529
      %v725 = vpop.f32.mrb[0].mxu0
      %v726 = vadd.f32 0.0, %v725
      %v727 = vpop.f32.mrb[0].mxu0
      %v728 = vpop.f32.mrb[0].mxu0
      %v729 = vadd.f32 0.0, %v728
      %v730 = vpop.f32.mrb[0].mxu0
      %731 = vmatprep.mubr.bf16.mxu0 0
      %732 = vmatmul.mubr.bf16.gmra.mrb[0].mxu0 %v532
      %v733 = vpop.f32.mrb[0].mxu0
      %v734 = vadd.f32 0.0, %v733
      %v735 = vpop.f32.mrb[0].mxu0
      %v736 = vpop.f32.mrb[0].mxu0
      %v737 = vadd.f32 0.0, %v736
      %v738 = vpop.f32.mrb[0].mxu0
      %739 = vmatprep.mubr.bf16.mxu0 0
      %740 = vmatmul.mubr.bf16.gmra.mrb[0].mxu0 %v535
      %v741 = vpop.f32.mrb[0].mxu0
      %v742 = vadd.f32 0.0, %v741
      %v743 = vpop.f32.mrb[0].mxu0
      %v744 = vpop.f32.mrb[0].mxu0
      %v745 = vadd.f32 0.0, %v744
      %v746 = vpop.f32.mrb[0].mxu0
      %747 = vmatprep.mubr.bf16.mxu0 0
      %748 = vmatmul.mubr.bf16.gmra.mrb[0].mxu0 %v538
      %v749 = vpop.f32.mrb[0].mxu0
      %v750 = vadd.f32 0.0, %v749
      %v751 = vpop.f32.mrb[0].mxu0
      %v752 = vpop.f32.mrb[0].mxu0
      %v753 = vadd.f32 0.0, %v752
      %v754 = vpop.f32.mrb[0].mxu0
      %755 = vmatprep.mubr.bf16.mxu0 0
      %756 = vmatmul.mubr.bf16.gmra.mrb[0].mxu0 %v541
      %v757 = vpop.f32.mrb[0].mxu0
      %v758 = vadd.f32 0.0, %v757
      %v759 = vpop.f32.mrb[0].mxu0
      %v760 = vpop.f32.mrb[0].mxu0
      %v761 = vadd.f32 0.0, %v760
      %v762 = vpop.f32.mrb[0].mxu0
      %763 = vmatprep.mubr.bf16.mxu0 0
      %764 = vmatmul.mubr.bf16.gmra.mrb[0].mxu0 %v544
      %v765 = vpop.f32.mrb[0].mxu0
      %v766 = vadd.f32 0.0, %v765
      %v767 = vpop.f32.mrb[0].mxu0
      %v768 = vpop.f32.mrb[0].mxu0
      %v769 = vadd.f32 0.0, %v768
      %v770 = vpop.f32.mrb[0].mxu0
      %771 = vmatprep.mubr.bf16.mxu0 0
      %772 = vmatmul.mubr.bf16.gmra.mrb[0].mxu0 %v547
      %v773 = vpop.f32.mrb[0].mxu0
      %v774 = vadd.f32 0.0, %v773
      %v775 = vpop.f32.mrb[0].mxu0
      %v776 = vpop.f32.mrb[0].mxu0
      %v777 = vadd.f32 0.0, %v776
      %v778 = vpop.f32.mrb[0].mxu0
      %779 = vmatprep.mubr.bf16.mxu0 0
      %780 = vmatmul.mubr.bf16.gmra.mrb[0].mxu0 %v550
      %v781 = vpop.f32.mrb[0].mxu0
      %v782 = vadd.f32 0.0, %v781
      %v783 = vpop.f32.mrb[0].mxu0
      %v784 = vpop.f32.mrb[0].mxu0
      %v785 = vadd.f32 0.0, %v784
      %v786 = vpop.f32.mrb[0].mxu0
      %787 = vmatprep.mubr.bf16.mxu0 0
      %788 = vmatmul.mubr.bf16.gmra.mrb[0].mxu0 %v553
      %v789 = vpop.f32.mrb[0].mxu0
      %v790 = vadd.f32 0.0, %v789
      %v791 = vpop.f32.mrb[0].mxu0
      %v792 = vpop.f32.mrb[0].mxu0
      %v793 = vadd.f32 0.0, %v792
      %v794 = vpop.f32.mrb[0].mxu0
      %795 = vmatprep.mubr.bf16.mxu0 0
      %796 = vmatmul.mubr.bf16.gmra.mrb[0].mxu0 %v556
      %v797 = vpop.f32.mrb[0].mxu0
      %v798 = vadd.f32 0.0, %v797
      %v799 = vpop.f32.mrb[0].mxu0
      %v800 = vpop.f32.mrb[0].mxu0
      %v801 = vadd.f32 0.0, %v800
      %v802 = vpop.f32.mrb[0].mxu0
      %803 = vmatprep.mubr.bf16.mxu0 0
      %804 = vmatmul.mubr.bf16.gmra.mrb[0].mxu0 %v559
      %v805 = vpop.f32.mrb[0].mxu0
      %v806 = vadd.f32 0.0, %v805
      %v807 = vpop.f32.mrb[0].mxu0
      %v808 = vpop.f32.mrb[0].mxu0
      %v809 = vadd.f32 0.0, %v808
      %v810 = vpop.f32.mrb[0].mxu0
      %811 = vmatprep.mubr.bf16.mxu0 0
      %812 = vmatmul.mubr.bf16.gmra.mrb[0].mxu0 %v562
      %v813 = vpop.f32.mrb[0].mxu0
      %v814 = vadd.f32 0.0, %v813
      %v815 = vpop.f32.mrb[0].mxu0
      %v816 = vpop.f32.mrb[0].mxu0
      %v817 = vadd.f32 0.0, %v816
      %v818 = vpop.f32.mrb[0].mxu0
      %819 = vmatprep.mubr.bf16.mxu0 0
      %820 = vmatmul.mubr.bf16.gmra.mrb[0].mxu0 %v565
      %v821 = vpop.f32.mrb[0].mxu0
      %v822 = vadd.f32 0.0, %v821
      %v823 = vpop.f32.mrb[0].mxu0
      %v824 = vpop.f32.mrb[0].mxu0
      %v825 = vadd.f32 0.0, %v824
      %v826 = vpop.f32.mrb[0].mxu0
      %827 = vmatprep.mubr.bf16.mxu0 0
      %828 = vmatmul.mubr.bf16.gmra.mrb[0].mxu0 %v568
      %v829 = vpop.f32.mrb[0].mxu0
      %v830 = vadd.f32 0.0, %v829
      %v831 = vpop.f32.mrb[0].mxu0
      %v832 = vpop.f32.mrb[0].mxu0
      %v833 = vadd.f32 0.0, %v832
      %v834 = vpop.f32.mrb[0].mxu0
      %835 = vmatprep.mubr.bf16.mxu0 0
      %836 = vmatmul.mubr.bf16.gmra.mrb[0].mxu0 %v571
      %v837 = vpop.f32.mrb[0].mxu0
      %v838 = vadd.f32 0.0, %v837
      %v839 = vpop.f32.mrb[0].mxu0
      %v840 = vpop.f32.mrb[0].mxu0
      %v841 = vadd.f32 0.0, %v840
      %v842 = vpop.f32.mrb[0].mxu0
      %843 = vmatprep.mubr.bf16.mxu0 0
      %844 = vmatmul.mubr.bf16.gmra.mrb[0].mxu0 %v574
      %v845 = vpop.f32.mrb[0].mxu0
      %v846 = vadd.f32 0.0, %v845
      %v847 = vpop.f32.mrb[0].mxu0
      %v848 = vpop.f32.mrb[0].mxu0
      %v849 = vadd.f32 0.0, %v848
      %v850 = vpop.f32.mrb[0].mxu0
      %851 = vmatprep.mubr.bf16.mxu0 0
      %852 = vmatmul.mubr.bf16.gmra.mrb[0].mxu0 %v577
      %v853 = vpop.f32.mrb[0].mxu0
      %v854 = vadd.f32 0.0, %v853
      %v855 = vpop.f32.mrb[0].mxu0
      %v856 = vpop.f32.mrb[0].mxu0
      %v857 = vadd.f32 0.0, %v856
      %v858 = vpop.f32.mrb[0].mxu0
      %859 = vmatprep.mubr.bf16.mxu0 0
      %860 = vmatmul.mubr.bf16.gmra.mrb[0].mxu0 %v580
      %v861 = vpop.f32.mrb[0].mxu0
      %v862 = vadd.f32 0.0, %v861
      %v863 = vpop.f32.mrb[0].mxu0
      %v864 = vpop.f32.mrb[0].mxu0
      %v865 = vadd.f32 0.0, %v864
      %v866 = vpop.f32.mrb[0].mxu0
      %867 = vmatprep.mubr.bf16.mxu0 0
      %868 = vmatmul.mubr.bf16.gmra.mrb[0].mxu0 %v583
      %v869 = vpop.f32.mrb[0].mxu0
      %v870 = vadd.f32 0.0, %v869
      %v871 = vpop.f32.mrb[0].mxu0
      %v872 = vpop.f32.mrb[0].mxu0
      %v873 = vadd.f32 0.0, %v872
      %v874 = vpop.f32.mrb[0].mxu0
      %875 = vmatprep.mubr.bf16.mxu0 0
      %876 = vmatmul.mubr.bf16.gmra.mrb[0].mxu0 %v586
      %v877 = vpop.f32.mrb[0].mxu0
      %v878 = vadd.f32 0.0, %v877
      %v879 = vpop.f32.mrb[0].mxu0
      %v880 = vpop.f32.mrb[0].mxu0
      %v881 = vadd.f32 0.0, %v880
      %v882 = vpop.f32.mrb[0].mxu0
      %883 = vmatprep.mubr.bf16.mxu0 0
      %884 = vmatmul.mubr.bf16.gmra.mrb[0].mxu0 %v589
      %v885 = vpop.f32.mrb[0].mxu0
      %v886 = vadd.f32 0.0, %v885
      %v887 = vpop.f32.mrb[0].mxu0
      %v888 = vpop.f32.mrb[0].mxu0
      %v889 = vadd.f32 0.0, %v888
      %v890 = vpop.f32.mrb[0].mxu0
      %891 = vmatprep.mubr.bf16.mxu0 0
      %892 = vmatmul.mubr.bf16.gmra.mrb[0].mxu0 %v592
      %v893 = vpop.f32.mrb[0].mxu0
      %v894 = vadd.f32 0.0, %v893
      %v895 = vpop.f32.mrb[0].mxu0
      %v896 = vpop.f32.mrb[0].mxu0
      %v897 = vadd.f32 0.0, %v896
      %v898 = vpop.f32.mrb[0].mxu0
      %899 = vmatprep.mubr.bf16.mxu0 0
      %900 = vmatmul.mubr.bf16.gmra.mrb[0].mxu0 %v595
      %v901 = vpop.f32.mrb[0].mxu0
      %v902 = vadd.f32 0.0, %v901
      %v903 = vpop.f32.mrb[0].mxu0
      %v904 = vpop.f32.mrb[0].mxu0
      %v905 = vadd.f32 0.0, %v904
      %v906 = vpop.f32.mrb[0].mxu0
      %907 = vmatprep.mubr.bf16.mxu0 0
      %908 = vmatmul.mubr.bf16.gmra.mrb[0].mxu0 %v598
      %v909 = vpop.f32.mrb[0].mxu0
      %v910 = vadd.f32 0.0, %v909
      %v911 = vpop.f32.mrb[0].mxu0
      %v912 = vpop.f32.mrb[0].mxu0
      %v913 = vadd.f32 0.0, %v912
      %v914 = vpop.f32.mrb[0].mxu0
      %915 = vmatprep.mubr.bf16.mxu0 0
      %916 = vmatmul.mubr.bf16.gmra.mrb[0].mxu0 %v601
      %v917 = vpop.f32.mrb[0].mxu0
      %v918 = vadd.f32 0.0, %v917
      %v919 = vpop.f32.mrb[0].mxu0
      %v920 = vpop.f32.mrb[0].mxu0
      %v921 = vadd.f32 0.0, %v920
      %v922 = vpop.f32.mrb[0].mxu0
      %923 = vdwg.mxu0
      %v924 = vmax.f32 %v638, %v710
      %v925 = vmax.f32 %v641, %v713
      %v926 = vmax.f32 %v646, %v718
      %v927 = vmax.f32 %v649, %v721
      %v928 = vmax.f32 %v654, %v726
      %v929 = vmax.f32 %v657, %v729
      %v930 = vmax.f32 %v662, %v734
      %v931 = vmax.f32 %v665, %v737
      %v932 = vmax.f32 %v670, %v742
      %v933 = vmax.f32 %v673, %v745
      %v934 = vmax.f32 %v678, %v750
      %v935 = vmax.f32 %v681, %v753
      %v936 = vmax.f32 %v686, %v758
      %v937 = vmax.f32 %v689, %v761
      %v938 = vmax.f32 %v694, %v766
      %v939 = vmax.f32 %v697, %v769
      %v940 = vmax.f32 %v702, %v774
      %v941 = vmax.f32 %v705, %v777
      %v942 = vmax.f32 %v782, %v854
      %v943 = vmax.f32 %v785, %v857
      %v944 = vmax.f32 %v790, %v862
      %v945 = vmax.f32 %v793, %v865
      %v946 = vmax.f32 %v798, %v870
      %v947 = vmax.f32 %v801, %v873
      %v948 = vmax.f32 %v806, %v878
      %v949 = vmax.f32 %v809, %v881
      %v950 = vmax.f32 %v814, %v886
      %v951 = vmax.f32 %v817, %v889
      %v952 = vmax.f32 %v822, %v894
      %v953 = vmax.f32 %v825, %v897
      %v954 = vmax.f32 %v830, %v902
      %v955 = vmax.f32 %v833, %v905
      %v956 = vmax.f32 %v838, %v910
      %v957 = vmax.f32 %v841, %v913
      %v958 = vmax.f32 %v846, %v918
      %v959 = vmax.f32 %v849, %v921
      %v960 = vmax.f32 %v924, %v942
      %v961 = vmax.f32 %v925, %v943
      %v962 = vmax.f32 %v926, %v944
      %v963 = vmax.f32 %v927, %v945
      %v964 = vmax.f32 %v928, %v946
      %v965 = vmax.f32 %v929, %v947
      %v966 = vmax.f32 %v930, %v948
      %v967 = vmax.f32 %v931, %v949
      %v968 = vmax.f32 %v932, %v950
      %v969 = vmax.f32 %v933, %v951
      %v970 = vmax.f32 %v934, %v952
      %v971 = vmax.f32 %v935, %v953
      %v972 = vmax.f32 %v936, %v954
      %v973 = vmax.f32 %v937, %v955
      %v974 = vmax.f32 %v938, %v956
      %v975 = vmax.f32 %v939, %v957
      %v976 = vmax.f32 %v940, %v958
      %v977 = vmax.f32 %v941, %v959
      %v978 = vld [vmem:[%s2] sm:$0x1]
      %v980 = vlaneseq
      %v981 = vshrl.u32 %v980, 7
      %v982 = vsub.s32 0, %v981
      %v983 = vrot.slane %v978, %v982
      %v985 = vadd.f32 %v960, %v983
      %v986 = vadd.f32 %v961, %v983
      %v987 = vadd.f32 %v962, %v983
      %v988 = vadd.f32 %v963, %v983
      %v989 = vadd.f32 %v964, %v983
      %v990 = vadd.f32 %v965, %v983
      %v991 = vadd.f32 %v966, %v983
      %v992 = vadd.f32 %v967, %v983
      %v993 = vadd.f32 %v968, %v983
      %v994 = vadd.f32 %v969, %v983
      %v995 = vadd.f32 %v970, %v983
      %v996 = vadd.f32 %v971, %v983
      %v997 = vadd.f32 %v972, %v983
      %v998 = vadd.f32 %v973, %v983
      %v999 = vadd.f32 %v974, %v983
      %v1000 = vadd.f32 %v975, %v983
      %v1001 = vadd.f32 %v976, %v983
      %v1002 = vadd.f32 %v977, %v983
      %v1003 = vmax.f32 %v985, 0.0
      %v1004 = vmax.f32 %v986, 0.0
      %v1005 = vmax.f32 %v987, 0.0
      %v1006 = vmax.f32 %v988, 0.0
      %v1007 = vmax.f32 %v989, 0.0
      %v1008 = vmax.f32 %v990, 0.0
      %v1009 = vmax.f32 %v991, 0.0
      %v1010 = vmax.f32 %v992, 0.0
      %v1011 = vmax.f32 %v993, 0.0
      %v1012 = vmax.f32 %v994, 0.0
      %v1013 = vmax.f32 %v995, 0.0
      %v1014 = vmax.f32 %v996, 0.0
      %v1015 = vmax.f32 %v997, 0.0
      %v1016 = vmax.f32 %v998, 0.0
      %v1017 = vmax.f32 %v999, 0.0
      %v1018 = vmax.f32 %v1000, 0.0
      %v1019 = vmax.f32 %v1001, 0.0
      %v1020 = vmax.f32 %v1002, 0.0
      %v1021 = vpack.c.bf16 %v1004, %v1003
      %v1022 = vpack.c.bf16 %v1006, %v1005
      %v1023 = vpack.c.bf16 %v1008, %v1007
      %v1024 = vpack.c.bf16 %v1010, %v1009
      %v1025 = vpack.c.bf16 %v1012, %v1011
      %v1026 = vpack.c.bf16 %v1014, %v1013
      %v1027 = vpack.c.bf16 %v1016, %v1015
      %v1028 = vpack.c.bf16 %v1018, %v1017
      %v1029 = vpack.c.bf16 %v1020, %v1019
      %v1030 = vld [vmem:[%s3] sm:$0xf]
      %v1031 = vld [vmem:[%s3 + $0x4] sm:$0xf]
      %v1032 = vld [vmem:[%s3 + $0x8] sm:$0xf]
      %v1033 = vld [vmem:[%s3 + $0xc] sm:$0xf]
      %v1034 = vld [vmem:[%s3 + $0x10] sm:$0xf]
      %v1035 = vld [vmem:[%s3 + $0x14] sm:$0xf]
      %v1036 = vld [vmem:[%s3 + $0x18] sm:$0xf]
      %v1037 = vld [vmem:[%s3 + $0x1c] sm:$0xf]
      %v1038 = vld [vmem:[%s3 + $0x20] sm:$0xf]
      %v1039 = vld [vmem:[%s3 + $0x24] sm:$0xf]
      %v1040 = vld [vmem:[%s3 + $0x28] sm:$0xf]
      %v1041 = vld [vmem:[%s3 + $0x2c] sm:$0xf]
      %v1042 = vld [vmem:[%s3 + $0x30] sm:$0xf]
      %v1043 = vld [vmem:[%s3 + $0x34] sm:$0xf]
      %v1044 = vld [vmem:[%s3 + $0x38] sm:$0xf]
      %v1045 = vld [vmem:[%s3 + $0x3c] sm:$0xf]
      %s1046 = scalar_lea.vmem %s3, 64
      %v1047 = vld [vmem:[%s1046] sm:$0xf]
      %v1048 = vld [vmem:[%s1046 + $0x4] sm:$0xf]
      %v1049 = vld [vmem:[%s1046 + $0x8] sm:$0xf]
      %v1050 = vld [vmem:[%s1046 + $0xc] sm:$0xf]
      %v1051 = vld [vmem:[%s1046 + $0x10] sm:$0xf]
      %v1052 = vld [vmem:[%s1046 + $0x14] sm:$0xf]
      %v1053 = vld [vmem:[%s1046 + $0x18] sm:$0xf]
      %v1054 = vld [vmem:[%s1046 + $0x1c] sm:$0xf]
      %v1055 = vld [vmem:[%s1046 + $0x20] sm:$0xf]
      %v1056 = vld [vmem:[%s1046 + $0x24] sm:$0xf]
      %v1057 = vld [vmem:[%s1046 + $0x28] sm:$0xf]
      %v1058 = vld [vmem:[%s1046 + $0x2c] sm:$0xf]
      %v1059 = vld [vmem:[%s1046 + $0x30] sm:$0xf]
      %v1060 = vld [vmem:[%s1046 + $0x34] sm:$0xf]
      %v1061 = vld [vmem:[%s1046 + $0x38] sm:$0xf]
      %v1062 = vld [vmem:[%s1046 + $0x3c] sm:$0xf]
      %vm1063 = vsmask.f32 7424
      %v1065 = vshrl.u32 %v1021, 16
      %v1067 = vshll.u32 %v1021, 16
      %v1069 = vrot.slane %v1067, 1
      %v1070 = vor.u32 %v1065, %v1069
      %v1072 = vshll.u32 %v1022, 16
      %v1074 = vrot.slane %v1072, 1
      %v1075 = vsel %vm1063, %v1070, %v1074
      %v1076 = vshrl.u32 %v1022, 16
      %v1078 = vor.u32 %v1076, %v1074
      %v1080 = vshll.u32 %v1023, 16
      %v1082 = vrot.slane %v1080, 1
      %v1083 = vsel %vm1063, %v1078, %v1082
      %v1084 = vshrl.u32 %v1023, 16
      %v1086 = vor.u32 %v1084, %v1082
      %v1088 = vshll.u32 %v1024, 16
      %v1090 = vrot.slane %v1088, 1
      %v1091 = vsel %vm1063, %v1086, %v1090
      %v1092 = vshrl.u32 %v1024, 16
      %v1094 = vor.u32 %v1092, %v1090
      %v1096 = vshll.u32 %v1025, 16
      %v1098 = vrot.slane %v1096, 1
      %v1099 = vsel %vm1063, %v1094, %v1098
      %v1100 = vshrl.u32 %v1025, 16
      %v1102 = vor.u32 %v1100, %v1098
      %v1104 = vshll.u32 %v1026, 16
      %v1106 = vrot.slane %v1104, 1
      %v1107 = vsel %vm1063, %v1102, %v1106
      %v1108 = vshrl.u32 %v1026, 16
      %v1110 = vor.u32 %v1108, %v1106
      %v1112 = vshll.u32 %v1027, 16
      %v1114 = vrot.slane %v1112, 1
      %v1115 = vsel %vm1063, %v1110, %v1114
      %v1116 = vshrl.u32 %v1027, 16
      %v1118 = vor.u32 %v1116, %v1114
      %v1120 = vshll.u32 %v1028, 16
      %v1122 = vrot.slane %v1120, 1
      %v1123 = vsel %vm1063, %v1118, %v1122
      %v1124 = vshrl.u32 %v1028, 16
      %v1126 = vor.u32 %v1124, %v1122
      %v1128 = vshll.u32 %v1029, 16
      %v1130 = vrot.slane %v1128, 1
      %v1131 = vsel %vm1063, %v1126, %v1130
      %v1132 = vshrl.u32 %v1029, 16
      %v1134 = vor.u32 %v1132, %v1130
      %v1136 = vshll.u32 0, 16
      %v1138 = vrot.slane %v1136, 1
      %v1139 = vsel %vm1063, %v1134, %v1138
      %v1165 = vunpack.c.l.b16 %v1047
      %v1166 = vunpack.c.l.b16 %v1048
      %v1167 = vunpack.c.l.b16 %v1049
      %v1168 = vunpack.c.l.b16 %v1050
      %v1169 = vunpack.c.l.b16 %v1051
      %v1170 = vunpack.c.l.b16 %v1052
      %v1171 = vunpack.c.l.b16 %v1053
      %v1172 = vunpack.c.l.b16 %v1054
      %v1173 = vunpack.c.l.b16 %v1055
      %v1174 = vunpack.c.l.b16 %v1056
      %v1175 = vunpack.c.l.b16 %v1057
      %v1176 = vunpack.c.l.b16 %v1058
      %v1177 = vunpack.c.l.b16 %v1059
      %v1178 = vunpack.c.l.b16 %v1060
      %v1179 = vunpack.c.l.b16 %v1061
      %v1180 = vunpack.c.l.b16 %v1062
      %v1181 = vpack.c.b16 %v1166, %v1165
      %v1182 = vpack.c.b16 %v1168, %v1167
      %v1183 = vpack.c.b16 %v1170, %v1169
      %v1184 = vpack.c.b16 %v1172, %v1171
      %v1185 = vpack.c.b16 %v1174, %v1173
      %v1186 = vpack.c.b16 %v1176, %v1175
      %v1187 = vpack.c.b16 %v1178, %v1177
      %v1188 = vpack.c.b16 %v1180, %v1179
      %1197 = vmatprep.subr.bf16.mxu0 0
      %1198 = vmatpush1.bf16.msra.mxu0 %v1181
      %1199 = vmatprep.subr.bf16.mxu0 0
      %1200 = vmatpush1.bf16.msra.mxu0 %v1182
      %1201 = vmatprep.subr.bf16.mxu0 0
      %1202 = vmatpush1.bf16.msra.mxu0 %v1183
      %1203 = vmatprep.subr.bf16.mxu0 0
      %1204 = vmatpush1.bf16.msra.mxu0 %v1184
      %1205 = vmatprep.subr.bf16.mxu0 0
      %1206 = vmatpush1.bf16.msra.mxu0 %v1185
      %1207 = vmatprep.subr.bf16.mxu0 0
      %1208 = vmatpush1.bf16.msra.mxu0 %v1186
      %1209 = vmatprep.subr.bf16.mxu0 0
      %1210 = vmatpush1.bf16.msra.mxu0 %v1187
      %1211 = vmatprep.subr.bf16.mxu0 0
      %1212 = vmatpush1.bf16.msra.mxu0 %v1188
      %1213 = vmatprep.subr.bf16.mxu0 0
      %1214 = vmatpush1.bf16.msra.mxu0 0
      %1215 = vmatprep.subr.bf16.mxu0 0
      %1216 = vmatpush1.bf16.msra.mxu0 0
      %1217 = vmatprep.subr.bf16.mxu0 0
      %1218 = vmatpush1.bf16.msra.mxu0 0
      %1219 = vmatprep.subr.bf16.mxu0 0
      %1220 = vmatpush1.bf16.msra.mxu0 0
      %1221 = vmatprep.subr.bf16.mxu0 0
      %1222 = vmatpush1.bf16.msra.mxu0 0
      %1223 = vmatprep.subr.bf16.mxu0 0
      %1224 = vmatpush1.bf16.msra.mxu0 0
      %1225 = vmatprep.subr.bf16.mxu0 0
      %1226 = vmatpush1.bf16.msra.mxu0 0
      %1227 = vmatprep.subr.bf16.mxu0 0
      %1228 = vmatpush1.bf16.msra.mxu0 0
      %1229 = vmatprep.mubr.bf16.mxu0 0
      %1230 = vmatmul.mubr.bf16.gmra.mrb[0].mxu0 %v1075
      %v1231 = vpop.f32.mrb[0].mxu0
      %v1232 = vadd.f32 0.0, %v1231
      %v1233 = vpop.f32.mrb[0].mxu0
      %v1234 = vpop.f32.mrb[0].mxu0
      %v1235 = vadd.f32 0.0, %v1234
      %v1236 = vpop.f32.mrb[0].mxu0
      %1237 = vmatprep.mubr.bf16.mxu0 0
      %1238 = vmatmul.mubr.bf16.gmra.mrb[0].mxu0 %v1083
      %v1239 = vpop.f32.mrb[0].mxu0
      %v1240 = vadd.f32 0.0, %v1239
      %v1241 = vpop.f32.mrb[0].mxu0
      %v1242 = vpop.f32.mrb[0].mxu0
      %v1243 = vadd.f32 0.0, %v1242
      %v1244 = vpop.f32.mrb[0].mxu0
      %1245 = vmatprep.mubr.bf16.mxu0 0
      %1246 = vmatmul.mubr.bf16.gmra.mrb[0].mxu0 %v1091
      %v1247 = vpop.f32.mrb[0].mxu0
      %v1248 = vadd.f32 0.0, %v1247
      %v1249 = vpop.f32.mrb[0].mxu0
      %v1250 = vpop.f32.mrb[0].mxu0
      %v1251 = vadd.f32 0.0, %v1250
      %v1252 = vpop.f32.mrb[0].mxu0
      %1253 = vmatprep.mubr.bf16.mxu0 0
      %1254 = vmatmul.mubr.bf16.gmra.mrb[0].mxu0 %v1099
      %v1255 = vpop.f32.mrb[0].mxu0
      %v1256 = vadd.f32 0.0, %v1255
      %v1257 = vpop.f32.mrb[0].mxu0
      %v1258 = vpop.f32.mrb[0].mxu0
      %v1259 = vadd.f32 0.0, %v1258
      %v1260 = vpop.f32.mrb[0].mxu0
      %1261 = vmatprep.mubr.bf16.mxu0 0
      %1262 = vmatmul.mubr.bf16.gmra.mrb[0].mxu0 %v1107
      %v1263 = vpop.f32.mrb[0].mxu0
      %v1264 = vadd.f32 0.0, %v1263
      %v1265 = vpop.f32.mrb[0].mxu0
      %v1266 = vpop.f32.mrb[0].mxu0
      %v1267 = vadd.f32 0.0, %v1266
      %v1268 = vpop.f32.mrb[0].mxu0
      %1269 = vmatprep.mubr.bf16.mxu0 0
      %1270 = vmatmul.mubr.bf16.gmra.mrb[0].mxu0 %v1115
      %v1271 = vpop.f32.mrb[0].mxu0
      %v1272 = vadd.f32 0.0, %v1271
      %v1273 = vpop.f32.mrb[0].mxu0
      %v1274 = vpop.f32.mrb[0].mxu0
      %v1275 = vadd.f32 0.0, %v1274
      %v1276 = vpop.f32.mrb[0].mxu0
      %1277 = vmatprep.mubr.bf16.mxu0 0
      %1278 = vmatmul.mubr.bf16.gmra.mrb[0].mxu0 %v1123
      %v1279 = vpop.f32.mrb[0].mxu0
      %v1280 = vadd.f32 0.0, %v1279
      %v1281 = vpop.f32.mrb[0].mxu0
      %v1282 = vpop.f32.mrb[0].mxu0
      %v1283 = vadd.f32 0.0, %v1282
      %v1284 = vpop.f32.mrb[0].mxu0
      %1285 = vmatprep.mubr.bf16.mxu0 0
      %1286 = vmatmul.mubr.bf16.gmra.mrb[0].mxu0 %v1131
      %v1287 = vpop.f32.mrb[0].mxu0
      %v1288 = vadd.f32 0.0, %v1287
      %v1289 = vpop.f32.mrb[0].mxu0
      %v1290 = vpop.f32.mrb[0].mxu0
      %v1291 = vadd.f32 0.0, %v1290
      %v1292 = vpop.f32.mrb[0].mxu0
      %1293 = vmatprep.mubr.bf16.mxu0 0
      %1294 = vmatmul.mubr.bf16.gmra.mrb[0].mxu0 %v1139
      %v1295 = vpop.f32.mrb[0].mxu0
      %v1296 = vadd.f32 0.0, %v1295
      %v1297 = vpop.f32.mrb[0].mxu0
      %v1298 = vpop.f32.mrb[0].mxu0
      %v1299 = vadd.f32 0.0, %v1298
      %v1300 = vpop.f32.mrb[0].mxu0
      %1301 = vdwg.mxu0
      %v1318 = vunpack.c.l.b16 %v1030
      %v1319 = vunpack.c.l.b16 %v1031
      %v1320 = vunpack.c.l.b16 %v1032
      %v1321 = vunpack.c.l.b16 %v1033
      %v1322 = vunpack.c.l.b16 %v1034
      %v1323 = vunpack.c.l.b16 %v1035
      %v1324 = vunpack.c.l.b16 %v1036
      %v1325 = vunpack.c.l.b16 %v1037
      %v1326 = vunpack.c.l.b16 %v1038
      %v1327 = vunpack.c.l.b16 %v1039
      %v1328 = vunpack.c.l.b16 %v1040
      %v1329 = vunpack.c.l.b16 %v1041
      %v1330 = vunpack.c.l.b16 %v1042
      %v1331 = vunpack.c.l.b16 %v1043
      %v1332 = vunpack.c.l.b16 %v1044
      %v1333 = vunpack.c.l.b16 %v1045
      %v1334 = vpack.c.b16 %v1319, %v1318
      %v1335 = vpack.c.b16 %v1321, %v1320
      %v1336 = vpack.c.b16 %v1323, %v1322
      %v1337 = vpack.c.b16 %v1325, %v1324
      %v1338 = vpack.c.b16 %v1327, %v1326
      %v1339 = vpack.c.b16 %v1329, %v1328
      %v1340 = vpack.c.b16 %v1331, %v1330
      %v1341 = vpack.c.b16 %v1333, %v1332
      %1350 = vmatprep.subr.bf16.mxu0 0
      %1351 = vmatpush1.bf16.msra.mxu0 %v1334
      %1352 = vmatprep.subr.bf16.mxu0 0
      %1353 = vmatpush1.bf16.msra.mxu0 %v1335
      %1354 = vmatprep.subr.bf16.mxu0 0
      %1355 = vmatpush1.bf16.msra.mxu0 %v1336
      %1356 = vmatprep.subr.bf16.mxu0 0
      %1357 = vmatpush1.bf16.msra.mxu0 %v1337
      %1358 = vmatprep.subr.bf16.mxu0 0
      %1359 = vmatpush1.bf16.msra.mxu0 %v1338
      %1360 = vmatprep.subr.bf16.mxu0 0
      %1361 = vmatpush1.bf16.msra.mxu0 %v1339
      %1362 = vmatprep.subr.bf16.mxu0 0
      %1363 = vmatpush1.bf16.msra.mxu0 %v1340
      %1364 = vmatprep.subr.bf16.mxu0 0
      %1365 = vmatpush1.bf16.msra.mxu0 %v1341
      %1366 = vmatprep.subr.bf16.mxu0 0
      %1367 = vmatpush1.bf16.msra.mxu0 0
      %1368 = vmatprep.subr.bf16.mxu0 0
      %1369 = vmatpush1.bf16.msra.mxu0 0
      %1370 = vmatprep.subr.bf16.mxu0 0
      %1371 = vmatpush1.bf16.msra.mxu0 0
      %1372 = vmatprep.subr.bf16.mxu0 0
      %1373 = vmatpush1.bf16.msra.mxu0 0
      %1374 = vmatprep.subr.bf16.mxu0 0
      %1375 = vmatpush1.bf16.msra.mxu0 0
      %1376 = vmatprep.subr.bf16.mxu0 0
      %1377 = vmatpush1.bf16.msra.mxu0 0
      %1378 = vmatprep.subr.bf16.mxu0 0
      %1379 = vmatpush1.bf16.msra.mxu0 0
      %1380 = vmatprep.subr.bf16.mxu0 0
      %1381 = vmatpush1.bf16.msra.mxu0 0
      %1382 = vmatprep.mubr.bf16.mxu0 0
      %1383 = vmatmul.mubr.bf16.gmra.mrb[0].mxu0 %v1021
      %v1384 = vpop.f32.mrb[0].mxu0
      %v1385 = vadd.f32 %v1232, %v1384
      %v1386 = vpop.f32.mrb[0].mxu0
      %v1387 = vpop.f32.mrb[0].mxu0
      %v1388 = vadd.f32 %v1235, %v1387
      %v1389 = vpop.f32.mrb[0].mxu0
      %1390 = vmatprep.mubr.bf16.mxu0 0
      %1391 = vmatmul.mubr.bf16.gmra.mrb[0].mxu0 %v1022
      %v1392 = vpop.f32.mrb[0].mxu0
      %v1393 = vadd.f32 %v1240, %v1392
      %v1394 = vpop.f32.mrb[0].mxu0
      %v1395 = vpop.f32.mrb[0].mxu0
      %v1396 = vadd.f32 %v1243, %v1395
      %v1397 = vpop.f32.mrb[0].mxu0
      %1398 = vmatprep.mubr.bf16.mxu0 0
      %1399 = vmatmul.mubr.bf16.gmra.mrb[0].mxu0 %v1023
      %v1400 = vpop.f32.mrb[0].mxu0
      %v1401 = vadd.f32 %v1248, %v1400
      %v1402 = vpop.f32.mrb[0].mxu0
      %v1403 = vpop.f32.mrb[0].mxu0
      %v1404 = vadd.f32 %v1251, %v1403
      %v1405 = vpop.f32.mrb[0].mxu0
      %1406 = vmatprep.mubr.bf16.mxu0 0
      %1407 = vmatmul.mubr.bf16.gmra.mrb[0].mxu0 %v1024
      %v1408 = vpop.f32.mrb[0].mxu0
      %v1409 = vadd.f32 %v1256, %v1408
      %v1410 = vpop.f32.mrb[0].mxu0
      %v1411 = vpop.f32.mrb[0].mxu0
      %v1412 = vadd.f32 %v1259, %v1411
      %v1413 = vpop.f32.mrb[0].mxu0
      %1414 = vmatprep.mubr.bf16.mxu0 0
      %1415 = vmatmul.mubr.bf16.gmra.mrb[0].mxu0 %v1025
      %v1416 = vpop.f32.mrb[0].mxu0
      %v1417 = vadd.f32 %v1264, %v1416
      %v1418 = vpop.f32.mrb[0].mxu0
      %v1419 = vpop.f32.mrb[0].mxu0
      %v1420 = vadd.f32 %v1267, %v1419
      %v1421 = vpop.f32.mrb[0].mxu0
      %1422 = vmatprep.mubr.bf16.mxu0 0
      %1423 = vmatmul.mubr.bf16.gmra.mrb[0].mxu0 %v1026
      %v1424 = vpop.f32.mrb[0].mxu0
      %v1425 = vadd.f32 %v1272, %v1424
      %v1426 = vpop.f32.mrb[0].mxu0
      %v1427 = vpop.f32.mrb[0].mxu0
      %v1428 = vadd.f32 %v1275, %v1427
      %v1429 = vpop.f32.mrb[0].mxu0
      %1430 = vmatprep.mubr.bf16.mxu0 0
      %1431 = vmatmul.mubr.bf16.gmra.mrb[0].mxu0 %v1027
      %v1432 = vpop.f32.mrb[0].mxu0
      %v1433 = vadd.f32 %v1280, %v1432
      %v1434 = vpop.f32.mrb[0].mxu0
      %v1435 = vpop.f32.mrb[0].mxu0
      %v1436 = vadd.f32 %v1283, %v1435
      %v1437 = vpop.f32.mrb[0].mxu0
      %1438 = vmatprep.mubr.bf16.mxu0 0
      %1439 = vmatmul.mubr.bf16.gmra.mrb[0].mxu0 %v1028
      %v1440 = vpop.f32.mrb[0].mxu0
      %v1441 = vadd.f32 %v1288, %v1440
      %v1442 = vpop.f32.mrb[0].mxu0
      %v1443 = vpop.f32.mrb[0].mxu0
      %v1444 = vadd.f32 %v1291, %v1443
      %v1445 = vpop.f32.mrb[0].mxu0
      %1446 = vmatprep.mubr.bf16.mxu0 0
      %1447 = vmatmul.mubr.bf16.gmra.mrb[0].mxu0 %v1029
      %v1448 = vpop.f32.mrb[0].mxu0
      %v1449 = vadd.f32 %v1296, %v1448
      %v1450 = vpop.f32.mrb[0].mxu0
      %v1451 = vpop.f32.mrb[0].mxu0
      %v1452 = vadd.f32 %v1299, %v1451
      %v1453 = vpop.f32.mrb[0].mxu0
      %1454 = vdwg.mxu0
      %s1455 = scalar_lea.vmem %s3, 128
      %v1456 = vld [vmem:[%s1455] sm:$0xf]
      %v1457 = vld [vmem:[%s1455 + $0x4] sm:$0xf]
      %v1458 = vld [vmem:[%s1455 + $0x8] sm:$0xf]
      %v1459 = vld [vmem:[%s1455 + $0xc] sm:$0xf]
      %v1460 = vld [vmem:[%s1455 + $0x10] sm:$0xf]
      %v1461 = vld [vmem:[%s1455 + $0x14] sm:$0xf]
      %v1462 = vld [vmem:[%s1455 + $0x18] sm:$0xf]
      %v1463 = vld [vmem:[%s1455 + $0x1c] sm:$0xf]
      %v1464 = vld [vmem:[%s1455 + $0x20] sm:$0xf]
      %v1465 = vld [vmem:[%s1455 + $0x24] sm:$0xf]
      %v1466 = vld [vmem:[%s1455 + $0x28] sm:$0xf]
      %v1467 = vld [vmem:[%s1455 + $0x2c] sm:$0xf]
      %v1468 = vld [vmem:[%s1455 + $0x30] sm:$0xf]
      %v1469 = vld [vmem:[%s1455 + $0x34] sm:$0xf]
      %v1470 = vld [vmem:[%s1455 + $0x38] sm:$0xf]
      %v1471 = vld [vmem:[%s1455 + $0x3c] sm:$0xf]
      %vm1482 = vcmask 1046528
      %v1483 = vrot.slane %v1021, 1
      %v1484 = vrot.slane %v1022, 1
      %v1485 = vsel %vm1482, %v1483, %v1484
      %v1486 = vrot.slane %v1023, 1
      %v1487 = vsel %vm1482, %v1484, %v1486
      %v1488 = vrot.slane %v1024, 1
      %v1489 = vsel %vm1482, %v1486, %v1488
      %v1490 = vrot.slane %v1025, 1
      %v1491 = vsel %vm1482, %v1488, %v1490
      %v1492 = vrot.slane %v1026, 1
      %v1493 = vsel %vm1482, %v1490, %v1492
      %v1494 = vrot.slane %v1027, 1
      %v1495 = vsel %vm1482, %v1492, %v1494
      %v1496 = vrot.slane %v1028, 1
      %v1497 = vsel %vm1482, %v1494, %v1496
      %v1498 = vrot.slane %v1029, 1
      %v1499 = vsel %vm1482, %v1496, %v1498
      %v1500 = vrot.slane 0, 1
      %v1501 = vsel %vm1482, %v1498, %v1500
      %v1527 = vunpack.c.l.b16 %v1456
      %v1528 = vunpack.c.l.b16 %v1457
      %v1529 = vunpack.c.l.b16 %v1458
      %v1530 = vunpack.c.l.b16 %v1459
      %v1531 = vunpack.c.l.b16 %v1460
      %v1532 = vunpack.c.l.b16 %v1461
      %v1533 = vunpack.c.l.b16 %v1462
      %v1534 = vunpack.c.l.b16 %v1463
      %v1535 = vunpack.c.l.b16 %v1464
      %v1536 = vunpack.c.l.b16 %v1465
      %v1537 = vunpack.c.l.b16 %v1466
      %v1538 = vunpack.c.l.b16 %v1467
      %v1539 = vunpack.c.l.b16 %v1468
      %v1540 = vunpack.c.l.b16 %v1469
      %v1541 = vunpack.c.l.b16 %v1470
      %v1542 = vunpack.c.l.b16 %v1471
      %v1543 = vpack.c.b16 %v1528, %v1527
      %v1544 = vpack.c.b16 %v1530, %v1529
      %v1545 = vpack.c.b16 %v1532, %v1531
      %v1546 = vpack.c.b16 %v1534, %v1533
      %v1547 = vpack.c.b16 %v1536, %v1535
      %v1548 = vpack.c.b16 %v1538, %v1537
      %v1549 = vpack.c.b16 %v1540, %v1539
      %v1550 = vpack.c.b16 %v1542, %v1541
      %1559 = vmatprep.subr.bf16.mxu0 0
      %1560 = vmatpush1.bf16.msra.mxu0 %v1543
      %1561 = vmatprep.subr.bf16.mxu0 0
      %1562 = vmatpush1.bf16.msra.mxu0 %v1544
      %1563 = vmatprep.subr.bf16.mxu0 0
      %1564 = vmatpush1.bf16.msra.mxu0 %v1545
      %1565 = vmatprep.subr.bf16.mxu0 0
      %1566 = vmatpush1.bf16.msra.mxu0 %v1546
      %1567 = vmatprep.subr.bf16.mxu0 0
      %1568 = vmatpush1.bf16.msra.mxu0 %v1547
      %1569 = vmatprep.subr.bf16.mxu0 0
      %1570 = vmatpush1.bf16.msra.mxu0 %v1548
      %1571 = vmatprep.subr.bf16.mxu0 0
      %1572 = vmatpush1.bf16.msra.mxu0 %v1549
      %1573 = vmatprep.subr.bf16.mxu0 0
      %1574 = vmatpush1.bf16.msra.mxu0 %v1550
      %1575 = vmatprep.subr.bf16.mxu0 0
      %1576 = vmatpush1.bf16.msra.mxu0 0
      %1577 = vmatprep.subr.bf16.mxu0 0
      %1578 = vmatpush1.bf16.msra.mxu0 0
      %1579 = vmatprep.subr.bf16.mxu0 0
      %1580 = vmatpush1.bf16.msra.mxu0 0
      %1581 = vmatprep.subr.bf16.mxu0 0
      %1582 = vmatpush1.bf16.msra.mxu0 0
      %1583 = vmatprep.subr.bf16.mxu0 0
      %1584 = vmatpush1.bf16.msra.mxu0 0
      %1585 = vmatprep.subr.bf16.mxu0 0
      %1586 = vmatpush1.bf16.msra.mxu0 0
      %1587 = vmatprep.subr.bf16.mxu0 0
      %1588 = vmatpush1.bf16.msra.mxu0 0
      %1589 = vmatprep.subr.bf16.mxu0 0
      %1590 = vmatpush1.bf16.msra.mxu0 0
      %1591 = vmatprep.mubr.bf16.mxu0 0
      %1592 = vmatmul.mubr.bf16.gmra.mrb[0].mxu0 %v1485
      %v1593 = vpop.f32.mrb[0].mxu0
      %v1594 = vadd.f32 0.0, %v1593
      %v1595 = vpop.f32.mrb[0].mxu0
      %v1596 = vpop.f32.mrb[0].mxu0
      %v1597 = vadd.f32 0.0, %v1596
      %v1598 = vpop.f32.mrb[0].mxu0
      %1599 = vmatprep.mubr.bf16.mxu0 0
      %1600 = vmatmul.mubr.bf16.gmra.mrb[0].mxu0 %v1487
      %v1601 = vpop.f32.mrb[0].mxu0
      %v1602 = vadd.f32 0.0, %v1601
      %v1603 = vpop.f32.mrb[0].mxu0
      %v1604 = vpop.f32.mrb[0].mxu0
      %v1605 = vadd.f32 0.0, %v1604
      %v1606 = vpop.f32.mrb[0].mxu0
      %1607 = vmatprep.mubr.bf16.mxu0 0
      %1608 = vmatmul.mubr.bf16.gmra.mrb[0].mxu0 %v1489
      %v1609 = vpop.f32.mrb[0].mxu0
      %v1610 = vadd.f32 0.0, %v1609
      %v1611 = vpop.f32.mrb[0].mxu0
      %v1612 = vpop.f32.mrb[0].mxu0
      %v1613 = vadd.f32 0.0, %v1612
      %v1614 = vpop.f32.mrb[0].mxu0
      %1615 = vmatprep.mubr.bf16.mxu0 0
      %1616 = vmatmul.mubr.bf16.gmra.mrb[0].mxu0 %v1491
      %v1617 = vpop.f32.mrb[0].mxu0
      %v1618 = vadd.f32 0.0, %v1617
      %v1619 = vpop.f32.mrb[0].mxu0
      %v1620 = vpop.f32.mrb[0].mxu0
      %v1621 = vadd.f32 0.0, %v1620
      %v1622 = vpop.f32.mrb[0].mxu0
      %1623 = vmatprep.mubr.bf16.mxu0 0
      %1624 = vmatmul.mubr.bf16.gmra.mrb[0].mxu0 %v1493
      %v1625 = vpop.f32.mrb[0].mxu0
      %v1626 = vadd.f32 0.0, %v1625
      %v1627 = vpop.f32.mrb[0].mxu0
      %v1628 = vpop.f32.mrb[0].mxu0
      %v1629 = vadd.f32 0.0, %v1628
      %v1630 = vpop.f32.mrb[0].mxu0
      %1631 = vmatprep.mubr.bf16.mxu0 0
      %1632 = vmatmul.mubr.bf16.gmra.mrb[0].mxu0 %v1495
      %v1633 = vpop.f32.mrb[0].mxu0
      %v1634 = vadd.f32 0.0, %v1633
      %v1635 = vpop.f32.mrb[0].mxu0
      %v1636 = vpop.f32.mrb[0].mxu0
      %v1637 = vadd.f32 0.0, %v1636
      %v1638 = vpop.f32.mrb[0].mxu0
      %1639 = vmatprep.mubr.bf16.mxu0 0
      %1640 = vmatmul.mubr.bf16.gmra.mrb[0].mxu0 %v1497
      %v1641 = vpop.f32.mrb[0].mxu0
      %v1642 = vadd.f32 0.0, %v1641
      %v1643 = vpop.f32.mrb[0].mxu0
      %v1644 = vpop.f32.mrb[0].mxu0
      %v1645 = vadd.f32 0.0, %v1644
      %v1646 = vpop.f32.mrb[0].mxu0
      %1647 = vmatprep.mubr.bf16.mxu0 0
      %1648 = vmatmul.mubr.bf16.gmra.mrb[0].mxu0 %v1499
      %v1649 = vpop.f32.mrb[0].mxu0
      %v1650 = vadd.f32 0.0, %v1649
      %v1651 = vpop.f32.mrb[0].mxu0
      %v1652 = vpop.f32.mrb[0].mxu0
      %v1653 = vadd.f32 0.0, %v1652
      %v1654 = vpop.f32.mrb[0].mxu0
      %1655 = vmatprep.mubr.bf16.mxu0 0
      %1656 = vmatmul.mubr.bf16.gmra.mrb[0].mxu0 %v1501
      %v1657 = vpop.f32.mrb[0].mxu0
      %v1658 = vadd.f32 0.0, %v1657
      %v1659 = vpop.f32.mrb[0].mxu0
      %v1660 = vpop.f32.mrb[0].mxu0
      %v1661 = vadd.f32 0.0, %v1660
      %v1662 = vpop.f32.mrb[0].mxu0
      %1663 = vdwg.mxu0
      %v1664 = vadd.f32 %v1385, %v1594
      %v1665 = vadd.f32 %v1388, %v1597
      %v1666 = vadd.f32 %v1393, %v1602
      %v1667 = vadd.f32 %v1396, %v1605
      %v1668 = vadd.f32 %v1401, %v1610
      %v1669 = vadd.f32 %v1404, %v1613
      %v1670 = vadd.f32 %v1409, %v1618
      %v1671 = vadd.f32 %v1412, %v1621
      %v1672 = vadd.f32 %v1417, %v1626
      %v1673 = vadd.f32 %v1420, %v1629
      %v1674 = vadd.f32 %v1425, %v1634
      %v1675 = vadd.f32 %v1428, %v1637
      %v1676 = vadd.f32 %v1433, %v1642
      %v1677 = vadd.f32 %v1436, %v1645
      %v1678 = vadd.f32 %v1441, %v1650
      %v1679 = vadd.f32 %v1444, %v1653
      %v1680 = vadd.f32 %v1449, %v1658
      %v1681 = vadd.f32 %v1452, %v1661
      %s1682 = scalar_lea.vmem %s3, 192
      %v1683 = vld [vmem:[%s1682] sm:$0xf]
      %v1684 = vld [vmem:[%s1682 + $0x4] sm:$0xf]
      %v1685 = vld [vmem:[%s1682 + $0x8] sm:$0xf]
      %v1686 = vld [vmem:[%s1682 + $0xc] sm:$0xf]
      %v1687 = vld [vmem:[%s1682 + $0x10] sm:$0xf]
      %v1688 = vld [vmem:[%s1682 + $0x14] sm:$0xf]
      %v1689 = vld [vmem:[%s1682 + $0x18] sm:$0xf]
      %v1690 = vld [vmem:[%s1682 + $0x1c] sm:$0xf]
      %v1691 = vld [vmem:[%s1682 + $0x20] sm:$0xf]
      %v1692 = vld [vmem:[%s1682 + $0x24] sm:$0xf]
      %v1693 = vld [vmem:[%s1682 + $0x28] sm:$0xf]
      %v1694 = vld [vmem:[%s1682 + $0x2c] sm:$0xf]
      %v1695 = vld [vmem:[%s1682 + $0x30] sm:$0xf]
      %v1696 = vld [vmem:[%s1682 + $0x34] sm:$0xf]
      %v1697 = vld [vmem:[%s1682 + $0x38] sm:$0xf]
      %v1698 = vld [vmem:[%s1682 + $0x3c] sm:$0xf]
      %vm1699 = vcmask 1041408
      %v1700 = vrot.slane %v1021, 6
      %v1701 = vrot.slane %v1022, 6
      %v1702 = vsel %vm1699, %v1700, %v1701
      %v1703 = vrot.slane %v1023, 6
      %v1704 = vsel %vm1699, %v1701, %v1703
      %v1705 = vrot.slane %v1024, 6
      %v1706 = vsel %vm1699, %v1703, %v1705
      %v1707 = vrot.slane %v1025, 6
      %v1708 = vsel %vm1699, %v1705, %v1707
      %v1709 = vrot.slane %v1026, 6
      %v1710 = vsel %vm1699, %v1707, %v1709
      %v1711 = vrot.slane %v1027, 6
      %v1712 = vsel %vm1699, %v1709, %v1711
      %v1713 = vrot.slane %v1028, 6
      %v1714 = vsel %vm1699, %v1711, %v1713
      %v1715 = vrot.slane %v1029, 6
      %v1716 = vsel %vm1699, %v1713, %v1715
      %v1717 = vrot.slane 0, 6
      %v1718 = vsel %vm1699, %v1715, %v1717
      %v1744 = vunpack.c.l.b16 %v1683
      %v1745 = vunpack.c.l.b16 %v1684
      %v1746 = vunpack.c.l.b16 %v1685
      %v1747 = vunpack.c.l.b16 %v1686
      %v1748 = vunpack.c.l.b16 %v1687
      %v1749 = vunpack.c.l.b16 %v1688
      %v1750 = vunpack.c.l.b16 %v1689
      %v1751 = vunpack.c.l.b16 %v1690
      %v1752 = vunpack.c.l.b16 %v1691
      %v1753 = vunpack.c.l.b16 %v1692
      %v1754 = vunpack.c.l.b16 %v1693
      %v1755 = vunpack.c.l.b16 %v1694
      %v1756 = vunpack.c.l.b16 %v1695
      %v1757 = vunpack.c.l.b16 %v1696
      %v1758 = vunpack.c.l.b16 %v1697
      %v1759 = vunpack.c.l.b16 %v1698
      %v1760 = vpack.c.b16 %v1745, %v1744
      %v1761 = vpack.c.b16 %v1747, %v1746
      %v1762 = vpack.c.b16 %v1749, %v1748
      %v1763 = vpack.c.b16 %v1751, %v1750
      %v1764 = vpack.c.b16 %v1753, %v1752
      %v1765 = vpack.c.b16 %v1755, %v1754
      %v1766 = vpack.c.b16 %v1757, %v1756
      %v1767 = vpack.c.b16 %v1759, %v1758
      %1776 = vmatprep.subr.bf16.mxu0 0
      %1777 = vmatpush1.bf16.msra.mxu0 %v1760
      %1778 = vmatprep.subr.bf16.mxu0 0
      %1779 = vmatpush1.bf16.msra.mxu0 %v1761
      %1780 = vmatprep.subr.bf16.mxu0 0
      %1781 = vmatpush1.bf16.msra.mxu0 %v1762
      %1782 = vmatprep.subr.bf16.mxu0 0
      %1783 = vmatpush1.bf16.msra.mxu0 %v1763
      %1784 = vmatprep.subr.bf16.mxu0 0
      %1785 = vmatpush1.bf16.msra.mxu0 %v1764
      %1786 = vmatprep.subr.bf16.mxu0 0
      %1787 = vmatpush1.bf16.msra.mxu0 %v1765
      %1788 = vmatprep.subr.bf16.mxu0 0
      %1789 = vmatpush1.bf16.msra.mxu0 %v1766
      %1790 = vmatprep.subr.bf16.mxu0 0
      %1791 = vmatpush1.bf16.msra.mxu0 %v1767
      %1792 = vmatprep.subr.bf16.mxu0 0
      %1793 = vmatpush1.bf16.msra.mxu0 0
      %1794 = vmatprep.subr.bf16.mxu0 0
      %1795 = vmatpush1.bf16.msra.mxu0 0
      %1796 = vmatprep.subr.bf16.mxu0 0
      %1797 = vmatpush1.bf16.msra.mxu0 0
      %1798 = vmatprep.subr.bf16.mxu0 0
      %1799 = vmatpush1.bf16.msra.mxu0 0
      %1800 = vmatprep.subr.bf16.mxu0 0
      %1801 = vmatpush1.bf16.msra.mxu0 0
      %1802 = vmatprep.subr.bf16.mxu0 0
      %1803 = vmatpush1.bf16.msra.mxu0 0
      %1804 = vmatprep.subr.bf16.mxu0 0
      %1805 = vmatpush1.bf16.msra.mxu0 0
      %1806 = vmatprep.subr.bf16.mxu0 0
      %1807 = vmatpush1.bf16.msra.mxu0 0
      %1808 = vmatprep.mubr.bf16.mxu0 0
      %1809 = vmatmul.mubr.bf16.gmra.mrb[0].mxu0 %v1702
      %v1810 = vpop.f32.mrb[0].mxu0
      %v1811 = vadd.f32 0.0, %v1810
      %v1812 = vpop.f32.mrb[0].mxu0
      %v1813 = vpop.f32.mrb[0].mxu0
      %v1814 = vadd.f32 0.0, %v1813
      %v1815 = vpop.f32.mrb[0].mxu0
      %1816 = vmatprep.mubr.bf16.mxu0 0
      %1817 = vmatmul.mubr.bf16.gmra.mrb[0].mxu0 %v1704
      %v1818 = vpop.f32.mrb[0].mxu0
      %v1819 = vadd.f32 0.0, %v1818
      %v1820 = vpop.f32.mrb[0].mxu0
      %v1821 = vpop.f32.mrb[0].mxu0
      %v1822 = vadd.f32 0.0, %v1821
      %v1823 = vpop.f32.mrb[0].mxu0
      %1824 = vmatprep.mubr.bf16.mxu0 0
      %1825 = vmatmul.mubr.bf16.gmra.mrb[0].mxu0 %v1706
      %v1826 = vpop.f32.mrb[0].mxu0
      %v1827 = vadd.f32 0.0, %v1826
      %v1828 = vpop.f32.mrb[0].mxu0
      %v1829 = vpop.f32.mrb[0].mxu0
      %v1830 = vadd.f32 0.0, %v1829
      %v1831 = vpop.f32.mrb[0].mxu0
      %1832 = vmatprep.mubr.bf16.mxu0 0
      %1833 = vmatmul.mubr.bf16.gmra.mrb[0].mxu0 %v1708
      %v1834 = vpop.f32.mrb[0].mxu0
      %v1835 = vadd.f32 0.0, %v1834
      %v1836 = vpop.f32.mrb[0].mxu0
      %v1837 = vpop.f32.mrb[0].mxu0
      %v1838 = vadd.f32 0.0, %v1837
      %v1839 = vpop.f32.mrb[0].mxu0
      %1840 = vmatprep.mubr.bf16.mxu0 0
      %1841 = vmatmul.mubr.bf16.gmra.mrb[0].mxu0 %v1710
      %v1842 = vpop.f32.mrb[0].mxu0
      %v1843 = vadd.f32 0.0, %v1842
      %v1844 = vpop.f32.mrb[0].mxu0
      %v1845 = vpop.f32.mrb[0].mxu0
      %v1846 = vadd.f32 0.0, %v1845
      %v1847 = vpop.f32.mrb[0].mxu0
      %1848 = vmatprep.mubr.bf16.mxu0 0
      %1849 = vmatmul.mubr.bf16.gmra.mrb[0].mxu0 %v1712
      %v1850 = vpop.f32.mrb[0].mxu0
      %v1851 = vadd.f32 0.0, %v1850
      %v1852 = vpop.f32.mrb[0].mxu0
      %v1853 = vpop.f32.mrb[0].mxu0
      %v1854 = vadd.f32 0.0, %v1853
      %v1855 = vpop.f32.mrb[0].mxu0
      %1856 = vmatprep.mubr.bf16.mxu0 0
      %1857 = vmatmul.mubr.bf16.gmra.mrb[0].mxu0 %v1714
      %v1858 = vpop.f32.mrb[0].mxu0
      %v1859 = vadd.f32 0.0, %v1858
      %v1860 = vpop.f32.mrb[0].mxu0
      %v1861 = vpop.f32.mrb[0].mxu0
      %v1862 = vadd.f32 0.0, %v1861
      %v1863 = vpop.f32.mrb[0].mxu0
      %1864 = vmatprep.mubr.bf16.mxu0 0
      %1865 = vmatmul.mubr.bf16.gmra.mrb[0].mxu0 %v1716
      %v1866 = vpop.f32.mrb[0].mxu0
      %v1867 = vadd.f32 0.0, %v1866
      %v1868 = vpop.f32.mrb[0].mxu0
      %v1869 = vpop.f32.mrb[0].mxu0
      %v1870 = vadd.f32 0.0, %v1869
      %v1871 = vpop.f32.mrb[0].mxu0
      %1872 = vmatprep.mubr.bf16.mxu0 0
      %1873 = vmatmul.mubr.bf16.gmra.mrb[0].mxu0 %v1718
      %v1874 = vpop.f32.mrb[0].mxu0
      %v1875 = vadd.f32 0.0, %v1874
      %v1876 = vpop.f32.mrb[0].mxu0
      %v1877 = vpop.f32.mrb[0].mxu0
      %v1878 = vadd.f32 0.0, %v1877
      %v1879 = vpop.f32.mrb[0].mxu0
      %1880 = vdwg.mxu0
      %v1881 = vadd.f32 %v1664, %v1811
      %v1882 = vadd.f32 %v1665, %v1814
      %v1883 = vadd.f32 %v1666, %v1819
      %v1884 = vadd.f32 %v1667, %v1822
      %v1885 = vadd.f32 %v1668, %v1827
      %v1886 = vadd.f32 %v1669, %v1830
      %v1887 = vadd.f32 %v1670, %v1835
      %v1888 = vadd.f32 %v1671, %v1838
      %v1889 = vadd.f32 %v1672, %v1843
      %v1890 = vadd.f32 %v1673, %v1846
      %v1891 = vadd.f32 %v1674, %v1851
      %v1892 = vadd.f32 %v1675, %v1854
      %v1893 = vadd.f32 %v1676, %v1859
      %v1894 = vadd.f32 %v1677, %v1862
      %v1895 = vadd.f32 %v1678, %v1867
      %v1896 = vadd.f32 %v1679, %v1870
      %v1897 = vadd.f32 %v1680, %v1875
      %v1898 = vadd.f32 %v1681, %v1878
      %s1899 = scalar_lea.vmem %s3, 256
      %v1900 = vld [vmem:[%s1899] sm:$0xf]
      %v1901 = vld [vmem:[%s1899 + $0x4] sm:$0xf]
      %v1902 = vld [vmem:[%s1899 + $0x8] sm:$0xf]
      %v1903 = vld [vmem:[%s1899 + $0xc] sm:$0xf]
      %v1904 = vld [vmem:[%s1899 + $0x10] sm:$0xf]
      %v1905 = vld [vmem:[%s1899 + $0x14] sm:$0xf]
      %v1906 = vld [vmem:[%s1899 + $0x18] sm:$0xf]
      %v1907 = vld [vmem:[%s1899 + $0x1c] sm:$0xf]
      %v1908 = vld [vmem:[%s1899 + $0x20] sm:$0xf]
      %v1909 = vld [vmem:[%s1899 + $0x24] sm:$0xf]
      %v1910 = vld [vmem:[%s1899 + $0x28] sm:$0xf]
      %v1911 = vld [vmem:[%s1899 + $0x2c] sm:$0xf]
      %v1912 = vld [vmem:[%s1899 + $0x30] sm:$0xf]
      %v1913 = vld [vmem:[%s1899 + $0x34] sm:$0xf]
      %v1914 = vld [vmem:[%s1899 + $0x38] sm:$0xf]
      %v1915 = vld [vmem:[%s1899 + $0x3c] sm:$0xf]
      %vm1916 = vsmask.f32 1280
      %v1917 = vrot.slane %v1065, 6
      %v1918 = vrot.slane %v1067, 7
      %v1919 = vor.u32 %v1917, %v1918
      %v1920 = vrot.slane %v1076, 6
      %v1921 = vrot.slane %v1072, 7
      %v1922 = vor.u32 %v1920, %v1921
      %v1923 = vsel %vm1916, %v1919, %v1922
      %v1924 = vrot.slane %v1084, 6
      %v1925 = vrot.slane %v1080, 7
      %v1926 = vor.u32 %v1924, %v1925
      %v1927 = vsel %vm1916, %v1922, %v1926
      %v1928 = vrot.slane %v1092, 6
      %v1929 = vrot.slane %v1088, 7
      %v1930 = vor.u32 %v1928, %v1929
      %v1931 = vsel %vm1916, %v1926, %v1930
      %v1932 = vrot.slane %v1100, 6
      %v1933 = vrot.slane %v1096, 7
      %v1934 = vor.u32 %v1932, %v1933
      %v1935 = vsel %vm1916, %v1930, %v1934
      %v1936 = vrot.slane %v1108, 6
      %v1937 = vrot.slane %v1104, 7
      %v1938 = vor.u32 %v1936, %v1937
      %v1939 = vsel %vm1916, %v1934, %v1938
      %v1940 = vrot.slane %v1116, 6
      %v1941 = vrot.slane %v1112, 7
      %v1942 = vor.u32 %v1940, %v1941
      %v1943 = vsel %vm1916, %v1938, %v1942
      %v1944 = vrot.slane %v1124, 6
      %v1945 = vrot.slane %v1120, 7
      %v1946 = vor.u32 %v1944, %v1945
      %v1947 = vsel %vm1916, %v1942, %v1946
      %v1948 = vrot.slane %v1132, 6
      %v1949 = vrot.slane %v1128, 7
      %v1950 = vor.u32 %v1948, %v1949
      %v1951 = vsel %vm1916, %v1946, %v1950
      %v1952 = vshrl.u32 0, 16
      %v1954 = vrot.slane %v1952, 6
      %v1955 = vrot.slane %v1136, 7
      %v1956 = vor.u32 %v1954, %v1955
      %v1957 = vsel %vm1916, %v1950, %v1956
      %v1983 = vunpack.c.l.b16 %v1900
      %v1984 = vunpack.c.l.b16 %v1901
      %v1985 = vunpack.c.l.b16 %v1902
      %v1986 = vunpack.c.l.b16 %v1903
      %v1987 = vunpack.c.l.b16 %v1904
      %v1988 = vunpack.c.l.b16 %v1905
      %v1989 = vunpack.c.l.b16 %v1906
      %v1990 = vunpack.c.l.b16 %v1907
      %v1991 = vunpack.c.l.b16 %v1908
      %v1992 = vunpack.c.l.b16 %v1909
      %v1993 = vunpack.c.l.b16 %v1910
      %v1994 = vunpack.c.l.b16 %v1911
      %v1995 = vunpack.c.l.b16 %v1912
      %v1996 = vunpack.c.l.b16 %v1913
      %v1997 = vunpack.c.l.b16 %v1914
      %v1998 = vunpack.c.l.b16 %v1915
      %v1999 = vpack.c.b16 %v1984, %v1983
      %v2000 = vpack.c.b16 %v1986, %v1985
      %v2001 = vpack.c.b16 %v1988, %v1987
      %v2002 = vpack.c.b16 %v1990, %v1989
      %v2003 = vpack.c.b16 %v1992, %v1991
      %v2004 = vpack.c.b16 %v1994, %v1993
      %v2005 = vpack.c.b16 %v1996, %v1995
      %v2006 = vpack.c.b16 %v1998, %v1997
      %2015 = vmatprep.subr.bf16.mxu0 0
      %2016 = vmatpush1.bf16.msra.mxu0 %v1999
      %2017 = vmatprep.subr.bf16.mxu0 0
      %2018 = vmatpush1.bf16.msra.mxu0 %v2000
      %2019 = vmatprep.subr.bf16.mxu0 0
      %2020 = vmatpush1.bf16.msra.mxu0 %v2001
      %2021 = vmatprep.subr.bf16.mxu0 0
      %2022 = vmatpush1.bf16.msra.mxu0 %v2002
      %2023 = vmatprep.subr.bf16.mxu0 0
      %2024 = vmatpush1.bf16.msra.mxu0 %v2003
      %2025 = vmatprep.subr.bf16.mxu0 0
      %2026 = vmatpush1.bf16.msra.mxu0 %v2004
      %2027 = vmatprep.subr.bf16.mxu0 0
      %2028 = vmatpush1.bf16.msra.mxu0 %v2005
      %2029 = vmatprep.subr.bf16.mxu0 0
      %2030 = vmatpush1.bf16.msra.mxu0 %v2006
      %2031 = vmatprep.subr.bf16.mxu0 0
      %2032 = vmatpush1.bf16.msra.mxu0 0
      %2033 = vmatprep.subr.bf16.mxu0 0
      %2034 = vmatpush1.bf16.msra.mxu0 0
      %2035 = vmatprep.subr.bf16.mxu0 0
      %2036 = vmatpush1.bf16.msra.mxu0 0
      %2037 = vmatprep.subr.bf16.mxu0 0
      %2038 = vmatpush1.bf16.msra.mxu0 0
      %2039 = vmatprep.subr.bf16.mxu0 0
      %2040 = vmatpush1.bf16.msra.mxu0 0
      %2041 = vmatprep.subr.bf16.mxu0 0
      %2042 = vmatpush1.bf16.msra.mxu0 0
      %2043 = vmatprep.subr.bf16.mxu0 0
      %2044 = vmatpush1.bf16.msra.mxu0 0
      %2045 = vmatprep.subr.bf16.mxu0 0
      %2046 = vmatpush1.bf16.msra.mxu0 0
      %2047 = vmatprep.mubr.bf16.mxu0 0
      %2048 = vmatmul.mubr.bf16.gmra.mrb[0].mxu0 %v1923
      %v2049 = vpop.f32.mrb[0].mxu0
      %v2050 = vadd.f32 0.0, %v2049
      %v2051 = vpop.f32.mrb[0].mxu0
      %v2052 = vpop.f32.mrb[0].mxu0
      %v2053 = vadd.f32 0.0, %v2052
      %v2054 = vpop.f32.mrb[0].mxu0
      %2055 = vmatprep.mubr.bf16.mxu0 0
      %2056 = vmatmul.mubr.bf16.gmra.mrb[0].mxu0 %v1927
      %v2057 = vpop.f32.mrb[0].mxu0
      %v2058 = vadd.f32 0.0, %v2057
      %v2059 = vpop.f32.mrb[0].mxu0
      %v2060 = vpop.f32.mrb[0].mxu0
      %v2061 = vadd.f32 0.0, %v2060
      %v2062 = vpop.f32.mrb[0].mxu0
      %2063 = vmatprep.mubr.bf16.mxu0 0
      %2064 = vmatmul.mubr.bf16.gmra.mrb[0].mxu0 %v1931
      %v2065 = vpop.f32.mrb[0].mxu0
      %v2066 = vadd.f32 0.0, %v2065
      %v2067 = vpop.f32.mrb[0].mxu0
      %v2068 = vpop.f32.mrb[0].mxu0
      %v2069 = vadd.f32 0.0, %v2068
      %v2070 = vpop.f32.mrb[0].mxu0
      %2071 = vmatprep.mubr.bf16.mxu0 0
      %2072 = vmatmul.mubr.bf16.gmra.mrb[0].mxu0 %v1935
      %v2073 = vpop.f32.mrb[0].mxu0
      %v2074 = vadd.f32 0.0, %v2073
      %v2075 = vpop.f32.mrb[0].mxu0
      %v2076 = vpop.f32.mrb[0].mxu0
      %v2077 = vadd.f32 0.0, %v2076
      %v2078 = vpop.f32.mrb[0].mxu0
      %2079 = vmatprep.mubr.bf16.mxu0 0
      %2080 = vmatmul.mubr.bf16.gmra.mrb[0].mxu0 %v1939
      %v2081 = vpop.f32.mrb[0].mxu0
      %v2082 = vadd.f32 0.0, %v2081
      %v2083 = vpop.f32.mrb[0].mxu0
      %v2084 = vpop.f32.mrb[0].mxu0
      %v2085 = vadd.f32 0.0, %v2084
      %v2086 = vpop.f32.mrb[0].mxu0
      %2087 = vmatprep.mubr.bf16.mxu0 0
      %2088 = vmatmul.mubr.bf16.gmra.mrb[0].mxu0 %v1943
      %v2089 = vpop.f32.mrb[0].mxu0
      %v2090 = vadd.f32 0.0, %v2089
      %v2091 = vpop.f32.mrb[0].mxu0
      %v2092 = vpop.f32.mrb[0].mxu0
      %v2093 = vadd.f32 0.0, %v2092
      %v2094 = vpop.f32.mrb[0].mxu0
      %2095 = vmatprep.mubr.bf16.mxu0 0
      %2096 = vmatmul.mubr.bf16.gmra.mrb[0].mxu0 %v1947
      %v2097 = vpop.f32.mrb[0].mxu0
      %v2098 = vadd.f32 0.0, %v2097
      %v2099 = vpop.f32.mrb[0].mxu0
      %v2100 = vpop.f32.mrb[0].mxu0
      %v2101 = vadd.f32 0.0, %v2100
      %v2102 = vpop.f32.mrb[0].mxu0
      %2103 = vmatprep.mubr.bf16.mxu0 0
      %2104 = vmatmul.mubr.bf16.gmra.mrb[0].mxu0 %v1951
      %v2105 = vpop.f32.mrb[0].mxu0
      %v2106 = vadd.f32 0.0, %v2105
      %v2107 = vpop.f32.mrb[0].mxu0
      %v2108 = vpop.f32.mrb[0].mxu0
      %v2109 = vadd.f32 0.0, %v2108
      %v2110 = vpop.f32.mrb[0].mxu0
      %2111 = vmatprep.mubr.bf16.mxu0 0
      %2112 = vmatmul.mubr.bf16.gmra.mrb[0].mxu0 %v1957
      %v2113 = vpop.f32.mrb[0].mxu0
      %v2114 = vadd.f32 0.0, %v2113
      %v2115 = vpop.f32.mrb[0].mxu0
      %v2116 = vpop.f32.mrb[0].mxu0
      %v2117 = vadd.f32 0.0, %v2116
      %v2118 = vpop.f32.mrb[0].mxu0
      %2119 = vdwg.mxu0
      %v2120 = vadd.f32 %v1881, %v2050
      %v2121 = vadd.f32 %v1882, %v2053
      %v2122 = vadd.f32 %v1883, %v2058
      %v2123 = vadd.f32 %v1884, %v2061
      %v2124 = vadd.f32 %v1885, %v2066
      %v2125 = vadd.f32 %v1886, %v2069
      %v2126 = vadd.f32 %v1887, %v2074
      %v2127 = vadd.f32 %v1888, %v2077
      %v2128 = vadd.f32 %v1889, %v2082
      %v2129 = vadd.f32 %v1890, %v2085
      %v2130 = vadd.f32 %v1891, %v2090
      %v2131 = vadd.f32 %v1892, %v2093
      %v2132 = vadd.f32 %v1893, %v2098
      %v2133 = vadd.f32 %v1894, %v2101
      %v2134 = vadd.f32 %v1895, %v2106
      %v2135 = vadd.f32 %v1896, %v2109
      %v2136 = vadd.f32 %v1897, %v2114
      %v2137 = vadd.f32 %v1898, %v2117
      %s2138 = scalar_lea.vmem %s3, 320
      %v2139 = vld [vmem:[%s2138] sm:$0xf]
      %v2140 = vld [vmem:[%s2138 + $0x4] sm:$0xf]
      %v2141 = vld [vmem:[%s2138 + $0x8] sm:$0xf]
      %v2142 = vld [vmem:[%s2138 + $0xc] sm:$0xf]
      %v2143 = vld [vmem:[%s2138 + $0x10] sm:$0xf]
      %v2144 = vld [vmem:[%s2138 + $0x14] sm:$0xf]
      %v2145 = vld [vmem:[%s2138 + $0x18] sm:$0xf]
      %v2146 = vld [vmem:[%s2138 + $0x1c] sm:$0xf]
      %v2147 = vld [vmem:[%s2138 + $0x20] sm:$0xf]
      %v2148 = vld [vmem:[%s2138 + $0x24] sm:$0xf]
      %v2149 = vld [vmem:[%s2138 + $0x28] sm:$0xf]
      %v2150 = vld [vmem:[%s2138 + $0x2c] sm:$0xf]
      %v2151 = vld [vmem:[%s2138 + $0x30] sm:$0xf]
      %v2152 = vld [vmem:[%s2138 + $0x34] sm:$0xf]
      %v2153 = vld [vmem:[%s2138 + $0x38] sm:$0xf]
      %v2154 = vld [vmem:[%s2138 + $0x3c] sm:$0xf]
      %vm2155 = vcmask 1040384
      %v2156 = vrot.slane %v1021, 7
      %v2157 = vrot.slane %v1022, 7
      %v2158 = vsel %vm2155, %v2156, %v2157
      %v2159 = vrot.slane %v1023, 7
      %v2160 = vsel %vm2155, %v2157, %v2159
      %v2161 = vrot.slane %v1024, 7
      %v2162 = vsel %vm2155, %v2159, %v2161
      %v2163 = vrot.slane %v1025, 7
      %v2164 = vsel %vm2155, %v2161, %v2163
      %v2165 = vrot.slane %v1026, 7
      %v2166 = vsel %vm2155, %v2163, %v2165
      %v2167 = vrot.slane %v1027, 7
      %v2168 = vsel %vm2155, %v2165, %v2167
      %v2169 = vrot.slane %v1028, 7
      %v2170 = vsel %vm2155, %v2167, %v2169
      %v2171 = vrot.slane %v1029, 7
      %v2172 = vsel %vm2155, %v2169, %v2171
      %v2173 = vrot.slane 0, 7
      %v2174 = vsel %vm2155, %v2171, %v2173
      %v2200 = vunpack.c.l.b16 %v2139
      %v2201 = vunpack.c.l.b16 %v2140
      %v2202 = vunpack.c.l.b16 %v2141
      %v2203 = vunpack.c.l.b16 %v2142
      %v2204 = vunpack.c.l.b16 %v2143
      %v2205 = vunpack.c.l.b16 %v2144
      %v2206 = vunpack.c.l.b16 %v2145
      %v2207 = vunpack.c.l.b16 %v2146
      %v2208 = vunpack.c.l.b16 %v2147
      %v2209 = vunpack.c.l.b16 %v2148
      %v2210 = vunpack.c.l.b16 %v2149
      %v2211 = vunpack.c.l.b16 %v2150
      %v2212 = vunpack.c.l.b16 %v2151
      %v2213 = vunpack.c.l.b16 %v2152
      %v2214 = vunpack.c.l.b16 %v2153
      %v2215 = vunpack.c.l.b16 %v2154
      %v2216 = vpack.c.b16 %v2201, %v2200
      %v2217 = vpack.c.b16 %v2203, %v2202
      %v2218 = vpack.c.b16 %v2205, %v2204
      %v2219 = vpack.c.b16 %v2207, %v2206
      %v2220 = vpack.c.b16 %v2209, %v2208
      %v2221 = vpack.c.b16 %v2211, %v2210
      %v2222 = vpack.c.b16 %v2213, %v2212
      %v2223 = vpack.c.b16 %v2215, %v2214
      %2232 = vmatprep.subr.bf16.mxu0 0
      %2233 = vmatpush1.bf16.msra.mxu0 %v2216
      %2234 = vmatprep.subr.bf16.mxu0 0
      %2235 = vmatpush1.bf16.msra.mxu0 %v2217
      %2236 = vmatprep.subr.bf16.mxu0 0
      %2237 = vmatpush1.bf16.msra.mxu0 %v2218
      %2238 = vmatprep.subr.bf16.mxu0 0
      %2239 = vmatpush1.bf16.msra.mxu0 %v2219
      %2240 = vmatprep.subr.bf16.mxu0 0
      %2241 = vmatpush1.bf16.msra.mxu0 %v2220
      %2242 = vmatprep.subr.bf16.mxu0 0
      %2243 = vmatpush1.bf16.msra.mxu0 %v2221
      %2244 = vmatprep.subr.bf16.mxu0 0
      %2245 = vmatpush1.bf16.msra.mxu0 %v2222
      %2246 = vmatprep.subr.bf16.mxu0 0
      %2247 = vmatpush1.bf16.msra.mxu0 %v2223
      %2248 = vmatprep.subr.bf16.mxu0 0
      %2249 = vmatpush1.bf16.msra.mxu0 0
      %2250 = vmatprep.subr.bf16.mxu0 0
      %2251 = vmatpush1.bf16.msra.mxu0 0
      %2252 = vmatprep.subr.bf16.mxu0 0
      %2253 = vmatpush1.bf16.msra.mxu0 0
      %2254 = vmatprep.subr.bf16.mxu0 0
      %2255 = vmatpush1.bf16.msra.mxu0 0
      %2256 = vmatprep.subr.bf16.mxu0 0
      %2257 = vmatpush1.bf16.msra.mxu0 0
      %2258 = vmatprep.subr.bf16.mxu0 0
      %2259 = vmatpush1.bf16.msra.mxu0 0
      %2260 = vmatprep.subr.bf16.mxu0 0
      %2261 = vmatpush1.bf16.msra.mxu0 0
      %2262 = vmatprep.subr.bf16.mxu0 0
      %2263 = vmatpush1.bf16.msra.mxu0 0
      %2264 = vmatprep.mubr.bf16.mxu0 0
      %2265 = vmatmul.mubr.bf16.gmra.mrb[0].mxu0 %v2158
      %v2266 = vpop.f32.mrb[0].mxu0
      %v2267 = vadd.f32 0.0, %v2266
      %v2268 = vpop.f32.mrb[0].mxu0
      %v2269 = vpop.f32.mrb[0].mxu0
      %v2270 = vadd.f32 0.0, %v2269
      %v2271 = vpop.f32.mrb[0].mxu0
      %2272 = vmatprep.mubr.bf16.mxu0 0
      %2273 = vmatmul.mubr.bf16.gmra.mrb[0].mxu0 %v2160
      %v2274 = vpop.f32.mrb[0].mxu0
      %v2275 = vadd.f32 0.0, %v2274
      %v2276 = vpop.f32.mrb[0].mxu0
      %v2277 = vpop.f32.mrb[0].mxu0
      %v2278 = vadd.f32 0.0, %v2277
      %v2279 = vpop.f32.mrb[0].mxu0
      %2280 = vmatprep.mubr.bf16.mxu0 0
      %2281 = vmatmul.mubr.bf16.gmra.mrb[0].mxu0 %v2162
      %v2282 = vpop.f32.mrb[0].mxu0
      %v2283 = vadd.f32 0.0, %v2282
      %v2284 = vpop.f32.mrb[0].mxu0
      %v2285 = vpop.f32.mrb[0].mxu0
      %v2286 = vadd.f32 0.0, %v2285
      %v2287 = vpop.f32.mrb[0].mxu0
      %2288 = vmatprep.mubr.bf16.mxu0 0
      %2289 = vmatmul.mubr.bf16.gmra.mrb[0].mxu0 %v2164
      %v2290 = vpop.f32.mrb[0].mxu0
      %v2291 = vadd.f32 0.0, %v2290
      %v2292 = vpop.f32.mrb[0].mxu0
      %v2293 = vpop.f32.mrb[0].mxu0
      %v2294 = vadd.f32 0.0, %v2293
      %v2295 = vpop.f32.mrb[0].mxu0
      %2296 = vmatprep.mubr.bf16.mxu0 0
      %2297 = vmatmul.mubr.bf16.gmra.mrb[0].mxu0 %v2166
      %v2298 = vpop.f32.mrb[0].mxu0
      %v2299 = vadd.f32 0.0, %v2298
      %v2300 = vpop.f32.mrb[0].mxu0
      %v2301 = vpop.f32.mrb[0].mxu0
      %v2302 = vadd.f32 0.0, %v2301
      %v2303 = vpop.f32.mrb[0].mxu0
      %2304 = vmatprep.mubr.bf16.mxu0 0
      %2305 = vmatmul.mubr.bf16.gmra.mrb[0].mxu0 %v2168
      %v2306 = vpop.f32.mrb[0].mxu0
      %v2307 = vadd.f32 0.0, %v2306
      %v2308 = vpop.f32.mrb[0].mxu0
      %v2309 = vpop.f32.mrb[0].mxu0
      %v2310 = vadd.f32 0.0, %v2309
      %v2311 = vpop.f32.mrb[0].mxu0
      %2312 = vmatprep.mubr.bf16.mxu0 0
      %2313 = vmatmul.mubr.bf16.gmra.mrb[0].mxu0 %v2170
      %v2314 = vpop.f32.mrb[0].mxu0
      %v2315 = vadd.f32 0.0, %v2314
      %v2316 = vpop.f32.mrb[0].mxu0
      %v2317 = vpop.f32.mrb[0].mxu0
      %v2318 = vadd.f32 0.0, %v2317
      %v2319 = vpop.f32.mrb[0].mxu0
      %2320 = vmatprep.mubr.bf16.mxu0 0
      %2321 = vmatmul.mubr.bf16.gmra.mrb[0].mxu0 %v2172
      %v2322 = vpop.f32.mrb[0].mxu0
      %v2323 = vadd.f32 0.0, %v2322
      %v2324 = vpop.f32.mrb[0].mxu0
      %v2325 = vpop.f32.mrb[0].mxu0
      %v2326 = vadd.f32 0.0, %v2325
      %v2327 = vpop.f32.mrb[0].mxu0
      %2328 = vmatprep.mubr.bf16.mxu0 0
      %2329 = vmatmul.mubr.bf16.gmra.mrb[0].mxu0 %v2174
      %v2330 = vpop.f32.mrb[0].mxu0
      %v2331 = vadd.f32 0.0, %v2330
      %v2332 = vpop.f32.mrb[0].mxu0
      %v2333 = vpop.f32.mrb[0].mxu0
      %v2334 = vadd.f32 0.0, %v2333
      %v2335 = vpop.f32.mrb[0].mxu0
      %2336 = vdwg.mxu0
      %v2337 = vadd.f32 %v2120, %v2267
      %v2338 = vadd.f32 %v2121, %v2270
      %v2339 = vadd.f32 %v2122, %v2275
      %v2340 = vadd.f32 %v2123, %v2278
      %v2341 = vadd.f32 %v2124, %v2283
      %v2342 = vadd.f32 %v2125, %v2286
      %v2343 = vadd.f32 %v2126, %v2291
      %v2344 = vadd.f32 %v2127, %v2294
      %v2345 = vadd.f32 %v2128, %v2299
      %v2346 = vadd.f32 %v2129, %v2302
      %v2347 = vadd.f32 %v2130, %v2307
      %v2348 = vadd.f32 %v2131, %v2310
      %v2349 = vadd.f32 %v2132, %v2315
      %v2350 = vadd.f32 %v2133, %v2318
      %v2351 = vadd.f32 %v2134, %v2323
      %v2352 = vadd.f32 %v2135, %v2326
      %v2353 = vadd.f32 %v2136, %v2331
      %v2354 = vadd.f32 %v2137, %v2334
      %s2355 = scalar_lea.vmem %s3, 384
      %v2356 = vld [vmem:[%s2355] sm:$0xf]
      %v2357 = vld [vmem:[%s2355 + $0x4] sm:$0xf]
      %v2358 = vld [vmem:[%s2355 + $0x8] sm:$0xf]
      %v2359 = vld [vmem:[%s2355 + $0xc] sm:$0xf]
      %v2360 = vld [vmem:[%s2355 + $0x10] sm:$0xf]
      %v2361 = vld [vmem:[%s2355 + $0x14] sm:$0xf]
      %v2362 = vld [vmem:[%s2355 + $0x18] sm:$0xf]
      %v2363 = vld [vmem:[%s2355 + $0x1c] sm:$0xf]
      %v2364 = vld [vmem:[%s2355 + $0x20] sm:$0xf]
      %v2365 = vld [vmem:[%s2355 + $0x24] sm:$0xf]
      %v2366 = vld [vmem:[%s2355 + $0x28] sm:$0xf]
      %v2367 = vld [vmem:[%s2355 + $0x2c] sm:$0xf]
      %v2368 = vld [vmem:[%s2355 + $0x30] sm:$0xf]
      %v2369 = vld [vmem:[%s2355 + $0x34] sm:$0xf]
      %v2370 = vld [vmem:[%s2355 + $0x38] sm:$0xf]
      %v2371 = vld [vmem:[%s2355 + $0x3c] sm:$0xf]
      %vm2372 = vcmask 1043456
      %v2373 = vrot.slane %v1022, 4
      %v2374 = vrot.slane %v1023, 4
      %v2375 = vsel %vm2372, %v2373, %v2374
      %v2376 = vrot.slane %v1024, 4
      %v2377 = vsel %vm2372, %v2374, %v2376
      %v2378 = vrot.slane %v1025, 4
      %v2379 = vsel %vm2372, %v2376, %v2378
      %v2380 = vrot.slane %v1026, 4
      %v2381 = vsel %vm2372, %v2378, %v2380
      %v2382 = vrot.slane %v1027, 4
      %v2383 = vsel %vm2372, %v2380, %v2382
      %v2384 = vrot.slane %v1028, 4
      %v2385 = vsel %vm2372, %v2382, %v2384
      %v2386 = vrot.slane %v1029, 4
      %v2387 = vsel %vm2372, %v2384, %v2386
      %v2388 = vrot.slane 0, 4
      %v2389 = vsel %vm2372, %v2386, %v2388
      %v2390 = vsel %vm2372, %v2388, %v2388
      %v2416 = vunpack.c.l.b16 %v2356
      %v2417 = vunpack.c.l.b16 %v2357
      %v2418 = vunpack.c.l.b16 %v2358
      %v2419 = vunpack.c.l.b16 %v2359
      %v2420 = vunpack.c.l.b16 %v2360
      %v2421 = vunpack.c.l.b16 %v2361
      %v2422 = vunpack.c.l.b16 %v2362
      %v2423 = vunpack.c.l.b16 %v2363
      %v2424 = vunpack.c.l.b16 %v2364
      %v2425 = vunpack.c.l.b16 %v2365
      %v2426 = vunpack.c.l.b16 %v2366
      %v2427 = vunpack.c.l.b16 %v2367
      %v2428 = vunpack.c.l.b16 %v2368
      %v2429 = vunpack.c.l.b16 %v2369
      %v2430 = vunpack.c.l.b16 %v2370
      %v2431 = vunpack.c.l.b16 %v2371
      %v2432 = vpack.c.b16 %v2417, %v2416
      %v2433 = vpack.c.b16 %v2419, %v2418
      %v2434 = vpack.c.b16 %v2421, %v2420
      %v2435 = vpack.c.b16 %v2423, %v2422
      %v2436 = vpack.c.b16 %v2425, %v2424
      %v2437 = vpack.c.b16 %v2427, %v2426
      %v2438 = vpack.c.b16 %v2429, %v2428
      %v2439 = vpack.c.b16 %v2431, %v2430
      %2448 = vmatprep.subr.bf16.mxu0 0
      %2449 = vmatpush1.bf16.msra.mxu0 %v2432
      %2450 = vmatprep.subr.bf16.mxu0 0
      %2451 = vmatpush1.bf16.msra.mxu0 %v2433
      %2452 = vmatprep.subr.bf16.mxu0 0
      %2453 = vmatpush1.bf16.msra.mxu0 %v2434
      %2454 = vmatprep.subr.bf16.mxu0 0
      %2455 = vmatpush1.bf16.msra.mxu0 %v2435
      %2456 = vmatprep.subr.bf16.mxu0 0
      %2457 = vmatpush1.bf16.msra.mxu0 %v2436
      %2458 = vmatprep.subr.bf16.mxu0 0
      %2459 = vmatpush1.bf16.msra.mxu0 %v2437
      %2460 = vmatprep.subr.bf16.mxu0 0
      %2461 = vmatpush1.bf16.msra.mxu0 %v2438
      %2462 = vmatprep.subr.bf16.mxu0 0
      %2463 = vmatpush1.bf16.msra.mxu0 %v2439
      %2464 = vmatprep.subr.bf16.mxu0 0
      %2465 = vmatpush1.bf16.msra.mxu0 0
      %2466 = vmatprep.subr.bf16.mxu0 0
      %2467 = vmatpush1.bf16.msra.mxu0 0
      %2468 = vmatprep.subr.bf16.mxu0 0
      %2469 = vmatpush1.bf16.msra.mxu0 0
      %2470 = vmatprep.subr.bf16.mxu0 0
      %2471 = vmatpush1.bf16.msra.mxu0 0
      %2472 = vmatprep.subr.bf16.mxu0 0
      %2473 = vmatpush1.bf16.msra.mxu0 0
      %2474 = vmatprep.subr.bf16.mxu0 0
      %2475 = vmatpush1.bf16.msra.mxu0 0
      %2476 = vmatprep.subr.bf16.mxu0 0
      %2477 = vmatpush1.bf16.msra.mxu0 0
      %2478 = vmatprep.subr.bf16.mxu0 0
      %2479 = vmatpush1.bf16.msra.mxu0 0
      %2480 = vmatprep.mubr.bf16.mxu0 0
      %2481 = vmatmul.mubr.bf16.gmra.mrb[0].mxu0 %v2375
      %v2482 = vpop.f32.mrb[0].mxu0
      %v2483 = vadd.f32 0.0, %v2482
      %v2484 = vpop.f32.mrb[0].mxu0
      %v2485 = vpop.f32.mrb[0].mxu0
      %v2486 = vadd.f32 0.0, %v2485
      %v2487 = vpop.f32.mrb[0].mxu0
      %2488 = vmatprep.mubr.bf16.mxu0 0
      %2489 = vmatmul.mubr.bf16.gmra.mrb[0].mxu0 %v2377
      %v2490 = vpop.f32.mrb[0].mxu0
      %v2491 = vadd.f32 0.0, %v2490
      %v2492 = vpop.f32.mrb[0].mxu0
      %v2493 = vpop.f32.mrb[0].mxu0
      %v2494 = vadd.f32 0.0, %v2493
      %v2495 = vpop.f32.mrb[0].mxu0
      %2496 = vmatprep.mubr.bf16.mxu0 0
      %2497 = vmatmul.mubr.bf16.gmra.mrb[0].mxu0 %v2379
      %v2498 = vpop.f32.mrb[0].mxu0
      %v2499 = vadd.f32 0.0, %v2498
      %v2500 = vpop.f32.mrb[0].mxu0
      %v2501 = vpop.f32.mrb[0].mxu0
      %v2502 = vadd.f32 0.0, %v2501
      %v2503 = vpop.f32.mrb[0].mxu0
      %2504 = vmatprep.mubr.bf16.mxu0 0
      %2505 = vmatmul.mubr.bf16.gmra.mrb[0].mxu0 %v2381
      %v2506 = vpop.f32.mrb[0].mxu0
      %v2507 = vadd.f32 0.0, %v2506
      %v2508 = vpop.f32.mrb[0].mxu0
      %v2509 = vpop.f32.mrb[0].mxu0
      %v2510 = vadd.f32 0.0, %v2509
      %v2511 = vpop.f32.mrb[0].mxu0
      %2512 = vmatprep.mubr.bf16.mxu0 0
      %2513 = vmatmul.mubr.bf16.gmra.mrb[0].mxu0 %v2383
      %v2514 = vpop.f32.mrb[0].mxu0
      %v2515 = vadd.f32 0.0, %v2514
      %v2516 = vpop.f32.mrb[0].mxu0
      %v2517 = vpop.f32.mrb[0].mxu0
      %v2518 = vadd.f32 0.0, %v2517
      %v2519 = vpop.f32.mrb[0].mxu0
      %2520 = vmatprep.mubr.bf16.mxu0 0
      %2521 = vmatmul.mubr.bf16.gmra.mrb[0].mxu0 %v2385
      %v2522 = vpop.f32.mrb[0].mxu0
      %v2523 = vadd.f32 0.0, %v2522
      %v2524 = vpop.f32.mrb[0].mxu0
      %v2525 = vpop.f32.mrb[0].mxu0
      %v2526 = vadd.f32 0.0, %v2525
      %v2527 = vpop.f32.mrb[0].mxu0
      %2528 = vmatprep.mubr.bf16.mxu0 0
      %2529 = vmatmul.mubr.bf16.gmra.mrb[0].mxu0 %v2387
      %v2530 = vpop.f32.mrb[0].mxu0
      %v2531 = vadd.f32 0.0, %v2530
      %v2532 = vpop.f32.mrb[0].mxu0
      %v2533 = vpop.f32.mrb[0].mxu0
      %v2534 = vadd.f32 0.0, %v2533
      %v2535 = vpop.f32.mrb[0].mxu0
      %2536 = vmatprep.mubr.bf16.mxu0 0
      %2537 = vmatmul.mubr.bf16.gmra.mrb[0].mxu0 %v2389
      %v2538 = vpop.f32.mrb[0].mxu0
      %v2539 = vadd.f32 0.0, %v2538
      %v2540 = vpop.f32.mrb[0].mxu0
      %v2541 = vpop.f32.mrb[0].mxu0
      %v2542 = vadd.f32 0.0, %v2541
      %v2543 = vpop.f32.mrb[0].mxu0
      %2544 = vmatprep.mubr.bf16.mxu0 0
      %2545 = vmatmul.mubr.bf16.gmra.mrb[0].mxu0 %v2390
      %v2546 = vpop.f32.mrb[0].mxu0
      %v2547 = vadd.f32 0.0, %v2546
      %v2548 = vpop.f32.mrb[0].mxu0
      %v2549 = vpop.f32.mrb[0].mxu0
      %v2550 = vadd.f32 0.0, %v2549
      %v2551 = vpop.f32.mrb[0].mxu0
      %2552 = vdwg.mxu0
      %v2553 = vadd.f32 %v2337, %v2483
      %v2554 = vadd.f32 %v2338, %v2486
      %v2555 = vadd.f32 %v2339, %v2491
      %v2556 = vadd.f32 %v2340, %v2494
      %v2557 = vadd.f32 %v2341, %v2499
      %v2558 = vadd.f32 %v2342, %v2502
      %v2559 = vadd.f32 %v2343, %v2507
      %v2560 = vadd.f32 %v2344, %v2510
      %v2561 = vadd.f32 %v2345, %v2515
      %v2562 = vadd.f32 %v2346, %v2518
      %v2563 = vadd.f32 %v2347, %v2523
      %v2564 = vadd.f32 %v2348, %v2526
      %v2565 = vadd.f32 %v2349, %v2531
      %v2566 = vadd.f32 %v2350, %v2534
      %v2567 = vadd.f32 %v2351, %v2539
      %v2568 = vadd.f32 %v2352, %v2542
      %v2569 = vadd.f32 %v2353, %v2547
      %v2570 = vadd.f32 %v2354, %v2550
      %s2571 = scalar_lea.vmem %s3, 448
      %v2572 = vld [vmem:[%s2571] sm:$0xf]
      %v2573 = vld [vmem:[%s2571 + $0x4] sm:$0xf]
      %v2574 = vld [vmem:[%s2571 + $0x8] sm:$0xf]
      %v2575 = vld [vmem:[%s2571 + $0xc] sm:$0xf]
      %v2576 = vld [vmem:[%s2571 + $0x10] sm:$0xf]
      %v2577 = vld [vmem:[%s2571 + $0x14] sm:$0xf]
      %v2578 = vld [vmem:[%s2571 + $0x18] sm:$0xf]
      %v2579 = vld [vmem:[%s2571 + $0x1c] sm:$0xf]
      %v2580 = vld [vmem:[%s2571 + $0x20] sm:$0xf]
      %v2581 = vld [vmem:[%s2571 + $0x24] sm:$0xf]
      %v2582 = vld [vmem:[%s2571 + $0x28] sm:$0xf]
      %v2583 = vld [vmem:[%s2571 + $0x2c] sm:$0xf]
      %v2584 = vld [vmem:[%s2571 + $0x30] sm:$0xf]
      %v2585 = vld [vmem:[%s2571 + $0x34] sm:$0xf]
      %v2586 = vld [vmem:[%s2571 + $0x38] sm:$0xf]
      %v2587 = vld [vmem:[%s2571 + $0x3c] sm:$0xf]
      %vm2588 = vsmask.f32 3328
      %v2589 = vrot.slane %v1076, 4
      %v2590 = vrot.slane %v1072, 5
      %v2591 = vor.u32 %v2589, %v2590
      %v2592 = vrot.slane %v1084, 4
      %v2593 = vrot.slane %v1080, 5
      %v2594 = vor.u32 %v2592, %v2593
      %v2595 = vsel %vm2588, %v2591, %v2594
      %v2596 = vrot.slane %v1092, 4
      %v2597 = vrot.slane %v1088, 5
      %v2598 = vor.u32 %v2596, %v2597
      %v2599 = vsel %vm2588, %v2594, %v2598
      %v2600 = vrot.slane %v1100, 4
      %v2601 = vrot.slane %v1096, 5
      %v2602 = vor.u32 %v2600, %v2601
      %v2603 = vsel %vm2588, %v2598, %v2602
      %v2604 = vrot.slane %v1108, 4
      %v2605 = vrot.slane %v1104, 5
      %v2606 = vor.u32 %v2604, %v2605
      %v2607 = vsel %vm2588, %v2602, %v2606
      %v2608 = vrot.slane %v1116, 4
      %v2609 = vrot.slane %v1112, 5
      %v2610 = vor.u32 %v2608, %v2609
      %v2611 = vsel %vm2588, %v2606, %v2610
      %v2612 = vrot.slane %v1124, 4
      %v2613 = vrot.slane %v1120, 5
      %v2614 = vor.u32 %v2612, %v2613
      %v2615 = vsel %vm2588, %v2610, %v2614
      %v2616 = vrot.slane %v1132, 4
      %v2617 = vrot.slane %v1128, 5
      %v2618 = vor.u32 %v2616, %v2617
      %v2619 = vsel %vm2588, %v2614, %v2618
      %v2620 = vrot.slane %v1952, 4
      %v2621 = vrot.slane %v1136, 5
      %v2622 = vor.u32 %v2620, %v2621
      %v2623 = vsel %vm2588, %v2618, %v2622
      %v2624 = vsel %vm2588, %v2622, %v2622
      %v2650 = vunpack.c.l.b16 %v2572
      %v2651 = vunpack.c.l.b16 %v2573
      %v2652 = vunpack.c.l.b16 %v2574
      %v2653 = vunpack.c.l.b16 %v2575
      %v2654 = vunpack.c.l.b16 %v2576
      %v2655 = vunpack.c.l.b16 %v2577
      %v2656 = vunpack.c.l.b16 %v2578
      %v2657 = vunpack.c.l.b16 %v2579
      %v2658 = vunpack.c.l.b16 %v2580
      %v2659 = vunpack.c.l.b16 %v2581
      %v2660 = vunpack.c.l.b16 %v2582
      %v2661 = vunpack.c.l.b16 %v2583
      %v2662 = vunpack.c.l.b16 %v2584
      %v2663 = vunpack.c.l.b16 %v2585
      %v2664 = vunpack.c.l.b16 %v2586
      %v2665 = vunpack.c.l.b16 %v2587
      %v2666 = vpack.c.b16 %v2651, %v2650
      %v2667 = vpack.c.b16 %v2653, %v2652
      %v2668 = vpack.c.b16 %v2655, %v2654
      %v2669 = vpack.c.b16 %v2657, %v2656
      %v2670 = vpack.c.b16 %v2659, %v2658
      %v2671 = vpack.c.b16 %v2661, %v2660
      %v2672 = vpack.c.b16 %v2663, %v2662
      %v2673 = vpack.c.b16 %v2665, %v2664
      %2682 = vmatprep.subr.bf16.mxu0 0
      %2683 = vmatpush1.bf16.msra.mxu0 %v2666
      %2684 = vmatprep.subr.bf16.mxu0 0
      %2685 = vmatpush1.bf16.msra.mxu0 %v2667
      %2686 = vmatprep.subr.bf16.mxu0 0
      %2687 = vmatpush1.bf16.msra.mxu0 %v2668
      %2688 = vmatprep.subr.bf16.mxu0 0
      %2689 = vmatpush1.bf16.msra.mxu0 %v2669
      %2690 = vmatprep.subr.bf16.mxu0 0
      %2691 = vmatpush1.bf16.msra.mxu0 %v2670
      %2692 = vmatprep.subr.bf16.mxu0 0
      %2693 = vmatpush1.bf16.msra.mxu0 %v2671
      %2694 = vmatprep.subr.bf16.mxu0 0
      %2695 = vmatpush1.bf16.msra.mxu0 %v2672
      %2696 = vmatprep.subr.bf16.mxu0 0
      %2697 = vmatpush1.bf16.msra.mxu0 %v2673
      %2698 = vmatprep.subr.bf16.mxu0 0
      %2699 = vmatpush1.bf16.msra.mxu0 0
      %2700 = vmatprep.subr.bf16.mxu0 0
      %2701 = vmatpush1.bf16.msra.mxu0 0
      %2702 = vmatprep.subr.bf16.mxu0 0
      %2703 = vmatpush1.bf16.msra.mxu0 0
      %2704 = vmatprep.subr.bf16.mxu0 0
      %2705 = vmatpush1.bf16.msra.mxu0 0
      %2706 = vmatprep.subr.bf16.mxu0 0
      %2707 = vmatpush1.bf16.msra.mxu0 0
      %2708 = vmatprep.subr.bf16.mxu0 0
      %2709 = vmatpush1.bf16.msra.mxu0 0
      %2710 = vmatprep.subr.bf16.mxu0 0
      %2711 = vmatpush1.bf16.msra.mxu0 0
      %2712 = vmatprep.subr.bf16.mxu0 0
      %2713 = vmatpush1.bf16.msra.mxu0 0
      %2714 = vmatprep.mubr.bf16.mxu0 0
      %2715 = vmatmul.mubr.bf16.gmra.mrb[0].mxu0 %v2595
      %v2716 = vpop.f32.mrb[0].mxu0
      %v2717 = vadd.f32 0.0, %v2716
      %v2718 = vpop.f32.mrb[0].mxu0
      %v2719 = vpop.f32.mrb[0].mxu0
      %v2720 = vadd.f32 0.0, %v2719
      %v2721 = vpop.f32.mrb[0].mxu0
      %2722 = vmatprep.mubr.bf16.mxu0 0
      %2723 = vmatmul.mubr.bf16.gmra.mrb[0].mxu0 %v2599
      %v2724 = vpop.f32.mrb[0].mxu0
      %v2725 = vadd.f32 0.0, %v2724
      %v2726 = vpop.f32.mrb[0].mxu0
      %v2727 = vpop.f32.mrb[0].mxu0
      %v2728 = vadd.f32 0.0, %v2727
      %v2729 = vpop.f32.mrb[0].mxu0
      %2730 = vmatprep.mubr.bf16.mxu0 0
      %2731 = vmatmul.mubr.bf16.gmra.mrb[0].mxu0 %v2603
      %v2732 = vpop.f32.mrb[0].mxu0
      %v2733 = vadd.f32 0.0, %v2732
      %v2734 = vpop.f32.mrb[0].mxu0
      %v2735 = vpop.f32.mrb[0].mxu0
      %v2736 = vadd.f32 0.0, %v2735
      %v2737 = vpop.f32.mrb[0].mxu0
      %2738 = vmatprep.mubr.bf16.mxu0 0
      %2739 = vmatmul.mubr.bf16.gmra.mrb[0].mxu0 %v2607
      %v2740 = vpop.f32.mrb[0].mxu0
      %v2741 = vadd.f32 0.0, %v2740
      %v2742 = vpop.f32.mrb[0].mxu0
      %v2743 = vpop.f32.mrb[0].mxu0
      %v2744 = vadd.f32 0.0, %v2743
      %v2745 = vpop.f32.mrb[0].mxu0
      %2746 = vmatprep.mubr.bf16.mxu0 0
      %2747 = vmatmul.mubr.bf16.gmra.mrb[0].mxu0 %v2611
      %v2748 = vpop.f32.mrb[0].mxu0
      %v2749 = vadd.f32 0.0, %v2748
      %v2750 = vpop.f32.mrb[0].mxu0
      %v2751 = vpop.f32.mrb[0].mxu0
      %v2752 = vadd.f32 0.0, %v2751
      %v2753 = vpop.f32.mrb[0].mxu0
      %2754 = vmatprep.mubr.bf16.mxu0 0
      %2755 = vmatmul.mubr.bf16.gmra.mrb[0].mxu0 %v2615
      %v2756 = vpop.f32.mrb[0].mxu0
      %v2757 = vadd.f32 0.0, %v2756
      %v2758 = vpop.f32.mrb[0].mxu0
      %v2759 = vpop.f32.mrb[0].mxu0
      %v2760 = vadd.f32 0.0, %v2759
      %v2761 = vpop.f32.mrb[0].mxu0
      %2762 = vmatprep.mubr.bf16.mxu0 0
      %2763 = vmatmul.mubr.bf16.gmra.mrb[0].mxu0 %v2619
      %v2764 = vpop.f32.mrb[0].mxu0
      %v2765 = vadd.f32 0.0, %v2764
      %v2766 = vpop.f32.mrb[0].mxu0
      %v2767 = vpop.f32.mrb[0].mxu0
      %v2768 = vadd.f32 0.0, %v2767
      %v2769 = vpop.f32.mrb[0].mxu0
      %2770 = vmatprep.mubr.bf16.mxu0 0
      %2771 = vmatmul.mubr.bf16.gmra.mrb[0].mxu0 %v2623
      %v2772 = vpop.f32.mrb[0].mxu0
      %v2773 = vadd.f32 0.0, %v2772
      %v2774 = vpop.f32.mrb[0].mxu0
      %v2775 = vpop.f32.mrb[0].mxu0
      %v2776 = vadd.f32 0.0, %v2775
      %v2777 = vpop.f32.mrb[0].mxu0
      %2778 = vmatprep.mubr.bf16.mxu0 0
      %2779 = vmatmul.mubr.bf16.gmra.mrb[0].mxu0 %v2624
      %v2780 = vpop.f32.mrb[0].mxu0
      %v2781 = vadd.f32 0.0, %v2780
      %v2782 = vpop.f32.mrb[0].mxu0
      %v2783 = vpop.f32.mrb[0].mxu0
      %v2784 = vadd.f32 0.0, %v2783
      %v2785 = vpop.f32.mrb[0].mxu0
      %2786 = vdwg.mxu0
      %v2787 = vadd.f32 %v2553, %v2717
      %v2788 = vadd.f32 %v2554, %v2720
      %v2789 = vadd.f32 %v2555, %v2725
      %v2790 = vadd.f32 %v2556, %v2728
      %v2791 = vadd.f32 %v2557, %v2733
      %v2792 = vadd.f32 %v2558, %v2736
      %v2793 = vadd.f32 %v2559, %v2741
      %v2794 = vadd.f32 %v2560, %v2744
      %v2795 = vadd.f32 %v2561, %v2749
      %v2796 = vadd.f32 %v2562, %v2752
      %v2797 = vadd.f32 %v2563, %v2757
      %v2798 = vadd.f32 %v2564, %v2760
      %v2799 = vadd.f32 %v2565, %v2765
      %v2800 = vadd.f32 %v2566, %v2768
      %v2801 = vadd.f32 %v2567, %v2773
      %v2802 = vadd.f32 %v2568, %v2776
      %v2803 = vadd.f32 %v2569, %v2781
      %v2804 = vadd.f32 %v2570, %v2784
      %s2805 = scalar_lea.vmem %s3, 512
      %v2806 = vld [vmem:[%s2805] sm:$0xf]
      %v2807 = vld [vmem:[%s2805 + $0x4] sm:$0xf]
      %v2808 = vld [vmem:[%s2805 + $0x8] sm:$0xf]
      %v2809 = vld [vmem:[%s2805 + $0xc] sm:$0xf]
      %v2810 = vld [vmem:[%s2805 + $0x10] sm:$0xf]
      %v2811 = vld [vmem:[%s2805 + $0x14] sm:$0xf]
      %v2812 = vld [vmem:[%s2805 + $0x18] sm:$0xf]
      %v2813 = vld [vmem:[%s2805 + $0x1c] sm:$0xf]
      %v2814 = vld [vmem:[%s2805 + $0x20] sm:$0xf]
      %v2815 = vld [vmem:[%s2805 + $0x24] sm:$0xf]
      %v2816 = vld [vmem:[%s2805 + $0x28] sm:$0xf]
      %v2817 = vld [vmem:[%s2805 + $0x2c] sm:$0xf]
      %v2818 = vld [vmem:[%s2805 + $0x30] sm:$0xf]
      %v2819 = vld [vmem:[%s2805 + $0x34] sm:$0xf]
      %v2820 = vld [vmem:[%s2805 + $0x38] sm:$0xf]
      %v2821 = vld [vmem:[%s2805 + $0x3c] sm:$0xf]
      %vm2822 = vcmask 1042432
      %v2823 = vrot.slane %v1022, 5
      %v2824 = vrot.slane %v1023, 5
      %v2825 = vsel %vm2822, %v2823, %v2824
      %v2826 = vrot.slane %v1024, 5
      %v2827 = vsel %vm2822, %v2824, %v2826
      %v2828 = vrot.slane %v1025, 5
      %v2829 = vsel %vm2822, %v2826, %v2828
      %v2830 = vrot.slane %v1026, 5
      %v2831 = vsel %vm2822, %v2828, %v2830
      %v2832 = vrot.slane %v1027, 5
      %v2833 = vsel %vm2822, %v2830, %v2832
      %v2834 = vrot.slane %v1028, 5
      %v2835 = vsel %vm2822, %v2832, %v2834
      %v2836 = vrot.slane %v1029, 5
      %v2837 = vsel %vm2822, %v2834, %v2836
      %v2838 = vrot.slane 0, 5
      %v2839 = vsel %vm2822, %v2836, %v2838
      %v2840 = vsel %vm2822, %v2838, %v2838
      %v2866 = vunpack.c.l.b16 %v2806
      %v2867 = vunpack.c.l.b16 %v2807
      %v2868 = vunpack.c.l.b16 %v2808
      %v2869 = vunpack.c.l.b16 %v2809
      %v2870 = vunpack.c.l.b16 %v2810
      %v2871 = vunpack.c.l.b16 %v2811
      %v2872 = vunpack.c.l.b16 %v2812
      %v2873 = vunpack.c.l.b16 %v2813
      %v2874 = vunpack.c.l.b16 %v2814
      %v2875 = vunpack.c.l.b16 %v2815
      %v2876 = vunpack.c.l.b16 %v2816
      %v2877 = vunpack.c.l.b16 %v2817
      %v2878 = vunpack.c.l.b16 %v2818
      %v2879 = vunpack.c.l.b16 %v2819
      %v2880 = vunpack.c.l.b16 %v2820
      %v2881 = vunpack.c.l.b16 %v2821
      %v2882 = vpack.c.b16 %v2867, %v2866
      %v2883 = vpack.c.b16 %v2869, %v2868
      %v2884 = vpack.c.b16 %v2871, %v2870
      %v2885 = vpack.c.b16 %v2873, %v2872
      %v2886 = vpack.c.b16 %v2875, %v2874
      %v2887 = vpack.c.b16 %v2877, %v2876
      %v2888 = vpack.c.b16 %v2879, %v2878
      %v2889 = vpack.c.b16 %v2881, %v2880
      %2898 = vmatprep.subr.bf16.mxu0 0
      %2899 = vmatpush1.bf16.msra.mxu0 %v2882
      %2900 = vmatprep.subr.bf16.mxu0 0
      %2901 = vmatpush1.bf16.msra.mxu0 %v2883
      %2902 = vmatprep.subr.bf16.mxu0 0
      %2903 = vmatpush1.bf16.msra.mxu0 %v2884
      %2904 = vmatprep.subr.bf16.mxu0 0
      %2905 = vmatpush1.bf16.msra.mxu0 %v2885
      %2906 = vmatprep.subr.bf16.mxu0 0
      %2907 = vmatpush1.bf16.msra.mxu0 %v2886
      %2908 = vmatprep.subr.bf16.mxu0 0
      %2909 = vmatpush1.bf16.msra.mxu0 %v2887
      %2910 = vmatprep.subr.bf16.mxu0 0
      %2911 = vmatpush1.bf16.msra.mxu0 %v2888
      %2912 = vmatprep.subr.bf16.mxu0 0
      %2913 = vmatpush1.bf16.msra.mxu0 %v2889
      %2914 = vmatprep.subr.bf16.mxu0 0
      %2915 = vmatpush1.bf16.msra.mxu0 0
      %2916 = vmatprep.subr.bf16.mxu0 0
      %2917 = vmatpush1.bf16.msra.mxu0 0
      %2918 = vmatprep.subr.bf16.mxu0 0
      %2919 = vmatpush1.bf16.msra.mxu0 0
      %2920 = vmatprep.subr.bf16.mxu0 0
      %2921 = vmatpush1.bf16.msra.mxu0 0
      %2922 = vmatprep.subr.bf16.mxu0 0
      %2923 = vmatpush1.bf16.msra.mxu0 0
      %2924 = vmatprep.subr.bf16.mxu0 0
      %2925 = vmatpush1.bf16.msra.mxu0 0
      %2926 = vmatprep.subr.bf16.mxu0 0
      %2927 = vmatpush1.bf16.msra.mxu0 0
      %2928 = vmatprep.subr.bf16.mxu0 0
      %2929 = vmatpush1.bf16.msra.mxu0 0
      %2930 = vmatprep.mubr.bf16.mxu0 0
      %2931 = vmatmul.mubr.bf16.gmra.mrb[0].mxu0 %v2825
      %v2932 = vpop.f32.mrb[0].mxu0
      %v2933 = vadd.f32 0.0, %v2932
      %v2934 = vpop.f32.mrb[0].mxu0
      %v2935 = vpop.f32.mrb[0].mxu0
      %v2936 = vadd.f32 0.0, %v2935
      %v2937 = vpop.f32.mrb[0].mxu0
      %2938 = vmatprep.mubr.bf16.mxu0 0
      %2939 = vmatmul.mubr.bf16.gmra.mrb[0].mxu0 %v2827
      %v2940 = vpop.f32.mrb[0].mxu0
      %v2941 = vadd.f32 0.0, %v2940
      %v2942 = vpop.f32.mrb[0].mxu0
      %v2943 = vpop.f32.mrb[0].mxu0
      %v2944 = vadd.f32 0.0, %v2943
      %v2945 = vpop.f32.mrb[0].mxu0
      %2946 = vmatprep.mubr.bf16.mxu0 0
      %2947 = vmatmul.mubr.bf16.gmra.mrb[0].mxu0 %v2829
      %v2948 = vpop.f32.mrb[0].mxu0
      %v2949 = vadd.f32 0.0, %v2948
      %v2950 = vpop.f32.mrb[0].mxu0
      %v2951 = vpop.f32.mrb[0].mxu0
      %v2952 = vadd.f32 0.0, %v2951
      %v2953 = vpop.f32.mrb[0].mxu0
      %2954 = vmatprep.mubr.bf16.mxu0 0
      %2955 = vmatmul.mubr.bf16.gmra.mrb[0].mxu0 %v2831
      %v2956 = vpop.f32.mrb[0].mxu0
      %v2957 = vadd.f32 0.0, %v2956
      %v2958 = vpop.f32.mrb[0].mxu0
      %v2959 = vpop.f32.mrb[0].mxu0
      %v2960 = vadd.f32 0.0, %v2959
      %v2961 = vpop.f32.mrb[0].mxu0
      %2962 = vmatprep.mubr.bf16.mxu0 0
      %2963 = vmatmul.mubr.bf16.gmra.mrb[0].mxu0 %v2833
      %v2964 = vpop.f32.mrb[0].mxu0
      %v2965 = vadd.f32 0.0, %v2964
      %v2966 = vpop.f32.mrb[0].mxu0
      %v2967 = vpop.f32.mrb[0].mxu0
      %v2968 = vadd.f32 0.0, %v2967
      %v2969 = vpop.f32.mrb[0].mxu0
      %2970 = vmatprep.mubr.bf16.mxu0 0
      %2971 = vmatmul.mubr.bf16.gmra.mrb[0].mxu0 %v2835
      %v2972 = vpop.f32.mrb[0].mxu0
      %v2973 = vadd.f32 0.0, %v2972
      %v2974 = vpop.f32.mrb[0].mxu0
      %v2975 = vpop.f32.mrb[0].mxu0
      %v2976 = vadd.f32 0.0, %v2975
      %v2977 = vpop.f32.mrb[0].mxu0
      %2978 = vmatprep.mubr.bf16.mxu0 0
      %2979 = vmatmul.mubr.bf16.gmra.mrb[0].mxu0 %v2837
      %v2980 = vpop.f32.mrb[0].mxu0
      %v2981 = vadd.f32 0.0, %v2980
      %v2982 = vpop.f32.mrb[0].mxu0
      %v2983 = vpop.f32.mrb[0].mxu0
      %v2984 = vadd.f32 0.0, %v2983
      %v2985 = vpop.f32.mrb[0].mxu0
      %2986 = vmatprep.mubr.bf16.mxu0 0
      %2987 = vmatmul.mubr.bf16.gmra.mrb[0].mxu0 %v2839
      %v2988 = vpop.f32.mrb[0].mxu0
      %v2989 = vadd.f32 0.0, %v2988
      %v2990 = vpop.f32.mrb[0].mxu0
      %v2991 = vpop.f32.mrb[0].mxu0
      %v2992 = vadd.f32 0.0, %v2991
      %v2993 = vpop.f32.mrb[0].mxu0
      %2994 = vmatprep.mubr.bf16.mxu0 0
      %2995 = vmatmul.mubr.bf16.gmra.mrb[0].mxu0 %v2840
      %v2996 = vpop.f32.mrb[0].mxu0
      %v2997 = vadd.f32 0.0, %v2996
      %v2998 = vpop.f32.mrb[0].mxu0
      %v2999 = vpop.f32.mrb[0].mxu0
      %v3000 = vadd.f32 0.0, %v2999
      %v3001 = vpop.f32.mrb[0].mxu0
      %3002 = vdwg.mxu0
      %v3003 = vadd.f32 %v2787, %v2933
      %v3004 = vadd.f32 %v2788, %v2936
      %v3005 = vadd.f32 %v2789, %v2941
      %v3006 = vadd.f32 %v2790, %v2944
      %v3007 = vadd.f32 %v2791, %v2949
      %v3008 = vadd.f32 %v2792, %v2952
      %v3009 = vadd.f32 %v2793, %v2957
      %v3010 = vadd.f32 %v2794, %v2960
      %v3011 = vadd.f32 %v2795, %v2965
      %v3012 = vadd.f32 %v2796, %v2968
      %v3013 = vadd.f32 %v2797, %v2973
      %v3014 = vadd.f32 %v2798, %v2976
      %v3015 = vadd.f32 %v2799, %v2981
      %v3016 = vadd.f32 %v2800, %v2984
      %v3017 = vadd.f32 %v2801, %v2989
      %v3018 = vadd.f32 %v2802, %v2992
      %v3019 = vadd.f32 %v2803, %v2997
      %v3020 = vadd.f32 %v2804, %v3000
      %v3021 = vld [vmem:[%s4] sm:$0x1]
      %v3023 = vlaneseq
      %v3024 = vshrl.u32 %v3023, 7
      %v3025 = vsub.s32 0, %v3024
      %v3026 = vrot.slane %v3021, %v3025
      %v3028 = vadd.f32 %v3003, %v3026
      %v3029 = vadd.f32 %v3004, %v3026
      %v3030 = vadd.f32 %v3005, %v3026
      %v3031 = vadd.f32 %v3006, %v3026
      %v3032 = vadd.f32 %v3007, %v3026
      %v3033 = vadd.f32 %v3008, %v3026
      %v3034 = vadd.f32 %v3009, %v3026
      %v3035 = vadd.f32 %v3010, %v3026
      %v3036 = vadd.f32 %v3011, %v3026
      %v3037 = vadd.f32 %v3012, %v3026
      %v3038 = vadd.f32 %v3013, %v3026
      %v3039 = vadd.f32 %v3014, %v3026
      %v3040 = vadd.f32 %v3015, %v3026
      %v3041 = vadd.f32 %v3016, %v3026
      %v3042 = vadd.f32 %v3017, %v3026
      %v3043 = vadd.f32 %v3018, %v3026
      %v3044 = vadd.f32 %v3019, %v3026
      %v3045 = vadd.f32 %v3020, %v3026
      %v3046 = vmax.f32 %v3028, 0.0
      %v3047 = vmax.f32 %v3029, 0.0
      %v3048 = vmax.f32 %v3030, 0.0
      %v3049 = vmax.f32 %v3031, 0.0
      %v3050 = vmax.f32 %v3032, 0.0
      %v3051 = vmax.f32 %v3033, 0.0
      %v3052 = vmax.f32 %v3034, 0.0
      %v3053 = vmax.f32 %v3035, 0.0
      %v3054 = vmax.f32 %v3036, 0.0
      %v3055 = vmax.f32 %v3037, 0.0
      %v3056 = vmax.f32 %v3038, 0.0
      %v3057 = vmax.f32 %v3039, 0.0
      %v3058 = vmax.f32 %v3040, 0.0
      %v3059 = vmax.f32 %v3041, 0.0
      %v3060 = vmax.f32 %v3042, 0.0
      %v3061 = vmax.f32 %v3043, 0.0
      %v3062 = vmax.f32 %v3044, 0.0
      %v3063 = vmax.f32 %v3045, 0.0
      %v3064 = vpack.c.bf16 %v3047, %v3046
      %v3065 = vpack.c.bf16 %v3049, %v3048
      %v3066 = vpack.c.bf16 %v3051, %v3050
      %v3067 = vpack.c.bf16 %v3053, %v3052
      %v3068 = vpack.c.bf16 %v3055, %v3054
      %v3069 = vpack.c.bf16 %v3057, %v3056
      %v3070 = vpack.c.bf16 %v3059, %v3058
      %v3071 = vpack.c.bf16 %v3061, %v3060
      %v3072 = vpack.c.bf16 %v3063, %v3062
      %v3082 = vunpack.c.l.b16 %v3064
      %v3083 = vunpack.c.h.b16 %v3064
      %v3084 = vunpack.c.l.b16 %v3065
      %v3085 = vunpack.c.h.b16 %v3065
      %v3086 = vunpack.c.l.b16 %v3066
      %v3087 = vunpack.c.h.b16 %v3066
      %v3088 = vunpack.c.l.b16 %v3067
      %v3089 = vunpack.c.h.b16 %v3067
      %v3090 = vunpack.c.l.b16 %v3068
      %v3091 = vunpack.c.h.b16 %v3068
      %v3092 = vunpack.c.l.b16 %v3069
      %v3093 = vunpack.c.h.b16 %v3069
      %v3094 = vunpack.c.l.b16 %v3070
      %v3095 = vunpack.c.h.b16 %v3070
      %v3096 = vunpack.c.l.b16 %v3071
      %v3097 = vunpack.c.h.b16 %v3071
      %v3098 = vunpack.c.l.b16 %v3072
      %v3099 = vunpack.c.h.b16 %v3072
      %v3100 = vpack.c.b16 %v3082, %v3082
      %v3101 = vpack.c.b16 %v3083, %v3083
      %v3102 = vpack.c.b16 %v3084, %v3084
      %v3103 = vpack.c.b16 %v3085, %v3085
      %v3104 = vpack.c.b16 %v3086, %v3086
      %v3105 = vpack.c.b16 %v3087, %v3087
      %v3106 = vpack.c.b16 %v3088, %v3088
      %v3107 = vpack.c.b16 %v3089, %v3089
      %v3108 = vpack.c.b16 %v3090, %v3090
      %v3109 = vpack.c.b16 %v3091, %v3091
      %v3110 = vpack.c.b16 %v3092, %v3092
      %v3111 = vpack.c.b16 %v3093, %v3093
      %v3112 = vpack.c.b16 %v3094, %v3094
      %v3113 = vpack.c.b16 %v3095, %v3095
      %v3114 = vpack.c.b16 %v3096, %v3096
      %v3115 = vpack.c.b16 %v3097, %v3097
      %v3116 = vpack.c.b16 %v3098, %v3098
      %v3117 = vpack.c.b16 %v3099, %v3099
      %vm3136 = vcmask 158720
      %3137 = vst.msk [vmem:[%s224] sm:$0xf] %vm3136, %v3100
      %3138 = vst.msk [vmem:[%s224 + $0x4] sm:$0xf] %vm3136, %v3101
      %3139 = vst.msk [vmem:[%s224 + $0x8] sm:$0xf] %vm3136, %v3102
      %3140 = vst.msk [vmem:[%s224 + $0xc] sm:$0xf] %vm3136, %v3103
      %3141 = vst.msk [vmem:[%s224 + $0x10] sm:$0xf] %vm3136, %v3104
      %3142 = vst.msk [vmem:[%s224 + $0x14] sm:$0xf] %vm3136, %v3105
      %3143 = vst.msk [vmem:[%s224 + $0x18] sm:$0xf] %vm3136, %v3106
      %3144 = vst.msk [vmem:[%s224 + $0x1c] sm:$0xf] %vm3136, %v3107
      %3145 = vst.msk [vmem:[%s224 + $0x20] sm:$0xf] %vm3136, %v3108
      %3146 = vst.msk [vmem:[%s224 + $0x24] sm:$0xf] %vm3136, %v3109
      %3147 = vst.msk [vmem:[%s224 + $0x28] sm:$0xf] %vm3136, %v3110
      %3148 = vst.msk [vmem:[%s224 + $0x2c] sm:$0xf] %vm3136, %v3111
      %3149 = vst.msk [vmem:[%s224 + $0x30] sm:$0xf] %vm3136, %v3112
      %3150 = vst.msk [vmem:[%s224 + $0x34] sm:$0xf] %vm3136, %v3113
      %3151 = vst.msk [vmem:[%s224 + $0x38] sm:$0xf] %vm3136, %v3114
      %3152 = vst.msk [vmem:[%s224 + $0x3c] sm:$0xf] %vm3136, %v3115
      %3153 = vst.msk [vmem:[%s224 + $0x40] sm:$0xf] %vm3136, %v3116
      %3154 = vst.msk [vmem:[%s224 + $0x44] sm:$0xf] %vm3136, %v3117
      %p3155 = scmp.lt.s32.totalorder %s16, 1
      %s3156 = scalar_select %p3155, %s16, 1
      %s3157 = smul.addr %s3156, 18
      %s3158 = smul.addr %s3157, 4
      %s3159 = scalar_lea.vmem %s5, %s3158
      // Predicated region
      $region41: #{forward.2} parent=39 // pred_check
        %p3160 = pneg %p144
      $region42: #{forward.2} parent=39 // pred_check_branch
        %3162 = sbr.rel (%p3160) target = $region44
      $region43: #{forward.2} parent=39 // pred_region
        _
      $region44: #{forward.2} parent=39 // pred_fallthru
        _
    $region40: #{forward.2} parent=5 // pred_fallthru
      _
    %p3163 = scmp.le.s32.totalorder 2, %s11
    // Predicated region
    $region45: #{forward.2} parent=5 // pred_check
      %p3164 = pneg %p3163
    $region46: #{forward.2} parent=5 // pred_check_branch
      %3166 = sbr.rel (%p3164) target = $region48
    $region47: #{forward.2} parent=5 // pred_region
      %s3167 = ssub.s32 %s11, 2
      // Predicated region
      $region49: #{forward.2} parent=47 // pred_check
        %p3168 = pneg %p150
      $region50: #{forward.2} parent=47 // pred_check_branch
        %3170 = sbr.rel (%p3168) target = $region52
      $region51: #{forward.2} parent=47 // pred_region
        %p3171 = scmp.lt.s32.totalorder %s17, 1
        %s3172 = scalar_select %p3171, %s17, 1
        %s3173 = smul.addr %s3172, 18
        %s3174 = smul.addr %s3173, 4
        %s3175 = scalar_lea.vmem %s5, %s3174
      $region52: #{forward.2} parent=47 // pred_fallthru
        _
    $region48: #{forward.2} parent=5 // pred_fallthru
      _
  $region6: #{forward.2} parent=0 // loop_footer
    %s15 = sadd.s32 1, %s11
  $region7: #{forward.2} parent=0 // loop_footer_branch
    %10 = sbr.rel target = $region3
  $region8: #{forward.2} parent=0 // loop_exit
    _

// kernel: forward.3
$region0: #{forward.3}
  #allocation0 [shape = 'u32[]', space=smem, size = 0x4, offset = 0x4, fixed_abs, tag = 'smem constant byte address 0x4 - core index']
  #allocation1 [shape = 'u32[144,128]{1,0:T(1,128)}', space=vmem, size = 0x12000, scoped, tag = 'internal scratch']
  %s0 = inlined_call_operand.vmem [shape: bf16[16,2880], index: 0, kind: input, shape index: {}]
  %s1 = inlined_call_operand.vmem [shape: bf16[2880,512], index: 1, kind: input, shape index: {}]
  %s2 = inlined_call_operand.vmem [shape: f32[1,512], index: 2, kind: input, shape index: {}]
  %s3 = inlined_call_operand.vmem [shape: bf16[512,128], index: 3, kind: input, shape index: {}]
  %s4 = inlined_call_operand.vmem [shape: f32[1,128], index: 4, kind: input, shape index: {}]
  %s5 = inlined_call_operand.vmem [shape: f32[16,128], index: 5, kind: output, shape index: {}]
  %s6 = sld [smem:[#allocation0]]
  $region30: #{forward.3} parent=0
    _
  %s8 = ssub.s32 1, %s6
  %s9 = scalar_select 0, %s8, %s6
  // Predicated region
  $region2: #{forward.3} parent=0 // pred_check
    _
  $region3: #{forward.3} parent=0 // pred_check_branch
    %11 = sbr.rel (0) target = $region5
  $region4: #{forward.3} parent=0 // pred_region
    _
  $region5: #{forward.3} parent=0 // pred_fallthru
    _
  // Predicated region
  $region6: #{forward.3} parent=0 // pred_check
    _
  $region7: #{forward.3} parent=0 // pred_check_branch
    %13 = sbr.rel (0) target = $region9
  $region8: #{forward.3} parent=0 // pred_region
    _
  $region9: #{forward.3} parent=0 // pred_fallthru
    _
  // Predicated region
  $region10: #{forward.3} parent=0 // pred_check
    _
  $region11: #{forward.3} parent=0 // pred_check_branch
    %15 = sbr.rel (0) target = $region13
  $region12: #{forward.3} parent=0 // pred_region
    _
  $region13: #{forward.3} parent=0 // pred_fallthru
    _
  // Predicated region
  $region14: #{forward.3} parent=0 // pred_check
    _
  $region15: #{forward.3} parent=0 // pred_check_branch
    %17 = sbr.rel (0) target = $region17
  $region16: #{forward.3} parent=0 // pred_region
    _
  $region17: #{forward.3} parent=0 // pred_fallthru
    _
  // Predicated region
  $region18: #{forward.3} parent=0 // pred_check
    _
  $region19: #{forward.3} parent=0 // pred_check_branch
    %19 = sbr.rel (0) target = $region21
  $region20: #{forward.3} parent=0 // pred_region
    _
  $region21: #{forward.3} parent=0 // pred_fallthru
    _
  %v21 = vld [vmem:[%s0] sm:$0xff]
  %v22 = vld [vmem:[%s0 + $0x8] sm:$0xff]
  %v23 = vld [vmem:[%s0 + $0x10] sm:$0xff]
  %v24 = vld [vmem:[%s0 + $0x18] sm:$0xff]
  %v25 = vld [vmem:[%s0 + $0x20] sm:$0xff]
  %v26 = vld [vmem:[%s0 + $0x28] sm:$0xff]
  %v27 = vld [vmem:[%s0 + $0x30] sm:$0xff]
  %v28 = vld [vmem:[%s0 + $0x38] sm:$0xff]
  %v29 = vld [vmem:[%s0 + $0x40] sm:$0xff]
  %v30 = vld [vmem:[%s0 + $0x48] sm:$0xff]
  %v31 = vld [vmem:[%s0 + $0x50] sm:$0xff]
  %v32 = vld [vmem:[%s0 + $0x58] sm:$0xf]
  %v33 = vld [vmem:[%s0 + $0x5c] sm:$0xff]
  %v34 = vld [vmem:[%s0 + $0x64] sm:$0xff]
  %v35 = vld [vmem:[%s0 + $0x6c] sm:$0xff]
  %v36 = vld [vmem:[%s0 + $0x74] sm:$0xff]
  %v37 = vld [vmem:[%s0 + $0x7c] sm:$0xff]
  %v38 = vld [vmem:[%s0 + $0x84] sm:$0xff]
  %v39 = vld [vmem:[%s0 + $0x8c] sm:$0xff]
  %v40 = vld [vmem:[%s0 + $0x94] sm:$0xff]
  %v41 = vld [vmem:[%s0 + $0x9c] sm:$0xff]
  %v42 = vld [vmem:[%s0 + $0xa4] sm:$0xff]
  %v43 = vld [vmem:[%s0 + $0xac] sm:$0xff]
  %v44 = vld [vmem:[%s0 + $0xb4] sm:$0xf]
  %v45 = vld [vmem:[%s1] sm:$0xff]
  %v46 = vld [vmem:[%s1 + $0x8] sm:$0xff]
  %v47 = vld [vmem:[%s1 + $0x10] sm:$0xff]
  %v48 = vld [vmem:[%s1 + $0x18] sm:$0xff]
  %v49 = vld [vmem:[%s1 + $0x20] sm:$0xff]
  %v50 = vld [vmem:[%s1 + $0x28] sm:$0xff]
  %v51 = vld [vmem:[%s1 + $0x30] sm:$0xff]
  %v52 = vld [vmem:[%s1 + $0x38] sm:$0xff]
  %v53 = vld [vmem:[%s1 + $0x40] sm:$0xff]
  %v54 = vld [vmem:[%s1 + $0x48] sm:$0xff]
  %v55 = vld [vmem:[%s1 + $0x50] sm:$0xff]
  %v56 = vld [vmem:[%s1 + $0x58] sm:$0xff]
  %v57 = vld [vmem:[%s1 + $0x60] sm:$0xff]
  %v58 = vld [vmem:[%s1 + $0x68] sm:$0xff]
  %v59 = vld [vmem:[%s1 + $0x70] sm:$0xff]
  %v60 = vld [vmem:[%s1 + $0x78] sm:$0xff]
  %v61 = vld [vmem:[%s1 + $0x80] sm:$0xff]
  %v62 = vld [vmem:[%s1 + $0x88] sm:$0xff]
  %v63 = vld [vmem:[%s1 + $0x90] sm:$0xff]
  %v64 = vld [vmem:[%s1 + $0x98] sm:$0xff]
  %v65 = vld [vmem:[%s1 + $0xa0] sm:$0xff]
  %v66 = vld [vmem:[%s1 + $0xa8] sm:$0xff]
  %v67 = vld [vmem:[%s1 + $0xb0] sm:$0xff]
  %v68 = vld [vmem:[%s1 + $0xb8] sm:$0xff]
  %v69 = vld [vmem:[%s1 + $0xc0] sm:$0xff]
  %v70 = vld [vmem:[%s1 + $0xc8] sm:$0xff]
  %v71 = vld [vmem:[%s1 + $0xd0] sm:$0xff]
  %v72 = vld [vmem:[%s1 + $0xd8] sm:$0xff]
  %v73 = vld [vmem:[%s1 + $0xe0] sm:$0xff]
  %v74 = vld [vmem:[%s1 + $0xe8] sm:$0xff]
  %v75 = vld [vmem:[%s1 + $0xf0] sm:$0xff]
  %v76 = vld [vmem:[%s1 + $0xf8] sm:$0xff]
  %v77 = vld [vmem:[%s1 + $0x100] sm:$0xff]
  %v78 = vld [vmem:[%s1 + $0x108] sm:$0xff]
  %v79 = vld [vmem:[%s1 + $0x110] sm:$0xff]
  %v80 = vld [vmem:[%s1 + $0x118] sm:$0xff]
  %v81 = vld [vmem:[%s1 + $0x120] sm:$0xff]
  %v82 = vld [vmem:[%s1 + $0x128] sm:$0xff]
  %v83 = vld [vmem:[%s1 + $0x130] sm:$0xff]
  %v84 = vld [vmem:[%s1 + $0x138] sm:$0xff]
  %v85 = vld [vmem:[%s1 + $0x140] sm:$0xff]
  %v86 = vld [vmem:[%s1 + $0x148] sm:$0xff]
  %v87 = vld [vmem:[%s1 + $0x150] sm:$0xff]
  %v88 = vld [vmem:[%s1 + $0x158] sm:$0xff]
  %v89 = vld [vmem:[%s1 + $0x160] sm:$0xff]
  %v90 = vld [vmem:[%s1 + $0x168] sm:$0xff]
  %v91 = vld [vmem:[%s1 + $0x170] sm:$0xff]
  %v92 = vld [vmem:[%s1 + $0x178] sm:$0xff]
  %v93 = vld [vmem:[%s1 + $0x180] sm:$0xff]
  %v94 = vld [vmem:[%s1 + $0x188] sm:$0xff]
  %v95 = vld [vmem:[%s1 + $0x190] sm:$0xff]
  %v96 = vld [vmem:[%s1 + $0x198] sm:$0xff]
  %v97 = vld [vmem:[%s1 + $0x1a0] sm:$0xff]
  %v98 = vld [vmem:[%s1 + $0x1a8] sm:$0xff]
  %v99 = vld [vmem:[%s1 + $0x1b0] sm:$0xff]
  %v100 = vld [vmem:[%s1 + $0x1b8] sm:$0xff]
  %v101 = vld [vmem:[%s1 + $0x1c0] sm:$0xff]
  %v102 = vld [vmem:[%s1 + $0x1c8] sm:$0xff]
  %v103 = vld [vmem:[%s1 + $0x1d0] sm:$0xff]
  %v104 = vld [vmem:[%s1 + $0x1d8] sm:$0xff]
  %v105 = vld [vmem:[%s1 + $0x1e0] sm:$0xff]
  %v106 = vld [vmem:[%s1 + $0x1e8] sm:$0xff]
  %v107 = vld [vmem:[%s1 + $0x1f0] sm:$0xff]
  %v108 = vld [vmem:[%s1 + $0x1f8] sm:$0xff]
  %v109 = vld [vmem:[%s1 + $0x200] sm:$0xff]
  %v110 = vld [vmem:[%s1 + $0x208] sm:$0xff]
  %v111 = vld [vmem:[%s1 + $0x210] sm:$0xff]
  %v112 = vld [vmem:[%s1 + $0x218] sm:$0xff]
  %v113 = vld [vmem:[%s1 + $0x220] sm:$0xff]
  %v114 = vld [vmem:[%s1 + $0x228] sm:$0xff]
  %v115 = vld [vmem:[%s1 + $0x230] sm:$0xff]
  %v116 = vld [vmem:[%s1 + $0x238] sm:$0xff]
  %v117 = vld [vmem:[%s1 + $0x240] sm:$0xff]
  %v118 = vld [vmem:[%s1 + $0x248] sm:$0xff]
  %v119 = vld [vmem:[%s1 + $0x250] sm:$0xff]
  %v120 = vld [vmem:[%s1 + $0x258] sm:$0xff]
  %v121 = vld [vmem:[%s1 + $0x260] sm:$0xff]
  %v122 = vld [vmem:[%s1 + $0x268] sm:$0xff]
  %v123 = vld [vmem:[%s1 + $0x270] sm:$0xff]
  %v124 = vld [vmem:[%s1 + $0x278] sm:$0xff]
  %v125 = vld [vmem:[%s1 + $0x280] sm:$0xff]
  %v126 = vld [vmem:[%s1 + $0x288] sm:$0xff]
  %v127 = vld [vmem:[%s1 + $0x290] sm:$0xff]
  %v128 = vld [vmem:[%s1 + $0x298] sm:$0xff]
  %v129 = vld [vmem:[%s1 + $0x2a0] sm:$0xff]
  %v130 = vld [vmem:[%s1 + $0x2a8] sm:$0xff]
  %v131 = vld [vmem:[%s1 + $0x2b0] sm:$0xff]
  %v132 = vld [vmem:[%s1 + $0x2b8] sm:$0xff]
  %v133 = vld [vmem:[%s1 + $0x2c0] sm:$0xff]
  %v134 = vld [vmem:[%s1 + $0x2c8] sm:$0xff]
  %v135 = vld [vmem:[%s1 + $0x2d0] sm:$0xff]
  %v136 = vld [vmem:[%s1 + $0x2d8] sm:$0xff]
  %v137 = vld [vmem:[%s1 + $0x2e0] sm:$0xff]
  %v138 = vld [vmem:[%s1 + $0x2e8] sm:$0xff]
  %v139 = vld [vmem:[%s1 + $0x2f0] sm:$0xff]
  %v140 = vld [vmem:[%s1 + $0x2f8] sm:$0xff]
  %v141 = vld [vmem:[%s1 + $0x300] sm:$0xff]
  %v142 = vld [vmem:[%s1 + $0x308] sm:$0xff]
  %v143 = vld [vmem:[%s1 + $0x310] sm:$0xff]
  %v144 = vld [vmem:[%s1 + $0x318] sm:$0xff]
  %v145 = vld [vmem:[%s1 + $0x320] sm:$0xff]
  %v146 = vld [vmem:[%s1 + $0x328] sm:$0xff]
  %v147 = vld [vmem:[%s1 + $0x330] sm:$0xff]
  %v148 = vld [vmem:[%s1 + $0x338] sm:$0xff]
  %v149 = vld [vmem:[%s1 + $0x340] sm:$0xff]
  %v150 = vld [vmem:[%s1 + $0x348] sm:$0xff]
  %v151 = vld [vmem:[%s1 + $0x350] sm:$0xff]
  %v152 = vld [vmem:[%s1 + $0x358] sm:$0xff]
  %v153 = vld [vmem:[%s1 + $0x360] sm:$0xff]
  %v154 = vld [vmem:[%s1 + $0x368] sm:$0xff]
  %v155 = vld [vmem:[%s1 + $0x370] sm:$0xff]
  %v156 = vld [vmem:[%s1 + $0x378] sm:$0xff]
  %v157 = vld [vmem:[%s1 + $0x380] sm:$0xff]
  %v158 = vld [vmem:[%s1 + $0x388] sm:$0xff]
  %v159 = vld [vmem:[%s1 + $0x390] sm:$0xff]
  %v160 = vld [vmem:[%s1 + $0x398] sm:$0xff]
  %v161 = vld [vmem:[%s1 + $0x3a0] sm:$0xff]
  %v162 = vld [vmem:[%s1 + $0x3a8] sm:$0xff]
  %v163 = vld [vmem:[%s1 + $0x3b0] sm:$0xff]
  %v164 = vld [vmem:[%s1 + $0x3b8] sm:$0xff]
  %v165 = vld [vmem:[%s1 + $0x3c0] sm:$0xff]
  %v166 = vld [vmem:[%s1 + $0x3c8] sm:$0xff]
  %v167 = vld [vmem:[%s1 + $0x3d0] sm:$0xff]
  %v168 = vld [vmem:[%s1 + $0x3d8] sm:$0xff]
  %v169 = vld [vmem:[%s1 + $0x3e0] sm:$0xff]
  %v170 = vld [vmem:[%s1 + $0x3e8] sm:$0xff]
  %v171 = vld [vmem:[%s1 + $0x3f0] sm:$0xff]
  %v172 = vld [vmem:[%s1 + $0x3f8] sm:$0xff]
  %v173 = vld [vmem:[%s1 + $0x400] sm:$0xff]
  %v174 = vld [vmem:[%s1 + $0x408] sm:$0xff]
  %v175 = vld [vmem:[%s1 + $0x410] sm:$0xff]
  %v176 = vld [vmem:[%s1 + $0x418] sm:$0xff]
  %v177 = vld [vmem:[%s1 + $0x420] sm:$0xff]
  %v178 = vld [vmem:[%s1 + $0x428] sm:$0xff]
  %v179 = vld [vmem:[%s1 + $0x430] sm:$0xff]
  %v180 = vld [vmem:[%s1 + $0x438] sm:$0xff]
  %v181 = vld [vmem:[%s1 + $0x440] sm:$0xff]
  %v182 = vld [vmem:[%s1 + $0x448] sm:$0xff]
  %v183 = vld [vmem:[%s1 + $0x450] sm:$0xff]
  %v184 = vld [vmem:[%s1 + $0x458] sm:$0xff]
  %v185 = vld [vmem:[%s1 + $0x460] sm:$0xff]
  %v186 = vld [vmem:[%s1 + $0x468] sm:$0xff]
  %v187 = vld [vmem:[%s1 + $0x470] sm:$0xff]
  %v188 = vld [vmem:[%s1 + $0x478] sm:$0xff]
  %v189 = vld [vmem:[%s1 + $0x480] sm:$0xff]
  %v190 = vld [vmem:[%s1 + $0x488] sm:$0xff]
  %v191 = vld [vmem:[%s1 + $0x490] sm:$0xff]
  %v192 = vld [vmem:[%s1 + $0x498] sm:$0xff]
  %v193 = vld [vmem:[%s1 + $0x4a0] sm:$0xff]
  %v194 = vld [vmem:[%s1 + $0x4a8] sm:$0xff]
  %v195 = vld [vmem:[%s1 + $0x4b0] sm:$0xff]
  %v196 = vld [vmem:[%s1 + $0x4b8] sm:$0xff]
  %v197 = vld [vmem:[%s1 + $0x4c0] sm:$0xff]
  %v198 = vld [vmem:[%s1 + $0x4c8] sm:$0xff]
  %v199 = vld [vmem:[%s1 + $0x4d0] sm:$0xff]
  %v200 = vld [vmem:[%s1 + $0x4d8] sm:$0xff]
  %v201 = vld [vmem:[%s1 + $0x4e0] sm:$0xff]
  %v202 = vld [vmem:[%s1 + $0x4e8] sm:$0xff]
  %v203 = vld [vmem:[%s1 + $0x4f0] sm:$0xff]
  %v204 = vld [vmem:[%s1 + $0x4f8] sm:$0xff]
  %v205 = vld [vmem:[%s1 + $0x500] sm:$0xff]
  %v206 = vld [vmem:[%s1 + $0x508] sm:$0xff]
  %v207 = vld [vmem:[%s1 + $0x510] sm:$0xff]
  %v208 = vld [vmem:[%s1 + $0x518] sm:$0xff]
  %v209 = vld [vmem:[%s1 + $0x520] sm:$0xff]
  %v210 = vld [vmem:[%s1 + $0x528] sm:$0xff]
  %v211 = vld [vmem:[%s1 + $0x530] sm:$0xff]
  %v212 = vld [vmem:[%s1 + $0x538] sm:$0xff]
  %v213 = vld [vmem:[%s1 + $0x540] sm:$0xff]
  %v214 = vld [vmem:[%s1 + $0x548] sm:$0xff]
  %v215 = vld [vmem:[%s1 + $0x550] sm:$0xff]
  %v216 = vld [vmem:[%s1 + $0x558] sm:$0xff]
  %v217 = vld [vmem:[%s1 + $0x560] sm:$0xff]
  %v218 = vld [vmem:[%s1 + $0x568] sm:$0xff]
  %v219 = vld [vmem:[%s1 + $0x570] sm:$0xff]
  %v220 = vld [vmem:[%s1 + $0x578] sm:$0xff]
  %v221 = vld [vmem:[%s1 + $0x580] sm:$0xff]
  %v222 = vld [vmem:[%s1 + $0x588] sm:$0xff]
  %v223 = vld [vmem:[%s1 + $0x590] sm:$0xff]
  %v224 = vld [vmem:[%s1 + $0x598] sm:$0xff]
  %v225 = vld [vmem:[%s1 + $0x5a0] sm:$0xff]
  %v226 = vld [vmem:[%s1 + $0x5a8] sm:$0xff]
  %v227 = vld [vmem:[%s1 + $0x5b0] sm:$0xff]
  %v228 = vld [vmem:[%s1 + $0x5b8] sm:$0xff]
  %v229 = vld [vmem:[%s1 + $0x5c0] sm:$0xff]
  %v230 = vld [vmem:[%s1 + $0x5c8] sm:$0xff]
  %v231 = vld [vmem:[%s1 + $0x5d0] sm:$0xff]
  %v232 = vld [vmem:[%s1 + $0x5d8] sm:$0xff]
  %v233 = vld [vmem:[%s1 + $0x5e0] sm:$0xff]
  %v234 = vld [vmem:[%s1 + $0x5e8] sm:$0xff]
  %v235 = vld [vmem:[%s1 + $0x5f0] sm:$0xff]
  %v236 = vld [vmem:[%s1 + $0x5f8] sm:$0xff]
  %v237 = vld [vmem:[%s1 + $0x600] sm:$0xff]
  %v238 = vld [vmem:[%s1 + $0x608] sm:$0xff]
  %v239 = vld [vmem:[%s1 + $0x610] sm:$0xff]
  %v240 = vld [vmem:[%s1 + $0x618] sm:$0xff]
  %v241 = vld [vmem:[%s1 + $0x620] sm:$0xff]
  %v242 = vld [vmem:[%s1 + $0x628] sm:$0xff]
  %v243 = vld [vmem:[%s1 + $0x630] sm:$0xff]
  %v244 = vld [vmem:[%s1 + $0x638] sm:$0xff]
  %v245 = vld [vmem:[%s1 + $0x640] sm:$0xff]
  %v246 = vld [vmem:[%s1 + $0x648] sm:$0xff]
  %v247 = vld [vmem:[%s1 + $0x650] sm:$0xff]
  %v248 = vld [vmem:[%s1 + $0x658] sm:$0xff]
  %v249 = vld [vmem:[%s1 + $0x660] sm:$0xff]
  %v250 = vld [vmem:[%s1 + $0x668] sm:$0xff]
  %v251 = vld [vmem:[%s1 + $0x670] sm:$0xff]
  %v252 = vld [vmem:[%s1 + $0x678] sm:$0xff]
  %v253 = vld [vmem:[%s1 + $0x680] sm:$0xff]
  %v254 = vld [vmem:[%s1 + $0x688] sm:$0xff]
  %v255 = vld [vmem:[%s1 + $0x690] sm:$0xff]
  %v256 = vld [vmem:[%s1 + $0x698] sm:$0xff]
  %v257 = vld [vmem:[%s1 + $0x6a0] sm:$0xff]
  %v258 = vld [vmem:[%s1 + $0x6a8] sm:$0xff]
  %v259 = vld [vmem:[%s1 + $0x6b0] sm:$0xff]
  %v260 = vld [vmem:[%s1 + $0x6b8] sm:$0xff]
  %v261 = vld [vmem:[%s1 + $0x6c0] sm:$0xff]
  %v262 = vld [vmem:[%s1 + $0x6c8] sm:$0xff]
  %v263 = vld [vmem:[%s1 + $0x6d0] sm:$0xff]
  %v264 = vld [vmem:[%s1 + $0x6d8] sm:$0xff]
  %v265 = vld [vmem:[%s1 + $0x6e0] sm:$0xff]
  %v266 = vld [vmem:[%s1 + $0x6e8] sm:$0xff]
  %v267 = vld [vmem:[%s1 + $0x6f0] sm:$0xff]
  %v268 = vld [vmem:[%s1 + $0x6f8] sm:$0xff]
  %v269 = vld [vmem:[%s1 + $0x700] sm:$0xff]
  %v270 = vld [vmem:[%s1 + $0x708] sm:$0xff]
  %v271 = vld [vmem:[%s1 + $0x710] sm:$0xff]
  %v272 = vld [vmem:[%s1 + $0x718] sm:$0xff]
  %v273 = vld [vmem:[%s1 + $0x720] sm:$0xff]
  %v274 = vld [vmem:[%s1 + $0x728] sm:$0xff]
  %v275 = vld [vmem:[%s1 + $0x730] sm:$0xff]
  %v276 = vld [vmem:[%s1 + $0x738] sm:$0xff]
  %v277 = vld [vmem:[%s1 + $0x740] sm:$0xff]
  %v278 = vld [vmem:[%s1 + $0x748] sm:$0xff]
  %v279 = vld [vmem:[%s1 + $0x750] sm:$0xff]
  %v280 = vld [vmem:[%s1 + $0x758] sm:$0xff]
  %v281 = vld [vmem:[%s1 + $0x760] sm:$0xff]
  %v282 = vld [vmem:[%s1 + $0x768] sm:$0xff]
  %v283 = vld [vmem:[%s1 + $0x770] sm:$0xff]
  %v284 = vld [vmem:[%s1 + $0x778] sm:$0xff]
  %v285 = vld [vmem:[%s1 + $0x780] sm:$0xff]
  %v286 = vld [vmem:[%s1 + $0x788] sm:$0xff]
  %v287 = vld [vmem:[%s1 + $0x790] sm:$0xff]
  %v288 = vld [vmem:[%s1 + $0x798] sm:$0xff]
  %v289 = vld [vmem:[%s1 + $0x7a0] sm:$0xff]
  %v290 = vld [vmem:[%s1 + $0x7a8] sm:$0xff]
  %v291 = vld [vmem:[%s1 + $0x7b0] sm:$0xff]
  %v292 = vld [vmem:[%s1 + $0x7b8] sm:$0xff]
  %v293 = vld [vmem:[%s1 + $0x7c0] sm:$0xff]
  %v294 = vld [vmem:[%s1 + $0x7c8] sm:$0xff]
  %v295 = vld [vmem:[%s1 + $0x7d0] sm:$0xff]
  %v296 = vld [vmem:[%s1 + $0x7d8] sm:$0xff]
  %v297 = vld [vmem:[%s1 + $0x7e0] sm:$0xff]
  %v298 = vld [vmem:[%s1 + $0x7e8] sm:$0xff]
  %v299 = vld [vmem:[%s1 + $0x7f0] sm:$0xff]
  %v300 = vld [vmem:[%s1 + $0x7f8] sm:$0xff]
  %v301 = vld [vmem:[%s1 + $0x800] sm:$0xff]
  %v302 = vld [vmem:[%s1 + $0x808] sm:$0xff]
  %v303 = vld [vmem:[%s1 + $0x810] sm:$0xff]
  %v304 = vld [vmem:[%s1 + $0x818] sm:$0xff]
  %v305 = vld [vmem:[%s1 + $0x820] sm:$0xff]
  %v306 = vld [vmem:[%s1 + $0x828] sm:$0xff]
  %v307 = vld [vmem:[%s1 + $0x830] sm:$0xff]
  %v308 = vld [vmem:[%s1 + $0x838] sm:$0xff]
  %v309 = vld [vmem:[%s1 + $0x840] sm:$0xff]
  %v310 = vld [vmem:[%s1 + $0x848] sm:$0xff]
  %v311 = vld [vmem:[%s1 + $0x850] sm:$0xff]
  %v312 = vld [vmem:[%s1 + $0x858] sm:$0xff]
  %v313 = vld [vmem:[%s1 + $0x860] sm:$0xff]
  %v314 = vld [vmem:[%s1 + $0x868] sm:$0xff]
  %v315 = vld [vmem:[%s1 + $0x870] sm:$0xff]
  %v316 = vld [vmem:[%s1 + $0x878] sm:$0xff]
  %v317 = vld [vmem:[%s1 + $0x880] sm:$0xff]
  %v318 = vld [vmem:[%s1 + $0x888] sm:$0xff]
  %v319 = vld [vmem:[%s1 + $0x890] sm:$0xff]
  %v320 = vld [vmem:[%s1 + $0x898] sm:$0xff]
  %v321 = vld [vmem:[%s1 + $0x8a0] sm:$0xff]
  %v322 = vld [vmem:[%s1 + $0x8a8] sm:$0xff]
  %v323 = vld [vmem:[%s1 + $0x8b0] sm:$0xff]
  %v324 = vld [vmem:[%s1 + $0x8b8] sm:$0xff]
  %v325 = vld [vmem:[%s1 + $0x8c0] sm:$0xff]
  %v326 = vld [vmem:[%s1 + $0x8c8] sm:$0xff]
  %v327 = vld [vmem:[%s1 + $0x8d0] sm:$0xff]
  %v328 = vld [vmem:[%s1 + $0x8d8] sm:$0xff]
  %v329 = vld [vmem:[%s1 + $0x8e0] sm:$0xff]
  %v330 = vld [vmem:[%s1 + $0x8e8] sm:$0xff]
  %v331 = vld [vmem:[%s1 + $0x8f0] sm:$0xff]
  %v332 = vld [vmem:[%s1 + $0x8f8] sm:$0xff]
  %v333 = vld [vmem:[%s1 + $0x900] sm:$0xff]
  %v334 = vld [vmem:[%s1 + $0x908] sm:$0xff]
  %v335 = vld [vmem:[%s1 + $0x910] sm:$0xff]
  %v336 = vld [vmem:[%s1 + $0x918] sm:$0xff]
  %v337 = vld [vmem:[%s1 + $0x920] sm:$0xff]
  %v338 = vld [vmem:[%s1 + $0x928] sm:$0xff]
  %v339 = vld [vmem:[%s1 + $0x930] sm:$0xff]
  %v340 = vld [vmem:[%s1 + $0x938] sm:$0xff]
  %v341 = vld [vmem:[%s1 + $0x940] sm:$0xff]
  %v342 = vld [vmem:[%s1 + $0x948] sm:$0xff]
  %v343 = vld [vmem:[%s1 + $0x950] sm:$0xff]
  %v344 = vld [vmem:[%s1 + $0x958] sm:$0xff]
  %v345 = vld [vmem:[%s1 + $0x960] sm:$0xff]
  %v346 = vld [vmem:[%s1 + $0x968] sm:$0xff]
  %v347 = vld [vmem:[%s1 + $0x970] sm:$0xff]
  %v348 = vld [vmem:[%s1 + $0x978] sm:$0xff]
  %v349 = vld [vmem:[%s1 + $0x980] sm:$0xff]
  %v350 = vld [vmem:[%s1 + $0x988] sm:$0xff]
  %v351 = vld [vmem:[%s1 + $0x990] sm:$0xff]
  %v352 = vld [vmem:[%s1 + $0x998] sm:$0xff]
  %v353 = vld [vmem:[%s1 + $0x9a0] sm:$0xff]
  %v354 = vld [vmem:[%s1 + $0x9a8] sm:$0xff]
  %v355 = vld [vmem:[%s1 + $0x9b0] sm:$0xff]
  %v356 = vld [vmem:[%s1 + $0x9b8] sm:$0xff]
  %v357 = vld [vmem:[%s1 + $0x9c0] sm:$0xff]
  %v358 = vld [vmem:[%s1 + $0x9c8] sm:$0xff]
  %v359 = vld [vmem:[%s1 + $0x9d0] sm:$0xff]
  %v360 = vld [vmem:[%s1 + $0x9d8] sm:$0xff]
  %v361 = vld [vmem:[%s1 + $0x9e0] sm:$0xff]
  %v362 = vld [vmem:[%s1 + $0x9e8] sm:$0xff]
  %v363 = vld [vmem:[%s1 + $0x9f0] sm:$0xff]
  %v364 = vld [vmem:[%s1 + $0x9f8] sm:$0xff]
  %v365 = vld [vmem:[%s1 + $0xa00] sm:$0xff]
  %v366 = vld [vmem:[%s1 + $0xa08] sm:$0xff]
  %v367 = vld [vmem:[%s1 + $0xa10] sm:$0xff]
  %v368 = vld [vmem:[%s1 + $0xa18] sm:$0xff]
  %v369 = vld [vmem:[%s1 + $0xa20] sm:$0xff]
  %v370 = vld [vmem:[%s1 + $0xa28] sm:$0xff]
  %v371 = vld [vmem:[%s1 + $0xa30] sm:$0xff]
  %v372 = vld [vmem:[%s1 + $0xa38] sm:$0xff]
  %v373 = vld [vmem:[%s1 + $0xa40] sm:$0xff]
  %v374 = vld [vmem:[%s1 + $0xa48] sm:$0xff]
  %v375 = vld [vmem:[%s1 + $0xa50] sm:$0xff]
  %v376 = vld [vmem:[%s1 + $0xa58] sm:$0xff]
  %v377 = vld [vmem:[%s1 + $0xa60] sm:$0xff]
  %v378 = vld [vmem:[%s1 + $0xa68] sm:$0xff]
  %v379 = vld [vmem:[%s1 + $0xa70] sm:$0xff]
  %v380 = vld [vmem:[%s1 + $0xa78] sm:$0xff]
  %v381 = vld [vmem:[%s1 + $0xa80] sm:$0xff]
  %v382 = vld [vmem:[%s1 + $0xa88] sm:$0xff]
  %v383 = vld [vmem:[%s1 + $0xa90] sm:$0xff]
  %v384 = vld [vmem:[%s1 + $0xa98] sm:$0xff]
  %v385 = vld [vmem:[%s1 + $0xaa0] sm:$0xff]
  %v386 = vld [vmem:[%s1 + $0xaa8] sm:$0xff]
  %v387 = vld [vmem:[%s1 + $0xab0] sm:$0xff]
  %v388 = vld [vmem:[%s1 + $0xab8] sm:$0xff]
  %v389 = vld [vmem:[%s1 + $0xac0] sm:$0xff]
  %v390 = vld [vmem:[%s1 + $0xac8] sm:$0xff]
  %v391 = vld [vmem:[%s1 + $0xad0] sm:$0xff]
  %v392 = vld [vmem:[%s1 + $0xad8] sm:$0xff]
  %v393 = vld [vmem:[%s1 + $0xae0] sm:$0xff]
  %v394 = vld [vmem:[%s1 + $0xae8] sm:$0xff]
  %v395 = vld [vmem:[%s1 + $0xaf0] sm:$0xff]
  %v396 = vld [vmem:[%s1 + $0xaf8] sm:$0xff]
  %v397 = vld [vmem:[%s1 + $0xb00] sm:$0xff]
  %v398 = vld [vmem:[%s1 + $0xb08] sm:$0xff]
  %v399 = vld [vmem:[%s1 + $0xb10] sm:$0xff]
  %v400 = vld [vmem:[%s1 + $0xb18] sm:$0xff]
  %v401 = vld [vmem:[%s1 + $0xb20] sm:$0xff]
  %v402 = vld [vmem:[%s1 + $0xb28] sm:$0xff]
  %v403 = vld [vmem:[%s1 + $0xb30] sm:$0xff]
  %v404 = vld [vmem:[%s1 + $0xb38] sm:$0xff]
  %v405 = vld [vmem:[%s1 + $0xb40] sm:$0xff]
  %v406 = vld [vmem:[%s1 + $0xb48] sm:$0xff]
  %v407 = vld [vmem:[%s1 + $0xb50] sm:$0xff]
  %v408 = vld [vmem:[%s1 + $0xb58] sm:$0xff]
  %v409 = vld [vmem:[%s1 + $0xb60] sm:$0xff]
  %v410 = vld [vmem:[%s1 + $0xb68] sm:$0xff]
  %v411 = vld [vmem:[%s1 + $0xb70] sm:$0xff]
  %v412 = vld [vmem:[%s1 + $0xb78] sm:$0xff]
  %v413 = vld [vmem:[%s1 + $0xb80] sm:$0xff]
  %v414 = vld [vmem:[%s1 + $0xb88] sm:$0xff]
  %v415 = vld [vmem:[%s1 + $0xb90] sm:$0xff]
  %v416 = vld [vmem:[%s1 + $0xb98] sm:$0xff]
  %v417 = vld [vmem:[%s1 + $0xba0] sm:$0xff]
  %v418 = vld [vmem:[%s1 + $0xba8] sm:$0xff]
  %v419 = vld [vmem:[%s1 + $0xbb0] sm:$0xff]
  %v420 = vld [vmem:[%s1 + $0xbb8] sm:$0xff]
  %v421 = vld [vmem:[%s1 + $0xbc0] sm:$0xff]
  %v422 = vld [vmem:[%s1 + $0xbc8] sm:$0xff]
  %v423 = vld [vmem:[%s1 + $0xbd0] sm:$0xff]
  %v424 = vld [vmem:[%s1 + $0xbd8] sm:$0xff]
  %v425 = vld [vmem:[%s1 + $0xbe0] sm:$0xff]
  %v426 = vld [vmem:[%s1 + $0xbe8] sm:$0xff]
  %v427 = vld [vmem:[%s1 + $0xbf0] sm:$0xff]
  %v428 = vld [vmem:[%s1 + $0xbf8] sm:$0xff]
  %v429 = vld [vmem:[%s1 + $0xc00] sm:$0xff]
  %v430 = vld [vmem:[%s1 + $0xc08] sm:$0xff]
  %v431 = vld [vmem:[%s1 + $0xc10] sm:$0xff]
  %v432 = vld [vmem:[%s1 + $0xc18] sm:$0xff]
  %v433 = vld [vmem:[%s1 + $0xc20] sm:$0xff]
  %v434 = vld [vmem:[%s1 + $0xc28] sm:$0xff]
  %v435 = vld [vmem:[%s1 + $0xc30] sm:$0xff]
  %v436 = vld [vmem:[%s1 + $0xc38] sm:$0xff]
  %v437 = vld [vmem:[%s1 + $0xc40] sm:$0xff]
  %v438 = vld [vmem:[%s1 + $0xc48] sm:$0xff]
  %v439 = vld [vmem:[%s1 + $0xc50] sm:$0xff]
  %v440 = vld [vmem:[%s1 + $0xc58] sm:$0xff]
  %v441 = vld [vmem:[%s1 + $0xc60] sm:$0xff]
  %v442 = vld [vmem:[%s1 + $0xc68] sm:$0xff]
  %v443 = vld [vmem:[%s1 + $0xc70] sm:$0xff]
  %v444 = vld [vmem:[%s1 + $0xc78] sm:$0xff]
  %v445 = vld [vmem:[%s1 + $0xc80] sm:$0xff]
  %v446 = vld [vmem:[%s1 + $0xc88] sm:$0xff]
  %v447 = vld [vmem:[%s1 + $0xc90] sm:$0xff]
  %v448 = vld [vmem:[%s1 + $0xc98] sm:$0xff]
  %v449 = vld [vmem:[%s1 + $0xca0] sm:$0xff]
  %v450 = vld [vmem:[%s1 + $0xca8] sm:$0xff]
  %v451 = vld [vmem:[%s1 + $0xcb0] sm:$0xff]
  %v452 = vld [vmem:[%s1 + $0xcb8] sm:$0xff]
  %v453 = vld [vmem:[%s1 + $0xcc0] sm:$0xff]
  %v454 = vld [vmem:[%s1 + $0xcc8] sm:$0xff]
  %v455 = vld [vmem:[%s1 + $0xcd0] sm:$0xff]
  %v456 = vld [vmem:[%s1 + $0xcd8] sm:$0xff]
  %v457 = vld [vmem:[%s1 + $0xce0] sm:$0xff]
  %v458 = vld [vmem:[%s1 + $0xce8] sm:$0xff]
  %v459 = vld [vmem:[%s1 + $0xcf0] sm:$0xff]
  %v460 = vld [vmem:[%s1 + $0xcf8] sm:$0xff]
  %v461 = vld [vmem:[%s1 + $0xd00] sm:$0xff]
  %v462 = vld [vmem:[%s1 + $0xd08] sm:$0xff]
  %v463 = vld [vmem:[%s1 + $0xd10] sm:$0xff]
  %v464 = vld [vmem:[%s1 + $0xd18] sm:$0xff]
  %v465 = vld [vmem:[%s1 + $0xd20] sm:$0xff]
  %v466 = vld [vmem:[%s1 + $0xd28] sm:$0xff]
  %v467 = vld [vmem:[%s1 + $0xd30] sm:$0xff]
  %v468 = vld [vmem:[%s1 + $0xd38] sm:$0xff]
  %v469 = vld [vmem:[%s1 + $0xd40] sm:$0xff]
  %v470 = vld [vmem:[%s1 + $0xd48] sm:$0xff]
  %v471 = vld [vmem:[%s1 + $0xd50] sm:$0xff]
  %v472 = vld [vmem:[%s1 + $0xd58] sm:$0xff]
  %v473 = vld [vmem:[%s1 + $0xd60] sm:$0xff]
  %v474 = vld [vmem:[%s1 + $0xd68] sm:$0xff]
  %v475 = vld [vmem:[%s1 + $0xd70] sm:$0xff]
  %v476 = vld [vmem:[%s1 + $0xd78] sm:$0xff]
  %v477 = vld [vmem:[%s1 + $0xd80] sm:$0xff]
  %v478 = vld [vmem:[%s1 + $0xd88] sm:$0xff]
  %v479 = vld [vmem:[%s1 + $0xd90] sm:$0xff]
  %v480 = vld [vmem:[%s1 + $0xd98] sm:$0xff]
  %v481 = vld [vmem:[%s1 + $0xda0] sm:$0xff]
  %v482 = vld [vmem:[%s1 + $0xda8] sm:$0xff]
  %v483 = vld [vmem:[%s1 + $0xdb0] sm:$0xff]
  %v484 = vld [vmem:[%s1 + $0xdb8] sm:$0xff]
  %v485 = vld [vmem:[%s1 + $0xdc0] sm:$0xff]
  %v486 = vld [vmem:[%s1 + $0xdc8] sm:$0xff]
  %v487 = vld [vmem:[%s1 + $0xdd0] sm:$0xff]
  %v488 = vld [vmem:[%s1 + $0xdd8] sm:$0xff]
  %v489 = vld [vmem:[%s1 + $0xde0] sm:$0xff]
  %v490 = vld [vmem:[%s1 + $0xde8] sm:$0xff]
  %v491 = vld [vmem:[%s1 + $0xdf0] sm:$0xff]
  %v492 = vld [vmem:[%s1 + $0xdf8] sm:$0xff]
  %v493 = vld [vmem:[%s1 + $0xe00] sm:$0xff]
  %v494 = vld [vmem:[%s1 + $0xe08] sm:$0xff]
  %v495 = vld [vmem:[%s1 + $0xe10] sm:$0xff]
  %v496 = vld [vmem:[%s1 + $0xe18] sm:$0xff]
  %v497 = vld [vmem:[%s1 + $0xe20] sm:$0xff]
  %v498 = vld [vmem:[%s1 + $0xe28] sm:$0xff]
  %v499 = vld [vmem:[%s1 + $0xe30] sm:$0xff]
  %v500 = vld [vmem:[%s1 + $0xe38] sm:$0xff]
  %v501 = vld [vmem:[%s1 + $0xe40] sm:$0xff]
  %v502 = vld [vmem:[%s1 + $0xe48] sm:$0xff]
  %v503 = vld [vmem:[%s1 + $0xe50] sm:$0xff]
  %v504 = vld [vmem:[%s1 + $0xe58] sm:$0xff]
  %v505 = vld [vmem:[%s1 + $0xe60] sm:$0xff]
  %v506 = vld [vmem:[%s1 + $0xe68] sm:$0xff]
  %v507 = vld [vmem:[%s1 + $0xe70] sm:$0xff]
  %v508 = vld [vmem:[%s1 + $0xe78] sm:$0xff]
  %v509 = vld [vmem:[%s1 + $0xe80] sm:$0xff]
  %v510 = vld [vmem:[%s1 + $0xe88] sm:$0xff]
  %v511 = vld [vmem:[%s1 + $0xe90] sm:$0xff]
  %v512 = vld [vmem:[%s1 + $0xe98] sm:$0xff]
  %v513 = vld [vmem:[%s1 + $0xea0] sm:$0xff]
  %v514 = vld [vmem:[%s1 + $0xea8] sm:$0xff]
  %v515 = vld [vmem:[%s1 + $0xeb0] sm:$0xff]
  %v516 = vld [vmem:[%s1 + $0xeb8] sm:$0xff]
  %v517 = vld [vmem:[%s1 + $0xec0] sm:$0xff]
  %v518 = vld [vmem:[%s1 + $0xec8] sm:$0xff]
  %v519 = vld [vmem:[%s1 + $0xed0] sm:$0xff]
  %v520 = vld [vmem:[%s1 + $0xed8] sm:$0xff]
  %v521 = vld [vmem:[%s1 + $0xee0] sm:$0xff]
  %v522 = vld [vmem:[%s1 + $0xee8] sm:$0xff]
  %v523 = vld [vmem:[%s1 + $0xef0] sm:$0xff]
  %v524 = vld [vmem:[%s1 + $0xef8] sm:$0xff]
  %v525 = vld [vmem:[%s1 + $0xf00] sm:$0xff]
  %v526 = vld [vmem:[%s1 + $0xf08] sm:$0xff]
  %v527 = vld [vmem:[%s1 + $0xf10] sm:$0xff]
  %v528 = vld [vmem:[%s1 + $0xf18] sm:$0xff]
  %v529 = vld [vmem:[%s1 + $0xf20] sm:$0xff]
  %v530 = vld [vmem:[%s1 + $0xf28] sm:$0xff]
  %v531 = vld [vmem:[%s1 + $0xf30] sm:$0xff]
  %v532 = vld [vmem:[%s1 + $0xf38] sm:$0xff]
  %v533 = vld [vmem:[%s1 + $0xf40] sm:$0xff]
  %v534 = vld [vmem:[%s1 + $0xf48] sm:$0xff]
  %v535 = vld [vmem:[%s1 + $0xf50] sm:$0xff]
  %v536 = vld [vmem:[%s1 + $0xf58] sm:$0xff]
  %v537 = vld [vmem:[%s1 + $0xf60] sm:$0xff]
  %v538 = vld [vmem:[%s1 + $0xf68] sm:$0xff]
  %v539 = vld [vmem:[%s1 + $0xf70] sm:$0xff]
  %v540 = vld [vmem:[%s1 + $0xf78] sm:$0xff]
  %v541 = vld [vmem:[%s1 + $0xf80] sm:$0xff]
  %v542 = vld [vmem:[%s1 + $0xf88] sm:$0xff]
  %v543 = vld [vmem:[%s1 + $0xf90] sm:$0xff]
  %v544 = vld [vmem:[%s1 + $0xf98] sm:$0xff]
  %v545 = vld [vmem:[%s1 + $0xfa0] sm:$0xff]
  %v546 = vld [vmem:[%s1 + $0xfa8] sm:$0xff]
  %v547 = vld [vmem:[%s1 + $0xfb0] sm:$0xff]
  %v548 = vld [vmem:[%s1 + $0xfb8] sm:$0xff]
  %v549 = vld [vmem:[%s1 + $0xfc0] sm:$0xff]
  %v550 = vld [vmem:[%s1 + $0xfc8] sm:$0xff]
  %v551 = vld [vmem:[%s1 + $0xfd0] sm:$0xff]
  %v552 = vld [vmem:[%s1 + $0xfd8] sm:$0xff]
  %v553 = vld [vmem:[%s1 + $0xfe0] sm:$0xff]
  %v554 = vld [vmem:[%s1 + $0xfe8] sm:$0xff]
  %v555 = vld [vmem:[%s1 + $0xff0] sm:$0xff]
  %v556 = vld [vmem:[%s1 + $0xff8] sm:$0xff]
  %v557 = vld [vmem:[%s1 + $0x1000] sm:$0xff]
  %v558 = vld [vmem:[%s1 + $0x1008] sm:$0xff]
  %v559 = vld [vmem:[%s1 + $0x1010] sm:$0xff]
  %v560 = vld [vmem:[%s1 + $0x1018] sm:$0xff]
  %v561 = vld [vmem:[%s1 + $0x1020] sm:$0xff]
  %v562 = vld [vmem:[%s1 + $0x1028] sm:$0xff]
  %v563 = vld [vmem:[%s1 + $0x1030] sm:$0xff]
  %v564 = vld [vmem:[%s1 + $0x1038] sm:$0xff]
  %v565 = vld [vmem:[%s1 + $0x1040] sm:$0xff]
  %v566 = vld [vmem:[%s1 + $0x1048] sm:$0xff]
  %v567 = vld [vmem:[%s1 + $0x1050] sm:$0xff]
  %v568 = vld [vmem:[%s1 + $0x1058] sm:$0xff]
  %v569 = vld [vmem:[%s1 + $0x1060] sm:$0xff]
  %v570 = vld [vmem:[%s1 + $0x1068] sm:$0xff]
  %v571 = vld [vmem:[%s1 + $0x1070] sm:$0xff]
  %v572 = vld [vmem:[%s1 + $0x1078] sm:$0xff]
  %v573 = vld [vmem:[%s1 + $0x1080] sm:$0xff]
  %v574 = vld [vmem:[%s1 + $0x1088] sm:$0xff]
  %v575 = vld [vmem:[%s1 + $0x1090] sm:$0xff]
  %v576 = vld [vmem:[%s1 + $0x1098] sm:$0xff]
  %v577 = vld [vmem:[%s1 + $0x10a0] sm:$0xff]
  %v578 = vld [vmem:[%s1 + $0x10a8] sm:$0xff]
  %v579 = vld [vmem:[%s1 + $0x10b0] sm:$0xff]
  %v580 = vld [vmem:[%s1 + $0x10b8] sm:$0xff]
  %v581 = vld [vmem:[%s1 + $0x10c0] sm:$0xff]
  %v582 = vld [vmem:[%s1 + $0x10c8] sm:$0xff]
  %v583 = vld [vmem:[%s1 + $0x10d0] sm:$0xff]
  %v584 = vld [vmem:[%s1 + $0x10d8] sm:$0xff]
  %v585 = vld [vmem:[%s1 + $0x10e0] sm:$0xff]
  %v586 = vld [vmem:[%s1 + $0x10e8] sm:$0xff]
  %v587 = vld [vmem:[%s1 + $0x10f0] sm:$0xff]
  %v588 = vld [vmem:[%s1 + $0x10f8] sm:$0xff]
  %v589 = vld [vmem:[%s1 + $0x1100] sm:$0xff]
  %v590 = vld [vmem:[%s1 + $0x1108] sm:$0xff]
  %v591 = vld [vmem:[%s1 + $0x1110] sm:$0xff]
  %v592 = vld [vmem:[%s1 + $0x1118] sm:$0xff]
  %v593 = vld [vmem:[%s1 + $0x1120] sm:$0xff]
  %v594 = vld [vmem:[%s1 + $0x1128] sm:$0xff]
  %v595 = vld [vmem:[%s1 + $0x1130] sm:$0xff]
  %v596 = vld [vmem:[%s1 + $0x1138] sm:$0xff]
  %v597 = vld [vmem:[%s1 + $0x1140] sm:$0xff]
  %v598 = vld [vmem:[%s1 + $0x1148] sm:$0xff]
  %v599 = vld [vmem:[%s1 + $0x1150] sm:$0xff]
  %v600 = vld [vmem:[%s1 + $0x1158] sm:$0xff]
  %v601 = vld [vmem:[%s1 + $0x1160] sm:$0xff]
  %v602 = vld [vmem:[%s1 + $0x1168] sm:$0xff]
  %v603 = vld [vmem:[%s1 + $0x1170] sm:$0xff]
  %v604 = vld [vmem:[%s1 + $0x1178] sm:$0xff]
  %v605 = vld [vmem:[%s1 + $0x1180] sm:$0xff]
  %v606 = vld [vmem:[%s1 + $0x1188] sm:$0xff]
  %v607 = vld [vmem:[%s1 + $0x1190] sm:$0xff]
  %v608 = vld [vmem:[%s1 + $0x1198] sm:$0xff]
  %v609 = vld [vmem:[%s1 + $0x11a0] sm:$0xff]
  %v610 = vld [vmem:[%s1 + $0x11a8] sm:$0xff]
  %v611 = vld [vmem:[%s1 + $0x11b0] sm:$0xff]
  %v612 = vld [vmem:[%s1 + $0x11b8] sm:$0xff]
  %v613 = vld [vmem:[%s1 + $0x11c0] sm:$0xff]
  %v614 = vld [vmem:[%s1 + $0x11c8] sm:$0xff]
  %v615 = vld [vmem:[%s1 + $0x11d0] sm:$0xff]
  %v616 = vld [vmem:[%s1 + $0x11d8] sm:$0xff]
  %v617 = vld [vmem:[%s1 + $0x11e0] sm:$0xff]
  %v618 = vld [vmem:[%s1 + $0x11e8] sm:$0xff]
  %v619 = vld [vmem:[%s1 + $0x11f0] sm:$0xff]
  %v620 = vld [vmem:[%s1 + $0x11f8] sm:$0xff]
  %v621 = vld [vmem:[%s1 + $0x1200] sm:$0xff]
  %v622 = vld [vmem:[%s1 + $0x1208] sm:$0xff]
  %v623 = vld [vmem:[%s1 + $0x1210] sm:$0xff]
  %v624 = vld [vmem:[%s1 + $0x1218] sm:$0xff]
  %v625 = vld [vmem:[%s1 + $0x1220] sm:$0xff]
  %v626 = vld [vmem:[%s1 + $0x1228] sm:$0xff]
  %v627 = vld [vmem:[%s1 + $0x1230] sm:$0xff]
  %v628 = vld [vmem:[%s1 + $0x1238] sm:$0xff]
  %v629 = vld [vmem:[%s1 + $0x1240] sm:$0xff]
  %v630 = vld [vmem:[%s1 + $0x1248] sm:$0xff]
  %v631 = vld [vmem:[%s1 + $0x1250] sm:$0xff]
  %v632 = vld [vmem:[%s1 + $0x1258] sm:$0xff]
  %v633 = vld [vmem:[%s1 + $0x1260] sm:$0xff]
  %v634 = vld [vmem:[%s1 + $0x1268] sm:$0xff]
  %v635 = vld [vmem:[%s1 + $0x1270] sm:$0xff]
  %v636 = vld [vmem:[%s1 + $0x1278] sm:$0xff]
  %v637 = vld [vmem:[%s1 + $0x1280] sm:$0xff]
  %v638 = vld [vmem:[%s1 + $0x1288] sm:$0xff]
  %v639 = vld [vmem:[%s1 + $0x1290] sm:$0xff]
  %v640 = vld [vmem:[%s1 + $0x1298] sm:$0xff]
  %v641 = vld [vmem:[%s1 + $0x12a0] sm:$0xff]
  %v642 = vld [vmem:[%s1 + $0x12a8] sm:$0xff]
  %v643 = vld [vmem:[%s1 + $0x12b0] sm:$0xff]
  %v644 = vld [vmem:[%s1 + $0x12b8] sm:$0xff]
  %v645 = vld [vmem:[%s1 + $0x12c0] sm:$0xff]
  %v646 = vld [vmem:[%s1 + $0x12c8] sm:$0xff]
  %v647 = vld [vmem:[%s1 + $0x12d0] sm:$0xff]
  %v648 = vld [vmem:[%s1 + $0x12d8] sm:$0xff]
  %v649 = vld [vmem:[%s1 + $0x12e0] sm:$0xff]
  %v650 = vld [vmem:[%s1 + $0x12e8] sm:$0xff]
  %v651 = vld [vmem:[%s1 + $0x12f0] sm:$0xff]
  %v652 = vld [vmem:[%s1 + $0x12f8] sm:$0xff]
  %v653 = vld [vmem:[%s1 + $0x1300] sm:$0xff]
  %v654 = vld [vmem:[%s1 + $0x1308] sm:$0xff]
  %v655 = vld [vmem:[%s1 + $0x1310] sm:$0xff]
  %v656 = vld [vmem:[%s1 + $0x1318] sm:$0xff]
  %v657 = vld [vmem:[%s1 + $0x1320] sm:$0xff]
  %v658 = vld [vmem:[%s1 + $0x1328] sm:$0xff]
  %v659 = vld [vmem:[%s1 + $0x1330] sm:$0xff]
  %v660 = vld [vmem:[%s1 + $0x1338] sm:$0xff]
  %v661 = vld [vmem:[%s1 + $0x1340] sm:$0xff]
  %v662 = vld [vmem:[%s1 + $0x1348] sm:$0xff]
  %v663 = vld [vmem:[%s1 + $0x1350] sm:$0xff]
  %v664 = vld [vmem:[%s1 + $0x1358] sm:$0xff]
  %v665 = vld [vmem:[%s1 + $0x1360] sm:$0xff]
  %v666 = vld [vmem:[%s1 + $0x1368] sm:$0xff]
  %v667 = vld [vmem:[%s1 + $0x1370] sm:$0xff]
  %v668 = vld [vmem:[%s1 + $0x1378] sm:$0xff]
  %v669 = vld [vmem:[%s1 + $0x1380] sm:$0xff]
  %v670 = vld [vmem:[%s1 + $0x1388] sm:$0xff]
  %v671 = vld [vmem:[%s1 + $0x1390] sm:$0xff]
  %v672 = vld [vmem:[%s1 + $0x1398] sm:$0xff]
  %v673 = vld [vmem:[%s1 + $0x13a0] sm:$0xff]
  %v674 = vld [vmem:[%s1 + $0x13a8] sm:$0xff]
  %v675 = vld [vmem:[%s1 + $0x13b0] sm:$0xff]
  %v676 = vld [vmem:[%s1 + $0x13b8] sm:$0xff]
  %v677 = vld [vmem:[%s1 + $0x13c0] sm:$0xff]
  %v678 = vld [vmem:[%s1 + $0x13c8] sm:$0xff]
  %v679 = vld [vmem:[%s1 + $0x13d0] sm:$0xff]
  %v680 = vld [vmem:[%s1 + $0x13d8] sm:$0xff]
  %v681 = vld [vmem:[%s1 + $0x13e0] sm:$0xff]
  %v682 = vld [vmem:[%s1 + $0x13e8] sm:$0xff]
  %v683 = vld [vmem:[%s1 + $0x13f0] sm:$0xff]
  %v684 = vld [vmem:[%s1 + $0x13f8] sm:$0xff]
  %v685 = vld [vmem:[%s1 + $0x1400] sm:$0xff]
  %v686 = vld [vmem:[%s1 + $0x1408] sm:$0xff]
  %v687 = vld [vmem:[%s1 + $0x1410] sm:$0xff]
  %v688 = vld [vmem:[%s1 + $0x1418] sm:$0xff]
  %v689 = vld [vmem:[%s1 + $0x1420] sm:$0xff]
  %v690 = vld [vmem:[%s1 + $0x1428] sm:$0xff]
  %v691 = vld [vmem:[%s1 + $0x1430] sm:$0xff]
  %v692 = vld [vmem:[%s1 + $0x1438] sm:$0xff]
  %v693 = vld [vmem:[%s1 + $0x1440] sm:$0xff]
  %v694 = vld [vmem:[%s1 + $0x1448] sm:$0xff]
  %v695 = vld [vmem:[%s1 + $0x1450] sm:$0xff]
  %v696 = vld [vmem:[%s1 + $0x1458] sm:$0xff]
  %v697 = vld [vmem:[%s1 + $0x1460] sm:$0xff]
  %v698 = vld [vmem:[%s1 + $0x1468] sm:$0xff]
  %v699 = vld [vmem:[%s1 + $0x1470] sm:$0xff]
  %v700 = vld [vmem:[%s1 + $0x1478] sm:$0xff]
  %v701 = vld [vmem:[%s1 + $0x1480] sm:$0xff]
  %v702 = vld [vmem:[%s1 + $0x1488] sm:$0xff]
  %v703 = vld [vmem:[%s1 + $0x1490] sm:$0xff]
  %v704 = vld [vmem:[%s1 + $0x1498] sm:$0xff]
  %v705 = vld [vmem:[%s1 + $0x14a0] sm:$0xff]
  %v706 = vld [vmem:[%s1 + $0x14a8] sm:$0xff]
  %v707 = vld [vmem:[%s1 + $0x14b0] sm:$0xff]
  %v708 = vld [vmem:[%s1 + $0x14b8] sm:$0xff]
  %v709 = vld [vmem:[%s1 + $0x14c0] sm:$0xff]
  %v710 = vld [vmem:[%s1 + $0x14c8] sm:$0xff]
  %v711 = vld [vmem:[%s1 + $0x14d0] sm:$0xff]
  %v712 = vld [vmem:[%s1 + $0x14d8] sm:$0xff]
  %v713 = vld [vmem:[%s1 + $0x14e0] sm:$0xff]
  %v714 = vld [vmem:[%s1 + $0x14e8] sm:$0xff]
  %v715 = vld [vmem:[%s1 + $0x14f0] sm:$0xff]
  %v716 = vld [vmem:[%s1 + $0x14f8] sm:$0xff]
  %v717 = vld [vmem:[%s1 + $0x1500] sm:$0xff]
  %v718 = vld [vmem:[%s1 + $0x1508] sm:$0xff]
  %v719 = vld [vmem:[%s1 + $0x1510] sm:$0xff]
  %v720 = vld [vmem:[%s1 + $0x1518] sm:$0xff]
  %v721 = vld [vmem:[%s1 + $0x1520] sm:$0xff]
  %v722 = vld [vmem:[%s1 + $0x1528] sm:$0xff]
  %v723 = vld [vmem:[%s1 + $0x1530] sm:$0xff]
  %v724 = vld [vmem:[%s1 + $0x1538] sm:$0xff]
  %v725 = vld [vmem:[%s1 + $0x1540] sm:$0xff]
  %v726 = vld [vmem:[%s1 + $0x1548] sm:$0xff]
  %v727 = vld [vmem:[%s1 + $0x1550] sm:$0xff]
  %v728 = vld [vmem:[%s1 + $0x1558] sm:$0xff]
  %v729 = vld [vmem:[%s1 + $0x1560] sm:$0xff]
  %v730 = vld [vmem:[%s1 + $0x1568] sm:$0xff]
  %v731 = vld [vmem:[%s1 + $0x1570] sm:$0xff]
  %v732 = vld [vmem:[%s1 + $0x1578] sm:$0xff]
  %v733 = vld [vmem:[%s1 + $0x1580] sm:$0xff]
  %v734 = vld [vmem:[%s1 + $0x1588] sm:$0xff]
  %v735 = vld [vmem:[%s1 + $0x1590] sm:$0xff]
  %v736 = vld [vmem:[%s1 + $0x1598] sm:$0xff]
  %v737 = vld [vmem:[%s1 + $0x15a0] sm:$0xff]
  %v738 = vld [vmem:[%s1 + $0x15a8] sm:$0xff]
  %v739 = vld [vmem:[%s1 + $0x15b0] sm:$0xff]
  %v740 = vld [vmem:[%s1 + $0x15b8] sm:$0xff]
  %v741 = vld [vmem:[%s1 + $0x15c0] sm:$0xff]
  %v742 = vld [vmem:[%s1 + $0x15c8] sm:$0xff]
  %v743 = vld [vmem:[%s1 + $0x15d0] sm:$0xff]
  %v744 = vld [vmem:[%s1 + $0x15d8] sm:$0xff]
  %v745 = vld [vmem:[%s1 + $0x15e0] sm:$0xff]
  %v746 = vld [vmem:[%s1 + $0x15e8] sm:$0xff]
  %v747 = vld [vmem:[%s1 + $0x15f0] sm:$0xff]
  %v748 = vld [vmem:[%s1 + $0x15f8] sm:$0xff]
  %v749 = vld [vmem:[%s1 + $0x1600] sm:$0xff]
  %v750 = vld [vmem:[%s1 + $0x1608] sm:$0xff]
  %v751 = vld [vmem:[%s1 + $0x1610] sm:$0xff]
  %v752 = vld [vmem:[%s1 + $0x1618] sm:$0xff]
  %v753 = vld [vmem:[%s1 + $0x1620] sm:$0xff]
  %v754 = vld [vmem:[%s1 + $0x1628] sm:$0xff]
  %v755 = vld [vmem:[%s1 + $0x1630] sm:$0xff]
  %v756 = vld [vmem:[%s1 + $0x1638] sm:$0xff]
  %v757 = vld [vmem:[%s1 + $0x1640] sm:$0xff]
  %v758 = vld [vmem:[%s1 + $0x1648] sm:$0xff]
  %v759 = vld [vmem:[%s1 + $0x1650] sm:$0xff]
  %v760 = vld [vmem:[%s1 + $0x1658] sm:$0xff]
  %v761 = vld [vmem:[%s1 + $0x1660] sm:$0xff]
  %v762 = vld [vmem:[%s1 + $0x1668] sm:$0xff]
  %v763 = vld [vmem:[%s1 + $0x1670] sm:$0xff]
  %v764 = vld [vmem:[%s1 + $0x1678] sm:$0xff]
  %v765 = vld [vmem:[%s2] sm:$0xf]
  %v767 = vlaneseq
  %v768 = vshrl.u32 %v767, 7
  %v769 = vsub.s32 0, %v768
  %v770 = vrot.slane %v765, %v769
  %v771 = vlaneseq
  %v772 = vshrl.u32 %v771, 7
  %v773 = vsub.s32 1, %v772
  %v774 = vrot.slane %v765, %v773
  %v775 = vlaneseq
  %v776 = vshrl.u32 %v775, 7
  %v777 = vsub.s32 2, %v776
  %v778 = vrot.slane %v765, %v777
  %v779 = vlaneseq
  %v780 = vshrl.u32 %v779, 7
  %v781 = vsub.s32 3, %v780
  %v782 = vrot.slane %v765, %v781
  %v811 = vunpack.c.l.b16 %v21
  %v812 = vunpack.c.h.b16 %v21
  %v813 = vunpack.c.l.b16 %v22
  %v814 = vunpack.c.h.b16 %v22
  %v815 = vunpack.c.l.b16 %v23
  %v816 = vunpack.c.h.b16 %v23
  %v817 = vunpack.c.l.b16 %v24
  %v818 = vunpack.c.h.b16 %v24
  %v819 = vunpack.c.l.b16 %v25
  %v820 = vunpack.c.h.b16 %v25
  %v821 = vunpack.c.l.b16 %v26
  %v822 = vunpack.c.h.b16 %v26
  %v823 = vunpack.c.l.b16 %v27
  %v824 = vunpack.c.h.b16 %v27
  %v825 = vunpack.c.l.b16 %v28
  %v826 = vunpack.c.h.b16 %v28
  %v827 = vunpack.c.l.b16 %v29
  %v828 = vunpack.c.h.b16 %v29
  %v829 = vunpack.c.l.b16 %v30
  %v830 = vunpack.c.h.b16 %v30
  %v831 = vunpack.c.l.b16 %v31
  %v832 = vunpack.c.h.b16 %v31
  %v833 = vunpack.c.l.b16 %v32
  %v834 = vunpack.c.l.b16 %v33
  %v835 = vunpack.c.h.b16 %v33
  %v836 = vunpack.c.l.b16 %v34
  %v837 = vunpack.c.h.b16 %v34
  %v838 = vunpack.c.l.b16 %v35
  %v839 = vunpack.c.h.b16 %v35
  %v840 = vunpack.c.l.b16 %v36
  %v841 = vunpack.c.h.b16 %v36
  %v842 = vunpack.c.l.b16 %v37
  %v843 = vunpack.c.h.b16 %v37
  %v844 = vunpack.c.l.b16 %v38
  %v845 = vunpack.c.h.b16 %v38
  %v846 = vunpack.c.l.b16 %v39
  %v847 = vunpack.c.h.b16 %v39
  %v848 = vunpack.c.l.b16 %v40
  %v849 = vunpack.c.h.b16 %v40
  %v850 = vunpack.c.l.b16 %v41
  %v851 = vunpack.c.h.b16 %v41
  %v852 = vunpack.c.l.b16 %v42
  %v853 = vunpack.c.h.b16 %v42
  %v854 = vunpack.c.l.b16 %v43
  %v855 = vunpack.c.h.b16 %v43
  %v856 = vunpack.c.l.b16 %v44
  %v857 = vpack.c.b16 %v834, %v811
  %v858 = vpack.c.b16 %v835, %v812
  %v859 = vpack.c.b16 %v836, %v813
  %v860 = vpack.c.b16 %v837, %v814
  %v861 = vpack.c.b16 %v838, %v815
  %v862 = vpack.c.b16 %v839, %v816
  %v863 = vpack.c.b16 %v840, %v817
  %v864 = vpack.c.b16 %v841, %v818
  %v865 = vpack.c.b16 %v842, %v819
  %v866 = vpack.c.b16 %v843, %v820
  %v867 = vpack.c.b16 %v844, %v821
  %v868 = vpack.c.b16 %v845, %v822
  %v869 = vpack.c.b16 %v846, %v823
  %v870 = vpack.c.b16 %v847, %v824
  %v871 = vpack.c.b16 %v848, %v825
  %v872 = vpack.c.b16 %v849, %v826
  %v873 = vpack.c.b16 %v850, %v827
  %v874 = vpack.c.b16 %v851, %v828
  %v875 = vpack.c.b16 %v852, %v829
  %v876 = vpack.c.b16 %v853, %v830
  %v877 = vpack.c.b16 %v854, %v831
  %v878 = vpack.c.b16 %v855, %v832
  %v879 = vpack.c.b16 %v856, %v833
  %v1622 = vunpack.c.l.b16 %v45
  %v1623 = vunpack.c.h.b16 %v45
  %v1624 = vunpack.c.l.b16 %v46
  %v1625 = vunpack.c.h.b16 %v46
  %v1626 = vunpack.c.l.b16 %v47
  %v1627 = vunpack.c.h.b16 %v47
  %v1628 = vunpack.c.l.b16 %v48
  %v1629 = vunpack.c.h.b16 %v48
  %v1630 = vunpack.c.l.b16 %v49
  %v1631 = vunpack.c.h.b16 %v49
  %v1632 = vunpack.c.l.b16 %v50
  %v1633 = vunpack.c.h.b16 %v50
  %v1634 = vunpack.c.l.b16 %v51
  %v1635 = vunpack.c.h.b16 %v51
  %v1636 = vunpack.c.l.b16 %v52
  %v1637 = vunpack.c.h.b16 %v52
  %v1638 = vunpack.c.l.b16 %v53
  %v1639 = vunpack.c.h.b16 %v53
  %v1640 = vunpack.c.l.b16 %v54
  %v1641 = vunpack.c.h.b16 %v54
  %v1642 = vunpack.c.l.b16 %v55
  %v1643 = vunpack.c.h.b16 %v55
  %v1644 = vunpack.c.l.b16 %v56
  %v1645 = vunpack.c.h.b16 %v56
  %v1646 = vunpack.c.l.b16 %v57
  %v1647 = vunpack.c.h.b16 %v57
  %v1648 = vunpack.c.l.b16 %v58
  %v1649 = vunpack.c.h.b16 %v58
  %v1650 = vunpack.c.l.b16 %v59
  %v1651 = vunpack.c.h.b16 %v59
  %v1652 = vunpack.c.l.b16 %v60
  %v1653 = vunpack.c.h.b16 %v60
  %v1654 = vunpack.c.l.b16 %v61
  %v1655 = vunpack.c.h.b16 %v61
  %v1656 = vunpack.c.l.b16 %v62
  %v1657 = vunpack.c.h.b16 %v62
  %v1658 = vunpack.c.l.b16 %v63
  %v1659 = vunpack.c.h.b16 %v63
  %v1660 = vunpack.c.l.b16 %v64
  %v1661 = vunpack.c.h.b16 %v64
  %v1662 = vunpack.c.l.b16 %v65
  %v1663 = vunpack.c.h.b16 %v65
  %v1664 = vunpack.c.l.b16 %v66
  %v1665 = vunpack.c.h.b16 %v66
  %v1666 = vunpack.c.l.b16 %v67
  %v1667 = vunpack.c.h.b16 %v67
  %v1668 = vunpack.c.l.b16 %v68
  %v1669 = vunpack.c.h.b16 %v68
  %v1670 = vunpack.c.l.b16 %v69
  %v1671 = vunpack.c.h.b16 %v69
  %v1672 = vunpack.c.l.b16 %v70
  %v1673 = vunpack.c.h.b16 %v70
  %v1674 = vunpack.c.l.b16 %v71
  %v1675 = vunpack.c.h.b16 %v71
  %v1676 = vunpack.c.l.b16 %v72
  %v1677 = vunpack.c.h.b16 %v72
  %v1678 = vunpack.c.l.b16 %v73
  %v1679 = vunpack.c.h.b16 %v73
  %v1680 = vunpack.c.l.b16 %v74
  %v1681 = vunpack.c.h.b16 %v74
  %v1682 = vunpack.c.l.b16 %v75
  %v1683 = vunpack.c.h.b16 %v75
  %v1684 = vunpack.c.l.b16 %v76
  %v1685 = vunpack.c.h.b16 %v76
  %v1686 = vunpack.c.l.b16 %v77
  %v1687 = vunpack.c.h.b16 %v77
  %v1688 = vunpack.c.l.b16 %v78
  %v1689 = vunpack.c.h.b16 %v78
  %v1690 = vunpack.c.l.b16 %v79
  %v1691 = vunpack.c.h.b16 %v79
  %v1692 = vunpack.c.l.b16 %v80
  %v1693 = vunpack.c.h.b16 %v80
  %v1694 = vunpack.c.l.b16 %v81
  %v1695 = vunpack.c.h.b16 %v81
  %v1696 = vunpack.c.l.b16 %v82
  %v1697 = vunpack.c.h.b16 %v82
  %v1698 = vunpack.c.l.b16 %v83
  %v1699 = vunpack.c.h.b16 %v83
  %v1700 = vunpack.c.l.b16 %v84
  %v1701 = vunpack.c.h.b16 %v84
  %v1702 = vunpack.c.l.b16 %v85
  %v1703 = vunpack.c.h.b16 %v85
  %v1704 = vunpack.c.l.b16 %v86
  %v1705 = vunpack.c.h.b16 %v86
  %v1706 = vunpack.c.l.b16 %v87
  %v1707 = vunpack.c.h.b16 %v87
  %v1708 = vunpack.c.l.b16 %v88
  %v1709 = vunpack.c.h.b16 %v88
  %v1710 = vunpack.c.l.b16 %v89
  %v1711 = vunpack.c.h.b16 %v89
  %v1712 = vunpack.c.l.b16 %v90
  %v1713 = vunpack.c.h.b16 %v90
  %v1714 = vunpack.c.l.b16 %v91
  %v1715 = vunpack.c.h.b16 %v91
  %v1716 = vunpack.c.l.b16 %v92
  %v1717 = vunpack.c.h.b16 %v92
  %v1718 = vunpack.c.l.b16 %v93
  %v1719 = vunpack.c.h.b16 %v93
  %v1720 = vunpack.c.l.b16 %v94
  %v1721 = vunpack.c.h.b16 %v94
  %v1722 = vunpack.c.l.b16 %v95
  %v1723 = vunpack.c.h.b16 %v95
  %v1724 = vunpack.c.l.b16 %v96
  %v1725 = vunpack.c.h.b16 %v96
  %v1726 = vunpack.c.l.b16 %v97
  %v1727 = vunpack.c.h.b16 %v97
  %v1728 = vunpack.c.l.b16 %v98
  %v1729 = vunpack.c.h.b16 %v98
  %v1730 = vunpack.c.l.b16 %v99
  %v1731 = vunpack.c.h.b16 %v99
  %v1732 = vunpack.c.l.b16 %v100
  %v1733 = vunpack.c.h.b16 %v100
  %v1734 = vunpack.c.l.b16 %v101
  %v1735 = vunpack.c.h.b16 %v101
  %v1736 = vunpack.c.l.b16 %v102
  %v1737 = vunpack.c.h.b16 %v102
  %v1738 = vunpack.c.l.b16 %v103
  %v1739 = vunpack.c.h.b16 %v103
  %v1740 = vunpack.c.l.b16 %v104
  %v1741 = vunpack.c.h.b16 %v104
  %v1742 = vunpack.c.l.b16 %v105
  %v1743 = vunpack.c.h.b16 %v105
  %v1744 = vunpack.c.l.b16 %v106
  %v1745 = vunpack.c.h.b16 %v106
  %v1746 = vunpack.c.l.b16 %v107
  %v1747 = vunpack.c.h.b16 %v107
  %v1748 = vunpack.c.l.b16 %v108
  %v1749 = vunpack.c.h.b16 %v108
  %v1750 = vunpack.c.l.b16 %v109
  %v1751 = vunpack.c.h.b16 %v109
  %v1752 = vunpack.c.l.b16 %v110
  %v1753 = vunpack.c.h.b16 %v110
  %v1754 = vunpack.c.l.b16 %v111
  %v1755 = vunpack.c.h.b16 %v111
  %v1756 = vunpack.c.l.b16 %v112
  %v1757 = vunpack.c.h.b16 %v112
  %v1758 = vunpack.c.l.b16 %v113
  %v1759 = vunpack.c.h.b16 %v113
  %v1760 = vunpack.c.l.b16 %v114
  %v1761 = vunpack.c.h.b16 %v114
  %v1762 = vunpack.c.l.b16 %v115
  %v1763 = vunpack.c.h.b16 %v115
  %v1764 = vunpack.c.l.b16 %v116
  %v1765 = vunpack.c.h.b16 %v116
  %v1766 = vunpack.c.l.b16 %v117
  %v1767 = vunpack.c.h.b16 %v117
  %v1768 = vunpack.c.l.b16 %v118
  %v1769 = vunpack.c.h.b16 %v118
  %v1770 = vunpack.c.l.b16 %v119
  %v1771 = vunpack.c.h.b16 %v119
  %v1772 = vunpack.c.l.b16 %v120
  %v1773 = vunpack.c.h.b16 %v120
  %v1774 = vunpack.c.l.b16 %v121
  %v1775 = vunpack.c.h.b16 %v121
  %v1776 = vunpack.c.l.b16 %v122
  %v1777 = vunpack.c.h.b16 %v122
  %v1778 = vunpack.c.l.b16 %v123
  %v1779 = vunpack.c.h.b16 %v123
  %v1780 = vunpack.c.l.b16 %v124
  %v1781 = vunpack.c.h.b16 %v124
  %v1782 = vunpack.c.l.b16 %v125
  %v1783 = vunpack.c.h.b16 %v125
  %v1784 = vunpack.c.l.b16 %v126
  %v1785 = vunpack.c.h.b16 %v126
  %v1786 = vunpack.c.l.b16 %v127
  %v1787 = vunpack.c.h.b16 %v127
  %v1788 = vunpack.c.l.b16 %v128
  %v1789 = vunpack.c.h.b16 %v128
  %v1790 = vunpack.c.l.b16 %v129
  %v1791 = vunpack.c.h.b16 %v129
  %v1792 = vunpack.c.l.b16 %v130
  %v1793 = vunpack.c.h.b16 %v130
  %v1794 = vunpack.c.l.b16 %v131
  %v1795 = vunpack.c.h.b16 %v131
  %v1796 = vunpack.c.l.b16 %v132
  %v1797 = vunpack.c.h.b16 %v132
  %v1798 = vunpack.c.l.b16 %v133
  %v1799 = vunpack.c.h.b16 %v133
  %v1800 = vunpack.c.l.b16 %v134
  %v1801 = vunpack.c.h.b16 %v134
  %v1802 = vunpack.c.l.b16 %v135
  %v1803 = vunpack.c.h.b16 %v135
  %v1804 = vunpack.c.l.b16 %v136
  %v1805 = vunpack.c.h.b16 %v136
  %v1806 = vunpack.c.l.b16 %v137
  %v1807 = vunpack.c.h.b16 %v137
  %v1808 = vunpack.c.l.b16 %v138
  %v1809 = vunpack.c.h.b16 %v138
  %v1810 = vunpack.c.l.b16 %v139
  %v1811 = vunpack.c.h.b16 %v139
  %v1812 = vunpack.c.l.b16 %v140
  %v1813 = vunpack.c.h.b16 %v140
  %v1814 = vunpack.c.l.b16 %v141
  %v1815 = vunpack.c.h.b16 %v141
  %v1816 = vunpack.c.l.b16 %v142
  %v1817 = vunpack.c.h.b16 %v142
  %v1818 = vunpack.c.l.b16 %v143
  %v1819 = vunpack.c.h.b16 %v143
  %v1820 = vunpack.c.l.b16 %v144
  %v1821 = vunpack.c.h.b16 %v144
  %v1822 = vunpack.c.l.b16 %v145
  %v1823 = vunpack.c.h.b16 %v145
  %v1824 = vunpack.c.l.b16 %v146
  %v1825 = vunpack.c.h.b16 %v146
  %v1826 = vunpack.c.l.b16 %v147
  %v1827 = vunpack.c.h.b16 %v147
  %v1828 = vunpack.c.l.b16 %v148
  %v1829 = vunpack.c.h.b16 %v148
  %v1830 = vunpack.c.l.b16 %v149
  %v1831 = vunpack.c.h.b16 %v149
  %v1832 = vunpack.c.l.b16 %v150
  %v1833 = vunpack.c.h.b16 %v150
  %v1834 = vunpack.c.l.b16 %v151
  %v1835 = vunpack.c.h.b16 %v151
  %v1836 = vunpack.c.l.b16 %v152
  %v1837 = vunpack.c.h.b16 %v152
  %v1838 = vunpack.c.l.b16 %v153
  %v1839 = vunpack.c.h.b16 %v153
  %v1840 = vunpack.c.l.b16 %v154
  %v1841 = vunpack.c.h.b16 %v154
  %v1842 = vunpack.c.l.b16 %v155
  %v1843 = vunpack.c.h.b16 %v155
  %v1844 = vunpack.c.l.b16 %v156
  %v1845 = vunpack.c.h.b16 %v156
  %v1846 = vunpack.c.l.b16 %v157
  %v1847 = vunpack.c.h.b16 %v157
  %v1848 = vunpack.c.l.b16 %v158
  %v1849 = vunpack.c.h.b16 %v158
  %v1850 = vunpack.c.l.b16 %v159
  %v1851 = vunpack.c.h.b16 %v159
  %v1852 = vunpack.c.l.b16 %v160
  %v1853 = vunpack.c.h.b16 %v160
  %v1854 = vunpack.c.l.b16 %v161
  %v1855 = vunpack.c.h.b16 %v161
  %v1856 = vunpack.c.l.b16 %v162
  %v1857 = vunpack.c.h.b16 %v162
  %v1858 = vunpack.c.l.b16 %v163
  %v1859 = vunpack.c.h.b16 %v163
  %v1860 = vunpack.c.l.b16 %v164
  %v1861 = vunpack.c.h.b16 %v164
  %v1862 = vunpack.c.l.b16 %v165
  %v1863 = vunpack.c.h.b16 %v165
  %v1864 = vunpack.c.l.b16 %v166
  %v1865 = vunpack.c.h.b16 %v166
  %v1866 = vunpack.c.l.b16 %v167
  %v1867 = vunpack.c.h.b16 %v167
  %v1868 = vunpack.c.l.b16 %v168
  %v1869 = vunpack.c.h.b16 %v168
  %v1870 = vunpack.c.l.b16 %v169
  %v1871 = vunpack.c.h.b16 %v169
  %v1872 = vunpack.c.l.b16 %v170
  %v1873 = vunpack.c.h.b16 %v170
  %v1874 = vunpack.c.l.b16 %v171
  %v1875 = vunpack.c.h.b16 %v171
  %v1876 = vunpack.c.l.b16 %v172
  %v1877 = vunpack.c.h.b16 %v172
  %v1878 = vunpack.c.l.b16 %v173
  %v1879 = vunpack.c.h.b16 %v173
  %v1880 = vunpack.c.l.b16 %v174
  %v1881 = vunpack.c.h.b16 %v174
  %v1882 = vunpack.c.l.b16 %v175
  %v1883 = vunpack.c.h.b16 %v175
  %v1884 = vunpack.c.l.b16 %v176
  %v1885 = vunpack.c.h.b16 %v176
  %v1886 = vunpack.c.l.b16 %v177
  %v1887 = vunpack.c.h.b16 %v177
  %v1888 = vunpack.c.l.b16 %v178
  %v1889 = vunpack.c.h.b16 %v178
  %v1890 = vunpack.c.l.b16 %v179
  %v1891 = vunpack.c.h.b16 %v179
  %v1892 = vunpack.c.l.b16 %v180
  %v1893 = vunpack.c.h.b16 %v180
  %v1894 = vunpack.c.l.b16 %v181
  %v1895 = vunpack.c.h.b16 %v181
  %v1896 = vunpack.c.l.b16 %v182
  %v1897 = vunpack.c.h.b16 %v182
  %v1898 = vunpack.c.l.b16 %v183
  %v1899 = vunpack.c.h.b16 %v183
  %v1900 = vunpack.c.l.b16 %v184
  %v1901 = vunpack.c.h.b16 %v184
  %v1902 = vunpack.c.l.b16 %v185
  %v1903 = vunpack.c.h.b16 %v185
  %v1904 = vunpack.c.l.b16 %v186
  %v1905 = vunpack.c.h.b16 %v186
  %v1906 = vunpack.c.l.b16 %v187
  %v1907 = vunpack.c.h.b16 %v187
  %v1908 = vunpack.c.l.b16 %v188
  %v1909 = vunpack.c.h.b16 %v188
  %v1910 = vunpack.c.l.b16 %v189
  %v1911 = vunpack.c.h.b16 %v189
  %v1912 = vunpack.c.l.b16 %v190
  %v1913 = vunpack.c.h.b16 %v190
  %v1914 = vunpack.c.l.b16 %v191
  %v1915 = vunpack.c.h.b16 %v191
  %v1916 = vunpack.c.l.b16 %v192
  %v1917 = vunpack.c.h.b16 %v192
  %v1918 = vunpack.c.l.b16 %v193
  %v1919 = vunpack.c.h.b16 %v193
  %v1920 = vunpack.c.l.b16 %v194
  %v1921 = vunpack.c.h.b16 %v194
  %v1922 = vunpack.c.l.b16 %v195
  %v1923 = vunpack.c.h.b16 %v195
  %v1924 = vunpack.c.l.b16 %v196
  %v1925 = vunpack.c.h.b16 %v196
  %v1926 = vunpack.c.l.b16 %v197
  %v1927 = vunpack.c.h.b16 %v197
  %v1928 = vunpack.c.l.b16 %v198
  %v1929 = vunpack.c.h.b16 %v198
  %v1930 = vunpack.c.l.b16 %v199
  %v1931 = vunpack.c.h.b16 %v199
  %v1932 = vunpack.c.l.b16 %v200
  %v1933 = vunpack.c.h.b16 %v200
  %v1934 = vunpack.c.l.b16 %v201
  %v1935 = vunpack.c.h.b16 %v201
  %v1936 = vunpack.c.l.b16 %v202
  %v1937 = vunpack.c.h.b16 %v202
  %v1938 = vunpack.c.l.b16 %v203
  %v1939 = vunpack.c.h.b16 %v203
  %v1940 = vunpack.c.l.b16 %v204
  %v1941 = vunpack.c.h.b16 %v204
  %v1942 = vunpack.c.l.b16 %v205
  %v1943 = vunpack.c.h.b16 %v205
  %v1944 = vunpack.c.l.b16 %v206
  %v1945 = vunpack.c.h.b16 %v206
  %v1946 = vunpack.c.l.b16 %v207
  %v1947 = vunpack.c.h.b16 %v207
  %v1948 = vunpack.c.l.b16 %v208
  %v1949 = vunpack.c.h.b16 %v208
  %v1950 = vunpack.c.l.b16 %v209
  %v1951 = vunpack.c.h.b16 %v209
  %v1952 = vunpack.c.l.b16 %v210
  %v1953 = vunpack.c.h.b16 %v210
  %v1954 = vunpack.c.l.b16 %v211
  %v1955 = vunpack.c.h.b16 %v211
  %v1956 = vunpack.c.l.b16 %v212
  %v1957 = vunpack.c.h.b16 %v212
  %v1958 = vunpack.c.l.b16 %v213
  %v1959 = vunpack.c.h.b16 %v213
  %v1960 = vunpack.c.l.b16 %v214
  %v1961 = vunpack.c.h.b16 %v214
  %v1962 = vunpack.c.l.b16 %v215
  %v1963 = vunpack.c.h.b16 %v215
  %v1964 = vunpack.c.l.b16 %v216
  %v1965 = vunpack.c.h.b16 %v216
  %v1966 = vunpack.c.l.b16 %v217
  %v1967 = vunpack.c.h.b16 %v217
  %v1968 = vunpack.c.l.b16 %v218
  %v1969 = vunpack.c.h.b16 %v218
  %v1970 = vunpack.c.l.b16 %v219
  %v1971 = vunpack.c.h.b16 %v219
  %v1972 = vunpack.c.l.b16 %v220
  %v1973 = vunpack.c.h.b16 %v220
  %v1974 = vunpack.c.l.b16 %v221
  %v1975 = vunpack.c.h.b16 %v221
  %v1976 = vunpack.c.l.b16 %v222
  %v1977 = vunpack.c.h.b16 %v222
  %v1978 = vunpack.c.l.b16 %v223
  %v1979 = vunpack.c.h.b16 %v223
  %v1980 = vunpack.c.l.b16 %v224
  %v1981 = vunpack.c.h.b16 %v224
  %v1982 = vunpack.c.l.b16 %v225
  %v1983 = vunpack.c.h.b16 %v225
  %v1984 = vunpack.c.l.b16 %v226
  %v1985 = vunpack.c.h.b16 %v226
  %v1986 = vunpack.c.l.b16 %v227
  %v1987 = vunpack.c.h.b16 %v227
  %v1988 = vunpack.c.l.b16 %v228
  %v1989 = vunpack.c.h.b16 %v228
  %v1990 = vunpack.c.l.b16 %v229
  %v1991 = vunpack.c.h.b16 %v229
  %v1992 = vunpack.c.l.b16 %v230
  %v1993 = vunpack.c.h.b16 %v230
  %v1994 = vunpack.c.l.b16 %v231
  %v1995 = vunpack.c.h.b16 %v231
  %v1996 = vunpack.c.l.b16 %v232
  %v1997 = vunpack.c.h.b16 %v232
  %v1998 = vunpack.c.l.b16 %v233
  %v1999 = vunpack.c.h.b16 %v233
  %v2000 = vunpack.c.l.b16 %v234
  %v2001 = vunpack.c.h.b16 %v234
  %v2002 = vunpack.c.l.b16 %v235
  %v2003 = vunpack.c.h.b16 %v235
  %v2004 = vunpack.c.l.b16 %v236
  %v2005 = vunpack.c.h.b16 %v236
  %v2006 = vunpack.c.l.b16 %v237
  %v2007 = vunpack.c.h.b16 %v237
  %v2008 = vunpack.c.l.b16 %v238
  %v2009 = vunpack.c.h.b16 %v238
  %v2010 = vunpack.c.l.b16 %v239
  %v2011 = vunpack.c.h.b16 %v239
  %v2012 = vunpack.c.l.b16 %v240
  %v2013 = vunpack.c.h.b16 %v240
  %v2014 = vunpack.c.l.b16 %v241
  %v2015 = vunpack.c.h.b16 %v241
  %v2016 = vunpack.c.l.b16 %v242
  %v2017 = vunpack.c.h.b16 %v242
  %v2018 = vunpack.c.l.b16 %v243
  %v2019 = vunpack.c.h.b16 %v243
  %v2020 = vunpack.c.l.b16 %v244
  %v2021 = vunpack.c.h.b16 %v244
  %v2022 = vunpack.c.l.b16 %v245
  %v2023 = vunpack.c.h.b16 %v245
  %v2024 = vunpack.c.l.b16 %v246
  %v2025 = vunpack.c.h.b16 %v246
  %v2026 = vunpack.c.l.b16 %v247
  %v2027 = vunpack.c.h.b16 %v247
  %v2028 = vunpack.c.l.b16 %v248
  %v2029 = vunpack.c.h.b16 %v248
  %v2030 = vunpack.c.l.b16 %v249
  %v2031 = vunpack.c.h.b16 %v249
  %v2032 = vunpack.c.l.b16 %v250
  %v2033 = vunpack.c.h.b16 %v250
  %v2034 = vunpack.c.l.b16 %v251
  %v2035 = vunpack.c.h.b16 %v251
  %v2036 = vunpack.c.l.b16 %v252
  %v2037 = vunpack.c.h.b16 %v252
  %v2038 = vunpack.c.l.b16 %v253
  %v2039 = vunpack.c.h.b16 %v253
  %v2040 = vunpack.c.l.b16 %v254
  %v2041 = vunpack.c.h.b16 %v254
  %v2042 = vunpack.c.l.b16 %v255
  %v2043 = vunpack.c.h.b16 %v255
  %v2044 = vunpack.c.l.b16 %v256
  %v2045 = vunpack.c.h.b16 %v256
  %v2046 = vunpack.c.l.b16 %v257
  %v2047 = vunpack.c.h.b16 %v257
  %v2048 = vunpack.c.l.b16 %v258
  %v2049 = vunpack.c.h.b16 %v258
  %v2050 = vunpack.c.l.b16 %v259
  %v2051 = vunpack.c.h.b16 %v259
  %v2052 = vunpack.c.l.b16 %v260
  %v2053 = vunpack.c.h.b16 %v260
  %v2054 = vunpack.c.l.b16 %v261
  %v2055 = vunpack.c.h.b16 %v261
  %v2056 = vunpack.c.l.b16 %v262
  %v2057 = vunpack.c.h.b16 %v262
  %v2058 = vunpack.c.l.b16 %v263
  %v2059 = vunpack.c.h.b16 %v263
  %v2060 = vunpack.c.l.b16 %v264
  %v2061 = vunpack.c.h.b16 %v264
  %v2062 = vunpack.c.l.b16 %v265
  %v2063 = vunpack.c.h.b16 %v265
  %v2064 = vunpack.c.l.b16 %v266
  %v2065 = vunpack.c.h.b16 %v266
  %v2066 = vunpack.c.l.b16 %v267
  %v2067 = vunpack.c.h.b16 %v267
  %v2068 = vunpack.c.l.b16 %v268
  %v2069 = vunpack.c.h.b16 %v268
  %v2070 = vunpack.c.l.b16 %v269
  %v2071 = vunpack.c.h.b16 %v269
  %v2072 = vunpack.c.l.b16 %v270
  %v2073 = vunpack.c.h.b16 %v270
  %v2074 = vunpack.c.l.b16 %v271
  %v2075 = vunpack.c.h.b16 %v271
  %v2076 = vunpack.c.l.b16 %v272
  %v2077 = vunpack.c.h.b16 %v272
  %v2078 = vunpack.c.l.b16 %v273
  %v2079 = vunpack.c.h.b16 %v273
  %v2080 = vunpack.c.l.b16 %v274
  %v2081 = vunpack.c.h.b16 %v274
  %v2082 = vunpack.c.l.b16 %v275
  %v2083 = vunpack.c.h.b16 %v275
  %v2084 = vunpack.c.l.b16 %v276
  %v2085 = vunpack.c.h.b16 %v276
  %v2086 = vunpack.c.l.b16 %v277
  %v2087 = vunpack.c.h.b16 %v277
  %v2088 = vunpack.c.l.b16 %v278
  %v2089 = vunpack.c.h.b16 %v278
  %v2090 = vunpack.c.l.b16 %v279
  %v2091 = vunpack.c.h.b16 %v279
  %v2092 = vunpack.c.l.b16 %v280
  %v2093 = vunpack.c.h.b16 %v280
  %v2094 = vunpack.c.l.b16 %v281
  %v2095 = vunpack.c.h.b16 %v281
  %v2096 = vunpack.c.l.b16 %v282
  %v2097 = vunpack.c.h.b16 %v282
  %v2098 = vunpack.c.l.b16 %v283
  %v2099 = vunpack.c.h.b16 %v283
  %v2100 = vunpack.c.l.b16 %v284
  %v2101 = vunpack.c.h.b16 %v284
  %v2102 = vunpack.c.l.b16 %v285
  %v2103 = vunpack.c.h.b16 %v285
  %v2104 = vunpack.c.l.b16 %v286
  %v2105 = vunpack.c.h.b16 %v286
  %v2106 = vunpack.c.l.b16 %v287
  %v2107 = vunpack.c.h.b16 %v287
  %v2108 = vunpack.c.l.b16 %v288
  %v2109 = vunpack.c.h.b16 %v288
  %v2110 = vunpack.c.l.b16 %v289
  %v2111 = vunpack.c.h.b16 %v289
  %v2112 = vunpack.c.l.b16 %v290
  %v2113 = vunpack.c.h.b16 %v290
  %v2114 = vunpack.c.l.b16 %v291
  %v2115 = vunpack.c.h.b16 %v291
  %v2116 = vunpack.c.l.b16 %v292
  %v2117 = vunpack.c.h.b16 %v292
  %v2118 = vunpack.c.l.b16 %v293
  %v2119 = vunpack.c.h.b16 %v293
  %v2120 = vunpack.c.l.b16 %v294
  %v2121 = vunpack.c.h.b16 %v294
  %v2122 = vunpack.c.l.b16 %v295
  %v2123 = vunpack.c.h.b16 %v295
  %v2124 = vunpack.c.l.b16 %v296
  %v2125 = vunpack.c.h.b16 %v296
  %v2126 = vunpack.c.l.b16 %v297
  %v2127 = vunpack.c.h.b16 %v297
  %v2128 = vunpack.c.l.b16 %v298
  %v2129 = vunpack.c.h.b16 %v298
  %v2130 = vunpack.c.l.b16 %v299
  %v2131 = vunpack.c.h.b16 %v299
  %v2132 = vunpack.c.l.b16 %v300
  %v2133 = vunpack.c.h.b16 %v300
  %v2134 = vunpack.c.l.b16 %v301
  %v2135 = vunpack.c.h.b16 %v301
  %v2136 = vunpack.c.l.b16 %v302
  %v2137 = vunpack.c.h.b16 %v302
  %v2138 = vunpack.c.l.b16 %v303
  %v2139 = vunpack.c.h.b16 %v303
  %v2140 = vunpack.c.l.b16 %v304
  %v2141 = vunpack.c.h.b16 %v304
  %v2142 = vunpack.c.l.b16 %v305
  %v2143 = vunpack.c.h.b16 %v305
  %v2144 = vunpack.c.l.b16 %v306
  %v2145 = vunpack.c.h.b16 %v306
  %v2146 = vunpack.c.l.b16 %v307
  %v2147 = vunpack.c.h.b16 %v307
  %v2148 = vunpack.c.l.b16 %v308
  %v2149 = vunpack.c.h.b16 %v308
  %v2150 = vunpack.c.l.b16 %v309
  %v2151 = vunpack.c.h.b16 %v309
  %v2152 = vunpack.c.l.b16 %v310
  %v2153 = vunpack.c.h.b16 %v310
  %v2154 = vunpack.c.l.b16 %v311
  %v2155 = vunpack.c.h.b16 %v311
  %v2156 = vunpack.c.l.b16 %v312
  %v2157 = vunpack.c.h.b16 %v312
  %v2158 = vunpack.c.l.b16 %v313
  %v2159 = vunpack.c.h.b16 %v313
  %v2160 = vunpack.c.l.b16 %v314
  %v2161 = vunpack.c.h.b16 %v314
  %v2162 = vunpack.c.l.b16 %v315
  %v2163 = vunpack.c.h.b16 %v315
  %v2164 = vunpack.c.l.b16 %v316
  %v2165 = vunpack.c.h.b16 %v316
  %v2166 = vunpack.c.l.b16 %v317
  %v2167 = vunpack.c.h.b16 %v317
  %v2168 = vunpack.c.l.b16 %v318
  %v2169 = vunpack.c.h.b16 %v318
  %v2170 = vunpack.c.l.b16 %v319
  %v2171 = vunpack.c.h.b16 %v319
  %v2172 = vunpack.c.l.b16 %v320
  %v2173 = vunpack.c.h.b16 %v320
  %v2174 = vunpack.c.l.b16 %v321
  %v2175 = vunpack.c.h.b16 %v321
  %v2176 = vunpack.c.l.b16 %v322
  %v2177 = vunpack.c.h.b16 %v322
  %v2178 = vunpack.c.l.b16 %v323
  %v2179 = vunpack.c.h.b16 %v323
  %v2180 = vunpack.c.l.b16 %v324
  %v2181 = vunpack.c.h.b16 %v324
  %v2182 = vunpack.c.l.b16 %v325
  %v2183 = vunpack.c.h.b16 %v325
  %v2184 = vunpack.c.l.b16 %v326
  %v2185 = vunpack.c.h.b16 %v326
  %v2186 = vunpack.c.l.b16 %v327
  %v2187 = vunpack.c.h.b16 %v327
  %v2188 = vunpack.c.l.b16 %v328
  %v2189 = vunpack.c.h.b16 %v328
  %v2190 = vunpack.c.l.b16 %v329
  %v2191 = vunpack.c.h.b16 %v329
  %v2192 = vunpack.c.l.b16 %v330
  %v2193 = vunpack.c.h.b16 %v330
  %v2194 = vunpack.c.l.b16 %v331
  %v2195 = vunpack.c.h.b16 %v331
  %v2196 = vunpack.c.l.b16 %v332
  %v2197 = vunpack.c.h.b16 %v332
  %v2198 = vunpack.c.l.b16 %v333
  %v2199 = vunpack.c.h.b16 %v333
  %v2200 = vunpack.c.l.b16 %v334
  %v2201 = vunpack.c.h.b16 %v334
  %v2202 = vunpack.c.l.b16 %v335
  %v2203 = vunpack.c.h.b16 %v335
  %v2204 = vunpack.c.l.b16 %v336
  %v2205 = vunpack.c.h.b16 %v336
  %v2206 = vunpack.c.l.b16 %v337
  %v2207 = vunpack.c.h.b16 %v337
  %v2208 = vunpack.c.l.b16 %v338
  %v2209 = vunpack.c.h.b16 %v338
  %v2210 = vunpack.c.l.b16 %v339
  %v2211 = vunpack.c.h.b16 %v339
  %v2212 = vunpack.c.l.b16 %v340
  %v2213 = vunpack.c.h.b16 %v340
  %v2214 = vunpack.c.l.b16 %v341
  %v2215 = vunpack.c.h.b16 %v341
  %v2216 = vunpack.c.l.b16 %v342
  %v2217 = vunpack.c.h.b16 %v342
  %v2218 = vunpack.c.l.b16 %v343
  %v2219 = vunpack.c.h.b16 %v343
  %v2220 = vunpack.c.l.b16 %v344
  %v2221 = vunpack.c.h.b16 %v344
  %v2222 = vunpack.c.l.b16 %v345
  %v2223 = vunpack.c.h.b16 %v345
  %v2224 = vunpack.c.l.b16 %v346
  %v2225 = vunpack.c.h.b16 %v346
  %v2226 = vunpack.c.l.b16 %v347
  %v2227 = vunpack.c.h.b16 %v347
  %v2228 = vunpack.c.l.b16 %v348
  %v2229 = vunpack.c.h.b16 %v348
  %v2230 = vunpack.c.l.b16 %v349
  %v2231 = vunpack.c.h.b16 %v349
  %v2232 = vunpack.c.l.b16 %v350
  %v2233 = vunpack.c.h.b16 %v350
  %v2234 = vunpack.c.l.b16 %v351
  %v2235 = vunpack.c.h.b16 %v351
  %v2236 = vunpack.c.l.b16 %v352
  %v2237 = vunpack.c.h.b16 %v352
  %v2238 = vunpack.c.l.b16 %v353
  %v2239 = vunpack.c.h.b16 %v353
  %v2240 = vunpack.c.l.b16 %v354
  %v2241 = vunpack.c.h.b16 %v354
  %v2242 = vunpack.c.l.b16 %v355
  %v2243 = vunpack.c.h.b16 %v355
  %v2244 = vunpack.c.l.b16 %v356
  %v2245 = vunpack.c.h.b16 %v356
  %v2246 = vunpack.c.l.b16 %v357
  %v2247 = vunpack.c.h.b16 %v357
  %v2248 = vunpack.c.l.b16 %v358
  %v2249 = vunpack.c.h.b16 %v358
  %v2250 = vunpack.c.l.b16 %v359
  %v2251 = vunpack.c.h.b16 %v359
  %v2252 = vunpack.c.l.b16 %v360
  %v2253 = vunpack.c.h.b16 %v360
  %v2254 = vunpack.c.l.b16 %v361
  %v2255 = vunpack.c.h.b16 %v361
  %v2256 = vunpack.c.l.b16 %v362
  %v2257 = vunpack.c.h.b16 %v362
  %v2258 = vunpack.c.l.b16 %v363
  %v2259 = vunpack.c.h.b16 %v363
  %v2260 = vunpack.c.l.b16 %v364
  %v2261 = vunpack.c.h.b16 %v364
  %v2262 = vunpack.c.l.b16 %v365
  %v2263 = vunpack.c.h.b16 %v365
  %v2264 = vunpack.c.l.b16 %v366
  %v2265 = vunpack.c.h.b16 %v366
  %v2266 = vunpack.c.l.b16 %v367
  %v2267 = vunpack.c.h.b16 %v367
  %v2268 = vunpack.c.l.b16 %v368
  %v2269 = vunpack.c.h.b16 %v368
  %v2270 = vunpack.c.l.b16 %v369
  %v2271 = vunpack.c.h.b16 %v369
  %v2272 = vunpack.c.l.b16 %v370
  %v2273 = vunpack.c.h.b16 %v370
  %v2274 = vunpack.c.l.b16 %v371
  %v2275 = vunpack.c.h.b16 %v371
  %v2276 = vunpack.c.l.b16 %v372
  %v2277 = vunpack.c.h.b16 %v372
  %v2278 = vunpack.c.l.b16 %v373
  %v2279 = vunpack.c.h.b16 %v373
  %v2280 = vunpack.c.l.b16 %v374
  %v2281 = vunpack.c.h.b16 %v374
  %v2282 = vunpack.c.l.b16 %v375
  %v2283 = vunpack.c.h.b16 %v375
  %v2284 = vunpack.c.l.b16 %v376
  %v2285 = vunpack.c.h.b16 %v376
  %v2286 = vunpack.c.l.b16 %v377
  %v2287 = vunpack.c.h.b16 %v377
  %v2288 = vunpack.c.l.b16 %v378
  %v2289 = vunpack.c.h.b16 %v378
  %v2290 = vunpack.c.l.b16 %v379
  %v2291 = vunpack.c.h.b16 %v379
  %v2292 = vunpack.c.l.b16 %v380
  %v2293 = vunpack.c.h.b16 %v380
  %v2294 = vunpack.c.l.b16 %v381
  %v2295 = vunpack.c.h.b16 %v381
  %v2296 = vunpack.c.l.b16 %v382
  %v2297 = vunpack.c.h.b16 %v382
  %v2298 = vunpack.c.l.b16 %v383
  %v2299 = vunpack.c.h.b16 %v383
  %v2300 = vunpack.c.l.b16 %v384
  %v2301 = vunpack.c.h.b16 %v384
  %v2302 = vunpack.c.l.b16 %v385
  %v2303 = vunpack.c.h.b16 %v385
  %v2304 = vunpack.c.l.b16 %v386
  %v2305 = vunpack.c.h.b16 %v386
  %v2306 = vunpack.c.l.b16 %v387
  %v2307 = vunpack.c.h.b16 %v387
  %v2308 = vunpack.c.l.b16 %v388
  %v2309 = vunpack.c.h.b16 %v388
  %v2310 = vunpack.c.l.b16 %v389
  %v2311 = vunpack.c.h.b16 %v389
  %v2312 = vunpack.c.l.b16 %v390
  %v2313 = vunpack.c.h.b16 %v390
  %v2314 = vunpack.c.l.b16 %v391
  %v2315 = vunpack.c.h.b16 %v391
  %v2316 = vunpack.c.l.b16 %v392
  %v2317 = vunpack.c.h.b16 %v392
  %v2318 = vunpack.c.l.b16 %v393
  %v2319 = vunpack.c.h.b16 %v393
  %v2320 = vunpack.c.l.b16 %v394
  %v2321 = vunpack.c.h.b16 %v394
  %v2322 = vunpack.c.l.b16 %v395
  %v2323 = vunpack.c.h.b16 %v395
  %v2324 = vunpack.c.l.b16 %v396
  %v2325 = vunpack.c.h.b16 %v396
  %v2326 = vunpack.c.l.b16 %v397
  %v2327 = vunpack.c.h.b16 %v397
  %v2328 = vunpack.c.l.b16 %v398
  %v2329 = vunpack.c.h.b16 %v398
  %v2330 = vunpack.c.l.b16 %v399
  %v2331 = vunpack.c.h.b16 %v399
  %v2332 = vunpack.c.l.b16 %v400
  %v2333 = vunpack.c.h.b16 %v400
  %v2334 = vunpack.c.l.b16 %v401
  %v2335 = vunpack.c.h.b16 %v401
  %v2336 = vunpack.c.l.b16 %v402
  %v2337 = vunpack.c.h.b16 %v402
  %v2338 = vunpack.c.l.b16 %v403
  %v2339 = vunpack.c.h.b16 %v403
  %v2340 = vunpack.c.l.b16 %v404
  %v2341 = vunpack.c.h.b16 %v404
  %v2342 = vunpack.c.l.b16 %v405
  %v2343 = vunpack.c.h.b16 %v405
  %v2344 = vunpack.c.l.b16 %v406
  %v2345 = vunpack.c.h.b16 %v406
  %v2346 = vunpack.c.l.b16 %v407
  %v2347 = vunpack.c.h.b16 %v407
  %v2348 = vunpack.c.l.b16 %v408
  %v2349 = vunpack.c.h.b16 %v408
  %v2350 = vunpack.c.l.b16 %v409
  %v2351 = vunpack.c.h.b16 %v409
  %v2352 = vunpack.c.l.b16 %v410
  %v2353 = vunpack.c.h.b16 %v410
  %v2354 = vunpack.c.l.b16 %v411
  %v2355 = vunpack.c.h.b16 %v411
  %v2356 = vunpack.c.l.b16 %v412
  %v2357 = vunpack.c.h.b16 %v412
  %v2358 = vunpack.c.l.b16 %v413
  %v2359 = vunpack.c.h.b16 %v413
  %v2360 = vunpack.c.l.b16 %v414
  %v2361 = vunpack.c.h.b16 %v414
  %v2362 = vunpack.c.l.b16 %v415
  %v2363 = vunpack.c.h.b16 %v415
  %v2364 = vunpack.c.l.b16 %v416
  %v2365 = vunpack.c.h.b16 %v416
  %v2366 = vunpack.c.l.b16 %v417
  %v2367 = vunpack.c.h.b16 %v417
  %v2368 = vunpack.c.l.b16 %v418
  %v2369 = vunpack.c.h.b16 %v418
  %v2370 = vunpack.c.l.b16 %v419
  %v2371 = vunpack.c.h.b16 %v419
  %v2372 = vunpack.c.l.b16 %v420
  %v2373 = vunpack.c.h.b16 %v420
  %v2374 = vunpack.c.l.b16 %v421
  %v2375 = vunpack.c.h.b16 %v421
  %v2376 = vunpack.c.l.b16 %v422
  %v2377 = vunpack.c.h.b16 %v422
  %v2378 = vunpack.c.l.b16 %v423
  %v2379 = vunpack.c.h.b16 %v423
  %v2380 = vunpack.c.l.b16 %v424
  %v2381 = vunpack.c.h.b16 %v424
  %v2382 = vunpack.c.l.b16 %v425
  %v2383 = vunpack.c.h.b16 %v425
  %v2384 = vunpack.c.l.b16 %v426
  %v2385 = vunpack.c.h.b16 %v426
  %v2386 = vunpack.c.l.b16 %v427
  %v2387 = vunpack.c.h.b16 %v427
  %v2388 = vunpack.c.l.b16 %v428
  %v2389 = vunpack.c.h.b16 %v428
  %v2390 = vunpack.c.l.b16 %v429
  %v2391 = vunpack.c.h.b16 %v429
  %v2392 = vunpack.c.l.b16 %v430
  %v2393 = vunpack.c.h.b16 %v430
  %v2394 = vunpack.c.l.b16 %v431
  %v2395 = vunpack.c.h.b16 %v431
  %v2396 = vunpack.c.l.b16 %v432
  %v2397 = vunpack.c.h.b16 %v432
  %v2398 = vunpack.c.l.b16 %v433
  %v2399 = vunpack.c.h.b16 %v433
  %v2400 = vunpack.c.l.b16 %v434
  %v2401 = vunpack.c.h.b16 %v434
  %v2402 = vunpack.c.l.b16 %v435
  %v2403 = vunpack.c.h.b16 %v435
  %v2404 = vunpack.c.l.b16 %v436
  %v2405 = vunpack.c.h.b16 %v436
  %v2406 = vunpack.c.l.b16 %v437
  %v2407 = vunpack.c.h.b16 %v437
  %v2408 = vunpack.c.l.b16 %v438
  %v2409 = vunpack.c.h.b16 %v438
  %v2410 = vunpack.c.l.b16 %v439
  %v2411 = vunpack.c.h.b16 %v439
  %v2412 = vunpack.c.l.b16 %v440
  %v2413 = vunpack.c.h.b16 %v440
  %v2414 = vunpack.c.l.b16 %v441
  %v2415 = vunpack.c.h.b16 %v441
  %v2416 = vunpack.c.l.b16 %v442
  %v2417 = vunpack.c.h.b16 %v442
  %v2418 = vunpack.c.l.b16 %v443
  %v2419 = vunpack.c.h.b16 %v443
  %v2420 = vunpack.c.l.b16 %v444
  %v2421 = vunpack.c.h.b16 %v444
  %v2422 = vunpack.c.l.b16 %v445
  %v2423 = vunpack.c.h.b16 %v445
  %v2424 = vunpack.c.l.b16 %v446
  %v2425 = vunpack.c.h.b16 %v446
  %v2426 = vunpack.c.l.b16 %v447
  %v2427 = vunpack.c.h.b16 %v447
  %v2428 = vunpack.c.l.b16 %v448
  %v2429 = vunpack.c.h.b16 %v448
  %v2430 = vunpack.c.l.b16 %v449
  %v2431 = vunpack.c.h.b16 %v449
  %v2432 = vunpack.c.l.b16 %v450
  %v2433 = vunpack.c.h.b16 %v450
  %v2434 = vunpack.c.l.b16 %v451
  %v2435 = vunpack.c.h.b16 %v451
  %v2436 = vunpack.c.l.b16 %v452
  %v2437 = vunpack.c.h.b16 %v452
  %v2438 = vunpack.c.l.b16 %v453
  %v2439 = vunpack.c.h.b16 %v453
  %v2440 = vunpack.c.l.b16 %v454
  %v2441 = vunpack.c.h.b16 %v454
  %v2442 = vunpack.c.l.b16 %v455
  %v2443 = vunpack.c.h.b16 %v455
  %v2444 = vunpack.c.l.b16 %v456
  %v2445 = vunpack.c.h.b16 %v456
  %v2446 = vunpack.c.l.b16 %v457
  %v2447 = vunpack.c.h.b16 %v457
  %v2448 = vunpack.c.l.b16 %v458
  %v2449 = vunpack.c.h.b16 %v458
  %v2450 = vunpack.c.l.b16 %v459
  %v2451 = vunpack.c.h.b16 %v459
  %v2452 = vunpack.c.l.b16 %v460
  %v2453 = vunpack.c.h.b16 %v460
  %v2454 = vunpack.c.l.b16 %v461
  %v2455 = vunpack.c.h.b16 %v461
  %v2456 = vunpack.c.l.b16 %v462
  %v2457 = vunpack.c.h.b16 %v462
  %v2458 = vunpack.c.l.b16 %v463
  %v2459 = vunpack.c.h.b16 %v463
  %v2460 = vunpack.c.l.b16 %v464
  %v2461 = vunpack.c.h.b16 %v464
  %v2462 = vunpack.c.l.b16 %v465
  %v2463 = vunpack.c.h.b16 %v465
  %v2464 = vunpack.c.l.b16 %v466
  %v2465 = vunpack.c.h.b16 %v466
  %v2466 = vunpack.c.l.b16 %v467
  %v2467 = vunpack.c.h.b16 %v467
  %v2468 = vunpack.c.l.b16 %v468
  %v2469 = vunpack.c.h.b16 %v468
  %v2470 = vunpack.c.l.b16 %v469
  %v2471 = vunpack.c.h.b16 %v469
  %v2472 = vunpack.c.l.b16 %v470
  %v2473 = vunpack.c.h.b16 %v470
  %v2474 = vunpack.c.l.b16 %v471
  %v2475 = vunpack.c.h.b16 %v471
  %v2476 = vunpack.c.l.b16 %v472
  %v2477 = vunpack.c.h.b16 %v472
  %v2478 = vunpack.c.l.b16 %v473
  %v2479 = vunpack.c.h.b16 %v473
  %v2480 = vunpack.c.l.b16 %v474
  %v2481 = vunpack.c.h.b16 %v474
  %v2482 = vunpack.c.l.b16 %v475
  %v2483 = vunpack.c.h.b16 %v475
  %v2484 = vunpack.c.l.b16 %v476
  %v2485 = vunpack.c.h.b16 %v476
  %v2486 = vunpack.c.l.b16 %v477
  %v2487 = vunpack.c.h.b16 %v477
  %v2488 = vunpack.c.l.b16 %v478
  %v2489 = vunpack.c.h.b16 %v478
  %v2490 = vunpack.c.l.b16 %v479
  %v2491 = vunpack.c.h.b16 %v479
  %v2492 = vunpack.c.l.b16 %v480
  %v2493 = vunpack.c.h.b16 %v480
  %v2494 = vunpack.c.l.b16 %v481
  %v2495 = vunpack.c.h.b16 %v481
  %v2496 = vunpack.c.l.b16 %v482
  %v2497 = vunpack.c.h.b16 %v482
  %v2498 = vunpack.c.l.b16 %v483
  %v2499 = vunpack.c.h.b16 %v483
  %v2500 = vunpack.c.l.b16 %v484
  %v2501 = vunpack.c.h.b16 %v484
  %v2502 = vunpack.c.l.b16 %v485
  %v2503 = vunpack.c.h.b16 %v485
  %v2504 = vunpack.c.l.b16 %v486
  %v2505 = vunpack.c.h.b16 %v486
  %v2506 = vunpack.c.l.b16 %v487
  %v2507 = vunpack.c.h.b16 %v487
  %v2508 = vunpack.c.l.b16 %v488
  %v2509 = vunpack.c.h.b16 %v488
  %v2510 = vunpack.c.l.b16 %v489
  %v2511 = vunpack.c.h.b16 %v489
  %v2512 = vunpack.c.l.b16 %v490
  %v2513 = vunpack.c.h.b16 %v490
  %v2514 = vunpack.c.l.b16 %v491
  %v2515 = vunpack.c.h.b16 %v491
  %v2516 = vunpack.c.l.b16 %v492
  %v2517 = vunpack.c.h.b16 %v492
  %v2518 = vunpack.c.l.b16 %v493
  %v2519 = vunpack.c.h.b16 %v493
  %v2520 = vunpack.c.l.b16 %v494
  %v2521 = vunpack.c.h.b16 %v494
  %v2522 = vunpack.c.l.b16 %v495
  %v2523 = vunpack.c.h.b16 %v495
  %v2524 = vunpack.c.l.b16 %v496
  %v2525 = vunpack.c.h.b16 %v496
  %v2526 = vunpack.c.l.b16 %v497
  %v2527 = vunpack.c.h.b16 %v497
  %v2528 = vunpack.c.l.b16 %v498
  %v2529 = vunpack.c.h.b16 %v498
  %v2530 = vunpack.c.l.b16 %v499
  %v2531 = vunpack.c.h.b16 %v499
  %v2532 = vunpack.c.l.b16 %v500
  %v2533 = vunpack.c.h.b16 %v500
  %v2534 = vunpack.c.l.b16 %v501
  %v2535 = vunpack.c.h.b16 %v501
  %v2536 = vunpack.c.l.b16 %v502
  %v2537 = vunpack.c.h.b16 %v502
  %v2538 = vunpack.c.l.b16 %v503
  %v2539 = vunpack.c.h.b16 %v503
  %v2540 = vunpack.c.l.b16 %v504
  %v2541 = vunpack.c.h.b16 %v504
  %v2542 = vunpack.c.l.b16 %v505
  %v2543 = vunpack.c.h.b16 %v505
  %v2544 = vunpack.c.l.b16 %v506
  %v2545 = vunpack.c.h.b16 %v506
  %v2546 = vunpack.c.l.b16 %v507
  %v2547 = vunpack.c.h.b16 %v507
  %v2548 = vunpack.c.l.b16 %v508
  %v2549 = vunpack.c.h.b16 %v508
  %v2550 = vunpack.c.l.b16 %v509
  %v2551 = vunpack.c.h.b16 %v509
  %v2552 = vunpack.c.l.b16 %v510
  %v2553 = vunpack.c.h.b16 %v510
  %v2554 = vunpack.c.l.b16 %v511
  %v2555 = vunpack.c.h.b16 %v511
  %v2556 = vunpack.c.l.b16 %v512
  %v2557 = vunpack.c.h.b16 %v512
  %v2558 = vunpack.c.l.b16 %v513
  %v2559 = vunpack.c.h.b16 %v513
  %v2560 = vunpack.c.l.b16 %v514
  %v2561 = vunpack.c.h.b16 %v514
  %v2562 = vunpack.c.l.b16 %v515
  %v2563 = vunpack.c.h.b16 %v515
  %v2564 = vunpack.c.l.b16 %v516
  %v2565 = vunpack.c.h.b16 %v516
  %v2566 = vunpack.c.l.b16 %v517
  %v2567 = vunpack.c.h.b16 %v517
  %v2568 = vunpack.c.l.b16 %v518
  %v2569 = vunpack.c.h.b16 %v518
  %v2570 = vunpack.c.l.b16 %v519
  %v2571 = vunpack.c.h.b16 %v519
  %v2572 = vunpack.c.l.b16 %v520
  %v2573 = vunpack.c.h.b16 %v520
  %v2574 = vunpack.c.l.b16 %v521
  %v2575 = vunpack.c.h.b16 %v521
  %v2576 = vunpack.c.l.b16 %v522
  %v2577 = vunpack.c.h.b16 %v522
  %v2578 = vunpack.c.l.b16 %v523
  %v2579 = vunpack.c.h.b16 %v523
  %v2580 = vunpack.c.l.b16 %v524
  %v2581 = vunpack.c.h.b16 %v524
  %v2582 = vunpack.c.l.b16 %v525
  %v2583 = vunpack.c.h.b16 %v525
  %v2584 = vunpack.c.l.b16 %v526
  %v2585 = vunpack.c.h.b16 %v526
  %v2586 = vunpack.c.l.b16 %v527
  %v2587 = vunpack.c.h.b16 %v527
  %v2588 = vunpack.c.l.b16 %v528
  %v2589 = vunpack.c.h.b16 %v528
  %v2590 = vunpack.c.l.b16 %v529
  %v2591 = vunpack.c.h.b16 %v529
  %v2592 = vunpack.c.l.b16 %v530
  %v2593 = vunpack.c.h.b16 %v530
  %v2594 = vunpack.c.l.b16 %v531
  %v2595 = vunpack.c.h.b16 %v531
  %v2596 = vunpack.c.l.b16 %v532
  %v2597 = vunpack.c.h.b16 %v532
  %v2598 = vunpack.c.l.b16 %v533
  %v2599 = vunpack.c.h.b16 %v533
  %v2600 = vunpack.c.l.b16 %v534
  %v2601 = vunpack.c.h.b16 %v534
  %v2602 = vunpack.c.l.b16 %v535
  %v2603 = vunpack.c.h.b16 %v535
  %v2604 = vunpack.c.l.b16 %v536
  %v2605 = vunpack.c.h.b16 %v536
  %v2606 = vunpack.c.l.b16 %v537
  %v2607 = vunpack.c.h.b16 %v537
  %v2608 = vunpack.c.l.b16 %v538
  %v2609 = vunpack.c.h.b16 %v538
  %v2610 = vunpack.c.l.b16 %v539
  %v2611 = vunpack.c.h.b16 %v539
  %v2612 = vunpack.c.l.b16 %v540
  %v2613 = vunpack.c.h.b16 %v540
  %v2614 = vunpack.c.l.b16 %v541
  %v2615 = vunpack.c.h.b16 %v541
  %v2616 = vunpack.c.l.b16 %v542
  %v2617 = vunpack.c.h.b16 %v542
  %v2618 = vunpack.c.l.b16 %v543
  %v2619 = vunpack.c.h.b16 %v543
  %v2620 = vunpack.c.l.b16 %v544
  %v2621 = vunpack.c.h.b16 %v544
  %v2622 = vunpack.c.l.b16 %v545
  %v2623 = vunpack.c.h.b16 %v545
  %v2624 = vunpack.c.l.b16 %v546
  %v2625 = vunpack.c.h.b16 %v546
  %v2626 = vunpack.c.l.b16 %v547
  %v2627 = vunpack.c.h.b16 %v547
  %v2628 = vunpack.c.l.b16 %v548
  %v2629 = vunpack.c.h.b16 %v548
  %v2630 = vunpack.c.l.b16 %v549
  %v2631 = vunpack.c.h.b16 %v549
  %v2632 = vunpack.c.l.b16 %v550
  %v2633 = vunpack.c.h.b16 %v550
  %v2634 = vunpack.c.l.b16 %v551
  %v2635 = vunpack.c.h.b16 %v551
  %v2636 = vunpack.c.l.b16 %v552
  %v2637 = vunpack.c.h.b16 %v552
  %v2638 = vunpack.c.l.b16 %v553
  %v2639 = vunpack.c.h.b16 %v553
  %v2640 = vunpack.c.l.b16 %v554
  %v2641 = vunpack.c.h.b16 %v554
  %v2642 = vunpack.c.l.b16 %v555
  %v2643 = vunpack.c.h.b16 %v555
  %v2644 = vunpack.c.l.b16 %v556
  %v2645 = vunpack.c.h.b16 %v556
  %v2646 = vunpack.c.l.b16 %v557
  %v2647 = vunpack.c.h.b16 %v557
  %v2648 = vunpack.c.l.b16 %v558
  %v2649 = vunpack.c.h.b16 %v558
  %v2650 = vunpack.c.l.b16 %v559
  %v2651 = vunpack.c.h.b16 %v559
  %v2652 = vunpack.c.l.b16 %v560
  %v2653 = vunpack.c.h.b16 %v560
  %v2654 = vunpack.c.l.b16 %v561
  %v2655 = vunpack.c.h.b16 %v561
  %v2656 = vunpack.c.l.b16 %v562
  %v2657 = vunpack.c.h.b16 %v562
  %v2658 = vunpack.c.l.b16 %v563
  %v2659 = vunpack.c.h.b16 %v563
  %v2660 = vunpack.c.l.b16 %v564
  %v2661 = vunpack.c.h.b16 %v564
  %v2662 = vunpack.c.l.b16 %v565
  %v2663 = vunpack.c.h.b16 %v565
  %v2664 = vunpack.c.l.b16 %v566
  %v2665 = vunpack.c.h.b16 %v566
  %v2666 = vunpack.c.l.b16 %v567
  %v2667 = vunpack.c.h.b16 %v567
  %v2668 = vunpack.c.l.b16 %v568
  %v2669 = vunpack.c.h.b16 %v568
  %v2670 = vunpack.c.l.b16 %v569
  %v2671 = vunpack.c.h.b16 %v569
  %v2672 = vunpack.c.l.b16 %v570
  %v2673 = vunpack.c.h.b16 %v570
  %v2674 = vunpack.c.l.b16 %v571
  %v2675 = vunpack.c.h.b16 %v571
  %v2676 = vunpack.c.l.b16 %v572
  %v2677 = vunpack.c.h.b16 %v572
  %v2678 = vunpack.c.l.b16 %v573
  %v2679 = vunpack.c.h.b16 %v573
  %v2680 = vunpack.c.l.b16 %v574
  %v2681 = vunpack.c.h.b16 %v574
  %v2682 = vunpack.c.l.b16 %v575
  %v2683 = vunpack.c.h.b16 %v575
  %v2684 = vunpack.c.l.b16 %v576
  %v2685 = vunpack.c.h.b16 %v576
  %v2686 = vunpack.c.l.b16 %v577
  %v2687 = vunpack.c.h.b16 %v577
  %v2688 = vunpack.c.l.b16 %v578
  %v2689 = vunpack.c.h.b16 %v578
  %v2690 = vunpack.c.l.b16 %v579
  %v2691 = vunpack.c.h.b16 %v579
  %v2692 = vunpack.c.l.b16 %v580
  %v2693 = vunpack.c.h.b16 %v580
  %v2694 = vunpack.c.l.b16 %v581
  %v2695 = vunpack.c.h.b16 %v581
  %v2696 = vunpack.c.l.b16 %v582
  %v2697 = vunpack.c.h.b16 %v582
  %v2698 = vunpack.c.l.b16 %v583
  %v2699 = vunpack.c.h.b16 %v583
  %v2700 = vunpack.c.l.b16 %v584
  %v2701 = vunpack.c.h.b16 %v584
  %v2702 = vunpack.c.l.b16 %v585
  %v2703 = vunpack.c.h.b16 %v585
  %v2704 = vunpack.c.l.b16 %v586
  %v2705 = vunpack.c.h.b16 %v586
  %v2706 = vunpack.c.l.b16 %v587
  %v2707 = vunpack.c.h.b16 %v587
  %v2708 = vunpack.c.l.b16 %v588
  %v2709 = vunpack.c.h.b16 %v588
  %v2710 = vunpack.c.l.b16 %v589
  %v2711 = vunpack.c.h.b16 %v589
  %v2712 = vunpack.c.l.b16 %v590
  %v2713 = vunpack.c.h.b16 %v590
  %v2714 = vunpack.c.l.b16 %v591
  %v2715 = vunpack.c.h.b16 %v591
  %v2716 = vunpack.c.l.b16 %v592
  %v2717 = vunpack.c.h.b16 %v592
  %v2718 = vunpack.c.l.b16 %v593
  %v2719 = vunpack.c.h.b16 %v593
  %v2720 = vunpack.c.l.b16 %v594
  %v2721 = vunpack.c.h.b16 %v594
  %v2722 = vunpack.c.l.b16 %v595
  %v2723 = vunpack.c.h.b16 %v595
  %v2724 = vunpack.c.l.b16 %v596
  %v2725 = vunpack.c.h.b16 %v596
  %v2726 = vunpack.c.l.b16 %v597
  %v2727 = vunpack.c.h.b16 %v597
  %v2728 = vunpack.c.l.b16 %v598
  %v2729 = vunpack.c.h.b16 %v598
  %v2730 = vunpack.c.l.b16 %v599
  %v2731 = vunpack.c.h.b16 %v599
  %v2732 = vunpack.c.l.b16 %v600
  %v2733 = vunpack.c.h.b16 %v600
  %v2734 = vunpack.c.l.b16 %v601
  %v2735 = vunpack.c.h.b16 %v601
  %v2736 = vunpack.c.l.b16 %v602
  %v2737 = vunpack.c.h.b16 %v602
  %v2738 = vunpack.c.l.b16 %v603
  %v2739 = vunpack.c.h.b16 %v603
  %v2740 = vunpack.c.l.b16 %v604
  %v2741 = vunpack.c.h.b16 %v604
  %v2742 = vunpack.c.l.b16 %v605
  %v2743 = vunpack.c.h.b16 %v605
  %v2744 = vunpack.c.l.b16 %v606
  %v2745 = vunpack.c.h.b16 %v606
  %v2746 = vunpack.c.l.b16 %v607
  %v2747 = vunpack.c.h.b16 %v607
  %v2748 = vunpack.c.l.b16 %v608
  %v2749 = vunpack.c.h.b16 %v608
  %v2750 = vunpack.c.l.b16 %v609
  %v2751 = vunpack.c.h.b16 %v609
  %v2752 = vunpack.c.l.b16 %v610
  %v2753 = vunpack.c.h.b16 %v610
  %v2754 = vunpack.c.l.b16 %v611
  %v2755 = vunpack.c.h.b16 %v611
  %v2756 = vunpack.c.l.b16 %v612
  %v2757 = vunpack.c.h.b16 %v612
  %v2758 = vunpack.c.l.b16 %v613
  %v2759 = vunpack.c.h.b16 %v613
  %v2760 = vunpack.c.l.b16 %v614
  %v2761 = vunpack.c.h.b16 %v614
  %v2762 = vunpack.c.l.b16 %v615
  %v2763 = vunpack.c.h.b16 %v615
  %v2764 = vunpack.c.l.b16 %v616
  %v2765 = vunpack.c.h.b16 %v616
  %v2766 = vunpack.c.l.b16 %v617
  %v2767 = vunpack.c.h.b16 %v617
  %v2768 = vunpack.c.l.b16 %v618
  %v2769 = vunpack.c.h.b16 %v618
  %v2770 = vunpack.c.l.b16 %v619
  %v2771 = vunpack.c.h.b16 %v619
  %v2772 = vunpack.c.l.b16 %v620
  %v2773 = vunpack.c.h.b16 %v620
  %v2774 = vunpack.c.l.b16 %v621
  %v2775 = vunpack.c.h.b16 %v621
  %v2776 = vunpack.c.l.b16 %v622
  %v2777 = vunpack.c.h.b16 %v622
  %v2778 = vunpack.c.l.b16 %v623
  %v2779 = vunpack.c.h.b16 %v623
  %v2780 = vunpack.c.l.b16 %v624
  %v2781 = vunpack.c.h.b16 %v624
  %v2782 = vunpack.c.l.b16 %v625
  %v2783 = vunpack.c.h.b16 %v625
  %v2784 = vunpack.c.l.b16 %v626
  %v2785 = vunpack.c.h.b16 %v626
  %v2786 = vunpack.c.l.b16 %v627
  %v2787 = vunpack.c.h.b16 %v627
  %v2788 = vunpack.c.l.b16 %v628
  %v2789 = vunpack.c.h.b16 %v628
  %v2790 = vunpack.c.l.b16 %v629
  %v2791 = vunpack.c.h.b16 %v629
  %v2792 = vunpack.c.l.b16 %v630
  %v2793 = vunpack.c.h.b16 %v630
  %v2794 = vunpack.c.l.b16 %v631
  %v2795 = vunpack.c.h.b16 %v631
  %v2796 = vunpack.c.l.b16 %v632
  %v2797 = vunpack.c.h.b16 %v632
  %v2798 = vunpack.c.l.b16 %v633
  %v2799 = vunpack.c.h.b16 %v633
  %v2800 = vunpack.c.l.b16 %v634
  %v2801 = vunpack.c.h.b16 %v634
  %v2802 = vunpack.c.l.b16 %v635
  %v2803 = vunpack.c.h.b16 %v635
  %v2804 = vunpack.c.l.b16 %v636
  %v2805 = vunpack.c.h.b16 %v636
  %v2806 = vunpack.c.l.b16 %v637
  %v2807 = vunpack.c.h.b16 %v637
  %v2808 = vunpack.c.l.b16 %v638
  %v2809 = vunpack.c.h.b16 %v638
  %v2810 = vunpack.c.l.b16 %v639
  %v2811 = vunpack.c.h.b16 %v639
  %v2812 = vunpack.c.l.b16 %v640
  %v2813 = vunpack.c.h.b16 %v640
  %v2814 = vunpack.c.l.b16 %v641
  %v2815 = vunpack.c.h.b16 %v641
  %v2816 = vunpack.c.l.b16 %v642
  %v2817 = vunpack.c.h.b16 %v642
  %v2818 = vunpack.c.l.b16 %v643
  %v2819 = vunpack.c.h.b16 %v643
  %v2820 = vunpack.c.l.b16 %v644
  %v2821 = vunpack.c.h.b16 %v644
  %v2822 = vunpack.c.l.b16 %v645
  %v2823 = vunpack.c.h.b16 %v645
  %v2824 = vunpack.c.l.b16 %v646
  %v2825 = vunpack.c.h.b16 %v646
  %v2826 = vunpack.c.l.b16 %v647
  %v2827 = vunpack.c.h.b16 %v647
  %v2828 = vunpack.c.l.b16 %v648
  %v2829 = vunpack.c.h.b16 %v648
  %v2830 = vunpack.c.l.b16 %v649
  %v2831 = vunpack.c.h.b16 %v649
  %v2832 = vunpack.c.l.b16 %v650
  %v2833 = vunpack.c.h.b16 %v650
  %v2834 = vunpack.c.l.b16 %v651
  %v2835 = vunpack.c.h.b16 %v651
  %v2836 = vunpack.c.l.b16 %v652
  %v2837 = vunpack.c.h.b16 %v652
  %v2838 = vunpack.c.l.b16 %v653
  %v2839 = vunpack.c.h.b16 %v653
  %v2840 = vunpack.c.l.b16 %v654
  %v2841 = vunpack.c.h.b16 %v654
  %v2842 = vunpack.c.l.b16 %v655
  %v2843 = vunpack.c.h.b16 %v655
  %v2844 = vunpack.c.l.b16 %v656
  %v2845 = vunpack.c.h.b16 %v656
  %v2846 = vunpack.c.l.b16 %v657
  %v2847 = vunpack.c.h.b16 %v657
  %v2848 = vunpack.c.l.b16 %v658
  %v2849 = vunpack.c.h.b16 %v658
  %v2850 = vunpack.c.l.b16 %v659
  %v2851 = vunpack.c.h.b16 %v659
  %v2852 = vunpack.c.l.b16 %v660
  %v2853 = vunpack.c.h.b16 %v660
  %v2854 = vunpack.c.l.b16 %v661
  %v2855 = vunpack.c.h.b16 %v661
  %v2856 = vunpack.c.l.b16 %v662
  %v2857 = vunpack.c.h.b16 %v662
  %v2858 = vunpack.c.l.b16 %v663
  %v2859 = vunpack.c.h.b16 %v663
  %v2860 = vunpack.c.l.b16 %v664
  %v2861 = vunpack.c.h.b16 %v664
  %v2862 = vunpack.c.l.b16 %v665
  %v2863 = vunpack.c.h.b16 %v665
  %v2864 = vunpack.c.l.b16 %v666
  %v2865 = vunpack.c.h.b16 %v666
  %v2866 = vunpack.c.l.b16 %v667
  %v2867 = vunpack.c.h.b16 %v667
  %v2868 = vunpack.c.l.b16 %v668
  %v2869 = vunpack.c.h.b16 %v668
  %v2870 = vunpack.c.l.b16 %v669
  %v2871 = vunpack.c.h.b16 %v669
  %v2872 = vunpack.c.l.b16 %v670
  %v2873 = vunpack.c.h.b16 %v670
  %v2874 = vunpack.c.l.b16 %v671
  %v2875 = vunpack.c.h.b16 %v671
  %v2876 = vunpack.c.l.b16 %v672
  %v2877 = vunpack.c.h.b16 %v672
  %v2878 = vunpack.c.l.b16 %v673
  %v2879 = vunpack.c.h.b16 %v673
  %v2880 = vunpack.c.l.b16 %v674
  %v2881 = vunpack.c.h.b16 %v674
  %v2882 = vunpack.c.l.b16 %v675
  %v2883 = vunpack.c.h.b16 %v675
  %v2884 = vunpack.c.l.b16 %v676
  %v2885 = vunpack.c.h.b16 %v676
  %v2886 = vunpack.c.l.b16 %v677
  %v2887 = vunpack.c.h.b16 %v677
  %v2888 = vunpack.c.l.b16 %v678
  %v2889 = vunpack.c.h.b16 %v678
  %v2890 = vunpack.c.l.b16 %v679
  %v2891 = vunpack.c.h.b16 %v679
  %v2892 = vunpack.c.l.b16 %v680
  %v2893 = vunpack.c.h.b16 %v680
  %v2894 = vunpack.c.l.b16 %v681
  %v2895 = vunpack.c.h.b16 %v681
  %v2896 = vunpack.c.l.b16 %v682
  %v2897 = vunpack.c.h.b16 %v682
  %v2898 = vunpack.c.l.b16 %v683
  %v2899 = vunpack.c.h.b16 %v683
  %v2900 = vunpack.c.l.b16 %v684
  %v2901 = vunpack.c.h.b16 %v684
  %v2902 = vunpack.c.l.b16 %v685
  %v2903 = vunpack.c.h.b16 %v685
  %v2904 = vunpack.c.l.b16 %v686
  %v2905 = vunpack.c.h.b16 %v686
  %v2906 = vunpack.c.l.b16 %v687
  %v2907 = vunpack.c.h.b16 %v687
  %v2908 = vunpack.c.l.b16 %v688
  %v2909 = vunpack.c.h.b16 %v688
  %v2910 = vunpack.c.l.b16 %v689
  %v2911 = vunpack.c.h.b16 %v689
  %v2912 = vunpack.c.l.b16 %v690
  %v2913 = vunpack.c.h.b16 %v690
  %v2914 = vunpack.c.l.b16 %v691
  %v2915 = vunpack.c.h.b16 %v691
  %v2916 = vunpack.c.l.b16 %v692
  %v2917 = vunpack.c.h.b16 %v692
  %v2918 = vunpack.c.l.b16 %v693
  %v2919 = vunpack.c.h.b16 %v693
  %v2920 = vunpack.c.l.b16 %v694
  %v2921 = vunpack.c.h.b16 %v694
  %v2922 = vunpack.c.l.b16 %v695
  %v2923 = vunpack.c.h.b16 %v695
  %v2924 = vunpack.c.l.b16 %v696
  %v2925 = vunpack.c.h.b16 %v696
  %v2926 = vunpack.c.l.b16 %v697
  %v2927 = vunpack.c.h.b16 %v697
  %v2928 = vunpack.c.l.b16 %v698
  %v2929 = vunpack.c.h.b16 %v698
  %v2930 = vunpack.c.l.b16 %v699
  %v2931 = vunpack.c.h.b16 %v699
  %v2932 = vunpack.c.l.b16 %v700
  %v2933 = vunpack.c.h.b16 %v700
  %v2934 = vunpack.c.l.b16 %v701
  %v2935 = vunpack.c.h.b16 %v701
  %v2936 = vunpack.c.l.b16 %v702
  %v2937 = vunpack.c.h.b16 %v702
  %v2938 = vunpack.c.l.b16 %v703
  %v2939 = vunpack.c.h.b16 %v703
  %v2940 = vunpack.c.l.b16 %v704
  %v2941 = vunpack.c.h.b16 %v704
  %v2942 = vunpack.c.l.b16 %v705
  %v2943 = vunpack.c.h.b16 %v705
  %v2944 = vunpack.c.l.b16 %v706
  %v2945 = vunpack.c.h.b16 %v706
  %v2946 = vunpack.c.l.b16 %v707
  %v2947 = vunpack.c.h.b16 %v707
  %v2948 = vunpack.c.l.b16 %v708
  %v2949 = vunpack.c.h.b16 %v708
  %v2950 = vunpack.c.l.b16 %v709
  %v2951 = vunpack.c.h.b16 %v709
  %v2952 = vunpack.c.l.b16 %v710
  %v2953 = vunpack.c.h.b16 %v710
  %v2954 = vunpack.c.l.b16 %v711
  %v2955 = vunpack.c.h.b16 %v711
  %v2956 = vunpack.c.l.b16 %v712
  %v2957 = vunpack.c.h.b16 %v712
  %v2958 = vunpack.c.l.b16 %v713
  %v2959 = vunpack.c.h.b16 %v713
  %v2960 = vunpack.c.l.b16 %v714
  %v2961 = vunpack.c.h.b16 %v714
  %v2962 = vunpack.c.l.b16 %v715
  %v2963 = vunpack.c.h.b16 %v715
  %v2964 = vunpack.c.l.b16 %v716
  %v2965 = vunpack.c.h.b16 %v716
  %v2966 = vunpack.c.l.b16 %v717
  %v2967 = vunpack.c.h.b16 %v717
  %v2968 = vunpack.c.l.b16 %v718
  %v2969 = vunpack.c.h.b16 %v718
  %v2970 = vunpack.c.l.b16 %v719
  %v2971 = vunpack.c.h.b16 %v719
  %v2972 = vunpack.c.l.b16 %v720
  %v2973 = vunpack.c.h.b16 %v720
  %v2974 = vunpack.c.l.b16 %v721
  %v2975 = vunpack.c.h.b16 %v721
  %v2976 = vunpack.c.l.b16 %v722
  %v2977 = vunpack.c.h.b16 %v722
  %v2978 = vunpack.c.l.b16 %v723
  %v2979 = vunpack.c.h.b16 %v723
  %v2980 = vunpack.c.l.b16 %v724
  %v2981 = vunpack.c.h.b16 %v724
  %v2982 = vunpack.c.l.b16 %v725
  %v2983 = vunpack.c.h.b16 %v725
  %v2984 = vunpack.c.l.b16 %v726
  %v2985 = vunpack.c.h.b16 %v726
  %v2986 = vunpack.c.l.b16 %v727
  %v2987 = vunpack.c.h.b16 %v727
  %v2988 = vunpack.c.l.b16 %v728
  %v2989 = vunpack.c.h.b16 %v728
  %v2990 = vunpack.c.l.b16 %v729
  %v2991 = vunpack.c.h.b16 %v729
  %v2992 = vunpack.c.l.b16 %v730
  %v2993 = vunpack.c.h.b16 %v730
  %v2994 = vunpack.c.l.b16 %v731
  %v2995 = vunpack.c.h.b16 %v731
  %v2996 = vunpack.c.l.b16 %v732
  %v2997 = vunpack.c.h.b16 %v732
  %v2998 = vunpack.c.l.b16 %v733
  %v2999 = vunpack.c.h.b16 %v733
  %v3000 = vunpack.c.l.b16 %v734
  %v3001 = vunpack.c.h.b16 %v734
  %v3002 = vunpack.c.l.b16 %v735
  %v3003 = vunpack.c.h.b16 %v735
  %v3004 = vunpack.c.l.b16 %v736
  %v3005 = vunpack.c.h.b16 %v736
  %v3006 = vunpack.c.l.b16 %v737
  %v3007 = vunpack.c.h.b16 %v737
  %v3008 = vunpack.c.l.b16 %v738
  %v3009 = vunpack.c.h.b16 %v738
  %v3010 = vunpack.c.l.b16 %v739
  %v3011 = vunpack.c.h.b16 %v739
  %v3012 = vunpack.c.l.b16 %v740
  %v3013 = vunpack.c.h.b16 %v740
  %v3014 = vunpack.c.l.b16 %v741
  %v3015 = vunpack.c.h.b16 %v741
  %v3016 = vunpack.c.l.b16 %v742
  %v3017 = vunpack.c.h.b16 %v742
  %v3018 = vunpack.c.l.b16 %v743
  %v3019 = vunpack.c.h.b16 %v743
  %v3020 = vunpack.c.l.b16 %v744
  %v3021 = vunpack.c.h.b16 %v744
  %v3022 = vunpack.c.l.b16 %v745
  %v3023 = vunpack.c.h.b16 %v745
  %v3024 = vunpack.c.l.b16 %v746
  %v3025 = vunpack.c.h.b16 %v746
  %v3026 = vunpack.c.l.b16 %v747
  %v3027 = vunpack.c.h.b16 %v747
  %v3028 = vunpack.c.l.b16 %v748
  %v3029 = vunpack.c.h.b16 %v748
  %v3030 = vunpack.c.l.b16 %v749
  %v3031 = vunpack.c.h.b16 %v749
  %v3032 = vunpack.c.l.b16 %v750
  %v3033 = vunpack.c.h.b16 %v750
  %v3034 = vunpack.c.l.b16 %v751
  %v3035 = vunpack.c.h.b16 %v751
  %v3036 = vunpack.c.l.b16 %v752
  %v3037 = vunpack.c.h.b16 %v752
  %v3038 = vunpack.c.l.b16 %v753
  %v3039 = vunpack.c.h.b16 %v753
  %v3040 = vunpack.c.l.b16 %v754
  %v3041 = vunpack.c.h.b16 %v754
  %v3042 = vunpack.c.l.b16 %v755
  %v3043 = vunpack.c.h.b16 %v755
  %v3044 = vunpack.c.l.b16 %v756
  %v3045 = vunpack.c.h.b16 %v756
  %v3046 = vunpack.c.l.b16 %v757
  %v3047 = vunpack.c.h.b16 %v757
  %v3048 = vunpack.c.l.b16 %v758
  %v3049 = vunpack.c.h.b16 %v758
  %v3050 = vunpack.c.l.b16 %v759
  %v3051 = vunpack.c.h.b16 %v759
  %v3052 = vunpack.c.l.b16 %v760
  %v3053 = vunpack.c.h.b16 %v760
  %v3054 = vunpack.c.l.b16 %v761
  %v3055 = vunpack.c.h.b16 %v761
  %v3056 = vunpack.c.l.b16 %v762
  %v3057 = vunpack.c.h.b16 %v762
  %v3058 = vunpack.c.l.b16 %v763
  %v3059 = vunpack.c.h.b16 %v763
  %v3060 = vunpack.c.l.b16 %v764
  %v3061 = vunpack.c.h.b16 %v764
  %v3062 = vpack.c.b16 %v1626, %v1622
  %v3063 = vpack.c.b16 %v1627, %v1623
  %v3064 = vpack.c.b16 %v1628, %v1624
  %v3065 = vpack.c.b16 %v1629, %v1625
  %v3066 = vpack.c.b16 %v1634, %v1630
  %v3067 = vpack.c.b16 %v1635, %v1631
  %v3068 = vpack.c.b16 %v1636, %v1632
  %v3069 = vpack.c.b16 %v1637, %v1633
  %v3070 = vpack.c.b16 %v1642, %v1638
  %v3071 = vpack.c.b16 %v1643, %v1639
  %v3072 = vpack.c.b16 %v1644, %v1640
  %v3073 = vpack.c.b16 %v1645, %v1641
  %v3074 = vpack.c.b16 %v1650, %v1646
  %v3075 = vpack.c.b16 %v1651, %v1647
  %v3076 = vpack.c.b16 %v1652, %v1648
  %v3077 = vpack.c.b16 %v1653, %v1649
  %v3078 = vpack.c.b16 %v1658, %v1654
  %v3079 = vpack.c.b16 %v1659, %v1655
  %v3080 = vpack.c.b16 %v1660, %v1656
  %v3081 = vpack.c.b16 %v1661, %v1657
  %v3082 = vpack.c.b16 %v1666, %v1662
  %v3083 = vpack.c.b16 %v1667, %v1663
  %v3084 = vpack.c.b16 %v1668, %v1664
  %v3085 = vpack.c.b16 %v1669, %v1665
  %v3086 = vpack.c.b16 %v1674, %v1670
  %v3087 = vpack.c.b16 %v1675, %v1671
  %v3088 = vpack.c.b16 %v1676, %v1672
  %v3089 = vpack.c.b16 %v1677, %v1673
  %v3090 = vpack.c.b16 %v1682, %v1678
  %v3091 = vpack.c.b16 %v1683, %v1679
  %v3092 = vpack.c.b16 %v1684, %v1680
  %v3093 = vpack.c.b16 %v1685, %v1681
  %v3094 = vpack.c.b16 %v1690, %v1686
  %v3095 = vpack.c.b16 %v1691, %v1687
  %v3096 = vpack.c.b16 %v1692, %v1688
  %v3097 = vpack.c.b16 %v1693, %v1689
  %v3098 = vpack.c.b16 %v1698, %v1694
  %v3099 = vpack.c.b16 %v1699, %v1695
  %v3100 = vpack.c.b16 %v1700, %v1696
  %v3101 = vpack.c.b16 %v1701, %v1697
  %v3102 = vpack.c.b16 %v1706, %v1702
  %v3103 = vpack.c.b16 %v1707, %v1703
  %v3104 = vpack.c.b16 %v1708, %v1704
  %v3105 = vpack.c.b16 %v1709, %v1705
  %v3106 = vpack.c.b16 %v1714, %v1710
  %v3107 = vpack.c.b16 %v1715, %v1711
  %v3108 = vpack.c.b16 %v1716, %v1712
  %v3109 = vpack.c.b16 %v1717, %v1713
  %v3110 = vpack.c.b16 %v1722, %v1718
  %v3111 = vpack.c.b16 %v1723, %v1719
  %v3112 = vpack.c.b16 %v1724, %v1720
  %v3113 = vpack.c.b16 %v1725, %v1721
  %v3114 = vpack.c.b16 %v1730, %v1726
  %v3115 = vpack.c.b16 %v1731, %v1727
  %v3116 = vpack.c.b16 %v1732, %v1728
  %v3117 = vpack.c.b16 %v1733, %v1729
  %v3118 = vpack.c.b16 %v1738, %v1734
  %v3119 = vpack.c.b16 %v1739, %v1735
  %v3120 = vpack.c.b16 %v1740, %v1736
  %v3121 = vpack.c.b16 %v1741, %v1737
  %v3122 = vpack.c.b16 %v1746, %v1742
  %v3123 = vpack.c.b16 %v1747, %v1743
  %v3124 = vpack.c.b16 %v1748, %v1744
  %v3125 = vpack.c.b16 %v1749, %v1745
  %v3126 = vpack.c.b16 %v1754, %v1750
  %v3127 = vpack.c.b16 %v1755, %v1751
  %v3128 = vpack.c.b16 %v1756, %v1752
  %v3129 = vpack.c.b16 %v1757, %v1753
  %v3130 = vpack.c.b16 %v1762, %v1758
  %v3131 = vpack.c.b16 %v1763, %v1759
  %v3132 = vpack.c.b16 %v1764, %v1760
  %v3133 = vpack.c.b16 %v1765, %v1761
  %v3134 = vpack.c.b16 %v1770, %v1766
  %v3135 = vpack.c.b16 %v1771, %v1767
  %v3136 = vpack.c.b16 %v1772, %v1768
  %v3137 = vpack.c.b16 %v1773, %v1769
  %v3138 = vpack.c.b16 %v1778, %v1774
  %v3139 = vpack.c.b16 %v1779, %v1775
  %v3140 = vpack.c.b16 %v1780, %v1776
  %v3141 = vpack.c.b16 %v1781, %v1777
  %v3142 = vpack.c.b16 %v1786, %v1782
  %v3143 = vpack.c.b16 %v1787, %v1783
  %v3144 = vpack.c.b16 %v1788, %v1784
  %v3145 = vpack.c.b16 %v1789, %v1785
  %v3146 = vpack.c.b16 %v1794, %v1790
  %v3147 = vpack.c.b16 %v1795, %v1791
  %v3148 = vpack.c.b16 %v1796, %v1792
  %v3149 = vpack.c.b16 %v1797, %v1793
  %v3150 = vpack.c.b16 %v1802, %v1798
  %v3151 = vpack.c.b16 %v1803, %v1799
  %v3152 = vpack.c.b16 %v1804, %v1800
  %v3153 = vpack.c.b16 %v1805, %v1801
  %v3154 = vpack.c.b16 %v1810, %v1806
  %v3155 = vpack.c.b16 %v1811, %v1807
  %v3156 = vpack.c.b16 %v1812, %v1808
  %v3157 = vpack.c.b16 %v1813, %v1809
  %v3158 = vpack.c.b16 %v1818, %v1814
  %v3159 = vpack.c.b16 %v1819, %v1815
  %v3160 = vpack.c.b16 %v1820, %v1816
  %v3161 = vpack.c.b16 %v1821, %v1817
  %v3162 = vpack.c.b16 %v1826, %v1822
  %v3163 = vpack.c.b16 %v1827, %v1823
  %v3164 = vpack.c.b16 %v1828, %v1824
  %v3165 = vpack.c.b16 %v1829, %v1825
  %v3166 = vpack.c.b16 %v1834, %v1830
  %v3167 = vpack.c.b16 %v1835, %v1831
  %v3168 = vpack.c.b16 %v1836, %v1832
  %v3169 = vpack.c.b16 %v1837, %v1833
  %v3170 = vpack.c.b16 %v1842, %v1838
  %v3171 = vpack.c.b16 %v1843, %v1839
  %v3172 = vpack.c.b16 %v1844, %v1840
  %v3173 = vpack.c.b16 %v1845, %v1841
  %v3174 = vpack.c.b16 %v1850, %v1846
  %v3175 = vpack.c.b16 %v1851, %v1847
  %v3176 = vpack.c.b16 %v1852, %v1848
  %v3177 = vpack.c.b16 %v1853, %v1849
  %v3178 = vpack.c.b16 %v1858, %v1854
  %v3179 = vpack.c.b16 %v1859, %v1855
  %v3180 = vpack.c.b16 %v1860, %v1856
  %v3181 = vpack.c.b16 %v1861, %v1857
  %v3182 = vpack.c.b16 %v1866, %v1862
  %v3183 = vpack.c.b16 %v1867, %v1863
  %v3184 = vpack.c.b16 %v1868, %v1864
  %v3185 = vpack.c.b16 %v1869, %v1865
  %v3186 = vpack.c.b16 %v1874, %v1870
  %v3187 = vpack.c.b16 %v1875, %v1871
  %v3188 = vpack.c.b16 %v1876, %v1872
  %v3189 = vpack.c.b16 %v1877, %v1873
  %v3190 = vpack.c.b16 %v1882, %v1878
  %v3191 = vpack.c.b16 %v1883, %v1879
  %v3192 = vpack.c.b16 %v1884, %v1880
  %v3193 = vpack.c.b16 %v1885, %v1881
  %v3194 = vpack.c.b16 %v1890, %v1886
  %v3195 = vpack.c.b16 %v1891, %v1887
  %v3196 = vpack.c.b16 %v1892, %v1888
  %v3197 = vpack.c.b16 %v1893, %v1889
  %v3198 = vpack.c.b16 %v1898, %v1894
  %v3199 = vpack.c.b16 %v1899, %v1895
  %v3200 = vpack.c.b16 %v1900, %v1896
  %v3201 = vpack.c.b16 %v1901, %v1897
  %v3202 = vpack.c.b16 %v1906, %v1902
  %v3203 = vpack.c.b16 %v1907, %v1903
  %v3204 = vpack.c.b16 %v1908, %v1904
  %v3205 = vpack.c.b16 %v1909, %v1905
  %v3206 = vpack.c.b16 %v1914, %v1910
  %v3207 = vpack.c.b16 %v1915, %v1911
  %v3208 = vpack.c.b16 %v1916, %v1912
  %v3209 = vpack.c.b16 %v1917, %v1913
  %v3210 = vpack.c.b16 %v1922, %v1918
  %v3211 = vpack.c.b16 %v1923, %v1919
  %v3212 = vpack.c.b16 %v1924, %v1920
  %v3213 = vpack.c.b16 %v1925, %v1921
  %v3214 = vpack.c.b16 %v1930, %v1926
  %v3215 = vpack.c.b16 %v1931, %v1927
  %v3216 = vpack.c.b16 %v1932, %v1928
  %v3217 = vpack.c.b16 %v1933, %v1929
  %v3218 = vpack.c.b16 %v1938, %v1934
  %v3219 = vpack.c.b16 %v1939, %v1935
  %v3220 = vpack.c.b16 %v1940, %v1936
  %v3221 = vpack.c.b16 %v1941, %v1937
  %v3222 = vpack.c.b16 %v1946, %v1942
  %v3223 = vpack.c.b16 %v1947, %v1943
  %v3224 = vpack.c.b16 %v1948, %v1944
  %v3225 = vpack.c.b16 %v1949, %v1945
  %v3226 = vpack.c.b16 %v1954, %v1950
  %v3227 = vpack.c.b16 %v1955, %v1951
  %v3228 = vpack.c.b16 %v1956, %v1952
  %v3229 = vpack.c.b16 %v1957, %v1953
  %v3230 = vpack.c.b16 %v1962, %v1958
  %v3231 = vpack.c.b16 %v1963, %v1959
  %v3232 = vpack.c.b16 %v1964, %v1960
  %v3233 = vpack.c.b16 %v1965, %v1961
  %v3234 = vpack.c.b16 %v1970, %v1966
  %v3235 = vpack.c.b16 %v1971, %v1967
  %v3236 = vpack.c.b16 %v1972, %v1968
  %v3237 = vpack.c.b16 %v1973, %v1969
  %v3238 = vpack.c.b16 %v1978, %v1974
  %v3239 = vpack.c.b16 %v1979, %v1975
  %v3240 = vpack.c.b16 %v1980, %v1976
  %v3241 = vpack.c.b16 %v1981, %v1977
  %v3242 = vpack.c.b16 %v1986, %v1982
  %v3243 = vpack.c.b16 %v1987, %v1983
  %v3244 = vpack.c.b16 %v1988, %v1984
  %v3245 = vpack.c.b16 %v1989, %v1985
  %v3246 = vpack.c.b16 %v1994, %v1990
  %v3247 = vpack.c.b16 %v1995, %v1991
  %v3248 = vpack.c.b16 %v1996, %v1992
  %v3249 = vpack.c.b16 %v1997, %v1993
  %v3250 = vpack.c.b16 %v2002, %v1998
  %v3251 = vpack.c.b16 %v2003, %v1999
  %v3252 = vpack.c.b16 %v2004, %v2000
  %v3253 = vpack.c.b16 %v2005, %v2001
  %v3254 = vpack.c.b16 %v2010, %v2006
  %v3255 = vpack.c.b16 %v2011, %v2007
  %v3256 = vpack.c.b16 %v2012, %v2008
  %v3257 = vpack.c.b16 %v2013, %v2009
  %v3258 = vpack.c.b16 %v2018, %v2014
  %v3259 = vpack.c.b16 %v2019, %v2015
  %v3260 = vpack.c.b16 %v2020, %v2016
  %v3261 = vpack.c.b16 %v2021, %v2017
  %v3262 = vpack.c.b16 %v2026, %v2022
  %v3263 = vpack.c.b16 %v2027, %v2023
  %v3264 = vpack.c.b16 %v2028, %v2024
  %v3265 = vpack.c.b16 %v2029, %v2025
  %v3266 = vpack.c.b16 %v2034, %v2030
  %v3267 = vpack.c.b16 %v2035, %v2031
  %v3268 = vpack.c.b16 %v2036, %v2032
  %v3269 = vpack.c.b16 %v2037, %v2033
  %v3270 = vpack.c.b16 %v2042, %v2038
  %v3271 = vpack.c.b16 %v2043, %v2039
  %v3272 = vpack.c.b16 %v2044, %v2040
  %v3273 = vpack.c.b16 %v2045, %v2041
  %v3274 = vpack.c.b16 %v2050, %v2046
  %v3275 = vpack.c.b16 %v2051, %v2047
  %v3276 = vpack.c.b16 %v2052, %v2048
  %v3277 = vpack.c.b16 %v2053, %v2049
  %v3278 = vpack.c.b16 %v2058, %v2054
  %v3279 = vpack.c.b16 %v2059, %v2055
  %v3280 = vpack.c.b16 %v2060, %v2056
  %v3281 = vpack.c.b16 %v2061, %v2057
  %v3282 = vpack.c.b16 %v2066, %v2062
  %v3283 = vpack.c.b16 %v2067, %v2063
  %v3284 = vpack.c.b16 %v2068, %v2064
  %v3285 = vpack.c.b16 %v2069, %v2065
  %v3286 = vpack.c.b16 %v2074, %v2070
  %v3287 = vpack.c.b16 %v2075, %v2071
  %v3288 = vpack.c.b16 %v2076, %v2072
  %v3289 = vpack.c.b16 %v2077, %v2073
  %v3290 = vpack.c.b16 %v2082, %v2078
  %v3291 = vpack.c.b16 %v2083, %v2079
  %v3292 = vpack.c.b16 %v2084, %v2080
  %v3293 = vpack.c.b16 %v2085, %v2081
  %v3294 = vpack.c.b16 %v2090, %v2086
  %v3295 = vpack.c.b16 %v2091, %v2087
  %v3296 = vpack.c.b16 %v2092, %v2088
  %v3297 = vpack.c.b16 %v2093, %v2089
  %v3298 = vpack.c.b16 %v2098, %v2094
  %v3299 = vpack.c.b16 %v2099, %v2095
  %v3300 = vpack.c.b16 %v2100, %v2096
  %v3301 = vpack.c.b16 %v2101, %v2097
  %v3302 = vpack.c.b16 %v2106, %v2102
  %v3303 = vpack.c.b16 %v2107, %v2103
  %v3304 = vpack.c.b16 %v2108, %v2104
  %v3305 = vpack.c.b16 %v2109, %v2105
  %v3306 = vpack.c.b16 %v2114, %v2110
  %v3307 = vpack.c.b16 %v2115, %v2111
  %v3308 = vpack.c.b16 %v2116, %v2112
  %v3309 = vpack.c.b16 %v2117, %v2113
  %v3310 = vpack.c.b16 %v2122, %v2118
  %v3311 = vpack.c.b16 %v2123, %v2119
  %v3312 = vpack.c.b16 %v2124, %v2120
  %v3313 = vpack.c.b16 %v2125, %v2121
  %v3314 = vpack.c.b16 %v2130, %v2126
  %v3315 = vpack.c.b16 %v2131, %v2127
  %v3316 = vpack.c.b16 %v2132, %v2128
  %v3317 = vpack.c.b16 %v2133, %v2129
  %v3318 = vpack.c.b16 %v2138, %v2134
  %v3319 = vpack.c.b16 %v2139, %v2135
  %v3320 = vpack.c.b16 %v2140, %v2136
  %v3321 = vpack.c.b16 %v2141, %v2137
  %v3322 = vpack.c.b16 %v2146, %v2142
  %v3323 = vpack.c.b16 %v2147, %v2143
  %v3324 = vpack.c.b16 %v2148, %v2144
  %v3325 = vpack.c.b16 %v2149, %v2145
  %v3326 = vpack.c.b16 %v2154, %v2150
  %v3327 = vpack.c.b16 %v2155, %v2151
  %v3328 = vpack.c.b16 %v2156, %v2152
  %v3329 = vpack.c.b16 %v2157, %v2153
  %v3330 = vpack.c.b16 %v2162, %v2158
  %v3331 = vpack.c.b16 %v2163, %v2159
  %v3332 = vpack.c.b16 %v2164, %v2160
  %v3333 = vpack.c.b16 %v2165, %v2161
  %v3334 = vpack.c.b16 %v2170, %v2166
  %v3335 = vpack.c.b16 %v2171, %v2167
  %v3336 = vpack.c.b16 %v2172, %v2168
  %v3337 = vpack.c.b16 %v2173, %v2169
  %v3338 = vpack.c.b16 %v2178, %v2174
  %v3339 = vpack.c.b16 %v2179, %v2175
  %v3340 = vpack.c.b16 %v2180, %v2176
  %v3341 = vpack.c.b16 %v2181, %v2177
  %v3342 = vpack.c.b16 %v2186, %v2182
  %v3343 = vpack.c.b16 %v2187, %v2183
  %v3344 = vpack.c.b16 %v2188, %v2184
  %v3345 = vpack.c.b16 %v2189, %v2185
  %v3346 = vpack.c.b16 %v2194, %v2190
  %v3347 = vpack.c.b16 %v2195, %v2191
  %v3348 = vpack.c.b16 %v2196, %v2192
  %v3349 = vpack.c.b16 %v2197, %v2193
  %v3350 = vpack.c.b16 %v2202, %v2198
  %v3351 = vpack.c.b16 %v2203, %v2199
  %v3352 = vpack.c.b16 %v2204, %v2200
  %v3353 = vpack.c.b16 %v2205, %v2201
  %v3354 = vpack.c.b16 %v2210, %v2206
  %v3355 = vpack.c.b16 %v2211, %v2207
  %v3356 = vpack.c.b16 %v2212, %v2208
  %v3357 = vpack.c.b16 %v2213, %v2209
  %v3358 = vpack.c.b16 %v2218, %v2214
  %v3359 = vpack.c.b16 %v2219, %v2215
  %v3360 = vpack.c.b16 %v2220, %v2216
  %v3361 = vpack.c.b16 %v2221, %v2217
  %v3362 = vpack.c.b16 %v2226, %v2222
  %v3363 = vpack.c.b16 %v2227, %v2223
  %v3364 = vpack.c.b16 %v2228, %v2224
  %v3365 = vpack.c.b16 %v2229, %v2225
  %v3366 = vpack.c.b16 %v2234, %v2230
  %v3367 = vpack.c.b16 %v2235, %v2231
  %v3368 = vpack.c.b16 %v2236, %v2232
  %v3369 = vpack.c.b16 %v2237, %v2233
  %v3370 = vpack.c.b16 %v2242, %v2238
  %v3371 = vpack.c.b16 %v2243, %v2239
  %v3372 = vpack.c.b16 %v2244, %v2240
  %v3373 = vpack.c.b16 %v2245, %v2241
  %v3374 = vpack.c.b16 %v2250, %v2246
  %v3375 = vpack.c.b16 %v2251, %v2247
  %v3376 = vpack.c.b16 %v2252, %v2248
  %v3377 = vpack.c.b16 %v2253, %v2249
  %v3378 = vpack.c.b16 %v2258, %v2254
  %v3379 = vpack.c.b16 %v2259, %v2255
  %v3380 = vpack.c.b16 %v2260, %v2256
  %v3381 = vpack.c.b16 %v2261, %v2257
  %v3382 = vpack.c.b16 %v2266, %v2262
  %v3383 = vpack.c.b16 %v2267, %v2263
  %v3384 = vpack.c.b16 %v2268, %v2264
  %v3385 = vpack.c.b16 %v2269, %v2265
  %v3386 = vpack.c.b16 %v2274, %v2270
  %v3387 = vpack.c.b16 %v2275, %v2271
  %v3388 = vpack.c.b16 %v2276, %v2272
  %v3389 = vpack.c.b16 %v2277, %v2273
  %v3390 = vpack.c.b16 %v2282, %v2278
  %v3391 = vpack.c.b16 %v2283, %v2279
  %v3392 = vpack.c.b16 %v2284, %v2280
  %v3393 = vpack.c.b16 %v2285, %v2281
  %v3394 = vpack.c.b16 %v2290, %v2286
  %v3395 = vpack.c.b16 %v2291, %v2287
  %v3396 = vpack.c.b16 %v2292, %v2288
  %v3397 = vpack.c.b16 %v2293, %v2289
  %v3398 = vpack.c.b16 %v2298, %v2294
  %v3399 = vpack.c.b16 %v2299, %v2295
  %v3400 = vpack.c.b16 %v2300, %v2296
  %v3401 = vpack.c.b16 %v2301, %v2297
  %v3402 = vpack.c.b16 %v2306, %v2302
  %v3403 = vpack.c.b16 %v2307, %v2303
  %v3404 = vpack.c.b16 %v2308, %v2304
  %v3405 = vpack.c.b16 %v2309, %v2305
  %v3406 = vpack.c.b16 %v2314, %v2310
  %v3407 = vpack.c.b16 %v2315, %v2311
  %v3408 = vpack.c.b16 %v2316, %v2312
  %v3409 = vpack.c.b16 %v2317, %v2313
  %v3410 = vpack.c.b16 %v2322, %v2318
  %v3411 = vpack.c.b16 %v2323, %v2319
  %v3412 = vpack.c.b16 %v2324, %v2320
  %v3413 = vpack.c.b16 %v2325, %v2321
  %v3414 = vpack.c.b16 %v2330, %v2326
  %v3415 = vpack.c.b16 %v2331, %v2327
  %v3416 = vpack.c.b16 %v2332, %v2328
  %v3417 = vpack.c.b16 %v2333, %v2329
  %v3418 = vpack.c.b16 %v2338, %v2334
  %v3419 = vpack.c.b16 %v2339, %v2335
  %v3420 = vpack.c.b16 %v2340, %v2336
  %v3421 = vpack.c.b16 %v2341, %v2337
  %v3422 = vpack.c.b16 %v2346, %v2342
  %v3423 = vpack.c.b16 %v2347, %v2343
  %v3424 = vpack.c.b16 %v2348, %v2344
  %v3425 = vpack.c.b16 %v2349, %v2345
  %v3426 = vpack.c.b16 %v2354, %v2350
  %v3427 = vpack.c.b16 %v2355, %v2351
  %v3428 = vpack.c.b16 %v2356, %v2352
  %v3429 = vpack.c.b16 %v2357, %v2353
  %v3430 = vpack.c.b16 %v2362, %v2358
  %v3431 = vpack.c.b16 %v2363, %v2359
  %v3432 = vpack.c.b16 %v2364, %v2360
  %v3433 = vpack.c.b16 %v2365, %v2361
  %v3434 = vpack.c.b16 %v2370, %v2366
  %v3435 = vpack.c.b16 %v2371, %v2367
  %v3436 = vpack.c.b16 %v2372, %v2368
  %v3437 = vpack.c.b16 %v2373, %v2369
  %v3438 = vpack.c.b16 %v2378, %v2374
  %v3439 = vpack.c.b16 %v2379, %v2375
  %v3440 = vpack.c.b16 %v2380, %v2376
  %v3441 = vpack.c.b16 %v2381, %v2377
  %v3442 = vpack.c.b16 %v2386, %v2382
  %v3443 = vpack.c.b16 %v2387, %v2383
  %v3444 = vpack.c.b16 %v2388, %v2384
  %v3445 = vpack.c.b16 %v2389, %v2385
  %v3446 = vpack.c.b16 %v2394, %v2390
  %v3447 = vpack.c.b16 %v2395, %v2391
  %v3448 = vpack.c.b16 %v2396, %v2392
  %v3449 = vpack.c.b16 %v2397, %v2393
  %v3450 = vpack.c.b16 %v2402, %v2398
  %v3451 = vpack.c.b16 %v2403, %v2399
  %v3452 = vpack.c.b16 %v2404, %v2400
  %v3453 = vpack.c.b16 %v2405, %v2401
  %v3454 = vpack.c.b16 %v2410, %v2406
  %v3455 = vpack.c.b16 %v2411, %v2407
  %v3456 = vpack.c.b16 %v2412, %v2408
  %v3457 = vpack.c.b16 %v2413, %v2409
  %v3458 = vpack.c.b16 %v2418, %v2414
  %v3459 = vpack.c.b16 %v2419, %v2415
  %v3460 = vpack.c.b16 %v2420, %v2416
  %v3461 = vpack.c.b16 %v2421, %v2417
  %v3462 = vpack.c.b16 %v2426, %v2422
  %v3463 = vpack.c.b16 %v2427, %v2423
  %v3464 = vpack.c.b16 %v2428, %v2424
  %v3465 = vpack.c.b16 %v2429, %v2425
  %v3466 = vpack.c.b16 %v2434, %v2430
  %v3467 = vpack.c.b16 %v2435, %v2431
  %v3468 = vpack.c.b16 %v2436, %v2432
  %v3469 = vpack.c.b16 %v2437, %v2433
  %v3470 = vpack.c.b16 %v2442, %v2438
  %v3471 = vpack.c.b16 %v2443, %v2439
  %v3472 = vpack.c.b16 %v2444, %v2440
  %v3473 = vpack.c.b16 %v2445, %v2441
  %v3474 = vpack.c.b16 %v2450, %v2446
  %v3475 = vpack.c.b16 %v2451, %v2447
  %v3476 = vpack.c.b16 %v2452, %v2448
  %v3477 = vpack.c.b16 %v2453, %v2449
  %v3478 = vpack.c.b16 %v2458, %v2454
  %v3479 = vpack.c.b16 %v2459, %v2455
  %v3480 = vpack.c.b16 %v2460, %v2456
  %v3481 = vpack.c.b16 %v2461, %v2457
  %v3482 = vpack.c.b16 %v2466, %v2462
  %v3483 = vpack.c.b16 %v2467, %v2463
  %v3484 = vpack.c.b16 %v2468, %v2464
  %v3485 = vpack.c.b16 %v2469, %v2465
  %v3486 = vpack.c.b16 %v2474, %v2470
  %v3487 = vpack.c.b16 %v2475, %v2471
  %v3488 = vpack.c.b16 %v2476, %v2472
  %v3489 = vpack.c.b16 %v2477, %v2473
  %v3490 = vpack.c.b16 %v2482, %v2478
  %v3491 = vpack.c.b16 %v2483, %v2479
  %v3492 = vpack.c.b16 %v2484, %v2480
  %v3493 = vpack.c.b16 %v2485, %v2481
  %v3494 = vpack.c.b16 %v2490, %v2486
  %v3495 = vpack.c.b16 %v2491, %v2487
  %v3496 = vpack.c.b16 %v2492, %v2488
  %v3497 = vpack.c.b16 %v2493, %v2489
  %v3498 = vpack.c.b16 %v2498, %v2494
  %v3499 = vpack.c.b16 %v2499, %v2495
  %v3500 = vpack.c.b16 %v2500, %v2496
  %v3501 = vpack.c.b16 %v2501, %v2497
  %v3502 = vpack.c.b16 %v2506, %v2502
  %v3503 = vpack.c.b16 %v2507, %v2503
  %v3504 = vpack.c.b16 %v2508, %v2504
  %v3505 = vpack.c.b16 %v2509, %v2505
  %v3506 = vpack.c.b16 %v2514, %v2510
  %v3507 = vpack.c.b16 %v2515, %v2511
  %v3508 = vpack.c.b16 %v2516, %v2512
  %v3509 = vpack.c.b16 %v2517, %v2513
  %v3510 = vpack.c.b16 %v2522, %v2518
  %v3511 = vpack.c.b16 %v2523, %v2519
  %v3512 = vpack.c.b16 %v2524, %v2520
  %v3513 = vpack.c.b16 %v2525, %v2521
  %v3514 = vpack.c.b16 %v2530, %v2526
  %v3515 = vpack.c.b16 %v2531, %v2527
  %v3516 = vpack.c.b16 %v2532, %v2528
  %v3517 = vpack.c.b16 %v2533, %v2529
  %v3518 = vpack.c.b16 %v2538, %v2534
  %v3519 = vpack.c.b16 %v2539, %v2535
  %v3520 = vpack.c.b16 %v2540, %v2536
  %v3521 = vpack.c.b16 %v2541, %v2537
  %v3522 = vpack.c.b16 %v2546, %v2542
  %v3523 = vpack.c.b16 %v2547, %v2543
  %v3524 = vpack.c.b16 %v2548, %v2544
  %v3525 = vpack.c.b16 %v2549, %v2545
  %v3526 = vpack.c.b16 %v2554, %v2550
  %v3527 = vpack.c.b16 %v2555, %v2551
  %v3528 = vpack.c.b16 %v2556, %v2552
  %v3529 = vpack.c.b16 %v2557, %v2553
  %v3530 = vpack.c.b16 %v2562, %v2558
  %v3531 = vpack.c.b16 %v2563, %v2559
  %v3532 = vpack.c.b16 %v2564, %v2560
  %v3533 = vpack.c.b16 %v2565, %v2561
  %v3534 = vpack.c.b16 %v2570, %v2566
  %v3535 = vpack.c.b16 %v2571, %v2567
  %v3536 = vpack.c.b16 %v2572, %v2568
  %v3537 = vpack.c.b16 %v2573, %v2569
  %v3538 = vpack.c.b16 %v2578, %v2574
  %v3539 = vpack.c.b16 %v2579, %v2575
  %v3540 = vpack.c.b16 %v2580, %v2576
  %v3541 = vpack.c.b16 %v2581, %v2577
  %v3542 = vpack.c.b16 %v2586, %v2582
  %v3543 = vpack.c.b16 %v2587, %v2583
  %v3544 = vpack.c.b16 %v2588, %v2584
  %v3545 = vpack.c.b16 %v2589, %v2585
  %v3546 = vpack.c.b16 %v2594, %v2590
  %v3547 = vpack.c.b16 %v2595, %v2591
  %v3548 = vpack.c.b16 %v2596, %v2592
  %v3549 = vpack.c.b16 %v2597, %v2593
  %v3550 = vpack.c.b16 %v2602, %v2598
  %v3551 = vpack.c.b16 %v2603, %v2599
  %v3552 = vpack.c.b16 %v2604, %v2600
  %v3553 = vpack.c.b16 %v2605, %v2601
  %v3554 = vpack.c.b16 %v2610, %v2606
  %v3555 = vpack.c.b16 %v2611, %v2607
  %v3556 = vpack.c.b16 %v2612, %v2608
  %v3557 = vpack.c.b16 %v2613, %v2609
  %v3558 = vpack.c.b16 %v2618, %v2614
  %v3559 = vpack.c.b16 %v2619, %v2615
  %v3560 = vpack.c.b16 %v2620, %v2616
  %v3561 = vpack.c.b16 %v2621, %v2617
  %v3562 = vpack.c.b16 %v2626, %v2622
  %v3563 = vpack.c.b16 %v2627, %v2623
  %v3564 = vpack.c.b16 %v2628, %v2624
  %v3565 = vpack.c.b16 %v2629, %v2625
  %v3566 = vpack.c.b16 %v2634, %v2630
  %v3567 = vpack.c.b16 %v2635, %v2631
  %v3568 = vpack.c.b16 %v2636, %v2632
  %v3569 = vpack.c.b16 %v2637, %v2633
  %v3570 = vpack.c.b16 %v2642, %v2638
  %v3571 = vpack.c.b16 %v2643, %v2639
  %v3572 = vpack.c.b16 %v2644, %v2640
  %v3573 = vpack.c.b16 %v2645, %v2641
  %v3574 = vpack.c.b16 %v2650, %v2646
  %v3575 = vpack.c.b16 %v2651, %v2647
  %v3576 = vpack.c.b16 %v2652, %v2648
  %v3577 = vpack.c.b16 %v2653, %v2649
  %v3578 = vpack.c.b16 %v2658, %v2654
  %v3579 = vpack.c.b16 %v2659, %v2655
  %v3580 = vpack.c.b16 %v2660, %v2656
  %v3581 = vpack.c.b16 %v2661, %v2657
  %v3582 = vpack.c.b16 %v2666, %v2662
  %v3583 = vpack.c.b16 %v2667, %v2663
  %v3584 = vpack.c.b16 %v2668, %v2664
  %v3585 = vpack.c.b16 %v2669, %v2665
  %v3586 = vpack.c.b16 %v2674, %v2670
  %v3587 = vpack.c.b16 %v2675, %v2671
  %v3588 = vpack.c.b16 %v2676, %v2672
  %v3589 = vpack.c.b16 %v2677, %v2673
  %v3590 = vpack.c.b16 %v2682, %v2678
  %v3591 = vpack.c.b16 %v2683, %v2679
  %v3592 = vpack.c.b16 %v2684, %v2680
  %v3593 = vpack.c.b16 %v2685, %v2681
  %v3594 = vpack.c.b16 %v2690, %v2686
  %v3595 = vpack.c.b16 %v2691, %v2687
  %v3596 = vpack.c.b16 %v2692, %v2688
  %v3597 = vpack.c.b16 %v2693, %v2689
  %v3598 = vpack.c.b16 %v2698, %v2694
  %v3599 = vpack.c.b16 %v2699, %v2695
  %v3600 = vpack.c.b16 %v2700, %v2696
  %v3601 = vpack.c.b16 %v2701, %v2697
  %v3602 = vpack.c.b16 %v2706, %v2702
  %v3603 = vpack.c.b16 %v2707, %v2703
  %v3604 = vpack.c.b16 %v2708, %v2704
  %v3605 = vpack.c.b16 %v2709, %v2705
  %v3606 = vpack.c.b16 %v2714, %v2710
  %v3607 = vpack.c.b16 %v2715, %v2711
  %v3608 = vpack.c.b16 %v2716, %v2712
  %v3609 = vpack.c.b16 %v2717, %v2713
  %v3610 = vpack.c.b16 %v2722, %v2718
  %v3611 = vpack.c.b16 %v2723, %v2719
  %v3612 = vpack.c.b16 %v2724, %v2720
  %v3613 = vpack.c.b16 %v2725, %v2721
  %v3614 = vpack.c.b16 %v2730, %v2726
  %v3615 = vpack.c.b16 %v2731, %v2727
  %v3616 = vpack.c.b16 %v2732, %v2728
  %v3617 = vpack.c.b16 %v2733, %v2729
  %v3618 = vpack.c.b16 %v2738, %v2734
  %v3619 = vpack.c.b16 %v2739, %v2735
  %v3620 = vpack.c.b16 %v2740, %v2736
  %v3621 = vpack.c.b16 %v2741, %v2737
  %v3622 = vpack.c.b16 %v2746, %v2742
  %v3623 = vpack.c.b16 %v2747, %v2743
  %v3624 = vpack.c.b16 %v2748, %v2744
  %v3625 = vpack.c.b16 %v2749, %v2745
  %v3626 = vpack.c.b16 %v2754, %v2750
  %v3627 = vpack.c.b16 %v2755, %v2751
  %v3628 = vpack.c.b16 %v2756, %v2752
  %v3629 = vpack.c.b16 %v2757, %v2753
  %v3630 = vpack.c.b16 %v2762, %v2758
  %v3631 = vpack.c.b16 %v2763, %v2759
  %v3632 = vpack.c.b16 %v2764, %v2760
  %v3633 = vpack.c.b16 %v2765, %v2761
  %v3634 = vpack.c.b16 %v2770, %v2766
  %v3635 = vpack.c.b16 %v2771, %v2767
  %v3636 = vpack.c.b16 %v2772, %v2768
  %v3637 = vpack.c.b16 %v2773, %v2769
  %v3638 = vpack.c.b16 %v2778, %v2774
  %v3639 = vpack.c.b16 %v2779, %v2775
  %v3640 = vpack.c.b16 %v2780, %v2776
  %v3641 = vpack.c.b16 %v2781, %v2777
  %v3642 = vpack.c.b16 %v2786, %v2782
  %v3643 = vpack.c.b16 %v2787, %v2783
  %v3644 = vpack.c.b16 %v2788, %v2784
  %v3645 = vpack.c.b16 %v2789, %v2785
  %v3646 = vpack.c.b16 %v2794, %v2790
  %v3647 = vpack.c.b16 %v2795, %v2791
  %v3648 = vpack.c.b16 %v2796, %v2792
  %v3649 = vpack.c.b16 %v2797, %v2793
  %v3650 = vpack.c.b16 %v2802, %v2798
  %v3651 = vpack.c.b16 %v2803, %v2799
  %v3652 = vpack.c.b16 %v2804, %v2800
  %v3653 = vpack.c.b16 %v2805, %v2801
  %v3654 = vpack.c.b16 %v2810, %v2806
  %v3655 = vpack.c.b16 %v2811, %v2807
  %v3656 = vpack.c.b16 %v2812, %v2808
  %v3657 = vpack.c.b16 %v2813, %v2809
  %v3658 = vpack.c.b16 %v2818, %v2814
  %v3659 = vpack.c.b16 %v2819, %v2815
  %v3660 = vpack.c.b16 %v2820, %v2816
  %v3661 = vpack.c.b16 %v2821, %v2817
  %v3662 = vpack.c.b16 %v2826, %v2822
  %v3663 = vpack.c.b16 %v2827, %v2823
  %v3664 = vpack.c.b16 %v2828, %v2824
  %v3665 = vpack.c.b16 %v2829, %v2825
  %v3666 = vpack.c.b16 %v2834, %v2830
  %v3667 = vpack.c.b16 %v2835, %v2831
  %v3668 = vpack.c.b16 %v2836, %v2832
  %v3669 = vpack.c.b16 %v2837, %v2833
  %v3670 = vpack.c.b16 %v2842, %v2838
  %v3671 = vpack.c.b16 %v2843, %v2839
  %v3672 = vpack.c.b16 %v2844, %v2840
  %v3673 = vpack.c.b16 %v2845, %v2841
  %v3674 = vpack.c.b16 %v2850, %v2846
  %v3675 = vpack.c.b16 %v2851, %v2847
  %v3676 = vpack.c.b16 %v2852, %v2848
  %v3677 = vpack.c.b16 %v2853, %v2849
  %v3678 = vpack.c.b16 %v2858, %v2854
  %v3679 = vpack.c.b16 %v2859, %v2855
  %v3680 = vpack.c.b16 %v2860, %v2856
  %v3681 = vpack.c.b16 %v2861, %v2857
  %v3682 = vpack.c.b16 %v2866, %v2862
  %v3683 = vpack.c.b16 %v2867, %v2863
  %v3684 = vpack.c.b16 %v2868, %v2864
  %v3685 = vpack.c.b16 %v2869, %v2865
  %v3686 = vpack.c.b16 %v2874, %v2870
  %v3687 = vpack.c.b16 %v2875, %v2871
  %v3688 = vpack.c.b16 %v2876, %v2872
  %v3689 = vpack.c.b16 %v2877, %v2873
  %v3690 = vpack.c.b16 %v2882, %v2878
  %v3691 = vpack.c.b16 %v2883, %v2879
  %v3692 = vpack.c.b16 %v2884, %v2880
  %v3693 = vpack.c.b16 %v2885, %v2881
  %v3694 = vpack.c.b16 %v2890, %v2886
  %v3695 = vpack.c.b16 %v2891, %v2887
  %v3696 = vpack.c.b16 %v2892, %v2888
  %v3697 = vpack.c.b16 %v2893, %v2889
  %v3698 = vpack.c.b16 %v2898, %v2894
  %v3699 = vpack.c.b16 %v2899, %v2895
  %v3700 = vpack.c.b16 %v2900, %v2896
  %v3701 = vpack.c.b16 %v2901, %v2897
  %v3702 = vpack.c.b16 %v2906, %v2902
  %v3703 = vpack.c.b16 %v2907, %v2903
  %v3704 = vpack.c.b16 %v2908, %v2904
  %v3705 = vpack.c.b16 %v2909, %v2905
  %v3706 = vpack.c.b16 %v2914, %v2910
  %v3707 = vpack.c.b16 %v2915, %v2911
  %v3708 = vpack.c.b16 %v2916, %v2912
  %v3709 = vpack.c.b16 %v2917, %v2913
  %v3710 = vpack.c.b16 %v2922, %v2918
  %v3711 = vpack.c.b16 %v2923, %v2919
  %v3712 = vpack.c.b16 %v2924, %v2920
  %v3713 = vpack.c.b16 %v2925, %v2921
  %v3714 = vpack.c.b16 %v2930, %v2926
  %v3715 = vpack.c.b16 %v2931, %v2927
  %v3716 = vpack.c.b16 %v2932, %v2928
  %v3717 = vpack.c.b16 %v2933, %v2929
  %v3718 = vpack.c.b16 %v2938, %v2934
  %v3719 = vpack.c.b16 %v2939, %v2935
  %v3720 = vpack.c.b16 %v2940, %v2936
  %v3721 = vpack.c.b16 %v2941, %v2937
  %v3722 = vpack.c.b16 %v2946, %v2942
  %v3723 = vpack.c.b16 %v2947, %v2943
  %v3724 = vpack.c.b16 %v2948, %v2944
  %v3725 = vpack.c.b16 %v2949, %v2945
  %v3726 = vpack.c.b16 %v2954, %v2950
  %v3727 = vpack.c.b16 %v2955, %v2951
  %v3728 = vpack.c.b16 %v2956, %v2952
  %v3729 = vpack.c.b16 %v2957, %v2953
  %v3730 = vpack.c.b16 %v2962, %v2958
  %v3731 = vpack.c.b16 %v2963, %v2959
  %v3732 = vpack.c.b16 %v2964, %v2960
  %v3733 = vpack.c.b16 %v2965, %v2961
  %v3734 = vpack.c.b16 %v2970, %v2966
  %v3735 = vpack.c.b16 %v2971, %v2967
  %v3736 = vpack.c.b16 %v2972, %v2968
  %v3737 = vpack.c.b16 %v2973, %v2969
  %v3738 = vpack.c.b16 %v2978, %v2974
  %v3739 = vpack.c.b16 %v2979, %v2975
  %v3740 = vpack.c.b16 %v2980, %v2976
  %v3741 = vpack.c.b16 %v2981, %v2977
  %v3742 = vpack.c.b16 %v2986, %v2982
  %v3743 = vpack.c.b16 %v2987, %v2983
  %v3744 = vpack.c.b16 %v2988, %v2984
  %v3745 = vpack.c.b16 %v2989, %v2985
  %v3746 = vpack.c.b16 %v2994, %v2990
  %v3747 = vpack.c.b16 %v2995, %v2991
  %v3748 = vpack.c.b16 %v2996, %v2992
  %v3749 = vpack.c.b16 %v2997, %v2993
  %v3750 = vpack.c.b16 %v3002, %v2998
  %v3751 = vpack.c.b16 %v3003, %v2999
  %v3752 = vpack.c.b16 %v3004, %v3000
  %v3753 = vpack.c.b16 %v3005, %v3001
  %v3754 = vpack.c.b16 %v3010, %v3006
  %v3755 = vpack.c.b16 %v3011, %v3007
  %v3756 = vpack.c.b16 %v3012, %v3008
  %v3757 = vpack.c.b16 %v3013, %v3009
  %v3758 = vpack.c.b16 %v3018, %v3014
  %v3759 = vpack.c.b16 %v3019, %v3015
  %v3760 = vpack.c.b16 %v3020, %v3016
  %v3761 = vpack.c.b16 %v3021, %v3017
  %v3762 = vpack.c.b16 %v3026, %v3022
  %v3763 = vpack.c.b16 %v3027, %v3023
  %v3764 = vpack.c.b16 %v3028, %v3024
  %v3765 = vpack.c.b16 %v3029, %v3025
  %v3766 = vpack.c.b16 %v3034, %v3030
  %v3767 = vpack.c.b16 %v3035, %v3031
  %v3768 = vpack.c.b16 %v3036, %v3032
  %v3769 = vpack.c.b16 %v3037, %v3033
  %v3770 = vpack.c.b16 %v3042, %v3038
  %v3771 = vpack.c.b16 %v3043, %v3039
  %v3772 = vpack.c.b16 %v3044, %v3040
  %v3773 = vpack.c.b16 %v3045, %v3041
  %v3774 = vpack.c.b16 %v3050, %v3046
  %v3775 = vpack.c.b16 %v3051, %v3047
  %v3776 = vpack.c.b16 %v3052, %v3048
  %v3777 = vpack.c.b16 %v3053, %v3049
  %v3778 = vpack.c.b16 %v3058, %v3054
  %v3779 = vpack.c.b16 %v3059, %v3055
  %v3780 = vpack.c.b16 %v3060, %v3056
  %v3781 = vpack.c.b16 %v3061, %v3057
  %vm4502 = vcmask 523264
  %v4504 = vsel %vm4502, %v879, 0
  %4506 = vmatprep.subr.bf16.mxu0 %v3063
  %4507 = vmatpush1.bf16.msra.mxu0 %v3062
  %4508 = vmatprep.subr.bf16.mxu0 %v3067
  %4509 = vmatpush1.bf16.msra.mxu0 %v3066
  %4510 = vmatprep.subr.bf16.mxu0 %v3071
  %4511 = vmatpush1.bf16.msra.mxu0 %v3070
  %4512 = vmatprep.subr.bf16.mxu0 %v3075
  %4513 = vmatpush1.bf16.msra.mxu0 %v3074
  %4514 = vmatprep.subr.bf16.mxu0 %v3079
  %4515 = vmatpush1.bf16.msra.mxu0 %v3078
  %4516 = vmatprep.subr.bf16.mxu0 %v3083
  %4517 = vmatpush1.bf16.msra.mxu0 %v3082
  %4518 = vmatprep.subr.bf16.mxu0 %v3087
  %4519 = vmatpush1.bf16.msra.mxu0 %v3086
  %4520 = vmatprep.subr.bf16.mxu0 %v3091
  %4521 = vmatpush1.bf16.msra.mxu0 %v3090
  %4522 = vmatprep.subr.bf16.mxu0 %v3095
  %4523 = vmatpush1.bf16.msra.mxu0 %v3094
  %4524 = vmatprep.subr.bf16.mxu0 %v3099
  %4525 = vmatpush1.bf16.msra.mxu0 %v3098
  %4526 = vmatprep.subr.bf16.mxu0 %v3103
  %4527 = vmatpush1.bf16.msra.mxu0 %v3102
  %4528 = vmatprep.subr.bf16.mxu0 %v3107
  %4529 = vmatpush1.bf16.msra.mxu0 %v3106
  %4530 = vmatprep.subr.bf16.mxu0 %v3111
  %4531 = vmatpush1.bf16.msra.mxu0 %v3110
  %4532 = vmatprep.subr.bf16.mxu0 %v3115
  %4533 = vmatpush1.bf16.msra.mxu0 %v3114
  %4534 = vmatprep.subr.bf16.mxu0 %v3119
  %4535 = vmatpush1.bf16.msra.mxu0 %v3118
  %4536 = vmatprep.subr.bf16.mxu0 %v3123
  %4537 = vmatpush1.bf16.msra.mxu0 %v3122
  %4538 = vmatprep.mubr.bf16.mxu0 %v858
  %4539 = vmatmul.mubr.bf16.gmra.mrb[0].mxu0 %v857
  %v4540 = vpop.f32.mrb[0].mxu0
  %v4541 = vadd.f32 %v770, %v4540
  %v4542 = vpop.f32.mrb[0].mxu0
  %v4543 = vadd.f32 %v774, %v4542
  %v4544 = vpop.f32.mrb[0].mxu0
  %v4545 = vadd.f32 %v770, %v4544
  %v4546 = vpop.f32.mrb[0].mxu0
  %v4547 = vadd.f32 %v774, %v4546
  %4548 = vdwg.mxu0
  %4549 = vmatprep.subr.bf16.mxu0 %v3127
  %4550 = vmatpush1.bf16.msra.mxu0 %v3126
  %4551 = vmatprep.subr.bf16.mxu0 %v3131
  %4552 = vmatpush1.bf16.msra.mxu0 %v3130
  %4553 = vmatprep.subr.bf16.mxu0 %v3135
  %4554 = vmatpush1.bf16.msra.mxu0 %v3134
  %4555 = vmatprep.subr.bf16.mxu0 %v3139
  %4556 = vmatpush1.bf16.msra.mxu0 %v3138
  %4557 = vmatprep.subr.bf16.mxu0 %v3143
  %4558 = vmatpush1.bf16.msra.mxu0 %v3142
  %4559 = vmatprep.subr.bf16.mxu0 %v3147
  %4560 = vmatpush1.bf16.msra.mxu0 %v3146
  %4561 = vmatprep.subr.bf16.mxu0 %v3151
  %4562 = vmatpush1.bf16.msra.mxu0 %v3150
  %4563 = vmatprep.subr.bf16.mxu0 %v3155
  %4564 = vmatpush1.bf16.msra.mxu0 %v3154
  %4565 = vmatprep.subr.bf16.mxu0 %v3159
  %4566 = vmatpush1.bf16.msra.mxu0 %v3158
  %4567 = vmatprep.subr.bf16.mxu0 %v3163
  %4568 = vmatpush1.bf16.msra.mxu0 %v3162
  %4569 = vmatprep.subr.bf16.mxu0 %v3167
  %4570 = vmatpush1.bf16.msra.mxu0 %v3166
  %4571 = vmatprep.subr.bf16.mxu0 %v3171
  %4572 = vmatpush1.bf16.msra.mxu0 %v3170
  %4573 = vmatprep.subr.bf16.mxu0 %v3175
  %4574 = vmatpush1.bf16.msra.mxu0 %v3174
  %4575 = vmatprep.subr.bf16.mxu0 %v3179
  %4576 = vmatpush1.bf16.msra.mxu0 %v3178
  %4577 = vmatprep.subr.bf16.mxu0 %v3183
  %4578 = vmatpush1.bf16.msra.mxu0 %v3182
  %4579 = vmatprep.subr.bf16.mxu0 %v3187
  %4580 = vmatpush1.bf16.msra.mxu0 %v3186
  %4581 = vmatprep.mubr.bf16.mxu0 %v860
  %4582 = vmatmul.mubr.bf16.gmra.mrb[0].mxu0 %v859
  %v4583 = vpop.f32.mrb[0].mxu0
  %v4584 = vadd.f32 %v4541, %v4583
  %v4585 = vpop.f32.mrb[0].mxu0
  %v4586 = vadd.f32 %v4543, %v4585
  %v4587 = vpop.f32.mrb[0].mxu0
  %v4588 = vadd.f32 %v4545, %v4587
  %v4589 = vpop.f32.mrb[0].mxu0
  %v4590 = vadd.f32 %v4547, %v4589
  %4591 = vdwg.mxu0
  %4592 = vmatprep.subr.bf16.mxu0 %v3191
  %4593 = vmatpush1.bf16.msra.mxu0 %v3190
  %4594 = vmatprep.subr.bf16.mxu0 %v3195
  %4595 = vmatpush1.bf16.msra.mxu0 %v3194
  %4596 = vmatprep.subr.bf16.mxu0 %v3199
  %4597 = vmatpush1.bf16.msra.mxu0 %v3198
  %4598 = vmatprep.subr.bf16.mxu0 %v3203
  %4599 = vmatpush1.bf16.msra.mxu0 %v3202
  %4600 = vmatprep.subr.bf16.mxu0 %v3207
  %4601 = vmatpush1.bf16.msra.mxu0 %v3206
  %4602 = vmatprep.subr.bf16.mxu0 %v3211
  %4603 = vmatpush1.bf16.msra.mxu0 %v3210
  %4604 = vmatprep.subr.bf16.mxu0 %v3215
  %4605 = vmatpush1.bf16.msra.mxu0 %v3214
  %4606 = vmatprep.subr.bf16.mxu0 %v3219
  %4607 = vmatpush1.bf16.msra.mxu0 %v3218
  %4608 = vmatprep.subr.bf16.mxu0 %v3223
  %4609 = vmatpush1.bf16.msra.mxu0 %v3222
  %4610 = vmatprep.subr.bf16.mxu0 %v3227
  %4611 = vmatpush1.bf16.msra.mxu0 %v3226
  %4612 = vmatprep.subr.bf16.mxu0 %v3231
  %4613 = vmatpush1.bf16.msra.mxu0 %v3230
  %4614 = vmatprep.subr.bf16.mxu0 %v3235
  %4615 = vmatpush1.bf16.msra.mxu0 %v3234
  %4616 = vmatprep.subr.bf16.mxu0 %v3239
  %4617 = vmatpush1.bf16.msra.mxu0 %v3238
  %4618 = vmatprep.subr.bf16.mxu0 %v3243
  %4619 = vmatpush1.bf16.msra.mxu0 %v3242
  %4620 = vmatprep.subr.bf16.mxu0 %v3247
  %4621 = vmatpush1.bf16.msra.mxu0 %v3246
  %4622 = vmatprep.subr.bf16.mxu0 %v3251
  %4623 = vmatpush1.bf16.msra.mxu0 %v3250
  %4624 = vmatprep.mubr.bf16.mxu0 %v862
  %4625 = vmatmul.mubr.bf16.gmra.mrb[0].mxu0 %v861
  %v4626 = vpop.f32.mrb[0].mxu0
  %v4627 = vadd.f32 %v4584, %v4626
  %v4628 = vpop.f32.mrb[0].mxu0
  %v4629 = vadd.f32 %v4586, %v4628
  %v4630 = vpop.f32.mrb[0].mxu0
  %v4631 = vadd.f32 %v4588, %v4630
  %v4632 = vpop.f32.mrb[0].mxu0
  %v4633 = vadd.f32 %v4590, %v4632
  %4634 = vdwg.mxu0
  %4635 = vmatprep.subr.bf16.mxu0 %v3255
  %4636 = vmatpush1.bf16.msra.mxu0 %v3254
  %4637 = vmatprep.subr.bf16.mxu0 %v3259
  %4638 = vmatpush1.bf16.msra.mxu0 %v3258
  %4639 = vmatprep.subr.bf16.mxu0 %v3263
  %4640 = vmatpush1.bf16.msra.mxu0 %v3262
  %4641 = vmatprep.subr.bf16.mxu0 %v3267
  %4642 = vmatpush1.bf16.msra.mxu0 %v3266
  %4643 = vmatprep.subr.bf16.mxu0 %v3271
  %4644 = vmatpush1.bf16.msra.mxu0 %v3270
  %4645 = vmatprep.subr.bf16.mxu0 %v3275
  %4646 = vmatpush1.bf16.msra.mxu0 %v3274
  %4647 = vmatprep.subr.bf16.mxu0 %v3279
  %4648 = vmatpush1.bf16.msra.mxu0 %v3278
  %4649 = vmatprep.subr.bf16.mxu0 %v3283
  %4650 = vmatpush1.bf16.msra.mxu0 %v3282
  %4651 = vmatprep.subr.bf16.mxu0 %v3287
  %4652 = vmatpush1.bf16.msra.mxu0 %v3286
  %4653 = vmatprep.subr.bf16.mxu0 %v3291
  %4654 = vmatpush1.bf16.msra.mxu0 %v3290
  %4655 = vmatprep.subr.bf16.mxu0 %v3295
  %4656 = vmatpush1.bf16.msra.mxu0 %v3294
  %4657 = vmatprep.subr.bf16.mxu0 %v3299
  %4658 = vmatpush1.bf16.msra.mxu0 %v3298
  %4659 = vmatprep.subr.bf16.mxu0 %v3303
  %4660 = vmatpush1.bf16.msra.mxu0 %v3302
  %4661 = vmatprep.subr.bf16.mxu0 %v3307
  %4662 = vmatpush1.bf16.msra.mxu0 %v3306
  %4663 = vmatprep.subr.bf16.mxu0 %v3311
  %4664 = vmatpush1.bf16.msra.mxu0 %v3310
  %4665 = vmatprep.subr.bf16.mxu0 %v3315
  %4666 = vmatpush1.bf16.msra.mxu0 %v3314
  %4667 = vmatprep.mubr.bf16.mxu0 %v864
  %4668 = vmatmul.mubr.bf16.gmra.mrb[0].mxu0 %v863
  %v4669 = vpop.f32.mrb[0].mxu0
  %v4670 = vadd.f32 %v4627, %v4669
  %v4671 = vpop.f32.mrb[0].mxu0
  %v4672 = vadd.f32 %v4629, %v4671
  %v4673 = vpop.f32.mrb[0].mxu0
  %v4674 = vadd.f32 %v4631, %v4673
  %v4675 = vpop.f32.mrb[0].mxu0
  %v4676 = vadd.f32 %v4633, %v4675
  %4677 = vdwg.mxu0
  %4678 = vmatprep.subr.bf16.mxu0 %v3319
  %4679 = vmatpush1.bf16.msra.mxu0 %v3318
  %4680 = vmatprep.subr.bf16.mxu0 %v3323
  %4681 = vmatpush1.bf16.msra.mxu0 %v3322
  %4682 = vmatprep.subr.bf16.mxu0 %v3327
  %4683 = vmatpush1.bf16.msra.mxu0 %v3326
  %4684 = vmatprep.subr.bf16.mxu0 %v3331
  %4685 = vmatpush1.bf16.msra.mxu0 %v3330
  %4686 = vmatprep.subr.bf16.mxu0 %v3335
  %4687 = vmatpush1.bf16.msra.mxu0 %v3334
  %4688 = vmatprep.subr.bf16.mxu0 %v3339
  %4689 = vmatpush1.bf16.msra.mxu0 %v3338
  %4690 = vmatprep.subr.bf16.mxu0 %v3343
  %4691 = vmatpush1.bf16.msra.mxu0 %v3342
  %4692 = vmatprep.subr.bf16.mxu0 %v3347
  %4693 = vmatpush1.bf16.msra.mxu0 %v3346
  %4694 = vmatprep.subr.bf16.mxu0 %v3351
  %4695 = vmatpush1.bf16.msra.mxu0 %v3350
  %4696 = vmatprep.subr.bf16.mxu0 %v3355
  %4697 = vmatpush1.bf16.msra.mxu0 %v3354
  %4698 = vmatprep.subr.bf16.mxu0 %v3359
  %4699 = vmatpush1.bf16.msra.mxu0 %v3358
  %4700 = vmatprep.subr.bf16.mxu0 %v3363
  %4701 = vmatpush1.bf16.msra.mxu0 %v3362
  %4702 = vmatprep.subr.bf16.mxu0 %v3367
  %4703 = vmatpush1.bf16.msra.mxu0 %v3366
  %4704 = vmatprep.subr.bf16.mxu0 %v3371
  %4705 = vmatpush1.bf16.msra.mxu0 %v3370
  %4706 = vmatprep.subr.bf16.mxu0 %v3375
  %4707 = vmatpush1.bf16.msra.mxu0 %v3374
  %4708 = vmatprep.subr.bf16.mxu0 %v3379
  %4709 = vmatpush1.bf16.msra.mxu0 %v3378
  %4710 = vmatprep.mubr.bf16.mxu0 %v866
  %4711 = vmatmul.mubr.bf16.gmra.mrb[0].mxu0 %v865
  %v4712 = vpop.f32.mrb[0].mxu0
  %v4713 = vadd.f32 %v4670, %v4712
  %v4714 = vpop.f32.mrb[0].mxu0
  %v4715 = vadd.f32 %v4672, %v4714
  %v4716 = vpop.f32.mrb[0].mxu0
  %v4717 = vadd.f32 %v4674, %v4716
  %v4718 = vpop.f32.mrb[0].mxu0
  %v4719 = vadd.f32 %v4676, %v4718
  %4720 = vdwg.mxu0
  %4721 = vmatprep.subr.bf16.mxu0 %v3383
  %4722 = vmatpush1.bf16.msra.mxu0 %v3382
  %4723 = vmatprep.subr.bf16.mxu0 %v3387
  %4724 = vmatpush1.bf16.msra.mxu0 %v3386
  %4725 = vmatprep.subr.bf16.mxu0 %v3391
  %4726 = vmatpush1.bf16.msra.mxu0 %v3390
  %4727 = vmatprep.subr.bf16.mxu0 %v3395
  %4728 = vmatpush1.bf16.msra.mxu0 %v3394
  %4729 = vmatprep.subr.bf16.mxu0 %v3399
  %4730 = vmatpush1.bf16.msra.mxu0 %v3398
  %4731 = vmatprep.subr.bf16.mxu0 %v3403
  %4732 = vmatpush1.bf16.msra.mxu0 %v3402
  %4733 = vmatprep.subr.bf16.mxu0 %v3407
  %4734 = vmatpush1.bf16.msra.mxu0 %v3406
  %4735 = vmatprep.subr.bf16.mxu0 %v3411
  %4736 = vmatpush1.bf16.msra.mxu0 %v3410
  %4737 = vmatprep.subr.bf16.mxu0 %v3415
  %4738 = vmatpush1.bf16.msra.mxu0 %v3414
  %4739 = vmatprep.subr.bf16.mxu0 %v3419
  %4740 = vmatpush1.bf16.msra.mxu0 %v3418
  %4741 = vmatprep.subr.bf16.mxu0 %v3423
  %4742 = vmatpush1.bf16.msra.mxu0 %v3422
  %4743 = vmatprep.subr.bf16.mxu0 %v3427
  %4744 = vmatpush1.bf16.msra.mxu0 %v3426
  %4745 = vmatprep.subr.bf16.mxu0 %v3431
  %4746 = vmatpush1.bf16.msra.mxu0 %v3430
  %4747 = vmatprep.subr.bf16.mxu0 %v3435
  %4748 = vmatpush1.bf16.msra.mxu0 %v3434
  %4749 = vmatprep.subr.bf16.mxu0 %v3439
  %4750 = vmatpush1.bf16.msra.mxu0 %v3438
  %4751 = vmatprep.subr.bf16.mxu0 %v3443
  %4752 = vmatpush1.bf16.msra.mxu0 %v3442
  %4753 = vmatprep.mubr.bf16.mxu0 %v868
  %4754 = vmatmul.mubr.bf16.gmra.mrb[0].mxu0 %v867
  %v4755 = vpop.f32.mrb[0].mxu0
  %v4756 = vadd.f32 %v4713, %v4755
  %v4757 = vpop.f32.mrb[0].mxu0
  %v4758 = vadd.f32 %v4715, %v4757
  %v4759 = vpop.f32.mrb[0].mxu0
  %v4760 = vadd.f32 %v4717, %v4759
  %v4761 = vpop.f32.mrb[0].mxu0
  %v4762 = vadd.f32 %v4719, %v4761
  %4763 = vdwg.mxu0
  %4764 = vmatprep.subr.bf16.mxu0 %v3447
  %4765 = vmatpush1.bf16.msra.mxu0 %v3446
  %4766 = vmatprep.subr.bf16.mxu0 %v3451
  %4767 = vmatpush1.bf16.msra.mxu0 %v3450
  %4768 = vmatprep.subr.bf16.mxu0 %v3455
  %4769 = vmatpush1.bf16.msra.mxu0 %v3454
  %4770 = vmatprep.subr.bf16.mxu0 %v3459
  %4771 = vmatpush1.bf16.msra.mxu0 %v3458
  %4772 = vmatprep.subr.bf16.mxu0 %v3463
  %4773 = vmatpush1.bf16.msra.mxu0 %v3462
  %4774 = vmatprep.subr.bf16.mxu0 %v3467
  %4775 = vmatpush1.bf16.msra.mxu0 %v3466
  %4776 = vmatprep.subr.bf16.mxu0 %v3471
  %4777 = vmatpush1.bf16.msra.mxu0 %v3470
  %4778 = vmatprep.subr.bf16.mxu0 %v3475
  %4779 = vmatpush1.bf16.msra.mxu0 %v3474
  %4780 = vmatprep.subr.bf16.mxu0 %v3479
  %4781 = vmatpush1.bf16.msra.mxu0 %v3478
  %4782 = vmatprep.subr.bf16.mxu0 %v3483
  %4783 = vmatpush1.bf16.msra.mxu0 %v3482
  %4784 = vmatprep.subr.bf16.mxu0 %v3487
  %4785 = vmatpush1.bf16.msra.mxu0 %v3486
  %4786 = vmatprep.subr.bf16.mxu0 %v3491
  %4787 = vmatpush1.bf16.msra.mxu0 %v3490
  %4788 = vmatprep.subr.bf16.mxu0 %v3495
  %4789 = vmatpush1.bf16.msra.mxu0 %v3494
  %4790 = vmatprep.subr.bf16.mxu0 %v3499
  %4791 = vmatpush1.bf16.msra.mxu0 %v3498
  %4792 = vmatprep.subr.bf16.mxu0 %v3503
  %4793 = vmatpush1.bf16.msra.mxu0 %v3502
  %4794 = vmatprep.subr.bf16.mxu0 %v3507
  %4795 = vmatpush1.bf16.msra.mxu0 %v3506
  %4796 = vmatprep.mubr.bf16.mxu0 %v870
  %4797 = vmatmul.mubr.bf16.gmra.mrb[0].mxu0 %v869
  %v4798 = vpop.f32.mrb[0].mxu0
  %v4799 = vadd.f32 %v4756, %v4798
  %v4800 = vpop.f32.mrb[0].mxu0
  %v4801 = vadd.f32 %v4758, %v4800
  %v4802 = vpop.f32.mrb[0].mxu0
  %v4803 = vadd.f32 %v4760, %v4802
  %v4804 = vpop.f32.mrb[0].mxu0
  %v4805 = vadd.f32 %v4762, %v4804
  %4806 = vdwg.mxu0
  %4807 = vmatprep.subr.bf16.mxu0 %v3511
  %4808 = vmatpush1.bf16.msra.mxu0 %v3510
  %4809 = vmatprep.subr.bf16.mxu0 %v3515
  %4810 = vmatpush1.bf16.msra.mxu0 %v3514
  %4811 = vmatprep.subr.bf16.mxu0 %v3519
  %4812 = vmatpush1.bf16.msra.mxu0 %v3518
  %4813 = vmatprep.subr.bf16.mxu0 %v3523
  %4814 = vmatpush1.bf16.msra.mxu0 %v3522
  %4815 = vmatprep.subr.bf16.mxu0 %v3527
  %4816 = vmatpush1.bf16.msra.mxu0 %v3526
  %4817 = vmatprep.subr.bf16.mxu0 %v3531
  %4818 = vmatpush1.bf16.msra.mxu0 %v3530
  %4819 = vmatprep.subr.bf16.mxu0 %v3535
  %4820 = vmatpush1.bf16.msra.mxu0 %v3534
  %4821 = vmatprep.subr.bf16.mxu0 %v3539
  %4822 = vmatpush1.bf16.msra.mxu0 %v3538
  %4823 = vmatprep.subr.bf16.mxu0 %v3543
  %4824 = vmatpush1.bf16.msra.mxu0 %v3542
  %4825 = vmatprep.subr.bf16.mxu0 %v3547
  %4826 = vmatpush1.bf16.msra.mxu0 %v3546
  %4827 = vmatprep.subr.bf16.mxu0 %v3551
  %4828 = vmatpush1.bf16.msra.mxu0 %v3550
  %4829 = vmatprep.subr.bf16.mxu0 %v3555
  %4830 = vmatpush1.bf16.msra.mxu0 %v3554
  %4831 = vmatprep.subr.bf16.mxu0 %v3559
  %4832 = vmatpush1.bf16.msra.mxu0 %v3558
  %4833 = vmatprep.subr.bf16.mxu0 %v3563
  %4834 = vmatpush1.bf16.msra.mxu0 %v3562
  %4835 = vmatprep.subr.bf16.mxu0 %v3567
  %4836 = vmatpush1.bf16.msra.mxu0 %v3566
  %4837 = vmatprep.subr.bf16.mxu0 %v3571
  %4838 = vmatpush1.bf16.msra.mxu0 %v3570
  %4839 = vmatprep.mubr.bf16.mxu0 %v872
  %4840 = vmatmul.mubr.bf16.gmra.mrb[0].mxu0 %v871
  %v4841 = vpop.f32.mrb[0].mxu0
  %v4842 = vadd.f32 %v4799, %v4841
  %v4843 = vpop.f32.mrb[0].mxu0
  %v4844 = vadd.f32 %v4801, %v4843
  %v4845 = vpop.f32.mrb[0].mxu0
  %v4846 = vadd.f32 %v4803, %v4845
  %v4847 = vpop.f32.mrb[0].mxu0
  %v4848 = vadd.f32 %v4805, %v4847
  %4849 = vdwg.mxu0
  %4850 = vmatprep.subr.bf16.mxu0 %v3575
  %4851 = vmatpush1.bf16.msra.mxu0 %v3574
  %4852 = vmatprep.subr.bf16.mxu0 %v3579
  %4853 = vmatpush1.bf16.msra.mxu0 %v3578
  %4854 = vmatprep.subr.bf16.mxu0 %v3583
  %4855 = vmatpush1.bf16.msra.mxu0 %v3582
  %4856 = vmatprep.subr.bf16.mxu0 %v3587
  %4857 = vmatpush1.bf16.msra.mxu0 %v3586
  %4858 = vmatprep.subr.bf16.mxu0 %v3591
  %4859 = vmatpush1.bf16.msra.mxu0 %v3590
  %4860 = vmatprep.subr.bf16.mxu0 %v3595
  %4861 = vmatpush1.bf16.msra.mxu0 %v3594
  %4862 = vmatprep.subr.bf16.mxu0 %v3599
  %4863 = vmatpush1.bf16.msra.mxu0 %v3598
  %4864 = vmatprep.subr.bf16.mxu0 %v3603
  %4865 = vmatpush1.bf16.msra.mxu0 %v3602
  %4866 = vmatprep.subr.bf16.mxu0 %v3607
  %4867 = vmatpush1.bf16.msra.mxu0 %v3606
  %4868 = vmatprep.subr.bf16.mxu0 %v3611
  %4869 = vmatpush1.bf16.msra.mxu0 %v3610
  %4870 = vmatprep.subr.bf16.mxu0 %v3615
  %4871 = vmatpush1.bf16.msra.mxu0 %v3614
  %4872 = vmatprep.subr.bf16.mxu0 %v3619
  %4873 = vmatpush1.bf16.msra.mxu0 %v3618
  %4874 = vmatprep.subr.bf16.mxu0 %v3623
  %4875 = vmatpush1.bf16.msra.mxu0 %v3622
  %4876 = vmatprep.subr.bf16.mxu0 %v3627
  %4877 = vmatpush1.bf16.msra.mxu0 %v3626
  %4878 = vmatprep.subr.bf16.mxu0 %v3631
  %4879 = vmatpush1.bf16.msra.mxu0 %v3630
  %4880 = vmatprep.subr.bf16.mxu0 %v3635
  %4881 = vmatpush1.bf16.msra.mxu0 %v3634
  %4882 = vmatprep.mubr.bf16.mxu0 %v874
  %4883 = vmatmul.mubr.bf16.gmra.mrb[0].mxu0 %v873
  %v4884 = vpop.f32.mrb[0].mxu0
  %v4885 = vadd.f32 %v4842, %v4884
  %v4886 = vpop.f32.mrb[0].mxu0
  %v4887 = vadd.f32 %v4844, %v4886
  %v4888 = vpop.f32.mrb[0].mxu0
  %v4889 = vadd.f32 %v4846, %v4888
  %v4890 = vpop.f32.mrb[0].mxu0
  %v4891 = vadd.f32 %v4848, %v4890
  %4892 = vdwg.mxu0
  %4893 = vmatprep.subr.bf16.mxu0 %v3639
  %4894 = vmatpush1.bf16.msra.mxu0 %v3638
  %4895 = vmatprep.subr.bf16.mxu0 %v3643
  %4896 = vmatpush1.bf16.msra.mxu0 %v3642
  %4897 = vmatprep.subr.bf16.mxu0 %v3647
  %4898 = vmatpush1.bf16.msra.mxu0 %v3646
  %4899 = vmatprep.subr.bf16.mxu0 %v3651
  %4900 = vmatpush1.bf16.msra.mxu0 %v3650
  %4901 = vmatprep.subr.bf16.mxu0 %v3655
  %4902 = vmatpush1.bf16.msra.mxu0 %v3654
  %4903 = vmatprep.subr.bf16.mxu0 %v3659
  %4904 = vmatpush1.bf16.msra.mxu0 %v3658
  %4905 = vmatprep.subr.bf16.mxu0 %v3663
  %4906 = vmatpush1.bf16.msra.mxu0 %v3662
  %4907 = vmatprep.subr.bf16.mxu0 %v3667
  %4908 = vmatpush1.bf16.msra.mxu0 %v3666
  %4909 = vmatprep.subr.bf16.mxu0 %v3671
  %4910 = vmatpush1.bf16.msra.mxu0 %v3670
  %4911 = vmatprep.subr.bf16.mxu0 %v3675
  %4912 = vmatpush1.bf16.msra.mxu0 %v3674
  %4913 = vmatprep.subr.bf16.mxu0 %v3679
  %4914 = vmatpush1.bf16.msra.mxu0 %v3678
  %4915 = vmatprep.subr.bf16.mxu0 %v3683
  %4916 = vmatpush1.bf16.msra.mxu0 %v3682
  %4917 = vmatprep.subr.bf16.mxu0 %v3687
  %4918 = vmatpush1.bf16.msra.mxu0 %v3686
  %4919 = vmatprep.subr.bf16.mxu0 %v3691
  %4920 = vmatpush1.bf16.msra.mxu0 %v3690
  %4921 = vmatprep.subr.bf16.mxu0 %v3695
  %4922 = vmatpush1.bf16.msra.mxu0 %v3694
  %4923 = vmatprep.subr.bf16.mxu0 %v3699
  %4924 = vmatpush1.bf16.msra.mxu0 %v3698
  %4925 = vmatprep.mubr.bf16.mxu0 %v876
  %4926 = vmatmul.mubr.bf16.gmra.mrb[0].mxu0 %v875
  %v4927 = vpop.f32.mrb[0].mxu0
  %v4928 = vadd.f32 %v4885, %v4927
  %v4929 = vpop.f32.mrb[0].mxu0
  %v4930 = vadd.f32 %v4887, %v4929
  %v4931 = vpop.f32.mrb[0].mxu0
  %v4932 = vadd.f32 %v4889, %v4931
  %v4933 = vpop.f32.mrb[0].mxu0
  %v4934 = vadd.f32 %v4891, %v4933
  %4935 = vdwg.mxu0
  %4936 = vmatprep.subr.bf16.mxu0 %v3703
  %4937 = vmatpush1.bf16.msra.mxu0 %v3702
  %4938 = vmatprep.subr.bf16.mxu0 %v3707
  %4939 = vmatpush1.bf16.msra.mxu0 %v3706
  %4940 = vmatprep.subr.bf16.mxu0 %v3711
  %4941 = vmatpush1.bf16.msra.mxu0 %v3710
  %4942 = vmatprep.subr.bf16.mxu0 %v3715
  %4943 = vmatpush1.bf16.msra.mxu0 %v3714
  %4944 = vmatprep.subr.bf16.mxu0 %v3719
  %4945 = vmatpush1.bf16.msra.mxu0 %v3718
  %4946 = vmatprep.subr.bf16.mxu0 %v3723
  %4947 = vmatpush1.bf16.msra.mxu0 %v3722
  %4948 = vmatprep.subr.bf16.mxu0 %v3727
  %4949 = vmatpush1.bf16.msra.mxu0 %v3726
  %4950 = vmatprep.subr.bf16.mxu0 %v3731
  %4951 = vmatpush1.bf16.msra.mxu0 %v3730
  %4952 = vmatprep.subr.bf16.mxu0 %v3735
  %4953 = vmatpush1.bf16.msra.mxu0 %v3734
  %4954 = vmatprep.subr.bf16.mxu0 %v3739
  %4955 = vmatpush1.bf16.msra.mxu0 %v3738
  %4956 = vmatprep.subr.bf16.mxu0 %v3743
  %4957 = vmatpush1.bf16.msra.mxu0 %v3742
  %4958 = vmatprep.subr.bf16.mxu0 %v3747
  %4959 = vmatpush1.bf16.msra.mxu0 %v3746
  %4960 = vmatprep.subr.bf16.mxu0 %v3751
  %4961 = vmatpush1.bf16.msra.mxu0 %v3750
  %4962 = vmatprep.subr.bf16.mxu0 %v3755
  %4963 = vmatpush1.bf16.msra.mxu0 %v3754
  %4964 = vmatprep.subr.bf16.mxu0 %v3759
  %4965 = vmatpush1.bf16.msra.mxu0 %v3758
  %4966 = vmatprep.subr.bf16.mxu0 %v3763
  %4967 = vmatpush1.bf16.msra.mxu0 %v3762
  %4968 = vmatprep.mubr.bf16.mxu0 %v878
  %4969 = vmatmul.mubr.bf16.gmra.mrb[0].mxu0 %v877
  %v4970 = vpop.f32.mrb[0].mxu0
  %v4971 = vadd.f32 %v4928, %v4970
  %v4972 = vpop.f32.mrb[0].mxu0
  %v4973 = vadd.f32 %v4930, %v4972
  %v4974 = vpop.f32.mrb[0].mxu0
  %v4975 = vadd.f32 %v4932, %v4974
  %v4976 = vpop.f32.mrb[0].mxu0
  %v4977 = vadd.f32 %v4934, %v4976
  %4978 = vdwg.mxu0
  %4979 = vmatprep.subr.bf16.mxu0 %v3767
  %4980 = vmatpush1.bf16.msra.mxu0 %v3766
  %4981 = vmatprep.subr.bf16.mxu0 %v3771
  %4982 = vmatpush1.bf16.msra.mxu0 %v3770
  %4983 = vmatprep.subr.bf16.mxu0 %v3775
  %4984 = vmatpush1.bf16.msra.mxu0 %v3774
  %4985 = vmatprep.subr.bf16.mxu0 %v3779
  %4986 = vmatpush1.bf16.msra.mxu0 %v3778
  %4987 = vmatprep.subr.bf16.mxu0 0
  %4988 = vmatpush1.bf16.msra.mxu0 0
  %4989 = vmatprep.subr.bf16.mxu0 0
  %4990 = vmatpush1.bf16.msra.mxu0 0
  %4991 = vmatprep.subr.bf16.mxu0 0
  %4992 = vmatpush1.bf16.msra.mxu0 0
  %4993 = vmatprep.subr.bf16.mxu0 0
  %4994 = vmatpush1.bf16.msra.mxu0 0
  %4995 = vmatprep.subr.bf16.mxu0 0
  %4996 = vmatpush1.bf16.msra.mxu0 0
  %4997 = vmatprep.subr.bf16.mxu0 0
  %4998 = vmatpush1.bf16.msra.mxu0 0
  %4999 = vmatprep.subr.bf16.mxu0 0
  %5000 = vmatpush1.bf16.msra.mxu0 0
  %5001 = vmatprep.subr.bf16.mxu0 0
  %5002 = vmatpush1.bf16.msra.mxu0 0
  %5003 = vmatprep.subr.bf16.mxu0 0
  %5004 = vmatpush1.bf16.msra.mxu0 0
  %5005 = vmatprep.subr.bf16.mxu0 0
  %5006 = vmatpush1.bf16.msra.mxu0 0
  %5007 = vmatprep.subr.bf16.mxu0 0
  %5008 = vmatpush1.bf16.msra.mxu0 0
  %5009 = vmatprep.subr.bf16.mxu0 0
  %5010 = vmatpush1.bf16.msra.mxu0 0
  %5011 = vmatprep.mubr.bf16.mxu0 0
  %5012 = vmatmul.mubr.bf16.gmra.mrb[0].mxu0 %v4504
  %v5013 = vpop.f32.mrb[0].mxu0
  %v5014 = vadd.f32 %v4971, %v5013
  %v5015 = vpop.f32.mrb[0].mxu0
  %v5016 = vadd.f32 %v4973, %v5015
  %v5017 = vpop.f32.mrb[0].mxu0
  %v5018 = vadd.f32 %v4975, %v5017
  %v5019 = vpop.f32.mrb[0].mxu0
  %v5020 = vadd.f32 %v4977, %v5019
  %5021 = vdwg.mxu0
  %5022 = vmatprep.subr.bf16.mxu0 %v3065
  %5023 = vmatpush1.bf16.msra.mxu0 %v3064
  %5024 = vmatprep.subr.bf16.mxu0 %v3069
  %5025 = vmatpush1.bf16.msra.mxu0 %v3068
  %5026 = vmatprep.subr.bf16.mxu0 %v3073
  %5027 = vmatpush1.bf16.msra.mxu0 %v3072
  %5028 = vmatprep.subr.bf16.mxu0 %v3077
  %5029 = vmatpush1.bf16.msra.mxu0 %v3076
  %5030 = vmatprep.subr.bf16.mxu0 %v3081
  %5031 = vmatpush1.bf16.msra.mxu0 %v3080
  %5032 = vmatprep.subr.bf16.mxu0 %v3085
  %5033 = vmatpush1.bf16.msra.mxu0 %v3084
  %5034 = vmatprep.subr.bf16.mxu0 %v3089
  %5035 = vmatpush1.bf16.msra.mxu0 %v3088
  %5036 = vmatprep.subr.bf16.mxu0 %v3093
  %5037 = vmatpush1.bf16.msra.mxu0 %v3092
  %5038 = vmatprep.subr.bf16.mxu0 %v3097
  %5039 = vmatpush1.bf16.msra.mxu0 %v3096
  %5040 = vmatprep.subr.bf16.mxu0 %v3101
  %5041 = vmatpush1.bf16.msra.mxu0 %v3100
  %5042 = vmatprep.subr.bf16.mxu0 %v3105
  %5043 = vmatpush1.bf16.msra.mxu0 %v3104
  %5044 = vmatprep.subr.bf16.mxu0 %v3109
  %5045 = vmatpush1.bf16.msra.mxu0 %v3108
  %5046 = vmatprep.subr.bf16.mxu0 %v3113
  %5047 = vmatpush1.bf16.msra.mxu0 %v3112
  %5048 = vmatprep.subr.bf16.mxu0 %v3117
  %5049 = vmatpush1.bf16.msra.mxu0 %v3116
  %5050 = vmatprep.subr.bf16.mxu0 %v3121
  %5051 = vmatpush1.bf16.msra.mxu0 %v3120
  %5052 = vmatprep.subr.bf16.mxu0 %v3125
  %5053 = vmatpush1.bf16.msra.mxu0 %v3124
  %5054 = vmatprep.mubr.bf16.mxu0 %v858
  %5055 = vmatmul.mubr.bf16.gmra.mrb[0].mxu0 %v857
  %v5056 = vpop.f32.mrb[0].mxu0
  %v5057 = vadd.f32 %v778, %v5056
  %v5058 = vpop.f32.mrb[0].mxu0
  %v5059 = vadd.f32 %v782, %v5058
  %v5060 = vpop.f32.mrb[0].mxu0
  %v5061 = vadd.f32 %v778, %v5060
  %v5062 = vpop.f32.mrb[0].mxu0
  %v5063 = vadd.f32 %v782, %v5062
  %5064 = vdwg.mxu0
  %5065 = vmatprep.subr.bf16.mxu0 %v3129
  %5066 = vmatpush1.bf16.msra.mxu0 %v3128
  %5067 = vmatprep.subr.bf16.mxu0 %v3133
  %5068 = vmatpush1.bf16.msra.mxu0 %v3132
  %5069 = vmatprep.subr.bf16.mxu0 %v3137
  %5070 = vmatpush1.bf16.msra.mxu0 %v3136
  %5071 = vmatprep.subr.bf16.mxu0 %v3141
  %5072 = vmatpush1.bf16.msra.mxu0 %v3140
  %5073 = vmatprep.subr.bf16.mxu0 %v3145
  %5074 = vmatpush1.bf16.msra.mxu0 %v3144
  %5075 = vmatprep.subr.bf16.mxu0 %v3149
  %5076 = vmatpush1.bf16.msra.mxu0 %v3148
  %5077 = vmatprep.subr.bf16.mxu0 %v3153
  %5078 = vmatpush1.bf16.msra.mxu0 %v3152
  %5079 = vmatprep.subr.bf16.mxu0 %v3157
  %5080 = vmatpush1.bf16.msra.mxu0 %v3156
  %5081 = vmatprep.subr.bf16.mxu0 %v3161
  %5082 = vmatpush1.bf16.msra.mxu0 %v3160
  %5083 = vmatprep.subr.bf16.mxu0 %v3165
  %5084 = vmatpush1.bf16.msra.mxu0 %v3164
  %5085 = vmatprep.subr.bf16.mxu0 %v3169
  %5086 = vmatpush1.bf16.msra.mxu0 %v3168
  %5087 = vmatprep.subr.bf16.mxu0 %v3173
  %5088 = vmatpush1.bf16.msra.mxu0 %v3172
  %5089 = vmatprep.subr.bf16.mxu0 %v3177
  %5090 = vmatpush1.bf16.msra.mxu0 %v3176
  %5091 = vmatprep.subr.bf16.mxu0 %v3181
  %5092 = vmatpush1.bf16.msra.mxu0 %v3180
  %5093 = vmatprep.subr.bf16.mxu0 %v3185
  %5094 = vmatpush1.bf16.msra.mxu0 %v3184
  %5095 = vmatprep.subr.bf16.mxu0 %v3189
  %5096 = vmatpush1.bf16.msra.mxu0 %v3188
  %5097 = vmatprep.mubr.bf16.mxu0 %v860
  %5098 = vmatmul.mubr.bf16.gmra.mrb[0].mxu0 %v859
  %v5099 = vpop.f32.mrb[0].mxu0
  %v5100 = vadd.f32 %v5057, %v5099
  %v5101 = vpop.f32.mrb[0].mxu0
  %v5102 = vadd.f32 %v5059, %v5101
  %v5103 = vpop.f32.mrb[0].mxu0
  %v5104 = vadd.f32 %v5061, %v5103
  %v5105 = vpop.f32.mrb[0].mxu0
  %v5106 = vadd.f32 %v5063, %v5105
  %5107 = vdwg.mxu0
  %5108 = vmatprep.subr.bf16.mxu0 %v3193
  %5109 = vmatpush1.bf16.msra.mxu0 %v3192
  %5110 = vmatprep.subr.bf16.mxu0 %v3197
  %5111 = vmatpush1.bf16.msra.mxu0 %v3196
  %5112 = vmatprep.subr.bf16.mxu0 %v3201
  %5113 = vmatpush1.bf16.msra.mxu0 %v3200
  %5114 = vmatprep.subr.bf16.mxu0 %v3205
  %5115 = vmatpush1.bf16.msra.mxu0 %v3204
  %5116 = vmatprep.subr.bf16.mxu0 %v3209
  %5117 = vmatpush1.bf16.msra.mxu0 %v3208
  %5118 = vmatprep.subr.bf16.mxu0 %v3213
  %5119 = vmatpush1.bf16.msra.mxu0 %v3212
  %5120 = vmatprep.subr.bf16.mxu0 %v3217
  %5121 = vmatpush1.bf16.msra.mxu0 %v3216
  %5122 = vmatprep.subr.bf16.mxu0 %v3221
  %5123 = vmatpush1.bf16.msra.mxu0 %v3220
  %5124 = vmatprep.subr.bf16.mxu0 %v3225
  %5125 = vmatpush1.bf16.msra.mxu0 %v3224
  %5126 = vmatprep.subr.bf16.mxu0 %v3229
  %5127 = vmatpush1.bf16.msra.mxu0 %v3228
  %5128 = vmatprep.subr.bf16.mxu0 %v3233
  %5129 = vmatpush1.bf16.msra.mxu0 %v3232
  %5130 = vmatprep.subr.bf16.mxu0 %v3237
  %5131 = vmatpush1.bf16.msra.mxu0 %v3236
  %5132 = vmatprep.subr.bf16.mxu0 %v3241
  %5133 = vmatpush1.bf16.msra.mxu0 %v3240
  %5134 = vmatprep.subr.bf16.mxu0 %v3245
  %5135 = vmatpush1.bf16.msra.mxu0 %v3244
  %5136 = vmatprep.subr.bf16.mxu0 %v3249
  %5137 = vmatpush1.bf16.msra.mxu0 %v3248
  %5138 = vmatprep.subr.bf16.mxu0 %v3253
  %5139 = vmatpush1.bf16.msra.mxu0 %v3252
  %5140 = vmatprep.mubr.bf16.mxu0 %v862
  %5141 = vmatmul.mubr.bf16.gmra.mrb[0].mxu0 %v861
  %v5142 = vpop.f32.mrb[0].mxu0
  %v5143 = vadd.f32 %v5100, %v5142
  %v5144 = vpop.f32.mrb[0].mxu0
  %v5145 = vadd.f32 %v5102, %v5144
  %v5146 = vpop.f32.mrb[0].mxu0
  %v5147 = vadd.f32 %v5104, %v5146
  %v5148 = vpop.f32.mrb[0].mxu0
  %v5149 = vadd.f32 %v5106, %v5148
  %5150 = vdwg.mxu0
  %5151 = vmatprep.subr.bf16.mxu0 %v3257
  %5152 = vmatpush1.bf16.msra.mxu0 %v3256
  %5153 = vmatprep.subr.bf16.mxu0 %v3261
  %5154 = vmatpush1.bf16.msra.mxu0 %v3260
  %5155 = vmatprep.subr.bf16.mxu0 %v3265
  %5156 = vmatpush1.bf16.msra.mxu0 %v3264
  %5157 = vmatprep.subr.bf16.mxu0 %v3269
  %5158 = vmatpush1.bf16.msra.mxu0 %v3268
  %5159 = vmatprep.subr.bf16.mxu0 %v3273
  %5160 = vmatpush1.bf16.msra.mxu0 %v3272
  %5161 = vmatprep.subr.bf16.mxu0 %v3277
  %5162 = vmatpush1.bf16.msra.mxu0 %v3276
  %5163 = vmatprep.subr.bf16.mxu0 %v3281
  %5164 = vmatpush1.bf16.msra.mxu0 %v3280
  %5165 = vmatprep.subr.bf16.mxu0 %v3285
  %5166 = vmatpush1.bf16.msra.mxu0 %v3284
  %5167 = vmatprep.subr.bf16.mxu0 %v3289
  %5168 = vmatpush1.bf16.msra.mxu0 %v3288
  %5169 = vmatprep.subr.bf16.mxu0 %v3293
  %5170 = vmatpush1.bf16.msra.mxu0 %v3292
  %5171 = vmatprep.subr.bf16.mxu0 %v3297
  %5172 = vmatpush1.bf16.msra.mxu0 %v3296
  %5173 = vmatprep.subr.bf16.mxu0 %v3301
  %5174 = vmatpush1.bf16.msra.mxu0 %v3300
  %5175 = vmatprep.subr.bf16.mxu0 %v3305
  %5176 = vmatpush1.bf16.msra.mxu0 %v3304
  %5177 = vmatprep.subr.bf16.mxu0 %v3309
  %5178 = vmatpush1.bf16.msra.mxu0 %v3308
  %5179 = vmatprep.subr.bf16.mxu0 %v3313
  %5180 = vmatpush1.bf16.msra.mxu0 %v3312
  %5181 = vmatprep.subr.bf16.mxu0 %v3317
  %5182 = vmatpush1.bf16.msra.mxu0 %v3316
  %5183 = vmatprep.mubr.bf16.mxu0 %v864
  %5184 = vmatmul.mubr.bf16.gmra.mrb[0].mxu0 %v863
  %v5185 = vpop.f32.mrb[0].mxu0
  %v5186 = vadd.f32 %v5143, %v5185
  %v5187 = vpop.f32.mrb[0].mxu0
  %v5188 = vadd.f32 %v5145, %v5187
  %v5189 = vpop.f32.mrb[0].mxu0
  %v5190 = vadd.f32 %v5147, %v5189
  %v5191 = vpop.f32.mrb[0].mxu0
  %v5192 = vadd.f32 %v5149, %v5191
  %5193 = vdwg.mxu0
  %5194 = vmatprep.subr.bf16.mxu0 %v3321
  %5195 = vmatpush1.bf16.msra.mxu0 %v3320
  %5196 = vmatprep.subr.bf16.mxu0 %v3325
  %5197 = vmatpush1.bf16.msra.mxu0 %v3324
  %5198 = vmatprep.subr.bf16.mxu0 %v3329
  %5199 = vmatpush1.bf16.msra.mxu0 %v3328
  %5200 = vmatprep.subr.bf16.mxu0 %v3333
  %5201 = vmatpush1.bf16.msra.mxu0 %v3332
  %5202 = vmatprep.subr.bf16.mxu0 %v3337
  %5203 = vmatpush1.bf16.msra.mxu0 %v3336
  %5204 = vmatprep.subr.bf16.mxu0 %v3341
  %5205 = vmatpush1.bf16.msra.mxu0 %v3340
  %5206 = vmatprep.subr.bf16.mxu0 %v3345
  %5207 = vmatpush1.bf16.msra.mxu0 %v3344
  %5208 = vmatprep.subr.bf16.mxu0 %v3349
  %5209 = vmatpush1.bf16.msra.mxu0 %v3348
  %5210 = vmatprep.subr.bf16.mxu0 %v3353
  %5211 = vmatpush1.bf16.msra.mxu0 %v3352
  %5212 = vmatprep.subr.bf16.mxu0 %v3357
  %5213 = vmatpush1.bf16.msra.mxu0 %v3356
  %5214 = vmatprep.subr.bf16.mxu0 %v3361
  %5215 = vmatpush1.bf16.msra.mxu0 %v3360
  %5216 = vmatprep.subr.bf16.mxu0 %v3365
  %5217 = vmatpush1.bf16.msra.mxu0 %v3364
  %5218 = vmatprep.subr.bf16.mxu0 %v3369
  %5219 = vmatpush1.bf16.msra.mxu0 %v3368
  %5220 = vmatprep.subr.bf16.mxu0 %v3373
  %5221 = vmatpush1.bf16.msra.mxu0 %v3372
  %5222 = vmatprep.subr.bf16.mxu0 %v3377
  %5223 = vmatpush1.bf16.msra.mxu0 %v3376
  %5224 = vmatprep.subr.bf16.mxu0 %v3381
  %5225 = vmatpush1.bf16.msra.mxu0 %v3380
  %5226 = vmatprep.mubr.bf16.mxu0 %v866
  %5227 = vmatmul.mubr.bf16.gmra.mrb[0].mxu0 %v865
  %v5228 = vpop.f32.mrb[0].mxu0
  %v5229 = vadd.f32 %v5186, %v5228
  %v5230 = vpop.f32.mrb[0].mxu0
  %v5231 = vadd.f32 %v5188, %v5230
  %v5232 = vpop.f32.mrb[0].mxu0
  %v5233 = vadd.f32 %v5190, %v5232
  %v5234 = vpop.f32.mrb[0].mxu0
  %v5235 = vadd.f32 %v5192, %v5234
  %5236 = vdwg.mxu0
  %5237 = vmatprep.subr.bf16.mxu0 %v3385
  %5238 = vmatpush1.bf16.msra.mxu0 %v3384
  %5239 = vmatprep.subr.bf16.mxu0 %v3389
  %5240 = vmatpush1.bf16.msra.mxu0 %v3388
  %5241 = vmatprep.subr.bf16.mxu0 %v3393
  %5242 = vmatpush1.bf16.msra.mxu0 %v3392
  %5243 = vmatprep.subr.bf16.mxu0 %v3397
  %5244 = vmatpush1.bf16.msra.mxu0 %v3396
  %5245 = vmatprep.subr.bf16.mxu0 %v3401
  %5246 = vmatpush1.bf16.msra.mxu0 %v3400
  %5247 = vmatprep.subr.bf16.mxu0 %v3405
  %5248 = vmatpush1.bf16.msra.mxu0 %v3404
  %5249 = vmatprep.subr.bf16.mxu0 %v3409
  %5250 = vmatpush1.bf16.msra.mxu0 %v3408
  %5251 = vmatprep.subr.bf16.mxu0 %v3413
  %5252 = vmatpush1.bf16.msra.mxu0 %v3412
  %5253 = vmatprep.subr.bf16.mxu0 %v3417
  %5254 = vmatpush1.bf16.msra.mxu0 %v3416
  %5255 = vmatprep.subr.bf16.mxu0 %v3421
  %5256 = vmatpush1.bf16.msra.mxu0 %v3420
  %5257 = vmatprep.subr.bf16.mxu0 %v3425
  %5258 = vmatpush1.bf16.msra.mxu0 %v3424
  %5259 = vmatprep.subr.bf16.mxu0 %v3429
  %5260 = vmatpush1.bf16.msra.mxu0 %v3428
  %5261 = vmatprep.subr.bf16.mxu0 %v3433
  %5262 = vmatpush1.bf16.msra.mxu0 %v3432
  %5263 = vmatprep.subr.bf16.mxu0 %v3437
  %5264 = vmatpush1.bf16.msra.mxu0 %v3436
  %5265 = vmatprep.subr.bf16.mxu0 %v3441
  %5266 = vmatpush1.bf16.msra.mxu0 %v3440
  %5267 = vmatprep.subr.bf16.mxu0 %v3445
  %5268 = vmatpush1.bf16.msra.mxu0 %v3444
  %5269 = vmatprep.mubr.bf16.mxu0 %v868
  %5270 = vmatmul.mubr.bf16.gmra.mrb[0].mxu0 %v867
  %v5271 = vpop.f32.mrb[0].mxu0
  %v5272 = vadd.f32 %v5229, %v5271
  %v5273 = vpop.f32.mrb[0].mxu0
  %v5274 = vadd.f32 %v5231, %v5273
  %v5275 = vpop.f32.mrb[0].mxu0
  %v5276 = vadd.f32 %v5233, %v5275
  %v5277 = vpop.f32.mrb[0].mxu0
  %v5278 = vadd.f32 %v5235, %v5277
  %5279 = vdwg.mxu0
  %5280 = vmatprep.subr.bf16.mxu0 %v3449
  %5281 = vmatpush1.bf16.msra.mxu0 %v3448
  %5282 = vmatprep.subr.bf16.mxu0 %v3453
  %5283 = vmatpush1.bf16.msra.mxu0 %v3452
  %5284 = vmatprep.subr.bf16.mxu0 %v3457
  %5285 = vmatpush1.bf16.msra.mxu0 %v3456
  %5286 = vmatprep.subr.bf16.mxu0 %v3461
  %5287 = vmatpush1.bf16.msra.mxu0 %v3460
  %5288 = vmatprep.subr.bf16.mxu0 %v3465
  %5289 = vmatpush1.bf16.msra.mxu0 %v3464
  %5290 = vmatprep.subr.bf16.mxu0 %v3469
  %5291 = vmatpush1.bf16.msra.mxu0 %v3468
  %5292 = vmatprep.subr.bf16.mxu0 %v3473
  %5293 = vmatpush1.bf16.msra.mxu0 %v3472
  %5294 = vmatprep.subr.bf16.mxu0 %v3477
  %5295 = vmatpush1.bf16.msra.mxu0 %v3476
  %5296 = vmatprep.subr.bf16.mxu0 %v3481
  %5297 = vmatpush1.bf16.msra.mxu0 %v3480
  %5298 = vmatprep.subr.bf16.mxu0 %v3485
  %5299 = vmatpush1.bf16.msra.mxu0 %v3484
  %5300 = vmatprep.subr.bf16.mxu0 %v3489
  %5301 = vmatpush1.bf16.msra.mxu0 %v3488
  %5302 = vmatprep.subr.bf16.mxu0 %v3493
  %5303 = vmatpush1.bf16.msra.mxu0 %v3492
  %5304 = vmatprep.subr.bf16.mxu0 %v3497
  %5305 = vmatpush1.bf16.msra.mxu0 %v3496
  %5306 = vmatprep.subr.bf16.mxu0 %v3501
  %5307 = vmatpush1.bf16.msra.mxu0 %v3500
  %5308 = vmatprep.subr.bf16.mxu0 %v3505
  %5309 = vmatpush1.bf16.msra.mxu0 %v3504
  %5310 = vmatprep.subr.bf16.mxu0 %v3509
  %5311 = vmatpush1.bf16.msra.mxu0 %v3508
  %5312 = vmatprep.mubr.bf16.mxu0 %v870
  %5313 = vmatmul.mubr.bf16.gmra.mrb[0].mxu0 %v869
  %v5314 = vpop.f32.mrb[0].mxu0
  %v5315 = vadd.f32 %v5272, %v5314
  %v5316 = vpop.f32.mrb[0].mxu0
  %v5317 = vadd.f32 %v5274, %v5316
  %v5318 = vpop.f32.mrb[0].mxu0
  %v5319 = vadd.f32 %v5276, %v5318
  %v5320 = vpop.f32.mrb[0].mxu0
  %v5321 = vadd.f32 %v5278, %v5320
  %5322 = vdwg.mxu0
  %5323 = vmatprep.subr.bf16.mxu0 %v3513
  %5324 = vmatpush1.bf16.msra.mxu0 %v3512
  %5325 = vmatprep.subr.bf16.mxu0 %v3517
  %5326 = vmatpush1.bf16.msra.mxu0 %v3516
  %5327 = vmatprep.subr.bf16.mxu0 %v3521
  %5328 = vmatpush1.bf16.msra.mxu0 %v3520
  %5329 = vmatprep.subr.bf16.mxu0 %v3525
  %5330 = vmatpush1.bf16.msra.mxu0 %v3524
  %5331 = vmatprep.subr.bf16.mxu0 %v3529
  %5332 = vmatpush1.bf16.msra.mxu0 %v3528
  %5333 = vmatprep.subr.bf16.mxu0 %v3533
  %5334 = vmatpush1.bf16.msra.mxu0 %v3532
  %5335 = vmatprep.subr.bf16.mxu0 %v3537
  %5336 = vmatpush1.bf16.msra.mxu0 %v3536
  %5337 = vmatprep.subr.bf16.mxu0 %v3541
  %5338 = vmatpush1.bf16.msra.mxu0 %v3540
  %5339 = vmatprep.subr.bf16.mxu0 %v3545
  %5340 = vmatpush1.bf16.msra.mxu0 %v3544
  %5341 = vmatprep.subr.bf16.mxu0 %v3549
  %5342 = vmatpush1.bf16.msra.mxu0 %v3548
  %5343 = vmatprep.subr.bf16.mxu0 %v3553
  %5344 = vmatpush1.bf16.msra.mxu0 %v3552
  %5345 = vmatprep.subr.bf16.mxu0 %v3557
  %5346 = vmatpush1.bf16.msra.mxu0 %v3556
  %5347 = vmatprep.subr.bf16.mxu0 %v3561
  %5348 = vmatpush1.bf16.msra.mxu0 %v3560
  %5349 = vmatprep.subr.bf16.mxu0 %v3565
  %5350 = vmatpush1.bf16.msra.mxu0 %v3564
  %5351 = vmatprep.subr.bf16.mxu0 %v3569
  %5352 = vmatpush1.bf16.msra.mxu0 %v3568
  %5353 = vmatprep.subr.bf16.mxu0 %v3573
  %5354 = vmatpush1.bf16.msra.mxu0 %v3572
  %5355 = vmatprep.mubr.bf16.mxu0 %v872
  %5356 = vmatmul.mubr.bf16.gmra.mrb[0].mxu0 %v871
  %v5357 = vpop.f32.mrb[0].mxu0
  %v5358 = vadd.f32 %v5315, %v5357
  %v5359 = vpop.f32.mrb[0].mxu0
  %v5360 = vadd.f32 %v5317, %v5359
  %v5361 = vpop.f32.mrb[0].mxu0
  %v5362 = vadd.f32 %v5319, %v5361
  %v5363 = vpop.f32.mrb[0].mxu0
  %v5364 = vadd.f32 %v5321, %v5363
  %5365 = vdwg.mxu0
  %5366 = vmatprep.subr.bf16.mxu0 %v3577
  %5367 = vmatpush1.bf16.msra.mxu0 %v3576
  %5368 = vmatprep.subr.bf16.mxu0 %v3581
  %5369 = vmatpush1.bf16.msra.mxu0 %v3580
  %5370 = vmatprep.subr.bf16.mxu0 %v3585
  %5371 = vmatpush1.bf16.msra.mxu0 %v3584
  %5372 = vmatprep.subr.bf16.mxu0 %v3589
  %5373 = vmatpush1.bf16.msra.mxu0 %v3588
  %5374 = vmatprep.subr.bf16.mxu0 %v3593
  %5375 = vmatpush1.bf16.msra.mxu0 %v3592
  %5376 = vmatprep.subr.bf16.mxu0 %v3597
  %5377 = vmatpush1.bf16.msra.mxu0 %v3596
  %5378 = vmatprep.subr.bf16.mxu0 %v3601
  %5379 = vmatpush1.bf16.msra.mxu0 %v3600
  %5380 = vmatprep.subr.bf16.mxu0 %v3605
  %5381 = vmatpush1.bf16.msra.mxu0 %v3604
  %5382 = vmatprep.subr.bf16.mxu0 %v3609
  %5383 = vmatpush1.bf16.msra.mxu0 %v3608
  %5384 = vmatprep.subr.bf16.mxu0 %v3613
  %5385 = vmatpush1.bf16.msra.mxu0 %v3612
  %5386 = vmatprep.subr.bf16.mxu0 %v3617
  %5387 = vmatpush1.bf16.msra.mxu0 %v3616
  %5388 = vmatprep.subr.bf16.mxu0 %v3621
  %5389 = vmatpush1.bf16.msra.mxu0 %v3620
  %5390 = vmatprep.subr.bf16.mxu0 %v3625
  %5391 = vmatpush1.bf16.msra.mxu0 %v3624
  %5392 = vmatprep.subr.bf16.mxu0 %v3629
  %5393 = vmatpush1.bf16.msra.mxu0 %v3628
  %5394 = vmatprep.subr.bf16.mxu0 %v3633
  %5395 = vmatpush1.bf16.msra.mxu0 %v3632
  %5396 = vmatprep.subr.bf16.mxu0 %v3637
  %5397 = vmatpush1.bf16.msra.mxu0 %v3636
  %5398 = vmatprep.mubr.bf16.mxu0 %v874
  %5399 = vmatmul.mubr.bf16.gmra.mrb[0].mxu0 %v873
  %v5400 = vpop.f32.mrb[0].mxu0
  %v5401 = vadd.f32 %v5358, %v5400
  %v5402 = vpop.f32.mrb[0].mxu0
  %v5403 = vadd.f32 %v5360, %v5402
  %v5404 = vpop.f32.mrb[0].mxu0
  %v5405 = vadd.f32 %v5362, %v5404
  %v5406 = vpop.f32.mrb[0].mxu0
  %v5407 = vadd.f32 %v5364, %v5406
  %5408 = vdwg.mxu0
  %5409 = vmatprep.subr.bf16.mxu0 %v3641
  %5410 = vmatpush1.bf16.msra.mxu0 %v3640
  %5411 = vmatprep.subr.bf16.mxu0 %v3645
  %5412 = vmatpush1.bf16.msra.mxu0 %v3644
  %5413 = vmatprep.subr.bf16.mxu0 %v3649
  %5414 = vmatpush1.bf16.msra.mxu0 %v3648
  %5415 = vmatprep.subr.bf16.mxu0 %v3653
  %5416 = vmatpush1.bf16.msra.mxu0 %v3652
  %5417 = vmatprep.subr.bf16.mxu0 %v3657
  %5418 = vmatpush1.bf16.msra.mxu0 %v3656
  %5419 = vmatprep.subr.bf16.mxu0 %v3661
  %5420 = vmatpush1.bf16.msra.mxu0 %v3660
  %5421 = vmatprep.subr.bf16.mxu0 %v3665
  %5422 = vmatpush1.bf16.msra.mxu0 %v3664
  %5423 = vmatprep.subr.bf16.mxu0 %v3669
  %5424 = vmatpush1.bf16.msra.mxu0 %v3668
  %5425 = vmatprep.subr.bf16.mxu0 %v3673
  %5426 = vmatpush1.bf16.msra.mxu0 %v3672
  %5427 = vmatprep.subr.bf16.mxu0 %v3677
  %5428 = vmatpush1.bf16.msra.mxu0 %v3676
  %5429 = vmatprep.subr.bf16.mxu0 %v3681
  %5430 = vmatpush1.bf16.msra.mxu0 %v3680
  %5431 = vmatprep.subr.bf16.mxu0 %v3685
  %5432 = vmatpush1.bf16.msra.mxu0 %v3684
  %5433 = vmatprep.subr.bf16.mxu0 %v3689
  %5434 = vmatpush1.bf16.msra.mxu0 %v3688
  %5435 = vmatprep.subr.bf16.mxu0 %v3693
  %5436 = vmatpush1.bf16.msra.mxu0 %v3692
  %5437 = vmatprep.subr.bf16.mxu0 %v3697
  %5438 = vmatpush1.bf16.msra.mxu0 %v3696
  %5439 = vmatprep.subr.bf16.mxu0 %v3701
  %5440 = vmatpush1.bf16.msra.mxu0 %v3700
  %5441 = vmatprep.mubr.bf16.mxu0 %v876
  %5442 = vmatmul.mubr.bf16.gmra.mrb[0].mxu0 %v875
  %v5443 = vpop.f32.mrb[0].mxu0
  %v5444 = vadd.f32 %v5401, %v5443
  %v5445 = vpop.f32.mrb[0].mxu0
  %v5446 = vadd.f32 %v5403, %v5445
  %v5447 = vpop.f32.mrb[0].mxu0
  %v5448 = vadd.f32 %v5405, %v5447
  %v5449 = vpop.f32.mrb[0].mxu0
  %v5450 = vadd.f32 %v5407, %v5449
  %5451 = vdwg.mxu0
  %5452 = vmatprep.subr.bf16.mxu0 %v3705
  %5453 = vmatpush1.bf16.msra.mxu0 %v3704
  %5454 = vmatprep.subr.bf16.mxu0 %v3709
  %5455 = vmatpush1.bf16.msra.mxu0 %v3708
  %5456 = vmatprep.subr.bf16.mxu0 %v3713
  %5457 = vmatpush1.bf16.msra.mxu0 %v3712
  %5458 = vmatprep.subr.bf16.mxu0 %v3717
  %5459 = vmatpush1.bf16.msra.mxu0 %v3716
  %5460 = vmatprep.subr.bf16.mxu0 %v3721
  %5461 = vmatpush1.bf16.msra.mxu0 %v3720
  %5462 = vmatprep.subr.bf16.mxu0 %v3725
  %5463 = vmatpush1.bf16.msra.mxu0 %v3724
  %5464 = vmatprep.subr.bf16.mxu0 %v3729
  %5465 = vmatpush1.bf16.msra.mxu0 %v3728
  %5466 = vmatprep.subr.bf16.mxu0 %v3733
  %5467 = vmatpush1.bf16.msra.mxu0 %v3732
  %5468 = vmatprep.subr.bf16.mxu0 %v3737
  %5469 = vmatpush1.bf16.msra.mxu0 %v3736
  %5470 = vmatprep.subr.bf16.mxu0 %v3741
  %5471 = vmatpush1.bf16.msra.mxu0 %v3740
  %5472 = vmatprep.subr.bf16.mxu0 %v3745
  %5473 = vmatpush1.bf16.msra.mxu0 %v3744
  %5474 = vmatprep.subr.bf16.mxu0 %v3749
  %5475 = vmatpush1.bf16.msra.mxu0 %v3748
  %5476 = vmatprep.subr.bf16.mxu0 %v3753
  %5477 = vmatpush1.bf16.msra.mxu0 %v3752
  %5478 = vmatprep.subr.bf16.mxu0 %v3757
  %5479 = vmatpush1.bf16.msra.mxu0 %v3756
  %5480 = vmatprep.subr.bf16.mxu0 %v3761
  %5481 = vmatpush1.bf16.msra.mxu0 %v3760
  %5482 = vmatprep.subr.bf16.mxu0 %v3765
  %5483 = vmatpush1.bf16.msra.mxu0 %v3764
  %5484 = vmatprep.mubr.bf16.mxu0 %v878
  %5485 = vmatmul.mubr.bf16.gmra.mrb[0].mxu0 %v877
  %v5486 = vpop.f32.mrb[0].mxu0
  %v5487 = vadd.f32 %v5444, %v5486
  %v5488 = vpop.f32.mrb[0].mxu0
  %v5489 = vadd.f32 %v5446, %v5488
  %v5490 = vpop.f32.mrb[0].mxu0
  %v5491 = vadd.f32 %v5448, %v5490
  %v5492 = vpop.f32.mrb[0].mxu0
  %v5493 = vadd.f32 %v5450, %v5492
  %5494 = vdwg.mxu0
  %5495 = vmatprep.subr.bf16.mxu0 %v3769
  %5496 = vmatpush1.bf16.msra.mxu0 %v3768
  %5497 = vmatprep.subr.bf16.mxu0 %v3773
  %5498 = vmatpush1.bf16.msra.mxu0 %v3772
  %5499 = vmatprep.subr.bf16.mxu0 %v3777
  %5500 = vmatpush1.bf16.msra.mxu0 %v3776
  %5501 = vmatprep.subr.bf16.mxu0 %v3781
  %5502 = vmatpush1.bf16.msra.mxu0 %v3780
  %5503 = vmatprep.subr.bf16.mxu0 0
  %5504 = vmatpush1.bf16.msra.mxu0 0
  %5505 = vmatprep.subr.bf16.mxu0 0
  %5506 = vmatpush1.bf16.msra.mxu0 0
  %5507 = vmatprep.subr.bf16.mxu0 0
  %5508 = vmatpush1.bf16.msra.mxu0 0
  %5509 = vmatprep.subr.bf16.mxu0 0
  %5510 = vmatpush1.bf16.msra.mxu0 0
  %5511 = vmatprep.subr.bf16.mxu0 0
  %5512 = vmatpush1.bf16.msra.mxu0 0
  %5513 = vmatprep.subr.bf16.mxu0 0
  %5514 = vmatpush1.bf16.msra.mxu0 0
  %5515 = vmatprep.subr.bf16.mxu0 0
  %5516 = vmatpush1.bf16.msra.mxu0 0
  %5517 = vmatprep.subr.bf16.mxu0 0
  %5518 = vmatpush1.bf16.msra.mxu0 0
  %5519 = vmatprep.subr.bf16.mxu0 0
  %5520 = vmatpush1.bf16.msra.mxu0 0
  %5521 = vmatprep.subr.bf16.mxu0 0
  %5522 = vmatpush1.bf16.msra.mxu0 0
  %5523 = vmatprep.subr.bf16.mxu0 0
  %5524 = vmatpush1.bf16.msra.mxu0 0
  %5525 = vmatprep.subr.bf16.mxu0 0
  %5526 = vmatpush1.bf16.msra.mxu0 0
  %5527 = vmatprep.mubr.bf16.mxu0 0
  %5528 = vmatmul.mubr.bf16.gmra.mrb[0].mxu0 %v4504
  %v5529 = vpop.f32.mrb[0].mxu0
  %v5530 = vadd.f32 %v5487, %v5529
  %v5531 = vpop.f32.mrb[0].mxu0
  %v5532 = vadd.f32 %v5489, %v5531
  %v5533 = vpop.f32.mrb[0].mxu0
  %v5534 = vadd.f32 %v5491, %v5533
  %v5535 = vpop.f32.mrb[0].mxu0
  %v5536 = vadd.f32 %v5493, %v5535
  %5537 = vdwg.mxu0
  %v5538 = vmax.f32 %v5014, 0.0
  %v5539 = vmax.f32 %v5016, 0.0
  %v5540 = vmax.f32 %v5530, 0.0
  %v5541 = vmax.f32 %v5532, 0.0
  %v5542 = vmax.f32 %v5018, 0.0
  %v5543 = vmax.f32 %v5020, 0.0
  %v5544 = vmax.f32 %v5534, 0.0
  %v5545 = vmax.f32 %v5536, 0.0
  %v5546 = vpack.c.bf16 %v5542, %v5538
  %v5547 = vpack.c.bf16 %v5543, %v5539
  %v5548 = vpack.c.bf16 %v5544, %v5540
  %v5549 = vpack.c.bf16 %v5545, %v5541
  %v5550 = vld [vmem:[%s3] sm:$0xf]
  %v5551 = vld [vmem:[%s3 + $0x4] sm:$0xf]
  %v5552 = vld [vmem:[%s3 + $0x8] sm:$0xf]
  %v5553 = vld [vmem:[%s3 + $0xc] sm:$0xf]
  %v5554 = vld [vmem:[%s3 + $0x10] sm:$0xf]
  %v5555 = vld [vmem:[%s3 + $0x14] sm:$0xf]
  %v5556 = vld [vmem:[%s3 + $0x18] sm:$0xf]
  %v5557 = vld [vmem:[%s3 + $0x1c] sm:$0xf]
  %v5558 = vld [vmem:[%s3 + $0x20] sm:$0xf]
  %v5559 = vld [vmem:[%s3 + $0x24] sm:$0xf]
  %v5560 = vld [vmem:[%s3 + $0x28] sm:$0xf]
  %v5561 = vld [vmem:[%s3 + $0x2c] sm:$0xf]
  %v5562 = vld [vmem:[%s3 + $0x30] sm:$0xf]
  %v5563 = vld [vmem:[%s3 + $0x34] sm:$0xf]
  %v5564 = vld [vmem:[%s3 + $0x38] sm:$0xf]
  %v5565 = vld [vmem:[%s3 + $0x3c] sm:$0xf]
  %v5566 = vld [vmem:[%s3 + $0x40] sm:$0xf]
  %v5567 = vld [vmem:[%s3 + $0x44] sm:$0xf]
  %v5568 = vld [vmem:[%s3 + $0x48] sm:$0xf]
  %v5569 = vld [vmem:[%s3 + $0x4c] sm:$0xf]
  %v5570 = vld [vmem:[%s3 + $0x50] sm:$0xf]
  %v5571 = vld [vmem:[%s3 + $0x54] sm:$0xf]
  %v5572 = vld [vmem:[%s3 + $0x58] sm:$0xf]
  %v5573 = vld [vmem:[%s3 + $0x5c] sm:$0xf]
  %v5574 = vld [vmem:[%s3 + $0x60] sm:$0xf]
  %v5575 = vld [vmem:[%s3 + $0x64] sm:$0xf]
  %v5576 = vld [vmem:[%s3 + $0x68] sm:$0xf]
  %v5577 = vld [vmem:[%s3 + $0x6c] sm:$0xf]
  %v5578 = vld [vmem:[%s3 + $0x70] sm:$0xf]
  %v5579 = vld [vmem:[%s3 + $0x74] sm:$0xf]
  %v5580 = vld [vmem:[%s3 + $0x78] sm:$0xf]
  %v5581 = vld [vmem:[%s3 + $0x7c] sm:$0xf]
  %v5582 = vld [vmem:[%s3 + $0x80] sm:$0xf]
  %v5583 = vld [vmem:[%s3 + $0x84] sm:$0xf]
  %v5584 = vld [vmem:[%s3 + $0x88] sm:$0xf]
  %v5585 = vld [vmem:[%s3 + $0x8c] sm:$0xf]
  %v5586 = vld [vmem:[%s3 + $0x90] sm:$0xf]
  %v5587 = vld [vmem:[%s3 + $0x94] sm:$0xf]
  %v5588 = vld [vmem:[%s3 + $0x98] sm:$0xf]
  %v5589 = vld [vmem:[%s3 + $0x9c] sm:$0xf]
  %v5590 = vld [vmem:[%s3 + $0xa0] sm:$0xf]
  %v5591 = vld [vmem:[%s3 + $0xa4] sm:$0xf]
  %v5592 = vld [vmem:[%s3 + $0xa8] sm:$0xf]
  %v5593 = vld [vmem:[%s3 + $0xac] sm:$0xf]
  %v5594 = vld [vmem:[%s3 + $0xb0] sm:$0xf]
  %v5595 = vld [vmem:[%s3 + $0xb4] sm:$0xf]
  %v5596 = vld [vmem:[%s3 + $0xb8] sm:$0xf]
  %v5597 = vld [vmem:[%s3 + $0xbc] sm:$0xf]
  %v5598 = vld [vmem:[%s3 + $0xc0] sm:$0xf]
  %v5599 = vld [vmem:[%s3 + $0xc4] sm:$0xf]
  %v5600 = vld [vmem:[%s3 + $0xc8] sm:$0xf]
  %v5601 = vld [vmem:[%s3 + $0xcc] sm:$0xf]
  %v5602 = vld [vmem:[%s3 + $0xd0] sm:$0xf]
  %v5603 = vld [vmem:[%s3 + $0xd4] sm:$0xf]
  %v5604 = vld [vmem:[%s3 + $0xd8] sm:$0xf]
  %v5605 = vld [vmem:[%s3 + $0xdc] sm:$0xf]
  %v5606 = vld [vmem:[%s3 + $0xe0] sm:$0xf]
  %v5607 = vld [vmem:[%s3 + $0xe4] sm:$0xf]
  %v5608 = vld [vmem:[%s3 + $0xe8] sm:$0xf]
  %v5609 = vld [vmem:[%s3 + $0xec] sm:$0xf]
  %v5610 = vld [vmem:[%s3 + $0xf0] sm:$0xf]
  %v5611 = vld [vmem:[%s3 + $0xf4] sm:$0xf]
  %v5612 = vld [vmem:[%s3 + $0xf8] sm:$0xf]
  %v5613 = vld [vmem:[%s3 + $0xfc] sm:$0xf]
  %v5614 = vld [vmem:[%s4] sm:$0x1]
  %v5616 = vlaneseq
  %v5617 = vshrl.u32 %v5616, 7
  %v5618 = vsub.s32 0, %v5617
  %v5619 = vrot.slane %v5614, %v5618
  %v5685 = vunpack.c.l.b16 %v5550
  %v5686 = vunpack.c.l.b16 %v5551
  %v5687 = vunpack.c.l.b16 %v5552
  %v5688 = vunpack.c.l.b16 %v5553
  %v5689 = vunpack.c.l.b16 %v5554
  %v5690 = vunpack.c.l.b16 %v5555
  %v5691 = vunpack.c.l.b16 %v5556
  %v5692 = vunpack.c.l.b16 %v5557
  %v5693 = vunpack.c.l.b16 %v5558
  %v5694 = vunpack.c.l.b16 %v5559
  %v5695 = vunpack.c.l.b16 %v5560
  %v5696 = vunpack.c.l.b16 %v5561
  %v5697 = vunpack.c.l.b16 %v5562
  %v5698 = vunpack.c.l.b16 %v5563
  %v5699 = vunpack.c.l.b16 %v5564
  %v5700 = vunpack.c.l.b16 %v5565
  %v5701 = vunpack.c.l.b16 %v5566
  %v5702 = vunpack.c.l.b16 %v5567
  %v5703 = vunpack.c.l.b16 %v5568
  %v5704 = vunpack.c.l.b16 %v5569
  %v5705 = vunpack.c.l.b16 %v5570
  %v5706 = vunpack.c.l.b16 %v5571
  %v5707 = vunpack.c.l.b16 %v5572
  %v5708 = vunpack.c.l.b16 %v5573
  %v5709 = vunpack.c.l.b16 %v5574
  %v5710 = vunpack.c.l.b16 %v5575
  %v5711 = vunpack.c.l.b16 %v5576
  %v5712 = vunpack.c.l.b16 %v5577
  %v5713 = vunpack.c.l.b16 %v5578
  %v5714 = vunpack.c.l.b16 %v5579
  %v5715 = vunpack.c.l.b16 %v5580
  %v5716 = vunpack.c.l.b16 %v5581
  %v5717 = vunpack.c.l.b16 %v5582
  %v5718 = vunpack.c.l.b16 %v5583
  %v5719 = vunpack.c.l.b16 %v5584
  %v5720 = vunpack.c.l.b16 %v5585
  %v5721 = vunpack.c.l.b16 %v5586
  %v5722 = vunpack.c.l.b16 %v5587
  %v5723 = vunpack.c.l.b16 %v5588
  %v5724 = vunpack.c.l.b16 %v5589
  %v5725 = vunpack.c.l.b16 %v5590
  %v5726 = vunpack.c.l.b16 %v5591
  %v5727 = vunpack.c.l.b16 %v5592
  %v5728 = vunpack.c.l.b16 %v5593
  %v5729 = vunpack.c.l.b16 %v5594
  %v5730 = vunpack.c.l.b16 %v5595
  %v5731 = vunpack.c.l.b16 %v5596
  %v5732 = vunpack.c.l.b16 %v5597
  %v5733 = vunpack.c.l.b16 %v5598
  %v5734 = vunpack.c.l.b16 %v5599
  %v5735 = vunpack.c.l.b16 %v5600
  %v5736 = vunpack.c.l.b16 %v5601
  %v5737 = vunpack.c.l.b16 %v5602
  %v5738 = vunpack.c.l.b16 %v5603
  %v5739 = vunpack.c.l.b16 %v5604
  %v5740 = vunpack.c.l.b16 %v5605
  %v5741 = vunpack.c.l.b16 %v5606
  %v5742 = vunpack.c.l.b16 %v5607
  %v5743 = vunpack.c.l.b16 %v5608
  %v5744 = vunpack.c.l.b16 %v5609
  %v5745 = vunpack.c.l.b16 %v5610
  %v5746 = vunpack.c.l.b16 %v5611
  %v5747 = vunpack.c.l.b16 %v5612
  %v5748 = vunpack.c.l.b16 %v5613
  %v5749 = vpack.c.b16 %v5686, %v5685
  %v5750 = vpack.c.b16 %v5688, %v5687
  %v5751 = vpack.c.b16 %v5690, %v5689
  %v5752 = vpack.c.b16 %v5692, %v5691
  %v5753 = vpack.c.b16 %v5694, %v5693
  %v5754 = vpack.c.b16 %v5696, %v5695
  %v5755 = vpack.c.b16 %v5698, %v5697
  %v5756 = vpack.c.b16 %v5700, %v5699
  %v5757 = vpack.c.b16 %v5702, %v5701
  %v5758 = vpack.c.b16 %v5704, %v5703
  %v5759 = vpack.c.b16 %v5706, %v5705
  %v5760 = vpack.c.b16 %v5708, %v5707
  %v5761 = vpack.c.b16 %v5710, %v5709
  %v5762 = vpack.c.b16 %v5712, %v5711
  %v5763 = vpack.c.b16 %v5714, %v5713
  %v5764 = vpack.c.b16 %v5716, %v5715
  %v5765 = vpack.c.b16 %v5718, %v5717
  %v5766 = vpack.c.b16 %v5720, %v5719
  %v5767 = vpack.c.b16 %v5722, %v5721
  %v5768 = vpack.c.b16 %v5724, %v5723
  %v5769 = vpack.c.b16 %v5726, %v5725
  %v5770 = vpack.c.b16 %v5728, %v5727
  %v5771 = vpack.c.b16 %v5730, %v5729
  %v5772 = vpack.c.b16 %v5732, %v5731
  %v5773 = vpack.c.b16 %v5734, %v5733
  %v5774 = vpack.c.b16 %v5736, %v5735
  %v5775 = vpack.c.b16 %v5738, %v5737
  %v5776 = vpack.c.b16 %v5740, %v5739
  %v5777 = vpack.c.b16 %v5742, %v5741
  %v5778 = vpack.c.b16 %v5744, %v5743
  %v5779 = vpack.c.b16 %v5746, %v5745
  %v5780 = vpack.c.b16 %v5748, %v5747
  %5813 = vmatprep.subr.bf16.mxu0 0
  %5814 = vmatpush1.bf16.msra.mxu0 %v5749
  %5815 = vmatprep.subr.bf16.mxu0 0
  %5816 = vmatpush1.bf16.msra.mxu0 %v5750
  %5817 = vmatprep.subr.bf16.mxu0 0
  %5818 = vmatpush1.bf16.msra.mxu0 %v5751
  %5819 = vmatprep.subr.bf16.mxu0 0
  %5820 = vmatpush1.bf16.msra.mxu0 %v5752
  %5821 = vmatprep.subr.bf16.mxu0 0
  %5822 = vmatpush1.bf16.msra.mxu0 %v5753
  %5823 = vmatprep.subr.bf16.mxu0 0
  %5824 = vmatpush1.bf16.msra.mxu0 %v5754
  %5825 = vmatprep.subr.bf16.mxu0 0
  %5826 = vmatpush1.bf16.msra.mxu0 %v5755
  %5827 = vmatprep.subr.bf16.mxu0 0
  %5828 = vmatpush1.bf16.msra.mxu0 %v5756
  %5829 = vmatprep.subr.bf16.mxu0 0
  %5830 = vmatpush1.bf16.msra.mxu0 %v5757
  %5831 = vmatprep.subr.bf16.mxu0 0
  %5832 = vmatpush1.bf16.msra.mxu0 %v5758
  %5833 = vmatprep.subr.bf16.mxu0 0
  %5834 = vmatpush1.bf16.msra.mxu0 %v5759
  %5835 = vmatprep.subr.bf16.mxu0 0
  %5836 = vmatpush1.bf16.msra.mxu0 %v5760
  %5837 = vmatprep.subr.bf16.mxu0 0
  %5838 = vmatpush1.bf16.msra.mxu0 %v5761
  %5839 = vmatprep.subr.bf16.mxu0 0
  %5840 = vmatpush1.bf16.msra.mxu0 %v5762
  %5841 = vmatprep.subr.bf16.mxu0 0
  %5842 = vmatpush1.bf16.msra.mxu0 %v5763
  %5843 = vmatprep.subr.bf16.mxu0 0
  %5844 = vmatpush1.bf16.msra.mxu0 %v5764
  %5845 = vmatprep.mubr.bf16.mxu0 %v5547
  %5846 = vmatmul.mubr.bf16.gmra.mrb[0].mxu0 %v5546
  %v5847 = vpop.f32.mrb[0].mxu0
  %v5848 = vadd.f32 %v5619, %v5847
  %v5849 = vpop.f32.mrb[0].mxu0
  %v5850 = vpop.f32.mrb[0].mxu0
  %v5851 = vadd.f32 %v5619, %v5850
  %v5852 = vpop.f32.mrb[0].mxu0
  %5853 = vdwg.mxu0
  %5854 = vmatprep.subr.bf16.mxu0 0
  %5855 = vmatpush1.bf16.msra.mxu0 %v5765
  %5856 = vmatprep.subr.bf16.mxu0 0
  %5857 = vmatpush1.bf16.msra.mxu0 %v5766
  %5858 = vmatprep.subr.bf16.mxu0 0
  %5859 = vmatpush1.bf16.msra.mxu0 %v5767
  %5860 = vmatprep.subr.bf16.mxu0 0
  %5861 = vmatpush1.bf16.msra.mxu0 %v5768
  %5862 = vmatprep.subr.bf16.mxu0 0
  %5863 = vmatpush1.bf16.msra.mxu0 %v5769
  %5864 = vmatprep.subr.bf16.mxu0 0
  %5865 = vmatpush1.bf16.msra.mxu0 %v5770
  %5866 = vmatprep.subr.bf16.mxu0 0
  %5867 = vmatpush1.bf16.msra.mxu0 %v5771
  %5868 = vmatprep.subr.bf16.mxu0 0
  %5869 = vmatpush1.bf16.msra.mxu0 %v5772
  %5870 = vmatprep.subr.bf16.mxu0 0
  %5871 = vmatpush1.bf16.msra.mxu0 %v5773
  %5872 = vmatprep.subr.bf16.mxu0 0
  %5873 = vmatpush1.bf16.msra.mxu0 %v5774
  %5874 = vmatprep.subr.bf16.mxu0 0
  %5875 = vmatpush1.bf16.msra.mxu0 %v5775
  %5876 = vmatprep.subr.bf16.mxu0 0
  %5877 = vmatpush1.bf16.msra.mxu0 %v5776
  %5878 = vmatprep.subr.bf16.mxu0 0
  %5879 = vmatpush1.bf16.msra.mxu0 %v5777
  %5880 = vmatprep.subr.bf16.mxu0 0
  %5881 = vmatpush1.bf16.msra.mxu0 %v5778
  %5882 = vmatprep.subr.bf16.mxu0 0
  %5883 = vmatpush1.bf16.msra.mxu0 %v5779
  %5884 = vmatprep.subr.bf16.mxu0 0
  %5885 = vmatpush1.bf16.msra.mxu0 %v5780
  %5886 = vmatprep.mubr.bf16.mxu0 %v5549
  %5887 = vmatmul.mubr.bf16.gmra.mrb[0].mxu0 %v5548
  %v5888 = vpop.f32.mrb[0].mxu0
  %v5889 = vadd.f32 %v5848, %v5888
  %v5890 = vpop.f32.mrb[0].mxu0
  %v5891 = vpop.f32.mrb[0].mxu0
  %v5892 = vadd.f32 %v5851, %v5891
  %v5893 = vpop.f32.mrb[0].mxu0
  %5894 = vdwg.mxu0
  %5895 = vst [vmem:[%s5] sm:$0xff] %v5889
  %5896 = vst [vmem:[%s5 + $0x8] sm:$0xff] %v5892
  // Predicated region
  $region22: #{forward.3} parent=0 // pred_check
    _
  $region23: #{forward.3} parent=0 // pred_check_branch
    %5898 = sbr.rel (0) target = $region25
  $region24: #{forward.3} parent=0 // pred_region
    _
  $region25: #{forward.3} parent=0 // pred_fallthru
    _
  // Predicated region
  $region26: #{forward.3} parent=0 // pred_check
    _
  $region27: #{forward.3} parent=0 // pred_check_branch
    %5900 = sbr.rel (0) target = $region29
  $region28: #{forward.3} parent=0 // pred_region
    _
  $region29: #{forward.3} parent=0 // pred_fallthru
    _

</llo_original>
